<compile_context>
chip_gen: v7x
topology: tpu7x:2x2x1
jax: 0.10.0
libtpu: 0.0.40
codegen_flags: <defaults>
</compile_context>

<pallas_src>
import numpy as np
import jax
import jax.numpy as jnp
from jax.experimental import pallas as pl
from jax.experimental.pallas import tpu as pltpu

WIN_SIZE = 11
WIN_SIGMA = 1.5
K1, K2 = 0.01, 0.03
DATA_RANGE = 1.0
SSIM_WEIGHT = 0.5
LANES = 128


def _ceil_to(a, m):
    return -(-a // m) * m


def _gaussian_1d(size, sigma):
    # matches pytorch_msssim._fspecial_gauss_1d
    coords = np.arange(size, dtype=np.float32) - size // 2
    g = np.exp(-(coords ** 2) / (2.0 * sigma ** 2))
    g /= g.sum()
    return g.astype(np.float32)


def _gauss_band_matrix(H, gauss):
    """Banded (Ho, H) matrix G with G[o, o:o+11] = gauss -> 'valid' H-pass as matmul."""
    Ho = H - WIN_SIZE + 1
    G = np.zeros((Ho, H), dtype=np.float32)
    for o in range(Ho):
        G[o, o:o + WIN_SIZE] = gauss
    return G


def _vmem_capacity_bytes():
    try:
        return int(pltpu.get_tpu_info().vmem_capacity_bytes)
    except Exception:
        return 64 * 1024 * 1024  # conservative: v7x physical VMEM per TensorCore


def _make_kernel(H, W, tile_n, gauss):
    Ho = H - WIN_SIZE + 1
    Wo = W - WIN_SIZE + 1
    g = [float(v) for v in gauss]
    half = WIN_SIZE // 2
    C1 = float((K1 * DATA_RANGE) ** 2)
    C2 = float((K2 * DATA_RANGE) ** 2)
    Tn = tile_n
    WoT = Wo * Tn

    def wpass(t):
        # t: (Ho, W*Tn).  Channel period Tn is a multiple of 128, so each tap
        # offset q*Tn is a vreg-aligned lane offset (free address math).
        # Symmetric taps: 6 vmul + 10 vadd per output element.
        f = g[half] * t[:, half * Tn: half * Tn + WoT]
        for q in range(half):
            a = t[:, q * Tn: q * Tn + WoT]
            b = t[:, (WIN_SIZE - 1 - q) * Tn: (WIN_SIZE - 1 - q) * Tn + WoT]
            f = f + g[q] * (a + b)
        return f

    def kernel(gh_ref, x_ref, y_ref, out_ref):
        x = x_ref[...]                      # (H, W*Tn) f32
        y = y_ref[...]
        gh = gh_ref[...]                    # (Ho, H) banded Gaussian taps

        # bf16 split of the tap matrix (tiny) for precision-robust MXU passes.
        gh_hi = gh.astype(jnp.bfloat16).astype(jnp.float32)
        gh_lo = gh - gh_hi

        def filt(z):
            # H-pass on the MXU: fp32-accurate split accumulation
            #   gh @ z ~= gh_hi@z_hi + gh_hi@z_lo + gh_lo@z   (error ~2^-16)
            z_hi = z.astype(jnp.bfloat16).astype(jnp.float32)
            z_lo = z - z_hi
            t = jnp.dot(gh_hi, z_hi, preferred_element_type=jnp.float32)
            t = t + jnp.dot(gh_hi, z_lo, preferred_element_type=jnp.float32)
            t = t + jnp.dot(gh_lo, z, preferred_element_type=jnp.float32)
            # W-pass on the VPU with aligned lane offsets.
            return wpass(t)                 # (Ho, Wo*Tn)

        # Five filtered planes, products kept transient (no stacked copy).
        mu1 = filt(x)
        mu2 = filt(y)
        e_xx = filt(x * x)
        e_yy = filt(y * y)
        e_xy = filt(x * y)

        mu1_sq = mu1 * mu1
        mu2_sq = mu2 * mu2
        mu1_mu2 = mu1 * mu2
        sigma1_sq = e_xx - mu1_sq
        sigma2_sq = e_yy - mu2_sq
        sigma12 = e_xy - mu1_mu2

        # Single fused divide (algebraically identical to cs_map * luminance).
        num = (2.0 * mu1_mu2 + C1) * (2.0 * sigma12 + C2)
        den = (mu1_sq + mu2_sq + C1) * (sigma1_sq + sigma2_sq + C2)
        ssim_map = num / den                # (Ho, Wo*Tn)

        # Per-channel partial sums, lane-dense: reduce rows (sublanes), then
        # fold the W positions with vreg-aligned lane-block adds.
        l1_cols = jnp.sum(jnp.abs(x - y), axis=0, keepdims=True)    # (1, W*Tn)
        ssim_cols = jnp.sum(ssim_map, axis=0, keepdims=True)        # (1, Wo*Tn)
        l1_n = l1_cols[:, 0:Tn]
        for w in range(1, W):
            l1_n = l1_n + l1_cols[:, w * Tn:(w + 1) * Tn]
        ssim_n = ssim_cols[:, 0:Tn]
        for w in range(1, Wo):
            ssim_n = ssim_n + ssim_cols[:, w * Tn:(w + 1) * Tn]

        # Single lane-dense store covering the whole (2, Tn) output block.
        out_ref[...] = jnp.concatenate([l1_n, ssim_n], axis=0)

    return kernel


def reconstruction_loss(output, target, ssim_weight=SSIM_WEIGHT):
    """output, target: (B, C, H, W) float32 in [0, data_range]. Returns scalar loss."""
    B, C, H, W = output.shape
    assert H >= WIN_SIZE and W >= WIN_SIZE, "spatial dims must be >= win_size (11)"
    N = B * C
    Ho = H - WIN_SIZE + 1
    Wo = W - WIN_SIZE + 1

    # ---- generation-aware channel-tile sizing: minimize lane padding and keep
    #      >= 2 grid steps on the parallel axis whenever N allows (v7x 2 TC) ----
    vmem_cap = _vmem_capacity_bytes()
    work_budget = int(0.55 * vmem_cap)
    per_chan_bytes = 64 * H * W     # ~16 f32 plane-equivalents/chan (incl. 2x-buffered inputs)
    max_tile = max(LANES, min(1024, (work_budget // per_chan_bytes) // LANES * LANES))
    npad0 = _ceil_to(N, LANES)
    num_tiles = -(-npad0 // max_tile)
    if num_tiles == 1 and npad0 >= 2 * LANES:
        num_tiles = 2               # keep both v7x TensorCores busy
    tile_n = _ceil_to(-(-N // num_tiles), LANES)
    n_pad = num_tiles * tile_n
    # TODO(synk): for very-high-resolution, few-channel inputs where even a
    # 128-lane tile exceeds the VMEM budget, additionally tile H with a 10-row
    # halo (second grid axis / manual pltpu.make_async_copy).

    def prep(a):
        # One fused XLA relayout per input (channels -> innermost/lane axis).
        # NOTE: producing channel-innermost activations upstream would remove it.
        a = a.reshape(N, H, W).astype(jnp.float32)
        a = jnp.pad(a, ((0, n_pad - N), (0, 0), (0, 0)))
        a = a.reshape(num_tiles, tile_n, H, W)
        a = jnp.transpose(a, (0, 2, 3, 1))                  # (T, H, W, tile_n)
        return a.reshape(num_tiles, H, W * tile_n)

    x = prep(output)
    y = prep(target)

    gauss = _gaussian_1d(WIN_SIZE, WIN_SIGMA)
    gh = jnp.asarray(_gauss_band_matrix(H, gauss))          # (Ho, H)
    kernel = _make_kernel(H, W, tile_n, gauss)

    flops_per_tile = tile_n * (3 * 2 * 5 * Ho * H * W       # MXU H-pass (split acc)
                               + 5 * 16 * Ho * Wo           # VPU W-pass
                               + 22 * Ho * Wo                # SSIM map
                               + 20 * H * W)                 # splits + L1 + folds
    cost = pl.CostEstimate(
        flops=int(num_tiles * flops_per_tile),
        transcendentals=0,
        bytes_accessed=int(2 * 4 * n_pad * H * W + num_tiles * 2 * tile_n * 4),
    )

    partials = pl.pallas_call(
        kernel,
        out_shape=jax.ShapeDtypeStruct((num_tiles, 2, tile_n), jnp.float32),
        grid=(num_tiles,),
        in_specs=[
            pl.BlockSpec((Ho, H), lambda i: (0, 0)),
            pl.BlockSpec((None, H, W * tile_n), lambda i: (i, 0, 0)),
            pl.BlockSpec((None, H, W * tile_n), lambda i: (i, 0, 0)),
        ],
        out_specs=pl.BlockSpec((None, 2, tile_n), lambda i: (i, 0, 0)),
        compiler_params=pltpu.CompilerParams(
            dimension_semantics=("parallel",),
            vmem_limit_bytes=int(min(int(0.9 * vmem_cap), 100 * 2 ** 20)),
        ),
        cost_estimate=cost,
    )(gh, x, y)

    # Finalize once: drop padded channels, global means, combine.
    l1_per_ch = partials[:, 0, :].reshape(n_pad)[:N]
    ssim_per_ch = partials[:, 1, :].reshape(n_pad)[:N]
    l1 = jnp.sum(l1_per_ch) / (N * H * W)
    ssim_val = jnp.sum(ssim_per_ch) / (N * Ho * Wo)
    return l1 + ssim_weight * (1.0 - ssim_val)


def _reference_loss(output, target, ssim_weight=SSIM_WEIGHT):
    # pure-JAX reference mirroring pytorch_msssim.ssim + L1
    B, C, H, W = output.shape
    x = output.reshape(B * C, H, W).astype(jnp.float32)
    y = target.reshape(B * C, H, W).astype(jnp.float32)
    g = jnp.asarray(_gaussian_1d(WIN_SIZE, WIN_SIGMA))
    Ho, Wo = H - WIN_SIZE + 1, W - WIN_SIZE + 1

    def filt(z):
        t = sum(g[q] * z[:, :, q:q + Wo] for q in range(WIN_SIZE))
        return sum(g[p] * t[:, p:p + Ho, :] for p in range(WIN_SIZE))

    C1 = (K1 * DATA_RANGE) ** 2
    C2 = (K2 * DATA_RANGE) ** 2
    mu1, mu2 = filt(x), filt(y)
    s1 = filt(x * x) - mu1 * mu1
    s2 = filt(y * y) - mu2 * mu2
    s12 = filt(x * y) - mu1 * mu2
    ssim_map = ((2 * mu1 * mu2 + C1) * (2 * s12 + C2)) / \
               ((mu1 * mu1 + mu2 * mu2 + C1) * (s1 + s2 + C2))
    ssim_val = jnp.mean(ssim_map)
    l1 = jnp.mean(jnp.abs(x - y))
    return l1 + ssim_weight * (1.0 - ssim_val)


if __name__ == "__main__":
    key = jax.random.PRNGKey(0)
    k1, k2 = jax.random.split(key)
    B, C, H, W = 2, 4, 16, 16
    output = jax.random.uniform(k1, (B, C, H, W), dtype=jnp.float32)
    target = jax.random.uniform(k2, (B, C, H, W), dtype=jnp.float32)

    loss = jax.block_until_ready(reconstruction_loss(output, target))
    ref = jax.block_until_ready(_reference_loss(output, target))
    assert np.allclose(np.asarray(loss), np.asarray(ref), rtol=1e-4, atol=1e-4), \
        f"mismatch: pallas={float(loss)} ref={float(ref)}"

    print("KERNEL_OK")
</pallas_src>

<mosaic_0001>
module attributes {stable_mosaic.version = 11 : i64} {
  func.func @kernel(%arg0: i32, %arg1: memref<6x16xf32, #tpu.memory_space<vmem>>, %arg2: memref<1x16x2048xf32, #tpu.memory_space<vmem>>, %arg3: memref<1x16x2048xf32, #tpu.memory_space<vmem>>, %arg4: memref<1x2x128xf32, #tpu.memory_space<vmem>>) attributes {dimension_semantics = [#tpu.dimension_semantics<parallel>], iteration_bounds = array<i64: 1>, scalar_prefetch = 0 : i64, scratch_operands = 0 : i64, tpu.core_type = #tpu.core_type<tc>, window_params = [{pipeline_mode = #tpu.pipeline_mode<synchronous>, transform_indices = @transform_0, window_bounds = array<i64: 6, 16>}, {transform_indices = @transform_1, window_bounds = array<i64: 1, 16, 2048>}, {transform_indices = @transform_2, window_bounds = array<i64: 1, 16, 2048>}, {transform_indices = @transform_3, window_bounds = array<i64: 1, 2, 128>}]} {
    %c0 = arith.constant 0 : index
    %c0_0 = arith.constant 0 : index
    %c0_1 = arith.constant 0 : index
    %0 = vector.load %arg2[%c0, %c0_0, %c0_1] : memref<1x16x2048xf32, #tpu.memory_space<vmem>>, vector<1x16x2048xf32>
    %1 = vector.shape_cast %0 : vector<1x16x2048xf32> to vector<16x2048xf32>
    %c0_2 = arith.constant 0 : index
    %c0_3 = arith.constant 0 : index
    %c0_4 = arith.constant 0 : index
    %2 = vector.load %arg3[%c0_2, %c0_3, %c0_4] : memref<1x16x2048xf32, #tpu.memory_space<vmem>>, vector<1x16x2048xf32>
    %3 = vector.shape_cast %2 : vector<1x16x2048xf32> to vector<16x2048xf32>
    %c0_5 = arith.constant 0 : index
    %c0_6 = arith.constant 0 : index
    %4 = vector.load %arg1[%c0_5, %c0_6] : memref<6x16xf32, #tpu.memory_space<vmem>>, vector<6x16xf32>
    %5 = arith.truncf %4 : vector<6x16xf32> to vector<6x16xbf16>
    %6 = arith.extf %5 : vector<6x16xbf16> to vector<6x16xf32>
    %7 = arith.subf %4, %6 : vector<6x16xf32>
    %8 = arith.truncf %1 : vector<16x2048xf32> to vector<16x2048xbf16>
    %9 = arith.extf %8 : vector<16x2048xbf16> to vector<16x2048xf32>
    %10 = arith.subf %1, %9 : vector<16x2048xf32>
    %cst = arith.constant dense<0.000000e+00> : vector<6x2048xf32>
    %11 = tpu.matmul %6, %9, %cst {dimension_numbers = #tpu.dot_dimension_numbers<[1], [0], [0], [1], [0, 0, 1, 1], [], []>} : vector<6x16xf32>, vector<16x2048xf32>, vector<6x2048xf32> -> vector<6x2048xf32>
    %cst_7 = arith.constant dense<0.000000e+00> : vector<6x2048xf32>
    %12 = tpu.matmul %6, %10, %cst_7 {dimension_numbers = #tpu.dot_dimension_numbers<[1], [0], [0], [1], [0, 0, 1, 1], [], []>} : vector<6x16xf32>, vector<16x2048xf32>, vector<6x2048xf32> -> vector<6x2048xf32>
    %13 = arith.addf %11, %12 : vector<6x2048xf32>
    %cst_8 = arith.constant dense<0.000000e+00> : vector<6x2048xf32>
    %14 = tpu.matmul %7, %1, %cst_8 {dimension_numbers = #tpu.dot_dimension_numbers<[1], [0], [0], [1], [0, 0, 1, 1], [], []>} : vector<6x16xf32>, vector<16x2048xf32>, vector<6x2048xf32> -> vector<6x2048xf32>
    %15 = arith.addf %13, %14 : vector<6x2048xf32>
    %16 = vector.extract_strided_slice %15 {offsets = [0, 640], sizes = [6, 768], strides = [1, 1]} : vector<6x2048xf32> to vector<6x768xf32>
    %cst_9 = arith.constant 0.266011745 : f32
    %17 = vector.broadcast %cst_9 : f32 to vector<6x768xf32>
    %18 = arith.mulf %17, %16 : vector<6x768xf32>
    %19 = vector.extract_strided_slice %15 {offsets = [0, 0], sizes = [6, 768], strides = [1, 1]} : vector<6x2048xf32> to vector<6x768xf32>
    %20 = vector.extract_strided_slice %15 {offsets = [0, 1280], sizes = [6, 768], strides = [1, 1]} : vector<6x2048xf32> to vector<6x768xf32>
    %21 = arith.addf %19, %20 : vector<6x768xf32>
    %cst_10 = arith.constant 0.00102838036 : f32
    %22 = vector.broadcast %cst_10 : f32 to vector<6x768xf32>
    %23 = arith.mulf %22, %21 : vector<6x768xf32>
    %24 = arith.addf %18, %23 : vector<6x768xf32>
    %25 = vector.extract_strided_slice %15 {offsets = [0, 128], sizes = [6, 768], strides = [1, 1]} : vector<6x2048xf32> to vector<6x768xf32>
    %26 = vector.extract_strided_slice %15 {offsets = [0, 1152], sizes = [6, 768], strides = [1, 1]} : vector<6x2048xf32> to vector<6x768xf32>
    %27 = arith.addf %25, %26 : vector<6x768xf32>
    %cst_11 = arith.constant 0.00759875868 : f32
    %28 = vector.broadcast %cst_11 : f32 to vector<6x768xf32>
    %29 = arith.mulf %28, %27 : vector<6x768xf32>
    %30 = arith.addf %24, %29 : vector<6x768xf32>
    %31 = vector.extract_strided_slice %15 {offsets = [0, 256], sizes = [6, 768], strides = [1, 1]} : vector<6x2048xf32> to vector<6x768xf32>
    %32 = vector.extract_strided_slice %15 {offsets = [0, 1024], sizes = [6, 768], strides = [1, 1]} : vector<6x2048xf32> to vector<6x768xf32>
    %33 = arith.addf %31, %32 : vector<6x768xf32>
    %cst_12 = arith.constant 0.0360007733 : f32
    %34 = vector.broadcast %cst_12 : f32 to vector<6x768xf32>
    %35 = arith.mulf %34, %33 : vector<6x768xf32>
    %36 = arith.addf %30, %35 : vector<6x768xf32>
    %37 = vector.extract_strided_slice %15 {offsets = [0, 384], sizes = [6, 768], strides = [1, 1]} : vector<6x2048xf32> to vector<6x768xf32>
    %38 = vector.extract_strided_slice %15 {offsets = [0, 896], sizes = [6, 768], strides = [1, 1]} : vector<6x2048xf32> to vector<6x768xf32>
    %39 = arith.addf %37, %38 : vector<6x768xf32>
    %cst_13 = arith.constant 0.109360702 : f32
    %40 = vector.broadcast %cst_13 : f32 to vector<6x768xf32>
    %41 = arith.mulf %40, %39 : vector<6x768xf32>
    %42 = arith.addf %36, %41 : vector<6x768xf32>
    %43 = vector.extract_strided_slice %15 {offsets = [0, 512], sizes = [6, 768], strides = [1, 1]} : vector<6x2048xf32> to vector<6x768xf32>
    %44 = vector.extract_strided_slice %15 {offsets = [0, 768], sizes = [6, 768], strides = [1, 1]} : vector<6x2048xf32> to vector<6x768xf32>
    %45 = arith.addf %43, %44 : vector<6x768xf32>
    %cst_14 = arith.constant 0.213005543 : f32
    %46 = vector.broadcast %cst_14 : f32 to vector<6x768xf32>
    %47 = arith.mulf %46, %45 : vector<6x768xf32>
    %48 = arith.addf %42, %47 : vector<6x768xf32>
    %49 = arith.truncf %3 : vector<16x2048xf32> to vector<16x2048xbf16>
    %50 = arith.extf %49 : vector<16x2048xbf16> to vector<16x2048xf32>
    %51 = arith.subf %3, %50 : vector<16x2048xf32>
    %cst_15 = arith.constant dense<0.000000e+00> : vector<6x2048xf32>
    %52 = tpu.matmul %6, %50, %cst_15 {dimension_numbers = #tpu.dot_dimension_numbers<[1], [0], [0], [1], [0, 0, 1, 1], [], []>} : vector<6x16xf32>, vector<16x2048xf32>, vector<6x2048xf32> -> vector<6x2048xf32>
    %cst_16 = arith.constant dense<0.000000e+00> : vector<6x2048xf32>
    %53 = tpu.matmul %6, %51, %cst_16 {dimension_numbers = #tpu.dot_dimension_numbers<[1], [0], [0], [1], [0, 0, 1, 1], [], []>} : vector<6x16xf32>, vector<16x2048xf32>, vector<6x2048xf32> -> vector<6x2048xf32>
    %54 = arith.addf %52, %53 : vector<6x2048xf32>
    %cst_17 = arith.constant dense<0.000000e+00> : vector<6x2048xf32>
    %55 = tpu.matmul %7, %3, %cst_17 {dimension_numbers = #tpu.dot_dimension_numbers<[1], [0], [0], [1], [0, 0, 1, 1], [], []>} : vector<6x16xf32>, vector<16x2048xf32>, vector<6x2048xf32> -> vector<6x2048xf32>
    %56 = arith.addf %54, %55 : vector<6x2048xf32>
    %57 = vector.extract_strided_slice %56 {offsets = [0, 640], sizes = [6, 768], strides = [1, 1]} : vector<6x2048xf32> to vector<6x768xf32>
    %cst_18 = arith.constant 0.266011745 : f32
    %58 = vector.broadcast %cst_18 : f32 to vector<6x768xf32>
    %59 = arith.mulf %58, %57 : vector<6x768xf32>
    %60 = vector.extract_strided_slice %56 {offsets = [0, 0], sizes = [6, 768], strides = [1, 1]} : vector<6x2048xf32> to vector<6x768xf32>
    %61 = vector.extract_strided_slice %56 {offsets = [0, 1280], sizes = [6, 768], strides = [1, 1]} : vector<6x2048xf32> to vector<6x768xf32>
    %62 = arith.addf %60, %61 : vector<6x768xf32>
    %cst_19 = arith.constant 0.00102838036 : f32
    %63 = vector.broadcast %cst_19 : f32 to vector<6x768xf32>
    %64 = arith.mulf %63, %62 : vector<6x768xf32>
    %65 = arith.addf %59, %64 : vector<6x768xf32>
    %66 = vector.extract_strided_slice %56 {offsets = [0, 128], sizes = [6, 768], strides = [1, 1]} : vector<6x2048xf32> to vector<6x768xf32>
    %67 = vector.extract_strided_slice %56 {offsets = [0, 1152], sizes = [6, 768], strides = [1, 1]} : vector<6x2048xf32> to vector<6x768xf32>
    %68 = arith.addf %66, %67 : vector<6x768xf32>
    %cst_20 = arith.constant 0.00759875868 : f32
    %69 = vector.broadcast %cst_20 : f32 to vector<6x768xf32>
    %70 = arith.mulf %69, %68 : vector<6x768xf32>
    %71 = arith.addf %65, %70 : vector<6x768xf32>
    %72 = vector.extract_strided_slice %56 {offsets = [0, 256], sizes = [6, 768], strides = [1, 1]} : vector<6x2048xf32> to vector<6x768xf32>
    %73 = vector.extract_strided_slice %56 {offsets = [0, 1024], sizes = [6, 768], strides = [1, 1]} : vector<6x2048xf32> to vector<6x768xf32>
    %74 = arith.addf %72, %73 : vector<6x768xf32>
    %cst_21 = arith.constant 0.0360007733 : f32
    %75 = vector.broadcast %cst_21 : f32 to vector<6x768xf32>
    %76 = arith.mulf %75, %74 : vector<6x768xf32>
    %77 = arith.addf %71, %76 : vector<6x768xf32>
    %78 = vector.extract_strided_slice %56 {offsets = [0, 384], sizes = [6, 768], strides = [1, 1]} : vector<6x2048xf32> to vector<6x768xf32>
    %79 = vector.extract_strided_slice %56 {offsets = [0, 896], sizes = [6, 768], strides = [1, 1]} : vector<6x2048xf32> to vector<6x768xf32>
    %80 = arith.addf %78, %79 : vector<6x768xf32>
    %cst_22 = arith.constant 0.109360702 : f32
    %81 = vector.broadcast %cst_22 : f32 to vector<6x768xf32>
    %82 = arith.mulf %81, %80 : vector<6x768xf32>
    %83 = arith.addf %77, %82 : vector<6x768xf32>
    %84 = vector.extract_strided_slice %56 {offsets = [0, 512], sizes = [6, 768], strides = [1, 1]} : vector<6x2048xf32> to vector<6x768xf32>
    %85 = vector.extract_strided_slice %56 {offsets = [0, 768], sizes = [6, 768], strides = [1, 1]} : vector<6x2048xf32> to vector<6x768xf32>
    %86 = arith.addf %84, %85 : vector<6x768xf32>
    %cst_23 = arith.constant 0.213005543 : f32
    %87 = vector.broadcast %cst_23 : f32 to vector<6x768xf32>
    %88 = arith.mulf %87, %86 : vector<6x768xf32>
    %89 = arith.addf %83, %88 : vector<6x768xf32>
    %90 = arith.mulf %1, %1 : vector<16x2048xf32>
    %91 = arith.truncf %90 : vector<16x2048xf32> to vector<16x2048xbf16>
    %92 = arith.extf %91 : vector<16x2048xbf16> to vector<16x2048xf32>
    %93 = arith.subf %90, %92 : vector<16x2048xf32>
    %cst_24 = arith.constant dense<0.000000e+00> : vector<6x2048xf32>
    %94 = tpu.matmul %6, %92, %cst_24 {dimension_numbers = #tpu.dot_dimension_numbers<[1], [0], [0], [1], [0, 0, 1, 1], [], []>} : vector<6x16xf32>, vector<16x2048xf32>, vector<6x2048xf32> -> vector<6x2048xf32>
    %cst_25 = arith.constant dense<0.000000e+00> : vector<6x2048xf32>
    %95 = tpu.matmul %6, %93, %cst_25 {dimension_numbers = #tpu.dot_dimension_numbers<[1], [0], [0], [1], [0, 0, 1, 1], [], []>} : vector<6x16xf32>, vector<16x2048xf32>, vector<6x2048xf32> -> vector<6x2048xf32>
    %96 = arith.addf %94, %95 : vector<6x2048xf32>
    %cst_26 = arith.constant dense<0.000000e+00> : vector<6x2048xf32>
    %97 = tpu.matmul %7, %90, %cst_26 {dimension_numbers = #tpu.dot_dimension_numbers<[1], [0], [0], [1], [0, 0, 1, 1], [], []>} : vector<6x16xf32>, vector<16x2048xf32>, vector<6x2048xf32> -> vector<6x2048xf32>
    %98 = arith.addf %96, %97 : vector<6x2048xf32>
    %99 = vector.extract_strided_slice %98 {offsets = [0, 640], sizes = [6, 768], strides = [1, 1]} : vector<6x2048xf32> to vector<6x768xf32>
    %cst_27 = arith.constant 0.266011745 : f32
    %100 = vector.broadcast %cst_27 : f32 to vector<6x768xf32>
    %101 = arith.mulf %100, %99 : vector<6x768xf32>
    %102 = vector.extract_strided_slice %98 {offsets = [0, 0], sizes = [6, 768], strides = [1, 1]} : vector<6x2048xf32> to vector<6x768xf32>
    %103 = vector.extract_strided_slice %98 {offsets = [0, 1280], sizes = [6, 768], strides = [1, 1]} : vector<6x2048xf32> to vector<6x768xf32>
    %104 = arith.addf %102, %103 : vector<6x768xf32>
    %cst_28 = arith.constant 0.00102838036 : f32
    %105 = vector.broadcast %cst_28 : f32 to vector<6x768xf32>
    %106 = arith.mulf %105, %104 : vector<6x768xf32>
    %107 = arith.addf %101, %106 : vector<6x768xf32>
    %108 = vector.extract_strided_slice %98 {offsets = [0, 128], sizes = [6, 768], strides = [1, 1]} : vector<6x2048xf32> to vector<6x768xf32>
    %109 = vector.extract_strided_slice %98 {offsets = [0, 1152], sizes = [6, 768], strides = [1, 1]} : vector<6x2048xf32> to vector<6x768xf32>
    %110 = arith.addf %108, %109 : vector<6x768xf32>
    %cst_29 = arith.constant 0.00759875868 : f32
    %111 = vector.broadcast %cst_29 : f32 to vector<6x768xf32>
    %112 = arith.mulf %111, %110 : vector<6x768xf32>
    %113 = arith.addf %107, %112 : vector<6x768xf32>
    %114 = vector.extract_strided_slice %98 {offsets = [0, 256], sizes = [6, 768], strides = [1, 1]} : vector<6x2048xf32> to vector<6x768xf32>
    %115 = vector.extract_strided_slice %98 {offsets = [0, 1024], sizes = [6, 768], strides = [1, 1]} : vector<6x2048xf32> to vector<6x768xf32>
    %116 = arith.addf %114, %115 : vector<6x768xf32>
    %cst_30 = arith.constant 0.0360007733 : f32
    %117 = vector.broadcast %cst_30 : f32 to vector<6x768xf32>
    %118 = arith.mulf %117, %116 : vector<6x768xf32>
    %119 = arith.addf %113, %118 : vector<6x768xf32>
    %120 = vector.extract_strided_slice %98 {offsets = [0, 384], sizes = [6, 768], strides = [1, 1]} : vector<6x2048xf32> to vector<6x768xf32>
    %121 = vector.extract_strided_slice %98 {offsets = [0, 896], sizes = [6, 768], strides = [1, 1]} : vector<6x2048xf32> to vector<6x768xf32>
    %122 = arith.addf %120, %121 : vector<6x768xf32>
    %cst_31 = arith.constant 0.109360702 : f32
    %123 = vector.broadcast %cst_31 : f32 to vector<6x768xf32>
    %124 = arith.mulf %123, %122 : vector<6x768xf32>
    %125 = arith.addf %119, %124 : vector<6x768xf32>
    %126 = vector.extract_strided_slice %98 {offsets = [0, 512], sizes = [6, 768], strides = [1, 1]} : vector<6x2048xf32> to vector<6x768xf32>
    %127 = vector.extract_strided_slice %98 {offsets = [0, 768], sizes = [6, 768], strides = [1, 1]} : vector<6x2048xf32> to vector<6x768xf32>
    %128 = arith.addf %126, %127 : vector<6x768xf32>
    %cst_32 = arith.constant 0.213005543 : f32
    %129 = vector.broadcast %cst_32 : f32 to vector<6x768xf32>
    %130 = arith.mulf %129, %128 : vector<6x768xf32>
    %131 = arith.addf %125, %130 : vector<6x768xf32>
    %132 = arith.mulf %3, %3 : vector<16x2048xf32>
    %133 = arith.truncf %132 : vector<16x2048xf32> to vector<16x2048xbf16>
    %134 = arith.extf %133 : vector<16x2048xbf16> to vector<16x2048xf32>
    %135 = arith.subf %132, %134 : vector<16x2048xf32>
    %cst_33 = arith.constant dense<0.000000e+00> : vector<6x2048xf32>
    %136 = tpu.matmul %6, %134, %cst_33 {dimension_numbers = #tpu.dot_dimension_numbers<[1], [0], [0], [1], [0, 0, 1, 1], [], []>} : vector<6x16xf32>, vector<16x2048xf32>, vector<6x2048xf32> -> vector<6x2048xf32>
    %cst_34 = arith.constant dense<0.000000e+00> : vector<6x2048xf32>
    %137 = tpu.matmul %6, %135, %cst_34 {dimension_numbers = #tpu.dot_dimension_numbers<[1], [0], [0], [1], [0, 0, 1, 1], [], []>} : vector<6x16xf32>, vector<16x2048xf32>, vector<6x2048xf32> -> vector<6x2048xf32>
    %138 = arith.addf %136, %137 : vector<6x2048xf32>
    %cst_35 = arith.constant dense<0.000000e+00> : vector<6x2048xf32>
    %139 = tpu.matmul %7, %132, %cst_35 {dimension_numbers = #tpu.dot_dimension_numbers<[1], [0], [0], [1], [0, 0, 1, 1], [], []>} : vector<6x16xf32>, vector<16x2048xf32>, vector<6x2048xf32> -> vector<6x2048xf32>
    %140 = arith.addf %138, %139 : vector<6x2048xf32>
    %141 = vector.extract_strided_slice %140 {offsets = [0, 640], sizes = [6, 768], strides = [1, 1]} : vector<6x2048xf32> to vector<6x768xf32>
    %cst_36 = arith.constant 0.266011745 : f32
    %142 = vector.broadcast %cst_36 : f32 to vector<6x768xf32>
    %143 = arith.mulf %142, %141 : vector<6x768xf32>
    %144 = vector.extract_strided_slice %140 {offsets = [0, 0], sizes = [6, 768], strides = [1, 1]} : vector<6x2048xf32> to vector<6x768xf32>
    %145 = vector.extract_strided_slice %140 {offsets = [0, 1280], sizes = [6, 768], strides = [1, 1]} : vector<6x2048xf32> to vector<6x768xf32>
    %146 = arith.addf %144, %145 : vector<6x768xf32>
    %cst_37 = arith.constant 0.00102838036 : f32
    %147 = vector.broadcast %cst_37 : f32 to vector<6x768xf32>
    %148 = arith.mulf %147, %146 : vector<6x768xf32>
    %149 = arith.addf %143, %148 : vector<6x768xf32>
    %150 = vector.extract_strided_slice %140 {offsets = [0, 128], sizes = [6, 768], strides = [1, 1]} : vector<6x2048xf32> to vector<6x768xf32>
    %151 = vector.extract_strided_slice %140 {offsets = [0, 1152], sizes = [6, 768], strides = [1, 1]} : vector<6x2048xf32> to vector<6x768xf32>
    %152 = arith.addf %150, %151 : vector<6x768xf32>
    %cst_38 = arith.constant 0.00759875868 : f32
    %153 = vector.broadcast %cst_38 : f32 to vector<6x768xf32>
    %154 = arith.mulf %153, %152 : vector<6x768xf32>
    %155 = arith.addf %149, %154 : vector<6x768xf32>
    %156 = vector.extract_strided_slice %140 {offsets = [0, 256], sizes = [6, 768], strides = [1, 1]} : vector<6x2048xf32> to vector<6x768xf32>
    %157 = vector.extract_strided_slice %140 {offsets = [0, 1024], sizes = [6, 768], strides = [1, 1]} : vector<6x2048xf32> to vector<6x768xf32>
    %158 = arith.addf %156, %157 : vector<6x768xf32>
    %cst_39 = arith.constant 0.0360007733 : f32
    %159 = vector.broadcast %cst_39 : f32 to vector<6x768xf32>
    %160 = arith.mulf %159, %158 : vector<6x768xf32>
    %161 = arith.addf %155, %160 : vector<6x768xf32>
    %162 = vector.extract_strided_slice %140 {offsets = [0, 384], sizes = [6, 768], strides = [1, 1]} : vector<6x2048xf32> to vector<6x768xf32>
    %163 = vector.extract_strided_slice %140 {offsets = [0, 896], sizes = [6, 768], strides = [1, 1]} : vector<6x2048xf32> to vector<6x768xf32>
    %164 = arith.addf %162, %163 : vector<6x768xf32>
    %cst_40 = arith.constant 0.109360702 : f32
    %165 = vector.broadcast %cst_40 : f32 to vector<6x768xf32>
    %166 = arith.mulf %165, %164 : vector<6x768xf32>
    %167 = arith.addf %161, %166 : vector<6x768xf32>
    %168 = vector.extract_strided_slice %140 {offsets = [0, 512], sizes = [6, 768], strides = [1, 1]} : vector<6x2048xf32> to vector<6x768xf32>
    %169 = vector.extract_strided_slice %140 {offsets = [0, 768], sizes = [6, 768], strides = [1, 1]} : vector<6x2048xf32> to vector<6x768xf32>
    %170 = arith.addf %168, %169 : vector<6x768xf32>
    %cst_41 = arith.constant 0.213005543 : f32
    %171 = vector.broadcast %cst_41 : f32 to vector<6x768xf32>
    %172 = arith.mulf %171, %170 : vector<6x768xf32>
    %173 = arith.addf %167, %172 : vector<6x768xf32>
    %174 = arith.mulf %1, %3 : vector<16x2048xf32>
    %175 = arith.truncf %174 : vector<16x2048xf32> to vector<16x2048xbf16>
    %176 = arith.extf %175 : vector<16x2048xbf16> to vector<16x2048xf32>
    %177 = arith.subf %174, %176 : vector<16x2048xf32>
    %cst_42 = arith.constant dense<0.000000e+00> : vector<6x2048xf32>
    %178 = tpu.matmul %6, %176, %cst_42 {dimension_numbers = #tpu.dot_dimension_numbers<[1], [0], [0], [1], [0, 0, 1, 1], [], []>} : vector<6x16xf32>, vector<16x2048xf32>, vector<6x2048xf32> -> vector<6x2048xf32>
    %cst_43 = arith.constant dense<0.000000e+00> : vector<6x2048xf32>
    %179 = tpu.matmul %6, %177, %cst_43 {dimension_numbers = #tpu.dot_dimension_numbers<[1], [0], [0], [1], [0, 0, 1, 1], [], []>} : vector<6x16xf32>, vector<16x2048xf32>, vector<6x2048xf32> -> vector<6x2048xf32>
    %180 = arith.addf %178, %179 : vector<6x2048xf32>
    %cst_44 = arith.constant dense<0.000000e+00> : vector<6x2048xf32>
    %181 = tpu.matmul %7, %174, %cst_44 {dimension_numbers = #tpu.dot_dimension_numbers<[1], [0], [0], [1], [0, 0, 1, 1], [], []>} : vector<6x16xf32>, vector<16x2048xf32>, vector<6x2048xf32> -> vector<6x2048xf32>
    %182 = arith.addf %180, %181 : vector<6x2048xf32>
    %183 = vector.extract_strided_slice %182 {offsets = [0, 640], sizes = [6, 768], strides = [1, 1]} : vector<6x2048xf32> to vector<6x768xf32>
    %cst_45 = arith.constant 0.266011745 : f32
    %184 = vector.broadcast %cst_45 : f32 to vector<6x768xf32>
    %185 = arith.mulf %184, %183 : vector<6x768xf32>
    %186 = vector.extract_strided_slice %182 {offsets = [0, 0], sizes = [6, 768], strides = [1, 1]} : vector<6x2048xf32> to vector<6x768xf32>
    %187 = vector.extract_strided_slice %182 {offsets = [0, 1280], sizes = [6, 768], strides = [1, 1]} : vector<6x2048xf32> to vector<6x768xf32>
    %188 = arith.addf %186, %187 : vector<6x768xf32>
    %cst_46 = arith.constant 0.00102838036 : f32
    %189 = vector.broadcast %cst_46 : f32 to vector<6x768xf32>
    %190 = arith.mulf %189, %188 : vector<6x768xf32>
    %191 = arith.addf %185, %190 : vector<6x768xf32>
    %192 = vector.extract_strided_slice %182 {offsets = [0, 128], sizes = [6, 768], strides = [1, 1]} : vector<6x2048xf32> to vector<6x768xf32>
    %193 = vector.extract_strided_slice %182 {offsets = [0, 1152], sizes = [6, 768], strides = [1, 1]} : vector<6x2048xf32> to vector<6x768xf32>
    %194 = arith.addf %192, %193 : vector<6x768xf32>
    %cst_47 = arith.constant 0.00759875868 : f32
    %195 = vector.broadcast %cst_47 : f32 to vector<6x768xf32>
    %196 = arith.mulf %195, %194 : vector<6x768xf32>
    %197 = arith.addf %191, %196 : vector<6x768xf32>
    %198 = vector.extract_strided_slice %182 {offsets = [0, 256], sizes = [6, 768], strides = [1, 1]} : vector<6x2048xf32> to vector<6x768xf32>
    %199 = vector.extract_strided_slice %182 {offsets = [0, 1024], sizes = [6, 768], strides = [1, 1]} : vector<6x2048xf32> to vector<6x768xf32>
    %200 = arith.addf %198, %199 : vector<6x768xf32>
    %cst_48 = arith.constant 0.0360007733 : f32
    %201 = vector.broadcast %cst_48 : f32 to vector<6x768xf32>
    %202 = arith.mulf %201, %200 : vector<6x768xf32>
    %203 = arith.addf %197, %202 : vector<6x768xf32>
    %204 = vector.extract_strided_slice %182 {offsets = [0, 384], sizes = [6, 768], strides = [1, 1]} : vector<6x2048xf32> to vector<6x768xf32>
    %205 = vector.extract_strided_slice %182 {offsets = [0, 896], sizes = [6, 768], strides = [1, 1]} : vector<6x2048xf32> to vector<6x768xf32>
    %206 = arith.addf %204, %205 : vector<6x768xf32>
    %cst_49 = arith.constant 0.109360702 : f32
    %207 = vector.broadcast %cst_49 : f32 to vector<6x768xf32>
    %208 = arith.mulf %207, %206 : vector<6x768xf32>
    %209 = arith.addf %203, %208 : vector<6x768xf32>
    %210 = vector.extract_strided_slice %182 {offsets = [0, 512], sizes = [6, 768], strides = [1, 1]} : vector<6x2048xf32> to vector<6x768xf32>
    %211 = vector.extract_strided_slice %182 {offsets = [0, 768], sizes = [6, 768], strides = [1, 1]} : vector<6x2048xf32> to vector<6x768xf32>
    %212 = arith.addf %210, %211 : vector<6x768xf32>
    %cst_50 = arith.constant 0.213005543 : f32
    %213 = vector.broadcast %cst_50 : f32 to vector<6x768xf32>
    %214 = arith.mulf %213, %212 : vector<6x768xf32>
    %215 = arith.addf %209, %214 : vector<6x768xf32>
    %216 = arith.mulf %48, %48 : vector<6x768xf32>
    %217 = arith.mulf %89, %89 : vector<6x768xf32>
    %218 = arith.mulf %48, %89 : vector<6x768xf32>
    %219 = arith.subf %131, %216 : vector<6x768xf32>
    %220 = arith.subf %173, %217 : vector<6x768xf32>
    %221 = arith.subf %215, %218 : vector<6x768xf32>
    %cst_51 = arith.constant 2.000000e+00 : f32
    %222 = vector.broadcast %cst_51 : f32 to vector<6x768xf32>
    %223 = arith.mulf %222, %218 : vector<6x768xf32>
    %cst_52 = arith.constant 9.99999974E-5 : f32
    %224 = vector.broadcast %cst_52 : f32 to vector<6x768xf32>
    %225 = arith.addf %223, %224 : vector<6x768xf32>
    %cst_53 = arith.constant 2.000000e+00 : f32
    %226 = vector.broadcast %cst_53 : f32 to vector<6x768xf32>
    %227 = arith.mulf %226, %221 : vector<6x768xf32>
    %cst_54 = arith.constant 8.99999984E-4 : f32
    %228 = vector.broadcast %cst_54 : f32 to vector<6x768xf32>
    %229 = arith.addf %227, %228 : vector<6x768xf32>
    %230 = arith.mulf %225, %229 : vector<6x768xf32>
    %231 = arith.addf %216, %217 : vector<6x768xf32>
    %cst_55 = arith.constant 9.99999974E-5 : f32
    %232 = vector.broadcast %cst_55 : f32 to vector<6x768xf32>
    %233 = arith.addf %231, %232 : vector<6x768xf32>
    %234 = arith.addf %219, %220 : vector<6x768xf32>
    %cst_56 = arith.constant 8.99999984E-4 : f32
    %235 = vector.broadcast %cst_56 : f32 to vector<6x768xf32>
    %236 = arith.addf %234, %235 : vector<6x768xf32>
    %237 = arith.mulf %233, %236 : vector<6x768xf32>
    %238 = arith.divf %230, %237 : vector<6x768xf32>
    %239 = arith.subf %1, %3 : vector<16x2048xf32>
    %240 = math.absf %239 : vector<16x2048xf32>
    %cst_57 = arith.constant dense<0.000000e+00> : vector<2048xf32>
    %241 = vector.multi_reduction <add>, %240, %cst_57 [0] : vector<16x2048xf32> to vector<2048xf32>
    %242 = vector.shape_cast %241 : vector<2048xf32> to vector<1x2048xf32>
    %cst_58 = arith.constant dense<0.000000e+00> : vector<768xf32>
    %243 = vector.multi_reduction <add>, %238, %cst_58 [0] : vector<6x768xf32> to vector<768xf32>
    %244 = vector.shape_cast %243 : vector<768xf32> to vector<1x768xf32>
    %245 = vector.extract_strided_slice %242 {offsets = [0, 0], sizes = [1, 128], strides = [1, 1]} : vector<1x2048xf32> to vector<1x128xf32>
    %246 = vector.extract_strided_slice %242 {offsets = [0, 128], sizes = [1, 128], strides = [1, 1]} : vector<1x2048xf32> to vector<1x128xf32>
    %247 = arith.addf %245, %246 : vector<1x128xf32>
    %248 = vector.extract_strided_slice %242 {offsets = [0, 256], sizes = [1, 128], strides = [1, 1]} : vector<1x2048xf32> to vector<1x128xf32>
    %249 = arith.addf %247, %248 : vector<1x128xf32>
    %250 = vector.extract_strided_slice %242 {offsets = [0, 384], sizes = [1, 128], strides = [1, 1]} : vector<1x2048xf32> to vector<1x128xf32>
    %251 = arith.addf %249, %250 : vector<1x128xf32>
    %252 = vector.extract_strided_slice %242 {offsets = [0, 512], sizes = [1, 128], strides = [1, 1]} : vector<1x2048xf32> to vector<1x128xf32>
    %253 = arith.addf %251, %252 : vector<1x128xf32>
    %254 = vector.extract_strided_slice %242 {offsets = [0, 640], sizes = [1, 128], strides = [1, 1]} : vector<1x2048xf32> to vector<1x128xf32>
    %255 = arith.addf %253, %254 : vector<1x128xf32>
    %256 = vector.extract_strided_slice %242 {offsets = [0, 768], sizes = [1, 128], strides = [1, 1]} : vector<1x2048xf32> to vector<1x128xf32>
    %257 = arith.addf %255, %256 : vector<1x128xf32>
    %258 = vector.extract_strided_slice %242 {offsets = [0, 896], sizes = [1, 128], strides = [1, 1]} : vector<1x2048xf32> to vector<1x128xf32>
    %259 = arith.addf %257, %258 : vector<1x128xf32>
    %260 = vector.extract_strided_slice %242 {offsets = [0, 1024], sizes = [1, 128], strides = [1, 1]} : vector<1x2048xf32> to vector<1x128xf32>
    %261 = arith.addf %259, %260 : vector<1x128xf32>
    %262 = vector.extract_strided_slice %242 {offsets = [0, 1152], sizes = [1, 128], strides = [1, 1]} : vector<1x2048xf32> to vector<1x128xf32>
    %263 = arith.addf %261, %262 : vector<1x128xf32>
    %264 = vector.extract_strided_slice %242 {offsets = [0, 1280], sizes = [1, 128], strides = [1, 1]} : vector<1x2048xf32> to vector<1x128xf32>
    %265 = arith.addf %263, %264 : vector<1x128xf32>
    %266 = vector.extract_strided_slice %242 {offsets = [0, 1408], sizes = [1, 128], strides = [1, 1]} : vector<1x2048xf32> to vector<1x128xf32>
    %267 = arith.addf %265, %266 : vector<1x128xf32>
    %268 = vector.extract_strided_slice %242 {offsets = [0, 1536], sizes = [1, 128], strides = [1, 1]} : vector<1x2048xf32> to vector<1x128xf32>
    %269 = arith.addf %267, %268 : vector<1x128xf32>
    %270 = vector.extract_strided_slice %242 {offsets = [0, 1664], sizes = [1, 128], strides = [1, 1]} : vector<1x2048xf32> to vector<1x128xf32>
    %271 = arith.addf %269, %270 : vector<1x128xf32>
    %272 = vector.extract_strided_slice %242 {offsets = [0, 1792], sizes = [1, 128], strides = [1, 1]} : vector<1x2048xf32> to vector<1x128xf32>
    %273 = arith.addf %271, %272 : vector<1x128xf32>
    %274 = vector.extract_strided_slice %242 {offsets = [0, 1920], sizes = [1, 128], strides = [1, 1]} : vector<1x2048xf32> to vector<1x128xf32>
    %275 = arith.addf %273, %274 : vector<1x128xf32>
    %276 = vector.extract_strided_slice %244 {offsets = [0, 0], sizes = [1, 128], strides = [1, 1]} : vector<1x768xf32> to vector<1x128xf32>
    %277 = vector.extract_strided_slice %244 {offsets = [0, 128], sizes = [1, 128], strides = [1, 1]} : vector<1x768xf32> to vector<1x128xf32>
    %278 = arith.addf %276, %277 : vector<1x128xf32>
    %279 = vector.extract_strided_slice %244 {offsets = [0, 256], sizes = [1, 128], strides = [1, 1]} : vector<1x768xf32> to vector<1x128xf32>
    %280 = arith.addf %278, %279 : vector<1x128xf32>
    %281 = vector.extract_strided_slice %244 {offsets = [0, 384], sizes = [1, 128], strides = [1, 1]} : vector<1x768xf32> to vector<1x128xf32>
    %282 = arith.addf %280, %281 : vector<1x128xf32>
    %283 = vector.extract_strided_slice %244 {offsets = [0, 512], sizes = [1, 128], strides = [1, 1]} : vector<1x768xf32> to vector<1x128xf32>
    %284 = arith.addf %282, %283 : vector<1x128xf32>
    %285 = vector.extract_strided_slice %244 {offsets = [0, 640], sizes = [1, 128], strides = [1, 1]} : vector<1x768xf32> to vector<1x128xf32>
    %286 = arith.addf %284, %285 : vector<1x128xf32>
    %287 = tpu.concatenate %275, %286 in 0 : vector<1x128xf32>, vector<1x128xf32> -> vector<2x128xf32>
    %c0_59 = arith.constant 0 : index
    %c0_60 = arith.constant 0 : index
    %c0_61 = arith.constant 0 : index
    %288 = vector.load %arg4[%c0_59, %c0_60, %c0_61] : memref<1x2x128xf32, #tpu.memory_space<vmem>>, vector<1x2x128xf32>
    %289 = vector.shape_cast %288 : vector<1x2x128xf32> to vector<2x128xf32>
    %290 = vector.shape_cast %287 : vector<2x128xf32> to vector<1x2x128xf32>
    tpu.vector_store %arg4[%c0_59, %c0_60, %c0_61], %290 {strides = array<i32>} : memref<1x2x128xf32, #tpu.memory_space<vmem>>, vector<1x2x128xf32>,
    return
  }
  func.func @transform_0(%arg0: i32) -> (i32, i32) {
    %c0_i32 = arith.constant 0 : i32
    %c0_i32_0 = arith.constant 0 : i32
    %c0_i32_1 = arith.constant 0 : i32
    return %c0_i32, %c0_i32_0 : i32, i32
  }
  func.func @transform_1(%arg0: i32) -> (i32, i32, i32) {
    %c0_i32 = arith.constant 0 : i32
    %c0_i32_0 = arith.constant 0 : i32
    %c0_i32_1 = arith.constant 0 : i32
    return %arg0, %c0_i32, %c0_i32_0 : i32, i32, i32
  }
  func.func @transform_2(%arg0: i32) -> (i32, i32, i32) {
    %c0_i32 = arith.constant 0 : i32
    %c0_i32_0 = arith.constant 0 : i32
    %c0_i32_1 = arith.constant 0 : i32
    return %arg0, %c0_i32, %c0_i32_0 : i32, i32, i32
  }
  func.func @transform_3(%arg0: i32) -> (i32, i32, i32) {
    %c0_i32 = arith.constant 0 : i32
    %c0_i32_0 = arith.constant 0 : i32
    %c0_i32_1 = arith.constant 0 : i32
    return %arg0, %c0_i32, %c0_i32_0 : i32, i32, i32
  }
}

</mosaic_0001>

<llo_original>
// kernel: tpu_custom_call.1
$region0: #{tpu_custom_call.1}
  #allocation0 [shape = 'u32[]', space=smem, size = 0x4, offset = 0x4, fixed_abs, tag = 'smem constant byte address 0x4 - core index']
  #allocation1 [shape = 'u32[144,128]{1,0:T(1,128)}', space=vmem, size = 0x12000, scoped, tag = 'internal scratch']
  %s0 = inlined_call_operand.hbm [shape: f32[6,16], index: 0, kind: input, shape index: {}]
  %s1 = inlined_call_operand.hbm [shape: f32[1,16,2048], index: 1, kind: input, shape index: {}]
  %s2 = inlined_call_operand.hbm [shape: f32[1,16,2048], index: 2, kind: input, shape index: {}]
  %s3 = inlined_call_operand.hbm [shape: f32[1,2,128], index: 3, kind: output, shape index: {}]
  %s4 = sld [smem:[#allocation0]]
  $region34: #{tpu_custom_call.1} parent=0
    _
  %s6 = ssub.s32 1, %s4
  %s7 = scalar_select 0, %s6, %s4
  $region1: #{tpu_custom_call.1} parent=0
    #allocation2 [shape = 'u8[4096]{0}', space=vmem, size = 0x1000, scoped, tag = 'input window, operand 0, single buffered']
    #allocation3 [shape = 's32[1]{0}', space=sflag, size = 0x4, scoped, tag = 'scoped memory for tpu_custom_call.1']
    #allocation4 [shape = 's32[1]{0}', space=sflag, size = 0x4, scoped, tag = 'scoped memory for tpu_custom_call.1']
    #allocation5 [shape = 'u8[131072]{0}', space=vmem, size = 0x20000, scoped, tag = 'input window, operand 1, single buffered']
    #allocation6 [shape = 's32[1]{0}', space=sflag, size = 0x4, scoped, tag = 'scoped memory for tpu_custom_call.1']
    #allocation7 [shape = 'u8[131072]{0}', space=vmem, size = 0x20000, scoped, tag = 'input window, operand 2, single buffered']
    #allocation8 [shape = 'u8[1024]{0}', space=vmem, size = 0x400, scoped, tag = 'output window, operand 0, single buffered']
    %8 = vsyncpa [#allocation3], 0
    %9 = vsyncpa [#allocation6], 0
    %10 = vsyncpa [#allocation4], 0
    // Predicated region
    $region2: #{tpu_custom_call.1} parent=1 // pred_check
      _
    $region3: #{tpu_custom_call.1} parent=1 // pred_check_branch
      %12 = sbr.rel (0) target = $region5
    $region4: #{tpu_custom_call.1} parent=1 // pred_region
      %s14 = ssub.s32 128, 128
      %15 = vsyncadd [#allocation3], %s14
      %s17 = sshll.u32 [#allocation2], 4
      %s18 = int_to_ptr.vmem [resolvable:$true] %s17
      %20 = dma.hbm_to_vmem [thread:$0]  %s0, 128, %s18, [#allocation3]
    $region5: #{tpu_custom_call.1} parent=1 // pred_fallthru
      _
    // Predicated region
    $region6: #{tpu_custom_call.1} parent=1 // pred_check
      _
    $region7: #{tpu_custom_call.1} parent=1 // pred_check_branch
      %22 = sbr.rel (0) target = $region9
    $region8: #{tpu_custom_call.1} parent=1 // pred_region
      %s24 = ssub.s32 4096, 4096
      %25 = vsyncadd [#allocation6], %s24
      %s26 = sshll.u32 [#allocation5], 4
      %s27 = int_to_ptr.vmem [resolvable:$true] %s26
      %32 = dma.hbm_to_vmem [thread:$0]  %s1, 4096, %s27, [#allocation6], 2048, 2048, 128
    $region9: #{tpu_custom_call.1} parent=1 // pred_fallthru
      _
    // Predicated region
    $region10: #{tpu_custom_call.1} parent=1 // pred_check
      _
    $region11: #{tpu_custom_call.1} parent=1 // pred_check_branch
      %34 = sbr.rel (0) target = $region13
    $region12: #{tpu_custom_call.1} parent=1 // pred_region
      %s36 = ssub.s32 4096, 4096
      %37 = vsyncadd [#allocation6], %s36
      %s38 = sshll.u32 [#allocation7], 4
      %s39 = int_to_ptr.vmem [resolvable:$true] %s38
      %44 = dma.hbm_to_vmem [thread:$0]  %s2, 4096, %s39, [#allocation6], 2048, 2048, 128
    $region13: #{tpu_custom_call.1} parent=1 // pred_fallthru
      _
    // Predicated region
    $region14: #{tpu_custom_call.1} parent=1 // pred_check
      _
    $region15: #{tpu_custom_call.1} parent=1 // pred_check_branch
      %46 = sbr.rel (0) target = $region17
    $region16: #{tpu_custom_call.1} parent=1 // pred_region
      %47 = dma.done [#allocation3], 128
    $region17: #{tpu_custom_call.1} parent=1 // pred_fallthru
      _
    // Predicated region
    $region18: #{tpu_custom_call.1} parent=1 // pred_check
      _
    $region19: #{tpu_custom_call.1} parent=1 // pred_check_branch
      %49 = sbr.rel (0) target = $region21
    $region20: #{tpu_custom_call.1} parent=1 // pred_region
      %50 = dma.done [#allocation6], 4096
    $region21: #{tpu_custom_call.1} parent=1 // pred_fallthru
      _
    // Predicated region
    $region22: #{tpu_custom_call.1} parent=1 // pred_check
      _
    $region23: #{tpu_custom_call.1} parent=1 // pred_check_branch
      %52 = sbr.rel (0) target = $region25
    $region24: #{tpu_custom_call.1} parent=1 // pred_region
      %53 = dma.done [#allocation6], 4096
    $region25: #{tpu_custom_call.1} parent=1 // pred_fallthru
      _
    %v54 = vld [vmem:[#allocation5] sm:$0xff]
    %v55 = vld [vmem:[#allocation5 + $0x8] sm:$0xff]
    %v56 = vld [vmem:[#allocation5 + $0x10] sm:$0xff]
    %v57 = vld [vmem:[#allocation5 + $0x18] sm:$0xff]
    %v58 = vld [vmem:[#allocation5 + $0x20] sm:$0xff]
    %v59 = vld [vmem:[#allocation5 + $0x28] sm:$0xff]
    %v60 = vld [vmem:[#allocation5 + $0x30] sm:$0xff]
    %v61 = vld [vmem:[#allocation5 + $0x38] sm:$0xff]
    %v62 = vld [vmem:[#allocation5 + $0x40] sm:$0xff]
    %v63 = vld [vmem:[#allocation5 + $0x48] sm:$0xff]
    %v64 = vld [vmem:[#allocation5 + $0x50] sm:$0xff]
    %v65 = vld [vmem:[#allocation5 + $0x58] sm:$0xff]
    %v66 = vld [vmem:[#allocation5 + $0x60] sm:$0xff]
    %v67 = vld [vmem:[#allocation5 + $0x68] sm:$0xff]
    %v68 = vld [vmem:[#allocation5 + $0x70] sm:$0xff]
    %v69 = vld [vmem:[#allocation5 + $0x78] sm:$0xff]
    %v70 = vld [vmem:[#allocation5 + $0x80] sm:$0xff]
    %v71 = vld [vmem:[#allocation5 + $0x88] sm:$0xff]
    %v72 = vld [vmem:[#allocation5 + $0x90] sm:$0xff]
    %v73 = vld [vmem:[#allocation5 + $0x98] sm:$0xff]
    %v74 = vld [vmem:[#allocation5 + $0xa0] sm:$0xff]
    %v75 = vld [vmem:[#allocation5 + $0xa8] sm:$0xff]
    %v76 = vld [vmem:[#allocation5 + $0xb0] sm:$0xff]
    %v77 = vld [vmem:[#allocation5 + $0xb8] sm:$0xff]
    %v78 = vld [vmem:[#allocation5 + $0xc0] sm:$0xff]
    %v79 = vld [vmem:[#allocation5 + $0xc8] sm:$0xff]
    %v80 = vld [vmem:[#allocation5 + $0xd0] sm:$0xff]
    %v81 = vld [vmem:[#allocation5 + $0xd8] sm:$0xff]
    %v82 = vld [vmem:[#allocation5 + $0xe0] sm:$0xff]
    %v83 = vld [vmem:[#allocation5 + $0xe8] sm:$0xff]
    %v84 = vld [vmem:[#allocation5 + $0xf0] sm:$0xff]
    %v85 = vld [vmem:[#allocation5 + $0xf8] sm:$0xff]
    %v86 = vld [vmem:[#allocation7] sm:$0xff]
    %v87 = vld [vmem:[#allocation7 + $0x8] sm:$0xff]
    %v88 = vld [vmem:[#allocation7 + $0x10] sm:$0xff]
    %v89 = vld [vmem:[#allocation7 + $0x18] sm:$0xff]
    %v90 = vld [vmem:[#allocation7 + $0x20] sm:$0xff]
    %v91 = vld [vmem:[#allocation7 + $0x28] sm:$0xff]
    %v92 = vld [vmem:[#allocation7 + $0x30] sm:$0xff]
    %v93 = vld [vmem:[#allocation7 + $0x38] sm:$0xff]
    %v94 = vld [vmem:[#allocation7 + $0x40] sm:$0xff]
    %v95 = vld [vmem:[#allocation7 + $0x48] sm:$0xff]
    %v96 = vld [vmem:[#allocation7 + $0x50] sm:$0xff]
    %v97 = vld [vmem:[#allocation7 + $0x58] sm:$0xff]
    %v98 = vld [vmem:[#allocation7 + $0x60] sm:$0xff]
    %v99 = vld [vmem:[#allocation7 + $0x68] sm:$0xff]
    %v100 = vld [vmem:[#allocation7 + $0x70] sm:$0xff]
    %v101 = vld [vmem:[#allocation7 + $0x78] sm:$0xff]
    %v102 = vld [vmem:[#allocation7 + $0x80] sm:$0xff]
    %v103 = vld [vmem:[#allocation7 + $0x88] sm:$0xff]
    %v104 = vld [vmem:[#allocation7 + $0x90] sm:$0xff]
    %v105 = vld [vmem:[#allocation7 + $0x98] sm:$0xff]
    %v106 = vld [vmem:[#allocation7 + $0xa0] sm:$0xff]
    %v107 = vld [vmem:[#allocation7 + $0xa8] sm:$0xff]
    %v108 = vld [vmem:[#allocation7 + $0xb0] sm:$0xff]
    %v109 = vld [vmem:[#allocation7 + $0xb8] sm:$0xff]
    %v110 = vld [vmem:[#allocation7 + $0xc0] sm:$0xff]
    %v111 = vld [vmem:[#allocation7 + $0xc8] sm:$0xff]
    %v112 = vld [vmem:[#allocation7 + $0xd0] sm:$0xff]
    %v113 = vld [vmem:[#allocation7 + $0xd8] sm:$0xff]
    %v114 = vld [vmem:[#allocation7 + $0xe0] sm:$0xff]
    %v115 = vld [vmem:[#allocation7 + $0xe8] sm:$0xff]
    %v116 = vld [vmem:[#allocation7 + $0xf0] sm:$0xff]
    %v117 = vld [vmem:[#allocation7 + $0xf8] sm:$0xff]
    %v118 = vld [vmem:[#allocation2] sm:$0x3f]
    %v119 = vpack.c.bf16 %v118, %v118
    %v120 = vunpack.c.l.bf16 %v119
    %v121 = vsub.f32 %v118, %v120
    %v122 = vpack.c.bf16 %v70, %v54
    %v123 = vpack.c.bf16 %v71, %v55
    %v124 = vpack.c.bf16 %v72, %v56
    %v125 = vpack.c.bf16 %v73, %v57
    %v126 = vpack.c.bf16 %v74, %v58
    %v127 = vpack.c.bf16 %v75, %v59
    %v128 = vpack.c.bf16 %v76, %v60
    %v129 = vpack.c.bf16 %v77, %v61
    %v130 = vpack.c.bf16 %v78, %v62
    %v131 = vpack.c.bf16 %v79, %v63
    %v132 = vpack.c.bf16 %v80, %v64
    %v133 = vpack.c.bf16 %v81, %v65
    %v134 = vpack.c.bf16 %v82, %v66
    %v135 = vpack.c.bf16 %v83, %v67
    %v136 = vpack.c.bf16 %v84, %v68
    %v137 = vpack.c.bf16 %v85, %v69
    %v138 = vunpack.c.l.bf16 %v122
    %v139 = vunpack.c.l.bf16 %v123
    %v140 = vunpack.c.l.bf16 %v124
    %v141 = vunpack.c.l.bf16 %v125
    %v142 = vunpack.c.l.bf16 %v126
    %v143 = vunpack.c.l.bf16 %v127
    %v144 = vunpack.c.l.bf16 %v128
    %v145 = vunpack.c.l.bf16 %v129
    %v146 = vunpack.c.l.bf16 %v130
    %v147 = vunpack.c.l.bf16 %v131
    %v148 = vunpack.c.l.bf16 %v132
    %v149 = vunpack.c.l.bf16 %v133
    %v150 = vunpack.c.l.bf16 %v134
    %v151 = vunpack.c.l.bf16 %v135
    %v152 = vunpack.c.l.bf16 %v136
    %v153 = vunpack.c.l.bf16 %v137
    %v154 = vunpack.c.h.bf16 %v122
    %v155 = vunpack.c.h.bf16 %v123
    %v156 = vunpack.c.h.bf16 %v124
    %v157 = vunpack.c.h.bf16 %v125
    %v158 = vunpack.c.h.bf16 %v126
    %v159 = vunpack.c.h.bf16 %v127
    %v160 = vunpack.c.h.bf16 %v128
    %v161 = vunpack.c.h.bf16 %v129
    %v162 = vunpack.c.h.bf16 %v130
    %v163 = vunpack.c.h.bf16 %v131
    %v164 = vunpack.c.h.bf16 %v132
    %v165 = vunpack.c.h.bf16 %v133
    %v166 = vunpack.c.h.bf16 %v134
    %v167 = vunpack.c.h.bf16 %v135
    %v168 = vunpack.c.h.bf16 %v136
    %v169 = vunpack.c.h.bf16 %v137
    %v170 = vsub.f32 %v54, %v138
    %v171 = vsub.f32 %v55, %v139
    %v172 = vsub.f32 %v56, %v140
    %v173 = vsub.f32 %v57, %v141
    %v174 = vsub.f32 %v58, %v142
    %v175 = vsub.f32 %v59, %v143
    %v176 = vsub.f32 %v60, %v144
    %v177 = vsub.f32 %v61, %v145
    %v178 = vsub.f32 %v62, %v146
    %v179 = vsub.f32 %v63, %v147
    %v180 = vsub.f32 %v64, %v148
    %v181 = vsub.f32 %v65, %v149
    %v182 = vsub.f32 %v66, %v150
    %v183 = vsub.f32 %v67, %v151
    %v184 = vsub.f32 %v68, %v152
    %v185 = vsub.f32 %v69, %v153
    %v186 = vsub.f32 %v70, %v154
    %v187 = vsub.f32 %v71, %v155
    %v188 = vsub.f32 %v72, %v156
    %v189 = vsub.f32 %v73, %v157
    %v190 = vsub.f32 %v74, %v158
    %v191 = vsub.f32 %v75, %v159
    %v192 = vsub.f32 %v76, %v160
    %v193 = vsub.f32 %v77, %v161
    %v194 = vsub.f32 %v78, %v162
    %v195 = vsub.f32 %v79, %v163
    %v196 = vsub.f32 %v80, %v164
    %v197 = vsub.f32 %v81, %v165
    %v198 = vsub.f32 %v82, %v166
    %v199 = vsub.f32 %v83, %v167
    %v200 = vsub.f32 %v84, %v168
    %v201 = vsub.f32 %v85, %v169
    %vm202 = vcmask 130048
    %v204 = vsel %vm202, %v120, 0
    %206 = vmatprep.subr.mxu0 %v171
    %207 = vmatpush1.msra.mxu0 %v170
    %208 = vmatprep.subr.mxu0 %v187
    %209 = vmatpush1.msra.mxu0 %v186
    %210 = vmatprep.subr.mxu0 0.0
    %211 = vmatpush1.msra.mxu0 0.0
    %212 = vmatprep.subr.mxu0 0.0
    %213 = vmatpush1.msra.mxu0 0.0
    %214 = vmatprep.subr.mxu0 0.0
    %215 = vmatpush1.msra.mxu0 0.0
    %216 = vmatprep.subr.mxu0 0.0
    %217 = vmatpush1.msra.mxu0 0.0
    %218 = vmatprep.subr.mxu0 0.0
    %219 = vmatpush1.msra.mxu0 0.0
    %220 = vmatprep.subr.mxu0 0.0
    %221 = vmatpush1.msra.mxu0 0.0
    %222 = vmatprep.subr.mxu0 0.0
    %223 = vmatpush1.msra.mxu0 0.0
    %224 = vmatprep.subr.mxu0 0.0
    %225 = vmatpush1.msra.mxu0 0.0
    %226 = vmatprep.subr.mxu0 0.0
    %227 = vmatpush1.msra.mxu0 0.0
    %228 = vmatprep.subr.mxu0 0.0
    %229 = vmatpush1.msra.mxu0 0.0
    %230 = vmatprep.subr.mxu0 0.0
    %231 = vmatpush1.msra.mxu0 0.0
    %232 = vmatprep.subr.mxu0 0.0
    %233 = vmatpush1.msra.mxu0 0.0
    %234 = vmatprep.subr.mxu0 0.0
    %235 = vmatpush1.msra.mxu0 0.0
    %236 = vmatprep.subr.mxu0 0.0
    %237 = vmatpush1.msra.mxu0 0.0
    %238 = vmatprep.subr.mxu0 0.0
    %239 = vmatpush1.msra.mxu0 0.0
    %240 = vmatprep.subr.mxu0 0.0
    %241 = vmatpush1.msra.mxu0 0.0
    %242 = vmatprep.subr.mxu0 0.0
    %243 = vmatpush1.msra.mxu0 0.0
    %244 = vmatprep.subr.mxu0 0.0
    %245 = vmatpush1.msra.mxu0 0.0
    %246 = vmatprep.subr.mxu0 0.0
    %247 = vmatpush1.msra.mxu0 0.0
    %248 = vmatprep.subr.mxu0 0.0
    %249 = vmatpush1.msra.mxu0 0.0
    %250 = vmatprep.subr.mxu0 0.0
    %251 = vmatpush1.msra.mxu0 0.0
    %252 = vmatprep.subr.mxu0 0.0
    %253 = vmatpush1.msra.mxu0 0.0
    %254 = vmatprep.subr.mxu0 0.0
    %255 = vmatpush1.msra.mxu0 0.0
    %256 = vmatprep.subr.mxu0 0.0
    %257 = vmatpush1.msra.mxu0 0.0
    %258 = vmatprep.subr.mxu0 0.0
    %259 = vmatpush1.msra.mxu0 0.0
    %260 = vmatprep.subr.mxu0 0.0
    %261 = vmatpush1.msra.mxu0 0.0
    %262 = vmatprep.subr.mxu0 0.0
    %263 = vmatpush1.msra.mxu0 0.0
    %264 = vmatprep.subr.mxu0 0.0
    %265 = vmatpush1.msra.mxu0 0.0
    %266 = vmatprep.subr.mxu0 0.0
    %267 = vmatpush1.msra.mxu0 0.0
    %268 = vmatprep.subr.mxu0 0.0
    %269 = vmatpush1.msra.mxu0 0.0
    %270 = vmatprep.mubr.f32.mxu0 0.0
    %271 = vmatmul.mubr.f32.gmra.mrb[0].mxu0 %v204
    %v272 = vpop.f32.mrb[0].mxu0
    %v273 = vadd.f32 0.0, %v272
    %v274 = vpop.f32.mrb[0].mxu0
    %v275 = vadd.f32 0.0, %v274
    %276 = vdwg.mxu0
    %277 = vmatprep.subr.mxu0 %v173
    %278 = vmatpush1.msra.mxu0 %v172
    %279 = vmatprep.subr.mxu0 %v189
    %280 = vmatpush1.msra.mxu0 %v188
    %281 = vmatprep.subr.mxu0 0.0
    %282 = vmatpush1.msra.mxu0 0.0
    %283 = vmatprep.subr.mxu0 0.0
    %284 = vmatpush1.msra.mxu0 0.0
    %285 = vmatprep.subr.mxu0 0.0
    %286 = vmatpush1.msra.mxu0 0.0
    %287 = vmatprep.subr.mxu0 0.0
    %288 = vmatpush1.msra.mxu0 0.0
    %289 = vmatprep.subr.mxu0 0.0
    %290 = vmatpush1.msra.mxu0 0.0
    %291 = vmatprep.subr.mxu0 0.0
    %292 = vmatpush1.msra.mxu0 0.0
    %293 = vmatprep.subr.mxu0 0.0
    %294 = vmatpush1.msra.mxu0 0.0
    %295 = vmatprep.subr.mxu0 0.0
    %296 = vmatpush1.msra.mxu0 0.0
    %297 = vmatprep.subr.mxu0 0.0
    %298 = vmatpush1.msra.mxu0 0.0
    %299 = vmatprep.subr.mxu0 0.0
    %300 = vmatpush1.msra.mxu0 0.0
    %301 = vmatprep.subr.mxu0 0.0
    %302 = vmatpush1.msra.mxu0 0.0
    %303 = vmatprep.subr.mxu0 0.0
    %304 = vmatpush1.msra.mxu0 0.0
    %305 = vmatprep.subr.mxu0 0.0
    %306 = vmatpush1.msra.mxu0 0.0
    %307 = vmatprep.subr.mxu0 0.0
    %308 = vmatpush1.msra.mxu0 0.0
    %309 = vmatprep.subr.mxu0 0.0
    %310 = vmatpush1.msra.mxu0 0.0
    %311 = vmatprep.subr.mxu0 0.0
    %312 = vmatpush1.msra.mxu0 0.0
    %313 = vmatprep.subr.mxu0 0.0
    %314 = vmatpush1.msra.mxu0 0.0
    %315 = vmatprep.subr.mxu0 0.0
    %316 = vmatpush1.msra.mxu0 0.0
    %317 = vmatprep.subr.mxu0 0.0
    %318 = vmatpush1.msra.mxu0 0.0
    %319 = vmatprep.subr.mxu0 0.0
    %320 = vmatpush1.msra.mxu0 0.0
    %321 = vmatprep.subr.mxu0 0.0
    %322 = vmatpush1.msra.mxu0 0.0
    %323 = vmatprep.subr.mxu0 0.0
    %324 = vmatpush1.msra.mxu0 0.0
    %325 = vmatprep.subr.mxu0 0.0
    %326 = vmatpush1.msra.mxu0 0.0
    %327 = vmatprep.subr.mxu0 0.0
    %328 = vmatpush1.msra.mxu0 0.0
    %329 = vmatprep.subr.mxu0 0.0
    %330 = vmatpush1.msra.mxu0 0.0
    %331 = vmatprep.subr.mxu0 0.0
    %332 = vmatpush1.msra.mxu0 0.0
    %333 = vmatprep.subr.mxu0 0.0
    %334 = vmatpush1.msra.mxu0 0.0
    %335 = vmatprep.subr.mxu0 0.0
    %336 = vmatpush1.msra.mxu0 0.0
    %337 = vmatprep.subr.mxu0 0.0
    %338 = vmatpush1.msra.mxu0 0.0
    %339 = vmatprep.subr.mxu0 0.0
    %340 = vmatpush1.msra.mxu0 0.0
    %341 = vmatprep.mubr.f32.mxu0 0.0
    %342 = vmatmul.mubr.f32.gmra.mrb[0].mxu0 %v204
    %v343 = vpop.f32.mrb[0].mxu0
    %v344 = vadd.f32 0.0, %v343
    %v345 = vpop.f32.mrb[0].mxu0
    %v346 = vadd.f32 0.0, %v345
    %347 = vdwg.mxu0
    %348 = vmatprep.subr.mxu0 %v175
    %349 = vmatpush1.msra.mxu0 %v174
    %350 = vmatprep.subr.mxu0 %v191
    %351 = vmatpush1.msra.mxu0 %v190
    %352 = vmatprep.subr.mxu0 0.0
    %353 = vmatpush1.msra.mxu0 0.0
    %354 = vmatprep.subr.mxu0 0.0
    %355 = vmatpush1.msra.mxu0 0.0
    %356 = vmatprep.subr.mxu0 0.0
    %357 = vmatpush1.msra.mxu0 0.0
    %358 = vmatprep.subr.mxu0 0.0
    %359 = vmatpush1.msra.mxu0 0.0
    %360 = vmatprep.subr.mxu0 0.0
    %361 = vmatpush1.msra.mxu0 0.0
    %362 = vmatprep.subr.mxu0 0.0
    %363 = vmatpush1.msra.mxu0 0.0
    %364 = vmatprep.subr.mxu0 0.0
    %365 = vmatpush1.msra.mxu0 0.0
    %366 = vmatprep.subr.mxu0 0.0
    %367 = vmatpush1.msra.mxu0 0.0
    %368 = vmatprep.subr.mxu0 0.0
    %369 = vmatpush1.msra.mxu0 0.0
    %370 = vmatprep.subr.mxu0 0.0
    %371 = vmatpush1.msra.mxu0 0.0
    %372 = vmatprep.subr.mxu0 0.0
    %373 = vmatpush1.msra.mxu0 0.0
    %374 = vmatprep.subr.mxu0 0.0
    %375 = vmatpush1.msra.mxu0 0.0
    %376 = vmatprep.subr.mxu0 0.0
    %377 = vmatpush1.msra.mxu0 0.0
    %378 = vmatprep.subr.mxu0 0.0
    %379 = vmatpush1.msra.mxu0 0.0
    %380 = vmatprep.subr.mxu0 0.0
    %381 = vmatpush1.msra.mxu0 0.0
    %382 = vmatprep.subr.mxu0 0.0
    %383 = vmatpush1.msra.mxu0 0.0
    %384 = vmatprep.subr.mxu0 0.0
    %385 = vmatpush1.msra.mxu0 0.0
    %386 = vmatprep.subr.mxu0 0.0
    %387 = vmatpush1.msra.mxu0 0.0
    %388 = vmatprep.subr.mxu0 0.0
    %389 = vmatpush1.msra.mxu0 0.0
    %390 = vmatprep.subr.mxu0 0.0
    %391 = vmatpush1.msra.mxu0 0.0
    %392 = vmatprep.subr.mxu0 0.0
    %393 = vmatpush1.msra.mxu0 0.0
    %394 = vmatprep.subr.mxu0 0.0
    %395 = vmatpush1.msra.mxu0 0.0
    %396 = vmatprep.subr.mxu0 0.0
    %397 = vmatpush1.msra.mxu0 0.0
    %398 = vmatprep.subr.mxu0 0.0
    %399 = vmatpush1.msra.mxu0 0.0
    %400 = vmatprep.subr.mxu0 0.0
    %401 = vmatpush1.msra.mxu0 0.0
    %402 = vmatprep.subr.mxu0 0.0
    %403 = vmatpush1.msra.mxu0 0.0
    %404 = vmatprep.subr.mxu0 0.0
    %405 = vmatpush1.msra.mxu0 0.0
    %406 = vmatprep.subr.mxu0 0.0
    %407 = vmatpush1.msra.mxu0 0.0
    %408 = vmatprep.subr.mxu0 0.0
    %409 = vmatpush1.msra.mxu0 0.0
    %410 = vmatprep.subr.mxu0 0.0
    %411 = vmatpush1.msra.mxu0 0.0
    %412 = vmatprep.mubr.f32.mxu0 0.0
    %413 = vmatmul.mubr.f32.gmra.mrb[0].mxu0 %v204
    %v414 = vpop.f32.mrb[0].mxu0
    %v415 = vadd.f32 0.0, %v414
    %v416 = vpop.f32.mrb[0].mxu0
    %v417 = vadd.f32 0.0, %v416
    %418 = vdwg.mxu0
    %419 = vmatprep.subr.mxu0 %v177
    %420 = vmatpush1.msra.mxu0 %v176
    %421 = vmatprep.subr.mxu0 %v193
    %422 = vmatpush1.msra.mxu0 %v192
    %423 = vmatprep.subr.mxu0 0.0
    %424 = vmatpush1.msra.mxu0 0.0
    %425 = vmatprep.subr.mxu0 0.0
    %426 = vmatpush1.msra.mxu0 0.0
    %427 = vmatprep.subr.mxu0 0.0
    %428 = vmatpush1.msra.mxu0 0.0
    %429 = vmatprep.subr.mxu0 0.0
    %430 = vmatpush1.msra.mxu0 0.0
    %431 = vmatprep.subr.mxu0 0.0
    %432 = vmatpush1.msra.mxu0 0.0
    %433 = vmatprep.subr.mxu0 0.0
    %434 = vmatpush1.msra.mxu0 0.0
    %435 = vmatprep.subr.mxu0 0.0
    %436 = vmatpush1.msra.mxu0 0.0
    %437 = vmatprep.subr.mxu0 0.0
    %438 = vmatpush1.msra.mxu0 0.0
    %439 = vmatprep.subr.mxu0 0.0
    %440 = vmatpush1.msra.mxu0 0.0
    %441 = vmatprep.subr.mxu0 0.0
    %442 = vmatpush1.msra.mxu0 0.0
    %443 = vmatprep.subr.mxu0 0.0
    %444 = vmatpush1.msra.mxu0 0.0
    %445 = vmatprep.subr.mxu0 0.0
    %446 = vmatpush1.msra.mxu0 0.0
    %447 = vmatprep.subr.mxu0 0.0
    %448 = vmatpush1.msra.mxu0 0.0
    %449 = vmatprep.subr.mxu0 0.0
    %450 = vmatpush1.msra.mxu0 0.0
    %451 = vmatprep.subr.mxu0 0.0
    %452 = vmatpush1.msra.mxu0 0.0
    %453 = vmatprep.subr.mxu0 0.0
    %454 = vmatpush1.msra.mxu0 0.0
    %455 = vmatprep.subr.mxu0 0.0
    %456 = vmatpush1.msra.mxu0 0.0
    %457 = vmatprep.subr.mxu0 0.0
    %458 = vmatpush1.msra.mxu0 0.0
    %459 = vmatprep.subr.mxu0 0.0
    %460 = vmatpush1.msra.mxu0 0.0
    %461 = vmatprep.subr.mxu0 0.0
    %462 = vmatpush1.msra.mxu0 0.0
    %463 = vmatprep.subr.mxu0 0.0
    %464 = vmatpush1.msra.mxu0 0.0
    %465 = vmatprep.subr.mxu0 0.0
    %466 = vmatpush1.msra.mxu0 0.0
    %467 = vmatprep.subr.mxu0 0.0
    %468 = vmatpush1.msra.mxu0 0.0
    %469 = vmatprep.subr.mxu0 0.0
    %470 = vmatpush1.msra.mxu0 0.0
    %471 = vmatprep.subr.mxu0 0.0
    %472 = vmatpush1.msra.mxu0 0.0
    %473 = vmatprep.subr.mxu0 0.0
    %474 = vmatpush1.msra.mxu0 0.0
    %475 = vmatprep.subr.mxu0 0.0
    %476 = vmatpush1.msra.mxu0 0.0
    %477 = vmatprep.subr.mxu0 0.0
    %478 = vmatpush1.msra.mxu0 0.0
    %479 = vmatprep.subr.mxu0 0.0
    %480 = vmatpush1.msra.mxu0 0.0
    %481 = vmatprep.subr.mxu0 0.0
    %482 = vmatpush1.msra.mxu0 0.0
    %483 = vmatprep.mubr.f32.mxu0 0.0
    %484 = vmatmul.mubr.f32.gmra.mrb[0].mxu0 %v204
    %v485 = vpop.f32.mrb[0].mxu0
    %v486 = vadd.f32 0.0, %v485
    %v487 = vpop.f32.mrb[0].mxu0
    %v488 = vadd.f32 0.0, %v487
    %489 = vdwg.mxu0
    %490 = vmatprep.subr.mxu0 %v179
    %491 = vmatpush1.msra.mxu0 %v178
    %492 = vmatprep.subr.mxu0 %v195
    %493 = vmatpush1.msra.mxu0 %v194
    %494 = vmatprep.subr.mxu0 0.0
    %495 = vmatpush1.msra.mxu0 0.0
    %496 = vmatprep.subr.mxu0 0.0
    %497 = vmatpush1.msra.mxu0 0.0
    %498 = vmatprep.subr.mxu0 0.0
    %499 = vmatpush1.msra.mxu0 0.0
    %500 = vmatprep.subr.mxu0 0.0
    %501 = vmatpush1.msra.mxu0 0.0
    %502 = vmatprep.subr.mxu0 0.0
    %503 = vmatpush1.msra.mxu0 0.0
    %504 = vmatprep.subr.mxu0 0.0
    %505 = vmatpush1.msra.mxu0 0.0
    %506 = vmatprep.subr.mxu0 0.0
    %507 = vmatpush1.msra.mxu0 0.0
    %508 = vmatprep.subr.mxu0 0.0
    %509 = vmatpush1.msra.mxu0 0.0
    %510 = vmatprep.subr.mxu0 0.0
    %511 = vmatpush1.msra.mxu0 0.0
    %512 = vmatprep.subr.mxu0 0.0
    %513 = vmatpush1.msra.mxu0 0.0
    %514 = vmatprep.subr.mxu0 0.0
    %515 = vmatpush1.msra.mxu0 0.0
    %516 = vmatprep.subr.mxu0 0.0
    %517 = vmatpush1.msra.mxu0 0.0
    %518 = vmatprep.subr.mxu0 0.0
    %519 = vmatpush1.msra.mxu0 0.0
    %520 = vmatprep.subr.mxu0 0.0
    %521 = vmatpush1.msra.mxu0 0.0
    %522 = vmatprep.subr.mxu0 0.0
    %523 = vmatpush1.msra.mxu0 0.0
    %524 = vmatprep.subr.mxu0 0.0
    %525 = vmatpush1.msra.mxu0 0.0
    %526 = vmatprep.subr.mxu0 0.0
    %527 = vmatpush1.msra.mxu0 0.0
    %528 = vmatprep.subr.mxu0 0.0
    %529 = vmatpush1.msra.mxu0 0.0
    %530 = vmatprep.subr.mxu0 0.0
    %531 = vmatpush1.msra.mxu0 0.0
    %532 = vmatprep.subr.mxu0 0.0
    %533 = vmatpush1.msra.mxu0 0.0
    %534 = vmatprep.subr.mxu0 0.0
    %535 = vmatpush1.msra.mxu0 0.0
    %536 = vmatprep.subr.mxu0 0.0
    %537 = vmatpush1.msra.mxu0 0.0
    %538 = vmatprep.subr.mxu0 0.0
    %539 = vmatpush1.msra.mxu0 0.0
    %540 = vmatprep.subr.mxu0 0.0
    %541 = vmatpush1.msra.mxu0 0.0
    %542 = vmatprep.subr.mxu0 0.0
    %543 = vmatpush1.msra.mxu0 0.0
    %544 = vmatprep.subr.mxu0 0.0
    %545 = vmatpush1.msra.mxu0 0.0
    %546 = vmatprep.subr.mxu0 0.0
    %547 = vmatpush1.msra.mxu0 0.0
    %548 = vmatprep.subr.mxu0 0.0
    %549 = vmatpush1.msra.mxu0 0.0
    %550 = vmatprep.subr.mxu0 0.0
    %551 = vmatpush1.msra.mxu0 0.0
    %552 = vmatprep.subr.mxu0 0.0
    %553 = vmatpush1.msra.mxu0 0.0
    %554 = vmatprep.mubr.f32.mxu0 0.0
    %555 = vmatmul.mubr.f32.gmra.mrb[0].mxu0 %v204
    %v556 = vpop.f32.mrb[0].mxu0
    %v557 = vadd.f32 0.0, %v556
    %v558 = vpop.f32.mrb[0].mxu0
    %v559 = vadd.f32 0.0, %v558
    %560 = vdwg.mxu0
    %561 = vmatprep.subr.mxu0 %v181
    %562 = vmatpush1.msra.mxu0 %v180
    %563 = vmatprep.subr.mxu0 %v197
    %564 = vmatpush1.msra.mxu0 %v196
    %565 = vmatprep.subr.mxu0 0.0
    %566 = vmatpush1.msra.mxu0 0.0
    %567 = vmatprep.subr.mxu0 0.0
    %568 = vmatpush1.msra.mxu0 0.0
    %569 = vmatprep.subr.mxu0 0.0
    %570 = vmatpush1.msra.mxu0 0.0
    %571 = vmatprep.subr.mxu0 0.0
    %572 = vmatpush1.msra.mxu0 0.0
    %573 = vmatprep.subr.mxu0 0.0
    %574 = vmatpush1.msra.mxu0 0.0
    %575 = vmatprep.subr.mxu0 0.0
    %576 = vmatpush1.msra.mxu0 0.0
    %577 = vmatprep.subr.mxu0 0.0
    %578 = vmatpush1.msra.mxu0 0.0
    %579 = vmatprep.subr.mxu0 0.0
    %580 = vmatpush1.msra.mxu0 0.0
    %581 = vmatprep.subr.mxu0 0.0
    %582 = vmatpush1.msra.mxu0 0.0
    %583 = vmatprep.subr.mxu0 0.0
    %584 = vmatpush1.msra.mxu0 0.0
    %585 = vmatprep.subr.mxu0 0.0
    %586 = vmatpush1.msra.mxu0 0.0
    %587 = vmatprep.subr.mxu0 0.0
    %588 = vmatpush1.msra.mxu0 0.0
    %589 = vmatprep.subr.mxu0 0.0
    %590 = vmatpush1.msra.mxu0 0.0
    %591 = vmatprep.subr.mxu0 0.0
    %592 = vmatpush1.msra.mxu0 0.0
    %593 = vmatprep.subr.mxu0 0.0
    %594 = vmatpush1.msra.mxu0 0.0
    %595 = vmatprep.subr.mxu0 0.0
    %596 = vmatpush1.msra.mxu0 0.0
    %597 = vmatprep.subr.mxu0 0.0
    %598 = vmatpush1.msra.mxu0 0.0
    %599 = vmatprep.subr.mxu0 0.0
    %600 = vmatpush1.msra.mxu0 0.0
    %601 = vmatprep.subr.mxu0 0.0
    %602 = vmatpush1.msra.mxu0 0.0
    %603 = vmatprep.subr.mxu0 0.0
    %604 = vmatpush1.msra.mxu0 0.0
    %605 = vmatprep.subr.mxu0 0.0
    %606 = vmatpush1.msra.mxu0 0.0
    %607 = vmatprep.subr.mxu0 0.0
    %608 = vmatpush1.msra.mxu0 0.0
    %609 = vmatprep.subr.mxu0 0.0
    %610 = vmatpush1.msra.mxu0 0.0
    %611 = vmatprep.subr.mxu0 0.0
    %612 = vmatpush1.msra.mxu0 0.0
    %613 = vmatprep.subr.mxu0 0.0
    %614 = vmatpush1.msra.mxu0 0.0
    %615 = vmatprep.subr.mxu0 0.0
    %616 = vmatpush1.msra.mxu0 0.0
    %617 = vmatprep.subr.mxu0 0.0
    %618 = vmatpush1.msra.mxu0 0.0
    %619 = vmatprep.subr.mxu0 0.0
    %620 = vmatpush1.msra.mxu0 0.0
    %621 = vmatprep.subr.mxu0 0.0
    %622 = vmatpush1.msra.mxu0 0.0
    %623 = vmatprep.subr.mxu0 0.0
    %624 = vmatpush1.msra.mxu0 0.0
    %625 = vmatprep.mubr.f32.mxu0 0.0
    %626 = vmatmul.mubr.f32.gmra.mrb[0].mxu0 %v204
    %v627 = vpop.f32.mrb[0].mxu0
    %v628 = vadd.f32 0.0, %v627
    %v629 = vpop.f32.mrb[0].mxu0
    %v630 = vadd.f32 0.0, %v629
    %631 = vdwg.mxu0
    %632 = vmatprep.subr.mxu0 %v183
    %633 = vmatpush1.msra.mxu0 %v182
    %634 = vmatprep.subr.mxu0 %v199
    %635 = vmatpush1.msra.mxu0 %v198
    %636 = vmatprep.subr.mxu0 0.0
    %637 = vmatpush1.msra.mxu0 0.0
    %638 = vmatprep.subr.mxu0 0.0
    %639 = vmatpush1.msra.mxu0 0.0
    %640 = vmatprep.subr.mxu0 0.0
    %641 = vmatpush1.msra.mxu0 0.0
    %642 = vmatprep.subr.mxu0 0.0
    %643 = vmatpush1.msra.mxu0 0.0
    %644 = vmatprep.subr.mxu0 0.0
    %645 = vmatpush1.msra.mxu0 0.0
    %646 = vmatprep.subr.mxu0 0.0
    %647 = vmatpush1.msra.mxu0 0.0
    %648 = vmatprep.subr.mxu0 0.0
    %649 = vmatpush1.msra.mxu0 0.0
    %650 = vmatprep.subr.mxu0 0.0
    %651 = vmatpush1.msra.mxu0 0.0
    %652 = vmatprep.subr.mxu0 0.0
    %653 = vmatpush1.msra.mxu0 0.0
    %654 = vmatprep.subr.mxu0 0.0
    %655 = vmatpush1.msra.mxu0 0.0
    %656 = vmatprep.subr.mxu0 0.0
    %657 = vmatpush1.msra.mxu0 0.0
    %658 = vmatprep.subr.mxu0 0.0
    %659 = vmatpush1.msra.mxu0 0.0
    %660 = vmatprep.subr.mxu0 0.0
    %661 = vmatpush1.msra.mxu0 0.0
    %662 = vmatprep.subr.mxu0 0.0
    %663 = vmatpush1.msra.mxu0 0.0
    %664 = vmatprep.subr.mxu0 0.0
    %665 = vmatpush1.msra.mxu0 0.0
    %666 = vmatprep.subr.mxu0 0.0
    %667 = vmatpush1.msra.mxu0 0.0
    %668 = vmatprep.subr.mxu0 0.0
    %669 = vmatpush1.msra.mxu0 0.0
    %670 = vmatprep.subr.mxu0 0.0
    %671 = vmatpush1.msra.mxu0 0.0
    %672 = vmatprep.subr.mxu0 0.0
    %673 = vmatpush1.msra.mxu0 0.0
    %674 = vmatprep.subr.mxu0 0.0
    %675 = vmatpush1.msra.mxu0 0.0
    %676 = vmatprep.subr.mxu0 0.0
    %677 = vmatpush1.msra.mxu0 0.0
    %678 = vmatprep.subr.mxu0 0.0
    %679 = vmatpush1.msra.mxu0 0.0
    %680 = vmatprep.subr.mxu0 0.0
    %681 = vmatpush1.msra.mxu0 0.0
    %682 = vmatprep.subr.mxu0 0.0
    %683 = vmatpush1.msra.mxu0 0.0
    %684 = vmatprep.subr.mxu0 0.0
    %685 = vmatpush1.msra.mxu0 0.0
    %686 = vmatprep.subr.mxu0 0.0
    %687 = vmatpush1.msra.mxu0 0.0
    %688 = vmatprep.subr.mxu0 0.0
    %689 = vmatpush1.msra.mxu0 0.0
    %690 = vmatprep.subr.mxu0 0.0
    %691 = vmatpush1.msra.mxu0 0.0
    %692 = vmatprep.subr.mxu0 0.0
    %693 = vmatpush1.msra.mxu0 0.0
    %694 = vmatprep.subr.mxu0 0.0
    %695 = vmatpush1.msra.mxu0 0.0
    %696 = vmatprep.mubr.f32.mxu0 0.0
    %697 = vmatmul.mubr.f32.gmra.mrb[0].mxu0 %v204
    %v698 = vpop.f32.mrb[0].mxu0
    %v699 = vadd.f32 0.0, %v698
    %v700 = vpop.f32.mrb[0].mxu0
    %v701 = vadd.f32 0.0, %v700
    %702 = vdwg.mxu0
    %703 = vmatprep.subr.mxu0 %v185
    %704 = vmatpush1.msra.mxu0 %v184
    %705 = vmatprep.subr.mxu0 %v201
    %706 = vmatpush1.msra.mxu0 %v200
    %707 = vmatprep.subr.mxu0 0.0
    %708 = vmatpush1.msra.mxu0 0.0
    %709 = vmatprep.subr.mxu0 0.0
    %710 = vmatpush1.msra.mxu0 0.0
    %711 = vmatprep.subr.mxu0 0.0
    %712 = vmatpush1.msra.mxu0 0.0
    %713 = vmatprep.subr.mxu0 0.0
    %714 = vmatpush1.msra.mxu0 0.0
    %715 = vmatprep.subr.mxu0 0.0
    %716 = vmatpush1.msra.mxu0 0.0
    %717 = vmatprep.subr.mxu0 0.0
    %718 = vmatpush1.msra.mxu0 0.0
    %719 = vmatprep.subr.mxu0 0.0
    %720 = vmatpush1.msra.mxu0 0.0
    %721 = vmatprep.subr.mxu0 0.0
    %722 = vmatpush1.msra.mxu0 0.0
    %723 = vmatprep.subr.mxu0 0.0
    %724 = vmatpush1.msra.mxu0 0.0
    %725 = vmatprep.subr.mxu0 0.0
    %726 = vmatpush1.msra.mxu0 0.0
    %727 = vmatprep.subr.mxu0 0.0
    %728 = vmatpush1.msra.mxu0 0.0
    %729 = vmatprep.subr.mxu0 0.0
    %730 = vmatpush1.msra.mxu0 0.0
    %731 = vmatprep.subr.mxu0 0.0
    %732 = vmatpush1.msra.mxu0 0.0
    %733 = vmatprep.subr.mxu0 0.0
    %734 = vmatpush1.msra.mxu0 0.0
    %735 = vmatprep.subr.mxu0 0.0
    %736 = vmatpush1.msra.mxu0 0.0
    %737 = vmatprep.subr.mxu0 0.0
    %738 = vmatpush1.msra.mxu0 0.0
    %739 = vmatprep.subr.mxu0 0.0
    %740 = vmatpush1.msra.mxu0 0.0
    %741 = vmatprep.subr.mxu0 0.0
    %742 = vmatpush1.msra.mxu0 0.0
    %743 = vmatprep.subr.mxu0 0.0
    %744 = vmatpush1.msra.mxu0 0.0
    %745 = vmatprep.subr.mxu0 0.0
    %746 = vmatpush1.msra.mxu0 0.0
    %747 = vmatprep.subr.mxu0 0.0
    %748 = vmatpush1.msra.mxu0 0.0
    %749 = vmatprep.subr.mxu0 0.0
    %750 = vmatpush1.msra.mxu0 0.0
    %751 = vmatprep.subr.mxu0 0.0
    %752 = vmatpush1.msra.mxu0 0.0
    %753 = vmatprep.subr.mxu0 0.0
    %754 = vmatpush1.msra.mxu0 0.0
    %755 = vmatprep.subr.mxu0 0.0
    %756 = vmatpush1.msra.mxu0 0.0
    %757 = vmatprep.subr.mxu0 0.0
    %758 = vmatpush1.msra.mxu0 0.0
    %759 = vmatprep.subr.mxu0 0.0
    %760 = vmatpush1.msra.mxu0 0.0
    %761 = vmatprep.subr.mxu0 0.0
    %762 = vmatpush1.msra.mxu0 0.0
    %763 = vmatprep.subr.mxu0 0.0
    %764 = vmatpush1.msra.mxu0 0.0
    %765 = vmatprep.subr.mxu0 0.0
    %766 = vmatpush1.msra.mxu0 0.0
    %767 = vmatprep.mubr.f32.mxu0 0.0
    %768 = vmatmul.mubr.f32.gmra.mrb[0].mxu0 %v204
    %v769 = vpop.f32.mrb[0].mxu0
    %v770 = vadd.f32 0.0, %v769
    %v771 = vpop.f32.mrb[0].mxu0
    %v772 = vadd.f32 0.0, %v771
    %773 = vdwg.mxu0
    %774 = vmatprep.subr.mxu0 %v139
    %775 = vmatpush1.msra.mxu0 %v138
    %776 = vmatprep.subr.mxu0 %v155
    %777 = vmatpush1.msra.mxu0 %v154
    %778 = vmatprep.subr.mxu0 0.0
    %779 = vmatpush1.msra.mxu0 0.0
    %780 = vmatprep.subr.mxu0 0.0
    %781 = vmatpush1.msra.mxu0 0.0
    %782 = vmatprep.subr.mxu0 0.0
    %783 = vmatpush1.msra.mxu0 0.0
    %784 = vmatprep.subr.mxu0 0.0
    %785 = vmatpush1.msra.mxu0 0.0
    %786 = vmatprep.subr.mxu0 0.0
    %787 = vmatpush1.msra.mxu0 0.0
    %788 = vmatprep.subr.mxu0 0.0
    %789 = vmatpush1.msra.mxu0 0.0
    %790 = vmatprep.subr.mxu0 0.0
    %791 = vmatpush1.msra.mxu0 0.0
    %792 = vmatprep.subr.mxu0 0.0
    %793 = vmatpush1.msra.mxu0 0.0
    %794 = vmatprep.subr.mxu0 0.0
    %795 = vmatpush1.msra.mxu0 0.0
    %796 = vmatprep.subr.mxu0 0.0
    %797 = vmatpush1.msra.mxu0 0.0
    %798 = vmatprep.subr.mxu0 0.0
    %799 = vmatpush1.msra.mxu0 0.0
    %800 = vmatprep.subr.mxu0 0.0
    %801 = vmatpush1.msra.mxu0 0.0
    %802 = vmatprep.subr.mxu0 0.0
    %803 = vmatpush1.msra.mxu0 0.0
    %804 = vmatprep.subr.mxu0 0.0
    %805 = vmatpush1.msra.mxu0 0.0
    %806 = vmatprep.subr.mxu0 0.0
    %807 = vmatpush1.msra.mxu0 0.0
    %808 = vmatprep.subr.mxu0 0.0
    %809 = vmatpush1.msra.mxu0 0.0
    %810 = vmatprep.subr.mxu0 0.0
    %811 = vmatpush1.msra.mxu0 0.0
    %812 = vmatprep.subr.mxu0 0.0
    %813 = vmatpush1.msra.mxu0 0.0
    %814 = vmatprep.subr.mxu0 0.0
    %815 = vmatpush1.msra.mxu0 0.0
    %816 = vmatprep.subr.mxu0 0.0
    %817 = vmatpush1.msra.mxu0 0.0
    %818 = vmatprep.subr.mxu0 0.0
    %819 = vmatpush1.msra.mxu0 0.0
    %820 = vmatprep.subr.mxu0 0.0
    %821 = vmatpush1.msra.mxu0 0.0
    %822 = vmatprep.subr.mxu0 0.0
    %823 = vmatpush1.msra.mxu0 0.0
    %824 = vmatprep.subr.mxu0 0.0
    %825 = vmatpush1.msra.mxu0 0.0
    %826 = vmatprep.subr.mxu0 0.0
    %827 = vmatpush1.msra.mxu0 0.0
    %828 = vmatprep.subr.mxu0 0.0
    %829 = vmatpush1.msra.mxu0 0.0
    %830 = vmatprep.subr.mxu0 0.0
    %831 = vmatpush1.msra.mxu0 0.0
    %832 = vmatprep.subr.mxu0 0.0
    %833 = vmatpush1.msra.mxu0 0.0
    %834 = vmatprep.subr.mxu0 0.0
    %835 = vmatpush1.msra.mxu0 0.0
    %836 = vmatprep.subr.mxu0 0.0
    %837 = vmatpush1.msra.mxu0 0.0
    %838 = vmatprep.mubr.f32.mxu0 0.0
    %839 = vmatmul.mubr.f32.gmra.mrb[0].mxu0 %v204
    %v840 = vpop.f32.mrb[0].mxu0
    %v841 = vadd.f32 %v273, %v840
    %v842 = vpop.f32.mrb[0].mxu0
    %v843 = vadd.f32 %v275, %v842
    %844 = vdwg.mxu0
    %845 = vmatprep.subr.mxu0 %v141
    %846 = vmatpush1.msra.mxu0 %v140
    %847 = vmatprep.subr.mxu0 %v157
    %848 = vmatpush1.msra.mxu0 %v156
    %849 = vmatprep.subr.mxu0 0.0
    %850 = vmatpush1.msra.mxu0 0.0
    %851 = vmatprep.subr.mxu0 0.0
    %852 = vmatpush1.msra.mxu0 0.0
    %853 = vmatprep.subr.mxu0 0.0
    %854 = vmatpush1.msra.mxu0 0.0
    %855 = vmatprep.subr.mxu0 0.0
    %856 = vmatpush1.msra.mxu0 0.0
    %857 = vmatprep.subr.mxu0 0.0
    %858 = vmatpush1.msra.mxu0 0.0
    %859 = vmatprep.subr.mxu0 0.0
    %860 = vmatpush1.msra.mxu0 0.0
    %861 = vmatprep.subr.mxu0 0.0
    %862 = vmatpush1.msra.mxu0 0.0
    %863 = vmatprep.subr.mxu0 0.0
    %864 = vmatpush1.msra.mxu0 0.0
    %865 = vmatprep.subr.mxu0 0.0
    %866 = vmatpush1.msra.mxu0 0.0
    %867 = vmatprep.subr.mxu0 0.0
    %868 = vmatpush1.msra.mxu0 0.0
    %869 = vmatprep.subr.mxu0 0.0
    %870 = vmatpush1.msra.mxu0 0.0
    %871 = vmatprep.subr.mxu0 0.0
    %872 = vmatpush1.msra.mxu0 0.0
    %873 = vmatprep.subr.mxu0 0.0
    %874 = vmatpush1.msra.mxu0 0.0
    %875 = vmatprep.subr.mxu0 0.0
    %876 = vmatpush1.msra.mxu0 0.0
    %877 = vmatprep.subr.mxu0 0.0
    %878 = vmatpush1.msra.mxu0 0.0
    %879 = vmatprep.subr.mxu0 0.0
    %880 = vmatpush1.msra.mxu0 0.0
    %881 = vmatprep.subr.mxu0 0.0
    %882 = vmatpush1.msra.mxu0 0.0
    %883 = vmatprep.subr.mxu0 0.0
    %884 = vmatpush1.msra.mxu0 0.0
    %885 = vmatprep.subr.mxu0 0.0
    %886 = vmatpush1.msra.mxu0 0.0
    %887 = vmatprep.subr.mxu0 0.0
    %888 = vmatpush1.msra.mxu0 0.0
    %889 = vmatprep.subr.mxu0 0.0
    %890 = vmatpush1.msra.mxu0 0.0
    %891 = vmatprep.subr.mxu0 0.0
    %892 = vmatpush1.msra.mxu0 0.0
    %893 = vmatprep.subr.mxu0 0.0
    %894 = vmatpush1.msra.mxu0 0.0
    %895 = vmatprep.subr.mxu0 0.0
    %896 = vmatpush1.msra.mxu0 0.0
    %897 = vmatprep.subr.mxu0 0.0
    %898 = vmatpush1.msra.mxu0 0.0
    %899 = vmatprep.subr.mxu0 0.0
    %900 = vmatpush1.msra.mxu0 0.0
    %901 = vmatprep.subr.mxu0 0.0
    %902 = vmatpush1.msra.mxu0 0.0
    %903 = vmatprep.subr.mxu0 0.0
    %904 = vmatpush1.msra.mxu0 0.0
    %905 = vmatprep.subr.mxu0 0.0
    %906 = vmatpush1.msra.mxu0 0.0
    %907 = vmatprep.subr.mxu0 0.0
    %908 = vmatpush1.msra.mxu0 0.0
    %909 = vmatprep.mubr.f32.mxu0 0.0
    %910 = vmatmul.mubr.f32.gmra.mrb[0].mxu0 %v204
    %v911 = vpop.f32.mrb[0].mxu0
    %v912 = vadd.f32 %v344, %v911
    %v913 = vpop.f32.mrb[0].mxu0
    %v914 = vadd.f32 %v346, %v913
    %915 = vdwg.mxu0
    %916 = vmatprep.subr.mxu0 %v143
    %917 = vmatpush1.msra.mxu0 %v142
    %918 = vmatprep.subr.mxu0 %v159
    %919 = vmatpush1.msra.mxu0 %v158
    %920 = vmatprep.subr.mxu0 0.0
    %921 = vmatpush1.msra.mxu0 0.0
    %922 = vmatprep.subr.mxu0 0.0
    %923 = vmatpush1.msra.mxu0 0.0
    %924 = vmatprep.subr.mxu0 0.0
    %925 = vmatpush1.msra.mxu0 0.0
    %926 = vmatprep.subr.mxu0 0.0
    %927 = vmatpush1.msra.mxu0 0.0
    %928 = vmatprep.subr.mxu0 0.0
    %929 = vmatpush1.msra.mxu0 0.0
    %930 = vmatprep.subr.mxu0 0.0
    %931 = vmatpush1.msra.mxu0 0.0
    %932 = vmatprep.subr.mxu0 0.0
    %933 = vmatpush1.msra.mxu0 0.0
    %934 = vmatprep.subr.mxu0 0.0
    %935 = vmatpush1.msra.mxu0 0.0
    %936 = vmatprep.subr.mxu0 0.0
    %937 = vmatpush1.msra.mxu0 0.0
    %938 = vmatprep.subr.mxu0 0.0
    %939 = vmatpush1.msra.mxu0 0.0
    %940 = vmatprep.subr.mxu0 0.0
    %941 = vmatpush1.msra.mxu0 0.0
    %942 = vmatprep.subr.mxu0 0.0
    %943 = vmatpush1.msra.mxu0 0.0
    %944 = vmatprep.subr.mxu0 0.0
    %945 = vmatpush1.msra.mxu0 0.0
    %946 = vmatprep.subr.mxu0 0.0
    %947 = vmatpush1.msra.mxu0 0.0
    %948 = vmatprep.subr.mxu0 0.0
    %949 = vmatpush1.msra.mxu0 0.0
    %950 = vmatprep.subr.mxu0 0.0
    %951 = vmatpush1.msra.mxu0 0.0
    %952 = vmatprep.subr.mxu0 0.0
    %953 = vmatpush1.msra.mxu0 0.0
    %954 = vmatprep.subr.mxu0 0.0
    %955 = vmatpush1.msra.mxu0 0.0
    %956 = vmatprep.subr.mxu0 0.0
    %957 = vmatpush1.msra.mxu0 0.0
    %958 = vmatprep.subr.mxu0 0.0
    %959 = vmatpush1.msra.mxu0 0.0
    %960 = vmatprep.subr.mxu0 0.0
    %961 = vmatpush1.msra.mxu0 0.0
    %962 = vmatprep.subr.mxu0 0.0
    %963 = vmatpush1.msra.mxu0 0.0
    %964 = vmatprep.subr.mxu0 0.0
    %965 = vmatpush1.msra.mxu0 0.0
    %966 = vmatprep.subr.mxu0 0.0
    %967 = vmatpush1.msra.mxu0 0.0
    %968 = vmatprep.subr.mxu0 0.0
    %969 = vmatpush1.msra.mxu0 0.0
    %970 = vmatprep.subr.mxu0 0.0
    %971 = vmatpush1.msra.mxu0 0.0
    %972 = vmatprep.subr.mxu0 0.0
    %973 = vmatpush1.msra.mxu0 0.0
    %974 = vmatprep.subr.mxu0 0.0
    %975 = vmatpush1.msra.mxu0 0.0
    %976 = vmatprep.subr.mxu0 0.0
    %977 = vmatpush1.msra.mxu0 0.0
    %978 = vmatprep.subr.mxu0 0.0
    %979 = vmatpush1.msra.mxu0 0.0
    %980 = vmatprep.mubr.f32.mxu0 0.0
    %981 = vmatmul.mubr.f32.gmra.mrb[0].mxu0 %v204
    %v982 = vpop.f32.mrb[0].mxu0
    %v983 = vadd.f32 %v415, %v982
    %v984 = vpop.f32.mrb[0].mxu0
    %v985 = vadd.f32 %v417, %v984
    %986 = vdwg.mxu0
    %987 = vmatprep.subr.mxu0 %v145
    %988 = vmatpush1.msra.mxu0 %v144
    %989 = vmatprep.subr.mxu0 %v161
    %990 = vmatpush1.msra.mxu0 %v160
    %991 = vmatprep.subr.mxu0 0.0
    %992 = vmatpush1.msra.mxu0 0.0
    %993 = vmatprep.subr.mxu0 0.0
    %994 = vmatpush1.msra.mxu0 0.0
    %995 = vmatprep.subr.mxu0 0.0
    %996 = vmatpush1.msra.mxu0 0.0
    %997 = vmatprep.subr.mxu0 0.0
    %998 = vmatpush1.msra.mxu0 0.0
    %999 = vmatprep.subr.mxu0 0.0
    %1000 = vmatpush1.msra.mxu0 0.0
    %1001 = vmatprep.subr.mxu0 0.0
    %1002 = vmatpush1.msra.mxu0 0.0
    %1003 = vmatprep.subr.mxu0 0.0
    %1004 = vmatpush1.msra.mxu0 0.0
    %1005 = vmatprep.subr.mxu0 0.0
    %1006 = vmatpush1.msra.mxu0 0.0
    %1007 = vmatprep.subr.mxu0 0.0
    %1008 = vmatpush1.msra.mxu0 0.0
    %1009 = vmatprep.subr.mxu0 0.0
    %1010 = vmatpush1.msra.mxu0 0.0
    %1011 = vmatprep.subr.mxu0 0.0
    %1012 = vmatpush1.msra.mxu0 0.0
    %1013 = vmatprep.subr.mxu0 0.0
    %1014 = vmatpush1.msra.mxu0 0.0
    %1015 = vmatprep.subr.mxu0 0.0
    %1016 = vmatpush1.msra.mxu0 0.0
    %1017 = vmatprep.subr.mxu0 0.0
    %1018 = vmatpush1.msra.mxu0 0.0
    %1019 = vmatprep.subr.mxu0 0.0
    %1020 = vmatpush1.msra.mxu0 0.0
    %1021 = vmatprep.subr.mxu0 0.0
    %1022 = vmatpush1.msra.mxu0 0.0
    %1023 = vmatprep.subr.mxu0 0.0
    %1024 = vmatpush1.msra.mxu0 0.0
    %1025 = vmatprep.subr.mxu0 0.0
    %1026 = vmatpush1.msra.mxu0 0.0
    %1027 = vmatprep.subr.mxu0 0.0
    %1028 = vmatpush1.msra.mxu0 0.0
    %1029 = vmatprep.subr.mxu0 0.0
    %1030 = vmatpush1.msra.mxu0 0.0
    %1031 = vmatprep.subr.mxu0 0.0
    %1032 = vmatpush1.msra.mxu0 0.0
    %1033 = vmatprep.subr.mxu0 0.0
    %1034 = vmatpush1.msra.mxu0 0.0
    %1035 = vmatprep.subr.mxu0 0.0
    %1036 = vmatpush1.msra.mxu0 0.0
    %1037 = vmatprep.subr.mxu0 0.0
    %1038 = vmatpush1.msra.mxu0 0.0
    %1039 = vmatprep.subr.mxu0 0.0
    %1040 = vmatpush1.msra.mxu0 0.0
    %1041 = vmatprep.subr.mxu0 0.0
    %1042 = vmatpush1.msra.mxu0 0.0
    %1043 = vmatprep.subr.mxu0 0.0
    %1044 = vmatpush1.msra.mxu0 0.0
    %1045 = vmatprep.subr.mxu0 0.0
    %1046 = vmatpush1.msra.mxu0 0.0
    %1047 = vmatprep.subr.mxu0 0.0
    %1048 = vmatpush1.msra.mxu0 0.0
    %1049 = vmatprep.subr.mxu0 0.0
    %1050 = vmatpush1.msra.mxu0 0.0
    %1051 = vmatprep.mubr.f32.mxu0 0.0
    %1052 = vmatmul.mubr.f32.gmra.mrb[0].mxu0 %v204
    %v1053 = vpop.f32.mrb[0].mxu0
    %v1054 = vadd.f32 %v486, %v1053
    %v1055 = vpop.f32.mrb[0].mxu0
    %v1056 = vadd.f32 %v488, %v1055
    %1057 = vdwg.mxu0
    %1058 = vmatprep.subr.mxu0 %v147
    %1059 = vmatpush1.msra.mxu0 %v146
    %1060 = vmatprep.subr.mxu0 %v163
    %1061 = vmatpush1.msra.mxu0 %v162
    %1062 = vmatprep.subr.mxu0 0.0
    %1063 = vmatpush1.msra.mxu0 0.0
    %1064 = vmatprep.subr.mxu0 0.0
    %1065 = vmatpush1.msra.mxu0 0.0
    %1066 = vmatprep.subr.mxu0 0.0
    %1067 = vmatpush1.msra.mxu0 0.0
    %1068 = vmatprep.subr.mxu0 0.0
    %1069 = vmatpush1.msra.mxu0 0.0
    %1070 = vmatprep.subr.mxu0 0.0
    %1071 = vmatpush1.msra.mxu0 0.0
    %1072 = vmatprep.subr.mxu0 0.0
    %1073 = vmatpush1.msra.mxu0 0.0
    %1074 = vmatprep.subr.mxu0 0.0
    %1075 = vmatpush1.msra.mxu0 0.0
    %1076 = vmatprep.subr.mxu0 0.0
    %1077 = vmatpush1.msra.mxu0 0.0
    %1078 = vmatprep.subr.mxu0 0.0
    %1079 = vmatpush1.msra.mxu0 0.0
    %1080 = vmatprep.subr.mxu0 0.0
    %1081 = vmatpush1.msra.mxu0 0.0
    %1082 = vmatprep.subr.mxu0 0.0
    %1083 = vmatpush1.msra.mxu0 0.0
    %1084 = vmatprep.subr.mxu0 0.0
    %1085 = vmatpush1.msra.mxu0 0.0
    %1086 = vmatprep.subr.mxu0 0.0
    %1087 = vmatpush1.msra.mxu0 0.0
    %1088 = vmatprep.subr.mxu0 0.0
    %1089 = vmatpush1.msra.mxu0 0.0
    %1090 = vmatprep.subr.mxu0 0.0
    %1091 = vmatpush1.msra.mxu0 0.0
    %1092 = vmatprep.subr.mxu0 0.0
    %1093 = vmatpush1.msra.mxu0 0.0
    %1094 = vmatprep.subr.mxu0 0.0
    %1095 = vmatpush1.msra.mxu0 0.0
    %1096 = vmatprep.subr.mxu0 0.0
    %1097 = vmatpush1.msra.mxu0 0.0
    %1098 = vmatprep.subr.mxu0 0.0
    %1099 = vmatpush1.msra.mxu0 0.0
    %1100 = vmatprep.subr.mxu0 0.0
    %1101 = vmatpush1.msra.mxu0 0.0
    %1102 = vmatprep.subr.mxu0 0.0
    %1103 = vmatpush1.msra.mxu0 0.0
    %1104 = vmatprep.subr.mxu0 0.0
    %1105 = vmatpush1.msra.mxu0 0.0
    %1106 = vmatprep.subr.mxu0 0.0
    %1107 = vmatpush1.msra.mxu0 0.0
    %1108 = vmatprep.subr.mxu0 0.0
    %1109 = vmatpush1.msra.mxu0 0.0
    %1110 = vmatprep.subr.mxu0 0.0
    %1111 = vmatpush1.msra.mxu0 0.0
    %1112 = vmatprep.subr.mxu0 0.0
    %1113 = vmatpush1.msra.mxu0 0.0
    %1114 = vmatprep.subr.mxu0 0.0
    %1115 = vmatpush1.msra.mxu0 0.0
    %1116 = vmatprep.subr.mxu0 0.0
    %1117 = vmatpush1.msra.mxu0 0.0
    %1118 = vmatprep.subr.mxu0 0.0
    %1119 = vmatpush1.msra.mxu0 0.0
    %1120 = vmatprep.subr.mxu0 0.0
    %1121 = vmatpush1.msra.mxu0 0.0
    %1122 = vmatprep.mubr.f32.mxu0 0.0
    %1123 = vmatmul.mubr.f32.gmra.mrb[0].mxu0 %v204
    %v1124 = vpop.f32.mrb[0].mxu0
    %v1125 = vadd.f32 %v557, %v1124
    %v1126 = vpop.f32.mrb[0].mxu0
    %v1127 = vadd.f32 %v559, %v1126
    %1128 = vdwg.mxu0
    %1129 = vmatprep.subr.mxu0 %v149
    %1130 = vmatpush1.msra.mxu0 %v148
    %1131 = vmatprep.subr.mxu0 %v165
    %1132 = vmatpush1.msra.mxu0 %v164
    %1133 = vmatprep.subr.mxu0 0.0
    %1134 = vmatpush1.msra.mxu0 0.0
    %1135 = vmatprep.subr.mxu0 0.0
    %1136 = vmatpush1.msra.mxu0 0.0
    %1137 = vmatprep.subr.mxu0 0.0
    %1138 = vmatpush1.msra.mxu0 0.0
    %1139 = vmatprep.subr.mxu0 0.0
    %1140 = vmatpush1.msra.mxu0 0.0
    %1141 = vmatprep.subr.mxu0 0.0
    %1142 = vmatpush1.msra.mxu0 0.0
    %1143 = vmatprep.subr.mxu0 0.0
    %1144 = vmatpush1.msra.mxu0 0.0
    %1145 = vmatprep.subr.mxu0 0.0
    %1146 = vmatpush1.msra.mxu0 0.0
    %1147 = vmatprep.subr.mxu0 0.0
    %1148 = vmatpush1.msra.mxu0 0.0
    %1149 = vmatprep.subr.mxu0 0.0
    %1150 = vmatpush1.msra.mxu0 0.0
    %1151 = vmatprep.subr.mxu0 0.0
    %1152 = vmatpush1.msra.mxu0 0.0
    %1153 = vmatprep.subr.mxu0 0.0
    %1154 = vmatpush1.msra.mxu0 0.0
    %1155 = vmatprep.subr.mxu0 0.0
    %1156 = vmatpush1.msra.mxu0 0.0
    %1157 = vmatprep.subr.mxu0 0.0
    %1158 = vmatpush1.msra.mxu0 0.0
    %1159 = vmatprep.subr.mxu0 0.0
    %1160 = vmatpush1.msra.mxu0 0.0
    %1161 = vmatprep.subr.mxu0 0.0
    %1162 = vmatpush1.msra.mxu0 0.0
    %1163 = vmatprep.subr.mxu0 0.0
    %1164 = vmatpush1.msra.mxu0 0.0
    %1165 = vmatprep.subr.mxu0 0.0
    %1166 = vmatpush1.msra.mxu0 0.0
    %1167 = vmatprep.subr.mxu0 0.0
    %1168 = vmatpush1.msra.mxu0 0.0
    %1169 = vmatprep.subr.mxu0 0.0
    %1170 = vmatpush1.msra.mxu0 0.0
    %1171 = vmatprep.subr.mxu0 0.0
    %1172 = vmatpush1.msra.mxu0 0.0
    %1173 = vmatprep.subr.mxu0 0.0
    %1174 = vmatpush1.msra.mxu0 0.0
    %1175 = vmatprep.subr.mxu0 0.0
    %1176 = vmatpush1.msra.mxu0 0.0
    %1177 = vmatprep.subr.mxu0 0.0
    %1178 = vmatpush1.msra.mxu0 0.0
    %1179 = vmatprep.subr.mxu0 0.0
    %1180 = vmatpush1.msra.mxu0 0.0
    %1181 = vmatprep.subr.mxu0 0.0
    %1182 = vmatpush1.msra.mxu0 0.0
    %1183 = vmatprep.subr.mxu0 0.0
    %1184 = vmatpush1.msra.mxu0 0.0
    %1185 = vmatprep.subr.mxu0 0.0
    %1186 = vmatpush1.msra.mxu0 0.0
    %1187 = vmatprep.subr.mxu0 0.0
    %1188 = vmatpush1.msra.mxu0 0.0
    %1189 = vmatprep.subr.mxu0 0.0
    %1190 = vmatpush1.msra.mxu0 0.0
    %1191 = vmatprep.subr.mxu0 0.0
    %1192 = vmatpush1.msra.mxu0 0.0
    %1193 = vmatprep.mubr.f32.mxu0 0.0
    %1194 = vmatmul.mubr.f32.gmra.mrb[0].mxu0 %v204
    %v1195 = vpop.f32.mrb[0].mxu0
    %v1196 = vadd.f32 %v628, %v1195
    %v1197 = vpop.f32.mrb[0].mxu0
    %v1198 = vadd.f32 %v630, %v1197
    %1199 = vdwg.mxu0
    %1200 = vmatprep.subr.mxu0 %v151
    %1201 = vmatpush1.msra.mxu0 %v150
    %1202 = vmatprep.subr.mxu0 %v167
    %1203 = vmatpush1.msra.mxu0 %v166
    %1204 = vmatprep.subr.mxu0 0.0
    %1205 = vmatpush1.msra.mxu0 0.0
    %1206 = vmatprep.subr.mxu0 0.0
    %1207 = vmatpush1.msra.mxu0 0.0
    %1208 = vmatprep.subr.mxu0 0.0
    %1209 = vmatpush1.msra.mxu0 0.0
    %1210 = vmatprep.subr.mxu0 0.0
    %1211 = vmatpush1.msra.mxu0 0.0
    %1212 = vmatprep.subr.mxu0 0.0
    %1213 = vmatpush1.msra.mxu0 0.0
    %1214 = vmatprep.subr.mxu0 0.0
    %1215 = vmatpush1.msra.mxu0 0.0
    %1216 = vmatprep.subr.mxu0 0.0
    %1217 = vmatpush1.msra.mxu0 0.0
    %1218 = vmatprep.subr.mxu0 0.0
    %1219 = vmatpush1.msra.mxu0 0.0
    %1220 = vmatprep.subr.mxu0 0.0
    %1221 = vmatpush1.msra.mxu0 0.0
    %1222 = vmatprep.subr.mxu0 0.0
    %1223 = vmatpush1.msra.mxu0 0.0
    %1224 = vmatprep.subr.mxu0 0.0
    %1225 = vmatpush1.msra.mxu0 0.0
    %1226 = vmatprep.subr.mxu0 0.0
    %1227 = vmatpush1.msra.mxu0 0.0
    %1228 = vmatprep.subr.mxu0 0.0
    %1229 = vmatpush1.msra.mxu0 0.0
    %1230 = vmatprep.subr.mxu0 0.0
    %1231 = vmatpush1.msra.mxu0 0.0
    %1232 = vmatprep.subr.mxu0 0.0
    %1233 = vmatpush1.msra.mxu0 0.0
    %1234 = vmatprep.subr.mxu0 0.0
    %1235 = vmatpush1.msra.mxu0 0.0
    %1236 = vmatprep.subr.mxu0 0.0
    %1237 = vmatpush1.msra.mxu0 0.0
    %1238 = vmatprep.subr.mxu0 0.0
    %1239 = vmatpush1.msra.mxu0 0.0
    %1240 = vmatprep.subr.mxu0 0.0
    %1241 = vmatpush1.msra.mxu0 0.0
    %1242 = vmatprep.subr.mxu0 0.0
    %1243 = vmatpush1.msra.mxu0 0.0
    %1244 = vmatprep.subr.mxu0 0.0
    %1245 = vmatpush1.msra.mxu0 0.0
    %1246 = vmatprep.subr.mxu0 0.0
    %1247 = vmatpush1.msra.mxu0 0.0
    %1248 = vmatprep.subr.mxu0 0.0
    %1249 = vmatpush1.msra.mxu0 0.0
    %1250 = vmatprep.subr.mxu0 0.0
    %1251 = vmatpush1.msra.mxu0 0.0
    %1252 = vmatprep.subr.mxu0 0.0
    %1253 = vmatpush1.msra.mxu0 0.0
    %1254 = vmatprep.subr.mxu0 0.0
    %1255 = vmatpush1.msra.mxu0 0.0
    %1256 = vmatprep.subr.mxu0 0.0
    %1257 = vmatpush1.msra.mxu0 0.0
    %1258 = vmatprep.subr.mxu0 0.0
    %1259 = vmatpush1.msra.mxu0 0.0
    %1260 = vmatprep.subr.mxu0 0.0
    %1261 = vmatpush1.msra.mxu0 0.0
    %1262 = vmatprep.subr.mxu0 0.0
    %1263 = vmatpush1.msra.mxu0 0.0
    %1264 = vmatprep.mubr.f32.mxu0 0.0
    %1265 = vmatmul.mubr.f32.gmra.mrb[0].mxu0 %v204
    %v1266 = vpop.f32.mrb[0].mxu0
    %v1267 = vadd.f32 %v699, %v1266
    %v1268 = vpop.f32.mrb[0].mxu0
    %v1269 = vadd.f32 %v701, %v1268
    %1270 = vdwg.mxu0
    %1271 = vmatprep.subr.mxu0 %v153
    %1272 = vmatpush1.msra.mxu0 %v152
    %1273 = vmatprep.subr.mxu0 %v169
    %1274 = vmatpush1.msra.mxu0 %v168
    %1275 = vmatprep.subr.mxu0 0.0
    %1276 = vmatpush1.msra.mxu0 0.0
    %1277 = vmatprep.subr.mxu0 0.0
    %1278 = vmatpush1.msra.mxu0 0.0
    %1279 = vmatprep.subr.mxu0 0.0
    %1280 = vmatpush1.msra.mxu0 0.0
    %1281 = vmatprep.subr.mxu0 0.0
    %1282 = vmatpush1.msra.mxu0 0.0
    %1283 = vmatprep.subr.mxu0 0.0
    %1284 = vmatpush1.msra.mxu0 0.0
    %1285 = vmatprep.subr.mxu0 0.0
    %1286 = vmatpush1.msra.mxu0 0.0
    %1287 = vmatprep.subr.mxu0 0.0
    %1288 = vmatpush1.msra.mxu0 0.0
    %1289 = vmatprep.subr.mxu0 0.0
    %1290 = vmatpush1.msra.mxu0 0.0
    %1291 = vmatprep.subr.mxu0 0.0
    %1292 = vmatpush1.msra.mxu0 0.0
    %1293 = vmatprep.subr.mxu0 0.0
    %1294 = vmatpush1.msra.mxu0 0.0
    %1295 = vmatprep.subr.mxu0 0.0
    %1296 = vmatpush1.msra.mxu0 0.0
    %1297 = vmatprep.subr.mxu0 0.0
    %1298 = vmatpush1.msra.mxu0 0.0
    %1299 = vmatprep.subr.mxu0 0.0
    %1300 = vmatpush1.msra.mxu0 0.0
    %1301 = vmatprep.subr.mxu0 0.0
    %1302 = vmatpush1.msra.mxu0 0.0
    %1303 = vmatprep.subr.mxu0 0.0
    %1304 = vmatpush1.msra.mxu0 0.0
    %1305 = vmatprep.subr.mxu0 0.0
    %1306 = vmatpush1.msra.mxu0 0.0
    %1307 = vmatprep.subr.mxu0 0.0
    %1308 = vmatpush1.msra.mxu0 0.0
    %1309 = vmatprep.subr.mxu0 0.0
    %1310 = vmatpush1.msra.mxu0 0.0
    %1311 = vmatprep.subr.mxu0 0.0
    %1312 = vmatpush1.msra.mxu0 0.0
    %1313 = vmatprep.subr.mxu0 0.0
    %1314 = vmatpush1.msra.mxu0 0.0
    %1315 = vmatprep.subr.mxu0 0.0
    %1316 = vmatpush1.msra.mxu0 0.0
    %1317 = vmatprep.subr.mxu0 0.0
    %1318 = vmatpush1.msra.mxu0 0.0
    %1319 = vmatprep.subr.mxu0 0.0
    %1320 = vmatpush1.msra.mxu0 0.0
    %1321 = vmatprep.subr.mxu0 0.0
    %1322 = vmatpush1.msra.mxu0 0.0
    %1323 = vmatprep.subr.mxu0 0.0
    %1324 = vmatpush1.msra.mxu0 0.0
    %1325 = vmatprep.subr.mxu0 0.0
    %1326 = vmatpush1.msra.mxu0 0.0
    %1327 = vmatprep.subr.mxu0 0.0
    %1328 = vmatpush1.msra.mxu0 0.0
    %1329 = vmatprep.subr.mxu0 0.0
    %1330 = vmatpush1.msra.mxu0 0.0
    %1331 = vmatprep.subr.mxu0 0.0
    %1332 = vmatpush1.msra.mxu0 0.0
    %1333 = vmatprep.subr.mxu0 0.0
    %1334 = vmatpush1.msra.mxu0 0.0
    %1335 = vmatprep.mubr.f32.mxu0 0.0
    %1336 = vmatmul.mubr.f32.gmra.mrb[0].mxu0 %v204
    %v1337 = vpop.f32.mrb[0].mxu0
    %v1338 = vadd.f32 %v770, %v1337
    %v1339 = vpop.f32.mrb[0].mxu0
    %v1340 = vadd.f32 %v772, %v1339
    %1341 = vdwg.mxu0
    %v1343 = vsel %vm202, %v121, 0
    %1345 = vmatprep.subr.mxu0 %v55
    %1346 = vmatpush1.msra.mxu0 %v54
    %1347 = vmatprep.subr.mxu0 %v71
    %1348 = vmatpush1.msra.mxu0 %v70
    %1349 = vmatprep.subr.mxu0 0.0
    %1350 = vmatpush1.msra.mxu0 0.0
    %1351 = vmatprep.subr.mxu0 0.0
    %1352 = vmatpush1.msra.mxu0 0.0
    %1353 = vmatprep.subr.mxu0 0.0
    %1354 = vmatpush1.msra.mxu0 0.0
    %1355 = vmatprep.subr.mxu0 0.0
    %1356 = vmatpush1.msra.mxu0 0.0
    %1357 = vmatprep.subr.mxu0 0.0
    %1358 = vmatpush1.msra.mxu0 0.0
    %1359 = vmatprep.subr.mxu0 0.0
    %1360 = vmatpush1.msra.mxu0 0.0
    %1361 = vmatprep.subr.mxu0 0.0
    %1362 = vmatpush1.msra.mxu0 0.0
    %1363 = vmatprep.subr.mxu0 0.0
    %1364 = vmatpush1.msra.mxu0 0.0
    %1365 = vmatprep.subr.mxu0 0.0
    %1366 = vmatpush1.msra.mxu0 0.0
    %1367 = vmatprep.subr.mxu0 0.0
    %1368 = vmatpush1.msra.mxu0 0.0
    %1369 = vmatprep.subr.mxu0 0.0
    %1370 = vmatpush1.msra.mxu0 0.0
    %1371 = vmatprep.subr.mxu0 0.0
    %1372 = vmatpush1.msra.mxu0 0.0
    %1373 = vmatprep.subr.mxu0 0.0
    %1374 = vmatpush1.msra.mxu0 0.0
    %1375 = vmatprep.subr.mxu0 0.0
    %1376 = vmatpush1.msra.mxu0 0.0
    %1377 = vmatprep.subr.mxu0 0.0
    %1378 = vmatpush1.msra.mxu0 0.0
    %1379 = vmatprep.subr.mxu0 0.0
    %1380 = vmatpush1.msra.mxu0 0.0
    %1381 = vmatprep.subr.mxu0 0.0
    %1382 = vmatpush1.msra.mxu0 0.0
    %1383 = vmatprep.subr.mxu0 0.0
    %1384 = vmatpush1.msra.mxu0 0.0
    %1385 = vmatprep.subr.mxu0 0.0
    %1386 = vmatpush1.msra.mxu0 0.0
    %1387 = vmatprep.subr.mxu0 0.0
    %1388 = vmatpush1.msra.mxu0 0.0
    %1389 = vmatprep.subr.mxu0 0.0
    %1390 = vmatpush1.msra.mxu0 0.0
    %1391 = vmatprep.subr.mxu0 0.0
    %1392 = vmatpush1.msra.mxu0 0.0
    %1393 = vmatprep.subr.mxu0 0.0
    %1394 = vmatpush1.msra.mxu0 0.0
    %1395 = vmatprep.subr.mxu0 0.0
    %1396 = vmatpush1.msra.mxu0 0.0
    %1397 = vmatprep.subr.mxu0 0.0
    %1398 = vmatpush1.msra.mxu0 0.0
    %1399 = vmatprep.subr.mxu0 0.0
    %1400 = vmatpush1.msra.mxu0 0.0
    %1401 = vmatprep.subr.mxu0 0.0
    %1402 = vmatpush1.msra.mxu0 0.0
    %1403 = vmatprep.subr.mxu0 0.0
    %1404 = vmatpush1.msra.mxu0 0.0
    %1405 = vmatprep.subr.mxu0 0.0
    %1406 = vmatpush1.msra.mxu0 0.0
    %1407 = vmatprep.subr.mxu0 0.0
    %1408 = vmatpush1.msra.mxu0 0.0
    %1409 = vmatprep.mubr.f32.mxu0 0.0
    %1410 = vmatmul.mubr.f32.gmra.mrb[0].mxu0 %v1343
    %v1411 = vpop.f32.mrb[0].mxu0
    %v1412 = vadd.f32 0.0, %v1411
    %v1413 = vpop.f32.mrb[0].mxu0
    %v1414 = vadd.f32 0.0, %v1413
    %1415 = vdwg.mxu0
    %1416 = vmatprep.subr.mxu0 %v57
    %1417 = vmatpush1.msra.mxu0 %v56
    %1418 = vmatprep.subr.mxu0 %v73
    %1419 = vmatpush1.msra.mxu0 %v72
    %1420 = vmatprep.subr.mxu0 0.0
    %1421 = vmatpush1.msra.mxu0 0.0
    %1422 = vmatprep.subr.mxu0 0.0
    %1423 = vmatpush1.msra.mxu0 0.0
    %1424 = vmatprep.subr.mxu0 0.0
    %1425 = vmatpush1.msra.mxu0 0.0
    %1426 = vmatprep.subr.mxu0 0.0
    %1427 = vmatpush1.msra.mxu0 0.0
    %1428 = vmatprep.subr.mxu0 0.0
    %1429 = vmatpush1.msra.mxu0 0.0
    %1430 = vmatprep.subr.mxu0 0.0
    %1431 = vmatpush1.msra.mxu0 0.0
    %1432 = vmatprep.subr.mxu0 0.0
    %1433 = vmatpush1.msra.mxu0 0.0
    %1434 = vmatprep.subr.mxu0 0.0
    %1435 = vmatpush1.msra.mxu0 0.0
    %1436 = vmatprep.subr.mxu0 0.0
    %1437 = vmatpush1.msra.mxu0 0.0
    %1438 = vmatprep.subr.mxu0 0.0
    %1439 = vmatpush1.msra.mxu0 0.0
    %1440 = vmatprep.subr.mxu0 0.0
    %1441 = vmatpush1.msra.mxu0 0.0
    %1442 = vmatprep.subr.mxu0 0.0
    %1443 = vmatpush1.msra.mxu0 0.0
    %1444 = vmatprep.subr.mxu0 0.0
    %1445 = vmatpush1.msra.mxu0 0.0
    %1446 = vmatprep.subr.mxu0 0.0
    %1447 = vmatpush1.msra.mxu0 0.0
    %1448 = vmatprep.subr.mxu0 0.0
    %1449 = vmatpush1.msra.mxu0 0.0
    %1450 = vmatprep.subr.mxu0 0.0
    %1451 = vmatpush1.msra.mxu0 0.0
    %1452 = vmatprep.subr.mxu0 0.0
    %1453 = vmatpush1.msra.mxu0 0.0
    %1454 = vmatprep.subr.mxu0 0.0
    %1455 = vmatpush1.msra.mxu0 0.0
    %1456 = vmatprep.subr.mxu0 0.0
    %1457 = vmatpush1.msra.mxu0 0.0
    %1458 = vmatprep.subr.mxu0 0.0
    %1459 = vmatpush1.msra.mxu0 0.0
    %1460 = vmatprep.subr.mxu0 0.0
    %1461 = vmatpush1.msra.mxu0 0.0
    %1462 = vmatprep.subr.mxu0 0.0
    %1463 = vmatpush1.msra.mxu0 0.0
    %1464 = vmatprep.subr.mxu0 0.0
    %1465 = vmatpush1.msra.mxu0 0.0
    %1466 = vmatprep.subr.mxu0 0.0
    %1467 = vmatpush1.msra.mxu0 0.0
    %1468 = vmatprep.subr.mxu0 0.0
    %1469 = vmatpush1.msra.mxu0 0.0
    %1470 = vmatprep.subr.mxu0 0.0
    %1471 = vmatpush1.msra.mxu0 0.0
    %1472 = vmatprep.subr.mxu0 0.0
    %1473 = vmatpush1.msra.mxu0 0.0
    %1474 = vmatprep.subr.mxu0 0.0
    %1475 = vmatpush1.msra.mxu0 0.0
    %1476 = vmatprep.subr.mxu0 0.0
    %1477 = vmatpush1.msra.mxu0 0.0
    %1478 = vmatprep.subr.mxu0 0.0
    %1479 = vmatpush1.msra.mxu0 0.0
    %1480 = vmatprep.mubr.f32.mxu0 0.0
    %1481 = vmatmul.mubr.f32.gmra.mrb[0].mxu0 %v1343
    %v1482 = vpop.f32.mrb[0].mxu0
    %v1483 = vadd.f32 0.0, %v1482
    %v1484 = vpop.f32.mrb[0].mxu0
    %v1485 = vadd.f32 0.0, %v1484
    %1486 = vdwg.mxu0
    %1487 = vmatprep.subr.mxu0 %v59
    %1488 = vmatpush1.msra.mxu0 %v58
    %1489 = vmatprep.subr.mxu0 %v75
    %1490 = vmatpush1.msra.mxu0 %v74
    %1491 = vmatprep.subr.mxu0 0.0
    %1492 = vmatpush1.msra.mxu0 0.0
    %1493 = vmatprep.subr.mxu0 0.0
    %1494 = vmatpush1.msra.mxu0 0.0
    %1495 = vmatprep.subr.mxu0 0.0
    %1496 = vmatpush1.msra.mxu0 0.0
    %1497 = vmatprep.subr.mxu0 0.0
    %1498 = vmatpush1.msra.mxu0 0.0
    %1499 = vmatprep.subr.mxu0 0.0
    %1500 = vmatpush1.msra.mxu0 0.0
    %1501 = vmatprep.subr.mxu0 0.0
    %1502 = vmatpush1.msra.mxu0 0.0
    %1503 = vmatprep.subr.mxu0 0.0
    %1504 = vmatpush1.msra.mxu0 0.0
    %1505 = vmatprep.subr.mxu0 0.0
    %1506 = vmatpush1.msra.mxu0 0.0
    %1507 = vmatprep.subr.mxu0 0.0
    %1508 = vmatpush1.msra.mxu0 0.0
    %1509 = vmatprep.subr.mxu0 0.0
    %1510 = vmatpush1.msra.mxu0 0.0
    %1511 = vmatprep.subr.mxu0 0.0
    %1512 = vmatpush1.msra.mxu0 0.0
    %1513 = vmatprep.subr.mxu0 0.0
    %1514 = vmatpush1.msra.mxu0 0.0
    %1515 = vmatprep.subr.mxu0 0.0
    %1516 = vmatpush1.msra.mxu0 0.0
    %1517 = vmatprep.subr.mxu0 0.0
    %1518 = vmatpush1.msra.mxu0 0.0
    %1519 = vmatprep.subr.mxu0 0.0
    %1520 = vmatpush1.msra.mxu0 0.0
    %1521 = vmatprep.subr.mxu0 0.0
    %1522 = vmatpush1.msra.mxu0 0.0
    %1523 = vmatprep.subr.mxu0 0.0
    %1524 = vmatpush1.msra.mxu0 0.0
    %1525 = vmatprep.subr.mxu0 0.0
    %1526 = vmatpush1.msra.mxu0 0.0
    %1527 = vmatprep.subr.mxu0 0.0
    %1528 = vmatpush1.msra.mxu0 0.0
    %1529 = vmatprep.subr.mxu0 0.0
    %1530 = vmatpush1.msra.mxu0 0.0
    %1531 = vmatprep.subr.mxu0 0.0
    %1532 = vmatpush1.msra.mxu0 0.0
    %1533 = vmatprep.subr.mxu0 0.0
    %1534 = vmatpush1.msra.mxu0 0.0
    %1535 = vmatprep.subr.mxu0 0.0
    %1536 = vmatpush1.msra.mxu0 0.0
    %1537 = vmatprep.subr.mxu0 0.0
    %1538 = vmatpush1.msra.mxu0 0.0
    %1539 = vmatprep.subr.mxu0 0.0
    %1540 = vmatpush1.msra.mxu0 0.0
    %1541 = vmatprep.subr.mxu0 0.0
    %1542 = vmatpush1.msra.mxu0 0.0
    %1543 = vmatprep.subr.mxu0 0.0
    %1544 = vmatpush1.msra.mxu0 0.0
    %1545 = vmatprep.subr.mxu0 0.0
    %1546 = vmatpush1.msra.mxu0 0.0
    %1547 = vmatprep.subr.mxu0 0.0
    %1548 = vmatpush1.msra.mxu0 0.0
    %1549 = vmatprep.subr.mxu0 0.0
    %1550 = vmatpush1.msra.mxu0 0.0
    %1551 = vmatprep.mubr.f32.mxu0 0.0
    %1552 = vmatmul.mubr.f32.gmra.mrb[0].mxu0 %v1343
    %v1553 = vpop.f32.mrb[0].mxu0
    %v1554 = vadd.f32 0.0, %v1553
    %v1555 = vpop.f32.mrb[0].mxu0
    %v1556 = vadd.f32 0.0, %v1555
    %1557 = vdwg.mxu0
    %1558 = vmatprep.subr.mxu0 %v61
    %1559 = vmatpush1.msra.mxu0 %v60
    %1560 = vmatprep.subr.mxu0 %v77
    %1561 = vmatpush1.msra.mxu0 %v76
    %1562 = vmatprep.subr.mxu0 0.0
    %1563 = vmatpush1.msra.mxu0 0.0
    %1564 = vmatprep.subr.mxu0 0.0
    %1565 = vmatpush1.msra.mxu0 0.0
    %1566 = vmatprep.subr.mxu0 0.0
    %1567 = vmatpush1.msra.mxu0 0.0
    %1568 = vmatprep.subr.mxu0 0.0
    %1569 = vmatpush1.msra.mxu0 0.0
    %1570 = vmatprep.subr.mxu0 0.0
    %1571 = vmatpush1.msra.mxu0 0.0
    %1572 = vmatprep.subr.mxu0 0.0
    %1573 = vmatpush1.msra.mxu0 0.0
    %1574 = vmatprep.subr.mxu0 0.0
    %1575 = vmatpush1.msra.mxu0 0.0
    %1576 = vmatprep.subr.mxu0 0.0
    %1577 = vmatpush1.msra.mxu0 0.0
    %1578 = vmatprep.subr.mxu0 0.0
    %1579 = vmatpush1.msra.mxu0 0.0
    %1580 = vmatprep.subr.mxu0 0.0
    %1581 = vmatpush1.msra.mxu0 0.0
    %1582 = vmatprep.subr.mxu0 0.0
    %1583 = vmatpush1.msra.mxu0 0.0
    %1584 = vmatprep.subr.mxu0 0.0
    %1585 = vmatpush1.msra.mxu0 0.0
    %1586 = vmatprep.subr.mxu0 0.0
    %1587 = vmatpush1.msra.mxu0 0.0
    %1588 = vmatprep.subr.mxu0 0.0
    %1589 = vmatpush1.msra.mxu0 0.0
    %1590 = vmatprep.subr.mxu0 0.0
    %1591 = vmatpush1.msra.mxu0 0.0
    %1592 = vmatprep.subr.mxu0 0.0
    %1593 = vmatpush1.msra.mxu0 0.0
    %1594 = vmatprep.subr.mxu0 0.0
    %1595 = vmatpush1.msra.mxu0 0.0
    %1596 = vmatprep.subr.mxu0 0.0
    %1597 = vmatpush1.msra.mxu0 0.0
    %1598 = vmatprep.subr.mxu0 0.0
    %1599 = vmatpush1.msra.mxu0 0.0
    %1600 = vmatprep.subr.mxu0 0.0
    %1601 = vmatpush1.msra.mxu0 0.0
    %1602 = vmatprep.subr.mxu0 0.0
    %1603 = vmatpush1.msra.mxu0 0.0
    %1604 = vmatprep.subr.mxu0 0.0
    %1605 = vmatpush1.msra.mxu0 0.0
    %1606 = vmatprep.subr.mxu0 0.0
    %1607 = vmatpush1.msra.mxu0 0.0
    %1608 = vmatprep.subr.mxu0 0.0
    %1609 = vmatpush1.msra.mxu0 0.0
    %1610 = vmatprep.subr.mxu0 0.0
    %1611 = vmatpush1.msra.mxu0 0.0
    %1612 = vmatprep.subr.mxu0 0.0
    %1613 = vmatpush1.msra.mxu0 0.0
    %1614 = vmatprep.subr.mxu0 0.0
    %1615 = vmatpush1.msra.mxu0 0.0
    %1616 = vmatprep.subr.mxu0 0.0
    %1617 = vmatpush1.msra.mxu0 0.0
    %1618 = vmatprep.subr.mxu0 0.0
    %1619 = vmatpush1.msra.mxu0 0.0
    %1620 = vmatprep.subr.mxu0 0.0
    %1621 = vmatpush1.msra.mxu0 0.0
    %1622 = vmatprep.mubr.f32.mxu0 0.0
    %1623 = vmatmul.mubr.f32.gmra.mrb[0].mxu0 %v1343
    %v1624 = vpop.f32.mrb[0].mxu0
    %v1625 = vadd.f32 0.0, %v1624
    %v1626 = vpop.f32.mrb[0].mxu0
    %v1627 = vadd.f32 0.0, %v1626
    %1628 = vdwg.mxu0
    %1629 = vmatprep.subr.mxu0 %v63
    %1630 = vmatpush1.msra.mxu0 %v62
    %1631 = vmatprep.subr.mxu0 %v79
    %1632 = vmatpush1.msra.mxu0 %v78
    %1633 = vmatprep.subr.mxu0 0.0
    %1634 = vmatpush1.msra.mxu0 0.0
    %1635 = vmatprep.subr.mxu0 0.0
    %1636 = vmatpush1.msra.mxu0 0.0
    %1637 = vmatprep.subr.mxu0 0.0
    %1638 = vmatpush1.msra.mxu0 0.0
    %1639 = vmatprep.subr.mxu0 0.0
    %1640 = vmatpush1.msra.mxu0 0.0
    %1641 = vmatprep.subr.mxu0 0.0
    %1642 = vmatpush1.msra.mxu0 0.0
    %1643 = vmatprep.subr.mxu0 0.0
    %1644 = vmatpush1.msra.mxu0 0.0
    %1645 = vmatprep.subr.mxu0 0.0
    %1646 = vmatpush1.msra.mxu0 0.0
    %1647 = vmatprep.subr.mxu0 0.0
    %1648 = vmatpush1.msra.mxu0 0.0
    %1649 = vmatprep.subr.mxu0 0.0
    %1650 = vmatpush1.msra.mxu0 0.0
    %1651 = vmatprep.subr.mxu0 0.0
    %1652 = vmatpush1.msra.mxu0 0.0
    %1653 = vmatprep.subr.mxu0 0.0
    %1654 = vmatpush1.msra.mxu0 0.0
    %1655 = vmatprep.subr.mxu0 0.0
    %1656 = vmatpush1.msra.mxu0 0.0
    %1657 = vmatprep.subr.mxu0 0.0
    %1658 = vmatpush1.msra.mxu0 0.0
    %1659 = vmatprep.subr.mxu0 0.0
    %1660 = vmatpush1.msra.mxu0 0.0
    %1661 = vmatprep.subr.mxu0 0.0
    %1662 = vmatpush1.msra.mxu0 0.0
    %1663 = vmatprep.subr.mxu0 0.0
    %1664 = vmatpush1.msra.mxu0 0.0
    %1665 = vmatprep.subr.mxu0 0.0
    %1666 = vmatpush1.msra.mxu0 0.0
    %1667 = vmatprep.subr.mxu0 0.0
    %1668 = vmatpush1.msra.mxu0 0.0
    %1669 = vmatprep.subr.mxu0 0.0
    %1670 = vmatpush1.msra.mxu0 0.0
    %1671 = vmatprep.subr.mxu0 0.0
    %1672 = vmatpush1.msra.mxu0 0.0
    %1673 = vmatprep.subr.mxu0 0.0
    %1674 = vmatpush1.msra.mxu0 0.0
    %1675 = vmatprep.subr.mxu0 0.0
    %1676 = vmatpush1.msra.mxu0 0.0
    %1677 = vmatprep.subr.mxu0 0.0
    %1678 = vmatpush1.msra.mxu0 0.0
    %1679 = vmatprep.subr.mxu0 0.0
    %1680 = vmatpush1.msra.mxu0 0.0
    %1681 = vmatprep.subr.mxu0 0.0
    %1682 = vmatpush1.msra.mxu0 0.0
    %1683 = vmatprep.subr.mxu0 0.0
    %1684 = vmatpush1.msra.mxu0 0.0
    %1685 = vmatprep.subr.mxu0 0.0
    %1686 = vmatpush1.msra.mxu0 0.0
    %1687 = vmatprep.subr.mxu0 0.0
    %1688 = vmatpush1.msra.mxu0 0.0
    %1689 = vmatprep.subr.mxu0 0.0
    %1690 = vmatpush1.msra.mxu0 0.0
    %1691 = vmatprep.subr.mxu0 0.0
    %1692 = vmatpush1.msra.mxu0 0.0
    %1693 = vmatprep.mubr.f32.mxu0 0.0
    %1694 = vmatmul.mubr.f32.gmra.mrb[0].mxu0 %v1343
    %v1695 = vpop.f32.mrb[0].mxu0
    %v1696 = vadd.f32 0.0, %v1695
    %v1697 = vpop.f32.mrb[0].mxu0
    %v1698 = vadd.f32 0.0, %v1697
    %1699 = vdwg.mxu0
    %1700 = vmatprep.subr.mxu0 %v65
    %1701 = vmatpush1.msra.mxu0 %v64
    %1702 = vmatprep.subr.mxu0 %v81
    %1703 = vmatpush1.msra.mxu0 %v80
    %1704 = vmatprep.subr.mxu0 0.0
    %1705 = vmatpush1.msra.mxu0 0.0
    %1706 = vmatprep.subr.mxu0 0.0
    %1707 = vmatpush1.msra.mxu0 0.0
    %1708 = vmatprep.subr.mxu0 0.0
    %1709 = vmatpush1.msra.mxu0 0.0
    %1710 = vmatprep.subr.mxu0 0.0
    %1711 = vmatpush1.msra.mxu0 0.0
    %1712 = vmatprep.subr.mxu0 0.0
    %1713 = vmatpush1.msra.mxu0 0.0
    %1714 = vmatprep.subr.mxu0 0.0
    %1715 = vmatpush1.msra.mxu0 0.0
    %1716 = vmatprep.subr.mxu0 0.0
    %1717 = vmatpush1.msra.mxu0 0.0
    %1718 = vmatprep.subr.mxu0 0.0
    %1719 = vmatpush1.msra.mxu0 0.0
    %1720 = vmatprep.subr.mxu0 0.0
    %1721 = vmatpush1.msra.mxu0 0.0
    %1722 = vmatprep.subr.mxu0 0.0
    %1723 = vmatpush1.msra.mxu0 0.0
    %1724 = vmatprep.subr.mxu0 0.0
    %1725 = vmatpush1.msra.mxu0 0.0
    %1726 = vmatprep.subr.mxu0 0.0
    %1727 = vmatpush1.msra.mxu0 0.0
    %1728 = vmatprep.subr.mxu0 0.0
    %1729 = vmatpush1.msra.mxu0 0.0
    %1730 = vmatprep.subr.mxu0 0.0
    %1731 = vmatpush1.msra.mxu0 0.0
    %1732 = vmatprep.subr.mxu0 0.0
    %1733 = vmatpush1.msra.mxu0 0.0
    %1734 = vmatprep.subr.mxu0 0.0
    %1735 = vmatpush1.msra.mxu0 0.0
    %1736 = vmatprep.subr.mxu0 0.0
    %1737 = vmatpush1.msra.mxu0 0.0
    %1738 = vmatprep.subr.mxu0 0.0
    %1739 = vmatpush1.msra.mxu0 0.0
    %1740 = vmatprep.subr.mxu0 0.0
    %1741 = vmatpush1.msra.mxu0 0.0
    %1742 = vmatprep.subr.mxu0 0.0
    %1743 = vmatpush1.msra.mxu0 0.0
    %1744 = vmatprep.subr.mxu0 0.0
    %1745 = vmatpush1.msra.mxu0 0.0
    %1746 = vmatprep.subr.mxu0 0.0
    %1747 = vmatpush1.msra.mxu0 0.0
    %1748 = vmatprep.subr.mxu0 0.0
    %1749 = vmatpush1.msra.mxu0 0.0
    %1750 = vmatprep.subr.mxu0 0.0
    %1751 = vmatpush1.msra.mxu0 0.0
    %1752 = vmatprep.subr.mxu0 0.0
    %1753 = vmatpush1.msra.mxu0 0.0
    %1754 = vmatprep.subr.mxu0 0.0
    %1755 = vmatpush1.msra.mxu0 0.0
    %1756 = vmatprep.subr.mxu0 0.0
    %1757 = vmatpush1.msra.mxu0 0.0
    %1758 = vmatprep.subr.mxu0 0.0
    %1759 = vmatpush1.msra.mxu0 0.0
    %1760 = vmatprep.subr.mxu0 0.0
    %1761 = vmatpush1.msra.mxu0 0.0
    %1762 = vmatprep.subr.mxu0 0.0
    %1763 = vmatpush1.msra.mxu0 0.0
    %1764 = vmatprep.mubr.f32.mxu0 0.0
    %1765 = vmatmul.mubr.f32.gmra.mrb[0].mxu0 %v1343
    %v1766 = vpop.f32.mrb[0].mxu0
    %v1767 = vadd.f32 0.0, %v1766
    %v1768 = vpop.f32.mrb[0].mxu0
    %v1769 = vadd.f32 0.0, %v1768
    %1770 = vdwg.mxu0
    %1771 = vmatprep.subr.mxu0 %v67
    %1772 = vmatpush1.msra.mxu0 %v66
    %1773 = vmatprep.subr.mxu0 %v83
    %1774 = vmatpush1.msra.mxu0 %v82
    %1775 = vmatprep.subr.mxu0 0.0
    %1776 = vmatpush1.msra.mxu0 0.0
    %1777 = vmatprep.subr.mxu0 0.0
    %1778 = vmatpush1.msra.mxu0 0.0
    %1779 = vmatprep.subr.mxu0 0.0
    %1780 = vmatpush1.msra.mxu0 0.0
    %1781 = vmatprep.subr.mxu0 0.0
    %1782 = vmatpush1.msra.mxu0 0.0
    %1783 = vmatprep.subr.mxu0 0.0
    %1784 = vmatpush1.msra.mxu0 0.0
    %1785 = vmatprep.subr.mxu0 0.0
    %1786 = vmatpush1.msra.mxu0 0.0
    %1787 = vmatprep.subr.mxu0 0.0
    %1788 = vmatpush1.msra.mxu0 0.0
    %1789 = vmatprep.subr.mxu0 0.0
    %1790 = vmatpush1.msra.mxu0 0.0
    %1791 = vmatprep.subr.mxu0 0.0
    %1792 = vmatpush1.msra.mxu0 0.0
    %1793 = vmatprep.subr.mxu0 0.0
    %1794 = vmatpush1.msra.mxu0 0.0
    %1795 = vmatprep.subr.mxu0 0.0
    %1796 = vmatpush1.msra.mxu0 0.0
    %1797 = vmatprep.subr.mxu0 0.0
    %1798 = vmatpush1.msra.mxu0 0.0
    %1799 = vmatprep.subr.mxu0 0.0
    %1800 = vmatpush1.msra.mxu0 0.0
    %1801 = vmatprep.subr.mxu0 0.0
    %1802 = vmatpush1.msra.mxu0 0.0
    %1803 = vmatprep.subr.mxu0 0.0
    %1804 = vmatpush1.msra.mxu0 0.0
    %1805 = vmatprep.subr.mxu0 0.0
    %1806 = vmatpush1.msra.mxu0 0.0
    %1807 = vmatprep.subr.mxu0 0.0
    %1808 = vmatpush1.msra.mxu0 0.0
    %1809 = vmatprep.subr.mxu0 0.0
    %1810 = vmatpush1.msra.mxu0 0.0
    %1811 = vmatprep.subr.mxu0 0.0
    %1812 = vmatpush1.msra.mxu0 0.0
    %1813 = vmatprep.subr.mxu0 0.0
    %1814 = vmatpush1.msra.mxu0 0.0
    %1815 = vmatprep.subr.mxu0 0.0
    %1816 = vmatpush1.msra.mxu0 0.0
    %1817 = vmatprep.subr.mxu0 0.0
    %1818 = vmatpush1.msra.mxu0 0.0
    %1819 = vmatprep.subr.mxu0 0.0
    %1820 = vmatpush1.msra.mxu0 0.0
    %1821 = vmatprep.subr.mxu0 0.0
    %1822 = vmatpush1.msra.mxu0 0.0
    %1823 = vmatprep.subr.mxu0 0.0
    %1824 = vmatpush1.msra.mxu0 0.0
    %1825 = vmatprep.subr.mxu0 0.0
    %1826 = vmatpush1.msra.mxu0 0.0
    %1827 = vmatprep.subr.mxu0 0.0
    %1828 = vmatpush1.msra.mxu0 0.0
    %1829 = vmatprep.subr.mxu0 0.0
    %1830 = vmatpush1.msra.mxu0 0.0
    %1831 = vmatprep.subr.mxu0 0.0
    %1832 = vmatpush1.msra.mxu0 0.0
    %1833 = vmatprep.subr.mxu0 0.0
    %1834 = vmatpush1.msra.mxu0 0.0
    %1835 = vmatprep.mubr.f32.mxu0 0.0
    %1836 = vmatmul.mubr.f32.gmra.mrb[0].mxu0 %v1343
    %v1837 = vpop.f32.mrb[0].mxu0
    %v1838 = vadd.f32 0.0, %v1837
    %v1839 = vpop.f32.mrb[0].mxu0
    %v1840 = vadd.f32 0.0, %v1839
    %1841 = vdwg.mxu0
    %1842 = vmatprep.subr.mxu0 %v69
    %1843 = vmatpush1.msra.mxu0 %v68
    %1844 = vmatprep.subr.mxu0 %v85
    %1845 = vmatpush1.msra.mxu0 %v84
    %1846 = vmatprep.subr.mxu0 0.0
    %1847 = vmatpush1.msra.mxu0 0.0
    %1848 = vmatprep.subr.mxu0 0.0
    %1849 = vmatpush1.msra.mxu0 0.0
    %1850 = vmatprep.subr.mxu0 0.0
    %1851 = vmatpush1.msra.mxu0 0.0
    %1852 = vmatprep.subr.mxu0 0.0
    %1853 = vmatpush1.msra.mxu0 0.0
    %1854 = vmatprep.subr.mxu0 0.0
    %1855 = vmatpush1.msra.mxu0 0.0
    %1856 = vmatprep.subr.mxu0 0.0
    %1857 = vmatpush1.msra.mxu0 0.0
    %1858 = vmatprep.subr.mxu0 0.0
    %1859 = vmatpush1.msra.mxu0 0.0
    %1860 = vmatprep.subr.mxu0 0.0
    %1861 = vmatpush1.msra.mxu0 0.0
    %1862 = vmatprep.subr.mxu0 0.0
    %1863 = vmatpush1.msra.mxu0 0.0
    %1864 = vmatprep.subr.mxu0 0.0
    %1865 = vmatpush1.msra.mxu0 0.0
    %1866 = vmatprep.subr.mxu0 0.0
    %1867 = vmatpush1.msra.mxu0 0.0
    %1868 = vmatprep.subr.mxu0 0.0
    %1869 = vmatpush1.msra.mxu0 0.0
    %1870 = vmatprep.subr.mxu0 0.0
    %1871 = vmatpush1.msra.mxu0 0.0
    %1872 = vmatprep.subr.mxu0 0.0
    %1873 = vmatpush1.msra.mxu0 0.0
    %1874 = vmatprep.subr.mxu0 0.0
    %1875 = vmatpush1.msra.mxu0 0.0
    %1876 = vmatprep.subr.mxu0 0.0
    %1877 = vmatpush1.msra.mxu0 0.0
    %1878 = vmatprep.subr.mxu0 0.0
    %1879 = vmatpush1.msra.mxu0 0.0
    %1880 = vmatprep.subr.mxu0 0.0
    %1881 = vmatpush1.msra.mxu0 0.0
    %1882 = vmatprep.subr.mxu0 0.0
    %1883 = vmatpush1.msra.mxu0 0.0
    %1884 = vmatprep.subr.mxu0 0.0
    %1885 = vmatpush1.msra.mxu0 0.0
    %1886 = vmatprep.subr.mxu0 0.0
    %1887 = vmatpush1.msra.mxu0 0.0
    %1888 = vmatprep.subr.mxu0 0.0
    %1889 = vmatpush1.msra.mxu0 0.0
    %1890 = vmatprep.subr.mxu0 0.0
    %1891 = vmatpush1.msra.mxu0 0.0
    %1892 = vmatprep.subr.mxu0 0.0
    %1893 = vmatpush1.msra.mxu0 0.0
    %1894 = vmatprep.subr.mxu0 0.0
    %1895 = vmatpush1.msra.mxu0 0.0
    %1896 = vmatprep.subr.mxu0 0.0
    %1897 = vmatpush1.msra.mxu0 0.0
    %1898 = vmatprep.subr.mxu0 0.0
    %1899 = vmatpush1.msra.mxu0 0.0
    %1900 = vmatprep.subr.mxu0 0.0
    %1901 = vmatpush1.msra.mxu0 0.0
    %1902 = vmatprep.subr.mxu0 0.0
    %1903 = vmatpush1.msra.mxu0 0.0
    %1904 = vmatprep.subr.mxu0 0.0
    %1905 = vmatpush1.msra.mxu0 0.0
    %1906 = vmatprep.mubr.f32.mxu0 0.0
    %1907 = vmatmul.mubr.f32.gmra.mrb[0].mxu0 %v1343
    %v1908 = vpop.f32.mrb[0].mxu0
    %v1909 = vadd.f32 0.0, %v1908
    %v1910 = vpop.f32.mrb[0].mxu0
    %v1911 = vadd.f32 0.0, %v1910
    %1912 = vdwg.mxu0
    %v1913 = vadd.f32 %v841, %v1412
    %v1914 = vadd.f32 %v843, %v1414
    %v1915 = vadd.f32 %v912, %v1483
    %v1916 = vadd.f32 %v914, %v1485
    %v1917 = vadd.f32 %v983, %v1554
    %v1918 = vadd.f32 %v985, %v1556
    %v1919 = vadd.f32 %v1054, %v1625
    %v1920 = vadd.f32 %v1056, %v1627
    %v1921 = vadd.f32 %v1125, %v1696
    %v1922 = vadd.f32 %v1127, %v1698
    %v1923 = vadd.f32 %v1196, %v1767
    %v1924 = vadd.f32 %v1198, %v1769
    %v1925 = vadd.f32 %v1267, %v1838
    %v1926 = vadd.f32 %v1269, %v1840
    %v1927 = vadd.f32 %v1338, %v1909
    %v1928 = vadd.f32 %v1340, %v1911
    %v1929 = vmul.f32 %v1918, 0.26601174
    %v1930 = vmul.f32 %v1919, 0.26601174
    %v1931 = vmul.f32 %v1920, 0.26601174
    %v1932 = vmul.f32 %v1921, 0.26601174
    %v1933 = vmul.f32 %v1922, 0.26601174
    %v1934 = vmul.f32 %v1923, 0.26601174
    %v1935 = vadd.f32 %v1913, %v1923
    %v1936 = vadd.f32 %v1914, %v1924
    %v1937 = vadd.f32 %v1915, %v1925
    %v1938 = vadd.f32 %v1916, %v1926
    %v1939 = vadd.f32 %v1917, %v1927
    %v1940 = vadd.f32 %v1918, %v1928
    %v1941 = vmul.f32 %v1935, 0.0010283804
    %v1942 = vmul.f32 %v1936, 0.0010283804
    %v1943 = vmul.f32 %v1937, 0.0010283804
    %v1944 = vmul.f32 %v1938, 0.0010283804
    %v1945 = vmul.f32 %v1939, 0.0010283804
    %v1946 = vmul.f32 %v1940, 0.0010283804
    %v1947 = vadd.f32 %v1929, %v1941
    %v1948 = vadd.f32 %v1930, %v1942
    %v1949 = vadd.f32 %v1931, %v1943
    %v1950 = vadd.f32 %v1932, %v1944
    %v1951 = vadd.f32 %v1933, %v1945
    %v1952 = vadd.f32 %v1934, %v1946
    %v1953 = vadd.f32 %v1914, %v1922
    %v1954 = vadd.f32 %v1915, %v1923
    %v1955 = vadd.f32 %v1916, %v1924
    %v1956 = vadd.f32 %v1917, %v1925
    %v1957 = vadd.f32 %v1918, %v1926
    %v1958 = vadd.f32 %v1919, %v1927
    %v1959 = vmul.f32 %v1953, 0.0075987587
    %v1960 = vmul.f32 %v1954, 0.0075987587
    %v1961 = vmul.f32 %v1955, 0.0075987587
    %v1962 = vmul.f32 %v1956, 0.0075987587
    %v1963 = vmul.f32 %v1957, 0.0075987587
    %v1964 = vmul.f32 %v1958, 0.0075987587
    %v1965 = vadd.f32 %v1947, %v1959
    %v1966 = vadd.f32 %v1948, %v1960
    %v1967 = vadd.f32 %v1949, %v1961
    %v1968 = vadd.f32 %v1950, %v1962
    %v1969 = vadd.f32 %v1951, %v1963
    %v1970 = vadd.f32 %v1952, %v1964
    %v1971 = vadd.f32 %v1915, %v1921
    %v1972 = vadd.f32 %v1916, %v1922
    %v1973 = vadd.f32 %v1917, %v1923
    %v1974 = vadd.f32 %v1918, %v1924
    %v1975 = vadd.f32 %v1919, %v1925
    %v1976 = vadd.f32 %v1920, %v1926
    %v1977 = vmul.f32 %v1971, 0.036000773
    %v1978 = vmul.f32 %v1972, 0.036000773
    %v1979 = vmul.f32 %v1973, 0.036000773
    %v1980 = vmul.f32 %v1974, 0.036000773
    %v1981 = vmul.f32 %v1975, 0.036000773
    %v1982 = vmul.f32 %v1976, 0.036000773
    %v1983 = vadd.f32 %v1965, %v1977
    %v1984 = vadd.f32 %v1966, %v1978
    %v1985 = vadd.f32 %v1967, %v1979
    %v1986 = vadd.f32 %v1968, %v1980
    %v1987 = vadd.f32 %v1969, %v1981
    %v1988 = vadd.f32 %v1970, %v1982
    %v1989 = vadd.f32 %v1916, %v1920
    %v1990 = vadd.f32 %v1917, %v1921
    %v1991 = vadd.f32 %v1918, %v1922
    %v1992 = vadd.f32 %v1919, %v1923
    %v1993 = vadd.f32 %v1920, %v1924
    %v1994 = vadd.f32 %v1921, %v1925
    %v1995 = vmul.f32 %v1989, 0.1093607
    %v1996 = vmul.f32 %v1990, 0.1093607
    %v1997 = vmul.f32 %v1991, 0.1093607
    %v1998 = vmul.f32 %v1992, 0.1093607
    %v1999 = vmul.f32 %v1993, 0.1093607
    %v2000 = vmul.f32 %v1994, 0.1093607
    %v2001 = vadd.f32 %v1983, %v1995
    %v2002 = vadd.f32 %v1984, %v1996
    %v2003 = vadd.f32 %v1985, %v1997
    %v2004 = vadd.f32 %v1986, %v1998
    %v2005 = vadd.f32 %v1987, %v1999
    %v2006 = vadd.f32 %v1988, %v2000
    %v2007 = vadd.f32 %v1917, %v1919
    %v2008 = vadd.f32 %v1918, %v1920
    %v2009 = vadd.f32 %v1919, %v1921
    %v2010 = vadd.f32 %v1920, %v1922
    %v2011 = vadd.f32 %v1921, %v1923
    %v2012 = vadd.f32 %v1922, %v1924
    %v2013 = vmul.f32 %v2007, 0.21300554
    %v2014 = vmul.f32 %v2008, 0.21300554
    %v2015 = vmul.f32 %v2009, 0.21300554
    %v2016 = vmul.f32 %v2010, 0.21300554
    %v2017 = vmul.f32 %v2011, 0.21300554
    %v2018 = vmul.f32 %v2012, 0.21300554
    %v2019 = vadd.f32 %v2001, %v2013
    %v2020 = vadd.f32 %v2002, %v2014
    %v2021 = vadd.f32 %v2003, %v2015
    %v2022 = vadd.f32 %v2004, %v2016
    %v2023 = vadd.f32 %v2005, %v2017
    %v2024 = vadd.f32 %v2006, %v2018
    %v2025 = vpack.c.bf16 %v102, %v86
    %v2026 = vpack.c.bf16 %v103, %v87
    %v2027 = vpack.c.bf16 %v104, %v88
    %v2028 = vpack.c.bf16 %v105, %v89
    %v2029 = vpack.c.bf16 %v106, %v90
    %v2030 = vpack.c.bf16 %v107, %v91
    %v2031 = vpack.c.bf16 %v108, %v92
    %v2032 = vpack.c.bf16 %v109, %v93
    %v2033 = vpack.c.bf16 %v110, %v94
    %v2034 = vpack.c.bf16 %v111, %v95
    %v2035 = vpack.c.bf16 %v112, %v96
    %v2036 = vpack.c.bf16 %v113, %v97
    %v2037 = vpack.c.bf16 %v114, %v98
    %v2038 = vpack.c.bf16 %v115, %v99
    %v2039 = vpack.c.bf16 %v116, %v100
    %v2040 = vpack.c.bf16 %v117, %v101
    %v2041 = vunpack.c.l.bf16 %v2025
    %v2042 = vunpack.c.l.bf16 %v2026
    %v2043 = vunpack.c.l.bf16 %v2027
    %v2044 = vunpack.c.l.bf16 %v2028
    %v2045 = vunpack.c.l.bf16 %v2029
    %v2046 = vunpack.c.l.bf16 %v2030
    %v2047 = vunpack.c.l.bf16 %v2031
    %v2048 = vunpack.c.l.bf16 %v2032
    %v2049 = vunpack.c.l.bf16 %v2033
    %v2050 = vunpack.c.l.bf16 %v2034
    %v2051 = vunpack.c.l.bf16 %v2035
    %v2052 = vunpack.c.l.bf16 %v2036
    %v2053 = vunpack.c.l.bf16 %v2037
    %v2054 = vunpack.c.l.bf16 %v2038
    %v2055 = vunpack.c.l.bf16 %v2039
    %v2056 = vunpack.c.l.bf16 %v2040
    %v2057 = vunpack.c.h.bf16 %v2025
    %v2058 = vunpack.c.h.bf16 %v2026
    %v2059 = vunpack.c.h.bf16 %v2027
    %v2060 = vunpack.c.h.bf16 %v2028
    %v2061 = vunpack.c.h.bf16 %v2029
    %v2062 = vunpack.c.h.bf16 %v2030
    %v2063 = vunpack.c.h.bf16 %v2031
    %v2064 = vunpack.c.h.bf16 %v2032
    %v2065 = vunpack.c.h.bf16 %v2033
    %v2066 = vunpack.c.h.bf16 %v2034
    %v2067 = vunpack.c.h.bf16 %v2035
    %v2068 = vunpack.c.h.bf16 %v2036
    %v2069 = vunpack.c.h.bf16 %v2037
    %v2070 = vunpack.c.h.bf16 %v2038
    %v2071 = vunpack.c.h.bf16 %v2039
    %v2072 = vunpack.c.h.bf16 %v2040
    %v2073 = vsub.f32 %v86, %v2041
    %v2074 = vsub.f32 %v87, %v2042
    %v2075 = vsub.f32 %v88, %v2043
    %v2076 = vsub.f32 %v89, %v2044
    %v2077 = vsub.f32 %v90, %v2045
    %v2078 = vsub.f32 %v91, %v2046
    %v2079 = vsub.f32 %v92, %v2047
    %v2080 = vsub.f32 %v93, %v2048
    %v2081 = vsub.f32 %v94, %v2049
    %v2082 = vsub.f32 %v95, %v2050
    %v2083 = vsub.f32 %v96, %v2051
    %v2084 = vsub.f32 %v97, %v2052
    %v2085 = vsub.f32 %v98, %v2053
    %v2086 = vsub.f32 %v99, %v2054
    %v2087 = vsub.f32 %v100, %v2055
    %v2088 = vsub.f32 %v101, %v2056
    %v2089 = vsub.f32 %v102, %v2057
    %v2090 = vsub.f32 %v103, %v2058
    %v2091 = vsub.f32 %v104, %v2059
    %v2092 = vsub.f32 %v105, %v2060
    %v2093 = vsub.f32 %v106, %v2061
    %v2094 = vsub.f32 %v107, %v2062
    %v2095 = vsub.f32 %v108, %v2063
    %v2096 = vsub.f32 %v109, %v2064
    %v2097 = vsub.f32 %v110, %v2065
    %v2098 = vsub.f32 %v111, %v2066
    %v2099 = vsub.f32 %v112, %v2067
    %v2100 = vsub.f32 %v113, %v2068
    %v2101 = vsub.f32 %v114, %v2069
    %v2102 = vsub.f32 %v115, %v2070
    %v2103 = vsub.f32 %v116, %v2071
    %v2104 = vsub.f32 %v117, %v2072
    %2105 = vmatprep.subr.mxu0 %v2074
    %2106 = vmatpush1.msra.mxu0 %v2073
    %2107 = vmatprep.subr.mxu0 %v2090
    %2108 = vmatpush1.msra.mxu0 %v2089
    %2109 = vmatprep.subr.mxu0 0.0
    %2110 = vmatpush1.msra.mxu0 0.0
    %2111 = vmatprep.subr.mxu0 0.0
    %2112 = vmatpush1.msra.mxu0 0.0
    %2113 = vmatprep.subr.mxu0 0.0
    %2114 = vmatpush1.msra.mxu0 0.0
    %2115 = vmatprep.subr.mxu0 0.0
    %2116 = vmatpush1.msra.mxu0 0.0
    %2117 = vmatprep.subr.mxu0 0.0
    %2118 = vmatpush1.msra.mxu0 0.0
    %2119 = vmatprep.subr.mxu0 0.0
    %2120 = vmatpush1.msra.mxu0 0.0
    %2121 = vmatprep.subr.mxu0 0.0
    %2122 = vmatpush1.msra.mxu0 0.0
    %2123 = vmatprep.subr.mxu0 0.0
    %2124 = vmatpush1.msra.mxu0 0.0
    %2125 = vmatprep.subr.mxu0 0.0
    %2126 = vmatpush1.msra.mxu0 0.0
    %2127 = vmatprep.subr.mxu0 0.0
    %2128 = vmatpush1.msra.mxu0 0.0
    %2129 = vmatprep.subr.mxu0 0.0
    %2130 = vmatpush1.msra.mxu0 0.0
    %2131 = vmatprep.subr.mxu0 0.0
    %2132 = vmatpush1.msra.mxu0 0.0
    %2133 = vmatprep.subr.mxu0 0.0
    %2134 = vmatpush1.msra.mxu0 0.0
    %2135 = vmatprep.subr.mxu0 0.0
    %2136 = vmatpush1.msra.mxu0 0.0
    %2137 = vmatprep.subr.mxu0 0.0
    %2138 = vmatpush1.msra.mxu0 0.0
    %2139 = vmatprep.subr.mxu0 0.0
    %2140 = vmatpush1.msra.mxu0 0.0
    %2141 = vmatprep.subr.mxu0 0.0
    %2142 = vmatpush1.msra.mxu0 0.0
    %2143 = vmatprep.subr.mxu0 0.0
    %2144 = vmatpush1.msra.mxu0 0.0
    %2145 = vmatprep.subr.mxu0 0.0
    %2146 = vmatpush1.msra.mxu0 0.0
    %2147 = vmatprep.subr.mxu0 0.0
    %2148 = vmatpush1.msra.mxu0 0.0
    %2149 = vmatprep.subr.mxu0 0.0
    %2150 = vmatpush1.msra.mxu0 0.0
    %2151 = vmatprep.subr.mxu0 0.0
    %2152 = vmatpush1.msra.mxu0 0.0
    %2153 = vmatprep.subr.mxu0 0.0
    %2154 = vmatpush1.msra.mxu0 0.0
    %2155 = vmatprep.subr.mxu0 0.0
    %2156 = vmatpush1.msra.mxu0 0.0
    %2157 = vmatprep.subr.mxu0 0.0
    %2158 = vmatpush1.msra.mxu0 0.0
    %2159 = vmatprep.subr.mxu0 0.0
    %2160 = vmatpush1.msra.mxu0 0.0
    %2161 = vmatprep.subr.mxu0 0.0
    %2162 = vmatpush1.msra.mxu0 0.0
    %2163 = vmatprep.subr.mxu0 0.0
    %2164 = vmatpush1.msra.mxu0 0.0
    %2165 = vmatprep.subr.mxu0 0.0
    %2166 = vmatpush1.msra.mxu0 0.0
    %2167 = vmatprep.subr.mxu0 0.0
    %2168 = vmatpush1.msra.mxu0 0.0
    %2169 = vmatprep.mubr.f32.mxu0 0.0
    %2170 = vmatmul.mubr.f32.gmra.mrb[0].mxu0 %v204
    %v2171 = vpop.f32.mrb[0].mxu0
    %v2172 = vadd.f32 0.0, %v2171
    %v2173 = vpop.f32.mrb[0].mxu0
    %v2174 = vadd.f32 0.0, %v2173
    %2175 = vdwg.mxu0
    %2176 = vmatprep.subr.mxu0 %v2076
    %2177 = vmatpush1.msra.mxu0 %v2075
    %2178 = vmatprep.subr.mxu0 %v2092
    %2179 = vmatpush1.msra.mxu0 %v2091
    %2180 = vmatprep.subr.mxu0 0.0
    %2181 = vmatpush1.msra.mxu0 0.0
    %2182 = vmatprep.subr.mxu0 0.0
    %2183 = vmatpush1.msra.mxu0 0.0
    %2184 = vmatprep.subr.mxu0 0.0
    %2185 = vmatpush1.msra.mxu0 0.0
    %2186 = vmatprep.subr.mxu0 0.0
    %2187 = vmatpush1.msra.mxu0 0.0
    %2188 = vmatprep.subr.mxu0 0.0
    %2189 = vmatpush1.msra.mxu0 0.0
    %2190 = vmatprep.subr.mxu0 0.0
    %2191 = vmatpush1.msra.mxu0 0.0
    %2192 = vmatprep.subr.mxu0 0.0
    %2193 = vmatpush1.msra.mxu0 0.0
    %2194 = vmatprep.subr.mxu0 0.0
    %2195 = vmatpush1.msra.mxu0 0.0
    %2196 = vmatprep.subr.mxu0 0.0
    %2197 = vmatpush1.msra.mxu0 0.0
    %2198 = vmatprep.subr.mxu0 0.0
    %2199 = vmatpush1.msra.mxu0 0.0
    %2200 = vmatprep.subr.mxu0 0.0
    %2201 = vmatpush1.msra.mxu0 0.0
    %2202 = vmatprep.subr.mxu0 0.0
    %2203 = vmatpush1.msra.mxu0 0.0
    %2204 = vmatprep.subr.mxu0 0.0
    %2205 = vmatpush1.msra.mxu0 0.0
    %2206 = vmatprep.subr.mxu0 0.0
    %2207 = vmatpush1.msra.mxu0 0.0
    %2208 = vmatprep.subr.mxu0 0.0
    %2209 = vmatpush1.msra.mxu0 0.0
    %2210 = vmatprep.subr.mxu0 0.0
    %2211 = vmatpush1.msra.mxu0 0.0
    %2212 = vmatprep.subr.mxu0 0.0
    %2213 = vmatpush1.msra.mxu0 0.0
    %2214 = vmatprep.subr.mxu0 0.0
    %2215 = vmatpush1.msra.mxu0 0.0
    %2216 = vmatprep.subr.mxu0 0.0
    %2217 = vmatpush1.msra.mxu0 0.0
    %2218 = vmatprep.subr.mxu0 0.0
    %2219 = vmatpush1.msra.mxu0 0.0
    %2220 = vmatprep.subr.mxu0 0.0
    %2221 = vmatpush1.msra.mxu0 0.0
    %2222 = vmatprep.subr.mxu0 0.0
    %2223 = vmatpush1.msra.mxu0 0.0
    %2224 = vmatprep.subr.mxu0 0.0
    %2225 = vmatpush1.msra.mxu0 0.0
    %2226 = vmatprep.subr.mxu0 0.0
    %2227 = vmatpush1.msra.mxu0 0.0
    %2228 = vmatprep.subr.mxu0 0.0
    %2229 = vmatpush1.msra.mxu0 0.0
    %2230 = vmatprep.subr.mxu0 0.0
    %2231 = vmatpush1.msra.mxu0 0.0
    %2232 = vmatprep.subr.mxu0 0.0
    %2233 = vmatpush1.msra.mxu0 0.0
    %2234 = vmatprep.subr.mxu0 0.0
    %2235 = vmatpush1.msra.mxu0 0.0
    %2236 = vmatprep.subr.mxu0 0.0
    %2237 = vmatpush1.msra.mxu0 0.0
    %2238 = vmatprep.subr.mxu0 0.0
    %2239 = vmatpush1.msra.mxu0 0.0
    %2240 = vmatprep.mubr.f32.mxu0 0.0
    %2241 = vmatmul.mubr.f32.gmra.mrb[0].mxu0 %v204
    %v2242 = vpop.f32.mrb[0].mxu0
    %v2243 = vadd.f32 0.0, %v2242
    %v2244 = vpop.f32.mrb[0].mxu0
    %v2245 = vadd.f32 0.0, %v2244
    %2246 = vdwg.mxu0
    %2247 = vmatprep.subr.mxu0 %v2078
    %2248 = vmatpush1.msra.mxu0 %v2077
    %2249 = vmatprep.subr.mxu0 %v2094
    %2250 = vmatpush1.msra.mxu0 %v2093
    %2251 = vmatprep.subr.mxu0 0.0
    %2252 = vmatpush1.msra.mxu0 0.0
    %2253 = vmatprep.subr.mxu0 0.0
    %2254 = vmatpush1.msra.mxu0 0.0
    %2255 = vmatprep.subr.mxu0 0.0
    %2256 = vmatpush1.msra.mxu0 0.0
    %2257 = vmatprep.subr.mxu0 0.0
    %2258 = vmatpush1.msra.mxu0 0.0
    %2259 = vmatprep.subr.mxu0 0.0
    %2260 = vmatpush1.msra.mxu0 0.0
    %2261 = vmatprep.subr.mxu0 0.0
    %2262 = vmatpush1.msra.mxu0 0.0
    %2263 = vmatprep.subr.mxu0 0.0
    %2264 = vmatpush1.msra.mxu0 0.0
    %2265 = vmatprep.subr.mxu0 0.0
    %2266 = vmatpush1.msra.mxu0 0.0
    %2267 = vmatprep.subr.mxu0 0.0
    %2268 = vmatpush1.msra.mxu0 0.0
    %2269 = vmatprep.subr.mxu0 0.0
    %2270 = vmatpush1.msra.mxu0 0.0
    %2271 = vmatprep.subr.mxu0 0.0
    %2272 = vmatpush1.msra.mxu0 0.0
    %2273 = vmatprep.subr.mxu0 0.0
    %2274 = vmatpush1.msra.mxu0 0.0
    %2275 = vmatprep.subr.mxu0 0.0
    %2276 = vmatpush1.msra.mxu0 0.0
    %2277 = vmatprep.subr.mxu0 0.0
    %2278 = vmatpush1.msra.mxu0 0.0
    %2279 = vmatprep.subr.mxu0 0.0
    %2280 = vmatpush1.msra.mxu0 0.0
    %2281 = vmatprep.subr.mxu0 0.0
    %2282 = vmatpush1.msra.mxu0 0.0
    %2283 = vmatprep.subr.mxu0 0.0
    %2284 = vmatpush1.msra.mxu0 0.0
    %2285 = vmatprep.subr.mxu0 0.0
    %2286 = vmatpush1.msra.mxu0 0.0
    %2287 = vmatprep.subr.mxu0 0.0
    %2288 = vmatpush1.msra.mxu0 0.0
    %2289 = vmatprep.subr.mxu0 0.0
    %2290 = vmatpush1.msra.mxu0 0.0
    %2291 = vmatprep.subr.mxu0 0.0
    %2292 = vmatpush1.msra.mxu0 0.0
    %2293 = vmatprep.subr.mxu0 0.0
    %2294 = vmatpush1.msra.mxu0 0.0
    %2295 = vmatprep.subr.mxu0 0.0
    %2296 = vmatpush1.msra.mxu0 0.0
    %2297 = vmatprep.subr.mxu0 0.0
    %2298 = vmatpush1.msra.mxu0 0.0
    %2299 = vmatprep.subr.mxu0 0.0
    %2300 = vmatpush1.msra.mxu0 0.0
    %2301 = vmatprep.subr.mxu0 0.0
    %2302 = vmatpush1.msra.mxu0 0.0
    %2303 = vmatprep.subr.mxu0 0.0
    %2304 = vmatpush1.msra.mxu0 0.0
    %2305 = vmatprep.subr.mxu0 0.0
    %2306 = vmatpush1.msra.mxu0 0.0
    %2307 = vmatprep.subr.mxu0 0.0
    %2308 = vmatpush1.msra.mxu0 0.0
    %2309 = vmatprep.subr.mxu0 0.0
    %2310 = vmatpush1.msra.mxu0 0.0
    %2311 = vmatprep.mubr.f32.mxu0 0.0
    %2312 = vmatmul.mubr.f32.gmra.mrb[0].mxu0 %v204
    %v2313 = vpop.f32.mrb[0].mxu0
    %v2314 = vadd.f32 0.0, %v2313
    %v2315 = vpop.f32.mrb[0].mxu0
    %v2316 = vadd.f32 0.0, %v2315
    %2317 = vdwg.mxu0
    %2318 = vmatprep.subr.mxu0 %v2080
    %2319 = vmatpush1.msra.mxu0 %v2079
    %2320 = vmatprep.subr.mxu0 %v2096
    %2321 = vmatpush1.msra.mxu0 %v2095
    %2322 = vmatprep.subr.mxu0 0.0
    %2323 = vmatpush1.msra.mxu0 0.0
    %2324 = vmatprep.subr.mxu0 0.0
    %2325 = vmatpush1.msra.mxu0 0.0
    %2326 = vmatprep.subr.mxu0 0.0
    %2327 = vmatpush1.msra.mxu0 0.0
    %2328 = vmatprep.subr.mxu0 0.0
    %2329 = vmatpush1.msra.mxu0 0.0
    %2330 = vmatprep.subr.mxu0 0.0
    %2331 = vmatpush1.msra.mxu0 0.0
    %2332 = vmatprep.subr.mxu0 0.0
    %2333 = vmatpush1.msra.mxu0 0.0
    %2334 = vmatprep.subr.mxu0 0.0
    %2335 = vmatpush1.msra.mxu0 0.0
    %2336 = vmatprep.subr.mxu0 0.0
    %2337 = vmatpush1.msra.mxu0 0.0
    %2338 = vmatprep.subr.mxu0 0.0
    %2339 = vmatpush1.msra.mxu0 0.0
    %2340 = vmatprep.subr.mxu0 0.0
    %2341 = vmatpush1.msra.mxu0 0.0
    %2342 = vmatprep.subr.mxu0 0.0
    %2343 = vmatpush1.msra.mxu0 0.0
    %2344 = vmatprep.subr.mxu0 0.0
    %2345 = vmatpush1.msra.mxu0 0.0
    %2346 = vmatprep.subr.mxu0 0.0
    %2347 = vmatpush1.msra.mxu0 0.0
    %2348 = vmatprep.subr.mxu0 0.0
    %2349 = vmatpush1.msra.mxu0 0.0
    %2350 = vmatprep.subr.mxu0 0.0
    %2351 = vmatpush1.msra.mxu0 0.0
    %2352 = vmatprep.subr.mxu0 0.0
    %2353 = vmatpush1.msra.mxu0 0.0
    %2354 = vmatprep.subr.mxu0 0.0
    %2355 = vmatpush1.msra.mxu0 0.0
    %2356 = vmatprep.subr.mxu0 0.0
    %2357 = vmatpush1.msra.mxu0 0.0
    %2358 = vmatprep.subr.mxu0 0.0
    %2359 = vmatpush1.msra.mxu0 0.0
    %2360 = vmatprep.subr.mxu0 0.0
    %2361 = vmatpush1.msra.mxu0 0.0
    %2362 = vmatprep.subr.mxu0 0.0
    %2363 = vmatpush1.msra.mxu0 0.0
    %2364 = vmatprep.subr.mxu0 0.0
    %2365 = vmatpush1.msra.mxu0 0.0
    %2366 = vmatprep.subr.mxu0 0.0
    %2367 = vmatpush1.msra.mxu0 0.0
    %2368 = vmatprep.subr.mxu0 0.0
    %2369 = vmatpush1.msra.mxu0 0.0
    %2370 = vmatprep.subr.mxu0 0.0
    %2371 = vmatpush1.msra.mxu0 0.0
    %2372 = vmatprep.subr.mxu0 0.0
    %2373 = vmatpush1.msra.mxu0 0.0
    %2374 = vmatprep.subr.mxu0 0.0
    %2375 = vmatpush1.msra.mxu0 0.0
    %2376 = vmatprep.subr.mxu0 0.0
    %2377 = vmatpush1.msra.mxu0 0.0
    %2378 = vmatprep.subr.mxu0 0.0
    %2379 = vmatpush1.msra.mxu0 0.0
    %2380 = vmatprep.subr.mxu0 0.0
    %2381 = vmatpush1.msra.mxu0 0.0
    %2382 = vmatprep.mubr.f32.mxu0 0.0
    %2383 = vmatmul.mubr.f32.gmra.mrb[0].mxu0 %v204
    %v2384 = vpop.f32.mrb[0].mxu0
    %v2385 = vadd.f32 0.0, %v2384
    %v2386 = vpop.f32.mrb[0].mxu0
    %v2387 = vadd.f32 0.0, %v2386
    %2388 = vdwg.mxu0
    %2389 = vmatprep.subr.mxu0 %v2082
    %2390 = vmatpush1.msra.mxu0 %v2081
    %2391 = vmatprep.subr.mxu0 %v2098
    %2392 = vmatpush1.msra.mxu0 %v2097
    %2393 = vmatprep.subr.mxu0 0.0
    %2394 = vmatpush1.msra.mxu0 0.0
    %2395 = vmatprep.subr.mxu0 0.0
    %2396 = vmatpush1.msra.mxu0 0.0
    %2397 = vmatprep.subr.mxu0 0.0
    %2398 = vmatpush1.msra.mxu0 0.0
    %2399 = vmatprep.subr.mxu0 0.0
    %2400 = vmatpush1.msra.mxu0 0.0
    %2401 = vmatprep.subr.mxu0 0.0
    %2402 = vmatpush1.msra.mxu0 0.0
    %2403 = vmatprep.subr.mxu0 0.0
    %2404 = vmatpush1.msra.mxu0 0.0
    %2405 = vmatprep.subr.mxu0 0.0
    %2406 = vmatpush1.msra.mxu0 0.0
    %2407 = vmatprep.subr.mxu0 0.0
    %2408 = vmatpush1.msra.mxu0 0.0
    %2409 = vmatprep.subr.mxu0 0.0
    %2410 = vmatpush1.msra.mxu0 0.0
    %2411 = vmatprep.subr.mxu0 0.0
    %2412 = vmatpush1.msra.mxu0 0.0
    %2413 = vmatprep.subr.mxu0 0.0
    %2414 = vmatpush1.msra.mxu0 0.0
    %2415 = vmatprep.subr.mxu0 0.0
    %2416 = vmatpush1.msra.mxu0 0.0
    %2417 = vmatprep.subr.mxu0 0.0
    %2418 = vmatpush1.msra.mxu0 0.0
    %2419 = vmatprep.subr.mxu0 0.0
    %2420 = vmatpush1.msra.mxu0 0.0
    %2421 = vmatprep.subr.mxu0 0.0
    %2422 = vmatpush1.msra.mxu0 0.0
    %2423 = vmatprep.subr.mxu0 0.0
    %2424 = vmatpush1.msra.mxu0 0.0
    %2425 = vmatprep.subr.mxu0 0.0
    %2426 = vmatpush1.msra.mxu0 0.0
    %2427 = vmatprep.subr.mxu0 0.0
    %2428 = vmatpush1.msra.mxu0 0.0
    %2429 = vmatprep.subr.mxu0 0.0
    %2430 = vmatpush1.msra.mxu0 0.0
    %2431 = vmatprep.subr.mxu0 0.0
    %2432 = vmatpush1.msra.mxu0 0.0
    %2433 = vmatprep.subr.mxu0 0.0
    %2434 = vmatpush1.msra.mxu0 0.0
    %2435 = vmatprep.subr.mxu0 0.0
    %2436 = vmatpush1.msra.mxu0 0.0
    %2437 = vmatprep.subr.mxu0 0.0
    %2438 = vmatpush1.msra.mxu0 0.0
    %2439 = vmatprep.subr.mxu0 0.0
    %2440 = vmatpush1.msra.mxu0 0.0
    %2441 = vmatprep.subr.mxu0 0.0
    %2442 = vmatpush1.msra.mxu0 0.0
    %2443 = vmatprep.subr.mxu0 0.0
    %2444 = vmatpush1.msra.mxu0 0.0
    %2445 = vmatprep.subr.mxu0 0.0
    %2446 = vmatpush1.msra.mxu0 0.0
    %2447 = vmatprep.subr.mxu0 0.0
    %2448 = vmatpush1.msra.mxu0 0.0
    %2449 = vmatprep.subr.mxu0 0.0
    %2450 = vmatpush1.msra.mxu0 0.0
    %2451 = vmatprep.subr.mxu0 0.0
    %2452 = vmatpush1.msra.mxu0 0.0
    %2453 = vmatprep.mubr.f32.mxu0 0.0
    %2454 = vmatmul.mubr.f32.gmra.mrb[0].mxu0 %v204
    %v2455 = vpop.f32.mrb[0].mxu0
    %v2456 = vadd.f32 0.0, %v2455
    %v2457 = vpop.f32.mrb[0].mxu0
    %v2458 = vadd.f32 0.0, %v2457
    %2459 = vdwg.mxu0
    %2460 = vmatprep.subr.mxu0 %v2084
    %2461 = vmatpush1.msra.mxu0 %v2083
    %2462 = vmatprep.subr.mxu0 %v2100
    %2463 = vmatpush1.msra.mxu0 %v2099
    %2464 = vmatprep.subr.mxu0 0.0
    %2465 = vmatpush1.msra.mxu0 0.0
    %2466 = vmatprep.subr.mxu0 0.0
    %2467 = vmatpush1.msra.mxu0 0.0
    %2468 = vmatprep.subr.mxu0 0.0
    %2469 = vmatpush1.msra.mxu0 0.0
    %2470 = vmatprep.subr.mxu0 0.0
    %2471 = vmatpush1.msra.mxu0 0.0
    %2472 = vmatprep.subr.mxu0 0.0
    %2473 = vmatpush1.msra.mxu0 0.0
    %2474 = vmatprep.subr.mxu0 0.0
    %2475 = vmatpush1.msra.mxu0 0.0
    %2476 = vmatprep.subr.mxu0 0.0
    %2477 = vmatpush1.msra.mxu0 0.0
    %2478 = vmatprep.subr.mxu0 0.0
    %2479 = vmatpush1.msra.mxu0 0.0
    %2480 = vmatprep.subr.mxu0 0.0
    %2481 = vmatpush1.msra.mxu0 0.0
    %2482 = vmatprep.subr.mxu0 0.0
    %2483 = vmatpush1.msra.mxu0 0.0
    %2484 = vmatprep.subr.mxu0 0.0
    %2485 = vmatpush1.msra.mxu0 0.0
    %2486 = vmatprep.subr.mxu0 0.0
    %2487 = vmatpush1.msra.mxu0 0.0
    %2488 = vmatprep.subr.mxu0 0.0
    %2489 = vmatpush1.msra.mxu0 0.0
    %2490 = vmatprep.subr.mxu0 0.0
    %2491 = vmatpush1.msra.mxu0 0.0
    %2492 = vmatprep.subr.mxu0 0.0
    %2493 = vmatpush1.msra.mxu0 0.0
    %2494 = vmatprep.subr.mxu0 0.0
    %2495 = vmatpush1.msra.mxu0 0.0
    %2496 = vmatprep.subr.mxu0 0.0
    %2497 = vmatpush1.msra.mxu0 0.0
    %2498 = vmatprep.subr.mxu0 0.0
    %2499 = vmatpush1.msra.mxu0 0.0
    %2500 = vmatprep.subr.mxu0 0.0
    %2501 = vmatpush1.msra.mxu0 0.0
    %2502 = vmatprep.subr.mxu0 0.0
    %2503 = vmatpush1.msra.mxu0 0.0
    %2504 = vmatprep.subr.mxu0 0.0
    %2505 = vmatpush1.msra.mxu0 0.0
    %2506 = vmatprep.subr.mxu0 0.0
    %2507 = vmatpush1.msra.mxu0 0.0
    %2508 = vmatprep.subr.mxu0 0.0
    %2509 = vmatpush1.msra.mxu0 0.0
    %2510 = vmatprep.subr.mxu0 0.0
    %2511 = vmatpush1.msra.mxu0 0.0
    %2512 = vmatprep.subr.mxu0 0.0
    %2513 = vmatpush1.msra.mxu0 0.0
    %2514 = vmatprep.subr.mxu0 0.0
    %2515 = vmatpush1.msra.mxu0 0.0
    %2516 = vmatprep.subr.mxu0 0.0
    %2517 = vmatpush1.msra.mxu0 0.0
    %2518 = vmatprep.subr.mxu0 0.0
    %2519 = vmatpush1.msra.mxu0 0.0
    %2520 = vmatprep.subr.mxu0 0.0
    %2521 = vmatpush1.msra.mxu0 0.0
    %2522 = vmatprep.subr.mxu0 0.0
    %2523 = vmatpush1.msra.mxu0 0.0
    %2524 = vmatprep.mubr.f32.mxu0 0.0
    %2525 = vmatmul.mubr.f32.gmra.mrb[0].mxu0 %v204
    %v2526 = vpop.f32.mrb[0].mxu0
    %v2527 = vadd.f32 0.0, %v2526
    %v2528 = vpop.f32.mrb[0].mxu0
    %v2529 = vadd.f32 0.0, %v2528
    %2530 = vdwg.mxu0
    %2531 = vmatprep.subr.mxu0 %v2086
    %2532 = vmatpush1.msra.mxu0 %v2085
    %2533 = vmatprep.subr.mxu0 %v2102
    %2534 = vmatpush1.msra.mxu0 %v2101
    %2535 = vmatprep.subr.mxu0 0.0
    %2536 = vmatpush1.msra.mxu0 0.0
    %2537 = vmatprep.subr.mxu0 0.0
    %2538 = vmatpush1.msra.mxu0 0.0
    %2539 = vmatprep.subr.mxu0 0.0
    %2540 = vmatpush1.msra.mxu0 0.0
    %2541 = vmatprep.subr.mxu0 0.0
    %2542 = vmatpush1.msra.mxu0 0.0
    %2543 = vmatprep.subr.mxu0 0.0
    %2544 = vmatpush1.msra.mxu0 0.0
    %2545 = vmatprep.subr.mxu0 0.0
    %2546 = vmatpush1.msra.mxu0 0.0
    %2547 = vmatprep.subr.mxu0 0.0
    %2548 = vmatpush1.msra.mxu0 0.0
    %2549 = vmatprep.subr.mxu0 0.0
    %2550 = vmatpush1.msra.mxu0 0.0
    %2551 = vmatprep.subr.mxu0 0.0
    %2552 = vmatpush1.msra.mxu0 0.0
    %2553 = vmatprep.subr.mxu0 0.0
    %2554 = vmatpush1.msra.mxu0 0.0
    %2555 = vmatprep.subr.mxu0 0.0
    %2556 = vmatpush1.msra.mxu0 0.0
    %2557 = vmatprep.subr.mxu0 0.0
    %2558 = vmatpush1.msra.mxu0 0.0
    %2559 = vmatprep.subr.mxu0 0.0
    %2560 = vmatpush1.msra.mxu0 0.0
    %2561 = vmatprep.subr.mxu0 0.0
    %2562 = vmatpush1.msra.mxu0 0.0
    %2563 = vmatprep.subr.mxu0 0.0
    %2564 = vmatpush1.msra.mxu0 0.0
    %2565 = vmatprep.subr.mxu0 0.0
    %2566 = vmatpush1.msra.mxu0 0.0
    %2567 = vmatprep.subr.mxu0 0.0
    %2568 = vmatpush1.msra.mxu0 0.0
    %2569 = vmatprep.subr.mxu0 0.0
    %2570 = vmatpush1.msra.mxu0 0.0
    %2571 = vmatprep.subr.mxu0 0.0
    %2572 = vmatpush1.msra.mxu0 0.0
    %2573 = vmatprep.subr.mxu0 0.0
    %2574 = vmatpush1.msra.mxu0 0.0
    %2575 = vmatprep.subr.mxu0 0.0
    %2576 = vmatpush1.msra.mxu0 0.0
    %2577 = vmatprep.subr.mxu0 0.0
    %2578 = vmatpush1.msra.mxu0 0.0
    %2579 = vmatprep.subr.mxu0 0.0
    %2580 = vmatpush1.msra.mxu0 0.0
    %2581 = vmatprep.subr.mxu0 0.0
    %2582 = vmatpush1.msra.mxu0 0.0
    %2583 = vmatprep.subr.mxu0 0.0
    %2584 = vmatpush1.msra.mxu0 0.0
    %2585 = vmatprep.subr.mxu0 0.0
    %2586 = vmatpush1.msra.mxu0 0.0
    %2587 = vmatprep.subr.mxu0 0.0
    %2588 = vmatpush1.msra.mxu0 0.0
    %2589 = vmatprep.subr.mxu0 0.0
    %2590 = vmatpush1.msra.mxu0 0.0
    %2591 = vmatprep.subr.mxu0 0.0
    %2592 = vmatpush1.msra.mxu0 0.0
    %2593 = vmatprep.subr.mxu0 0.0
    %2594 = vmatpush1.msra.mxu0 0.0
    %2595 = vmatprep.mubr.f32.mxu0 0.0
    %2596 = vmatmul.mubr.f32.gmra.mrb[0].mxu0 %v204
    %v2597 = vpop.f32.mrb[0].mxu0
    %v2598 = vadd.f32 0.0, %v2597
    %v2599 = vpop.f32.mrb[0].mxu0
    %v2600 = vadd.f32 0.0, %v2599
    %2601 = vdwg.mxu0
    %2602 = vmatprep.subr.mxu0 %v2088
    %2603 = vmatpush1.msra.mxu0 %v2087
    %2604 = vmatprep.subr.mxu0 %v2104
    %2605 = vmatpush1.msra.mxu0 %v2103
    %2606 = vmatprep.subr.mxu0 0.0
    %2607 = vmatpush1.msra.mxu0 0.0
    %2608 = vmatprep.subr.mxu0 0.0
    %2609 = vmatpush1.msra.mxu0 0.0
    %2610 = vmatprep.subr.mxu0 0.0
    %2611 = vmatpush1.msra.mxu0 0.0
    %2612 = vmatprep.subr.mxu0 0.0
    %2613 = vmatpush1.msra.mxu0 0.0
    %2614 = vmatprep.subr.mxu0 0.0
    %2615 = vmatpush1.msra.mxu0 0.0
    %2616 = vmatprep.subr.mxu0 0.0
    %2617 = vmatpush1.msra.mxu0 0.0
    %2618 = vmatprep.subr.mxu0 0.0
    %2619 = vmatpush1.msra.mxu0 0.0
    %2620 = vmatprep.subr.mxu0 0.0
    %2621 = vmatpush1.msra.mxu0 0.0
    %2622 = vmatprep.subr.mxu0 0.0
    %2623 = vmatpush1.msra.mxu0 0.0
    %2624 = vmatprep.subr.mxu0 0.0
    %2625 = vmatpush1.msra.mxu0 0.0
    %2626 = vmatprep.subr.mxu0 0.0
    %2627 = vmatpush1.msra.mxu0 0.0
    %2628 = vmatprep.subr.mxu0 0.0
    %2629 = vmatpush1.msra.mxu0 0.0
    %2630 = vmatprep.subr.mxu0 0.0
    %2631 = vmatpush1.msra.mxu0 0.0
    %2632 = vmatprep.subr.mxu0 0.0
    %2633 = vmatpush1.msra.mxu0 0.0
    %2634 = vmatprep.subr.mxu0 0.0
    %2635 = vmatpush1.msra.mxu0 0.0
    %2636 = vmatprep.subr.mxu0 0.0
    %2637 = vmatpush1.msra.mxu0 0.0
    %2638 = vmatprep.subr.mxu0 0.0
    %2639 = vmatpush1.msra.mxu0 0.0
    %2640 = vmatprep.subr.mxu0 0.0
    %2641 = vmatpush1.msra.mxu0 0.0
    %2642 = vmatprep.subr.mxu0 0.0
    %2643 = vmatpush1.msra.mxu0 0.0
    %2644 = vmatprep.subr.mxu0 0.0
    %2645 = vmatpush1.msra.mxu0 0.0
    %2646 = vmatprep.subr.mxu0 0.0
    %2647 = vmatpush1.msra.mxu0 0.0
    %2648 = vmatprep.subr.mxu0 0.0
    %2649 = vmatpush1.msra.mxu0 0.0
    %2650 = vmatprep.subr.mxu0 0.0
    %2651 = vmatpush1.msra.mxu0 0.0
    %2652 = vmatprep.subr.mxu0 0.0
    %2653 = vmatpush1.msra.mxu0 0.0
    %2654 = vmatprep.subr.mxu0 0.0
    %2655 = vmatpush1.msra.mxu0 0.0
    %2656 = vmatprep.subr.mxu0 0.0
    %2657 = vmatpush1.msra.mxu0 0.0
    %2658 = vmatprep.subr.mxu0 0.0
    %2659 = vmatpush1.msra.mxu0 0.0
    %2660 = vmatprep.subr.mxu0 0.0
    %2661 = vmatpush1.msra.mxu0 0.0
    %2662 = vmatprep.subr.mxu0 0.0
    %2663 = vmatpush1.msra.mxu0 0.0
    %2664 = vmatprep.subr.mxu0 0.0
    %2665 = vmatpush1.msra.mxu0 0.0
    %2666 = vmatprep.mubr.f32.mxu0 0.0
    %2667 = vmatmul.mubr.f32.gmra.mrb[0].mxu0 %v204
    %v2668 = vpop.f32.mrb[0].mxu0
    %v2669 = vadd.f32 0.0, %v2668
    %v2670 = vpop.f32.mrb[0].mxu0
    %v2671 = vadd.f32 0.0, %v2670
    %2672 = vdwg.mxu0
    %2673 = vmatprep.subr.mxu0 %v2042
    %2674 = vmatpush1.msra.mxu0 %v2041
    %2675 = vmatprep.subr.mxu0 %v2058
    %2676 = vmatpush1.msra.mxu0 %v2057
    %2677 = vmatprep.subr.mxu0 0.0
    %2678 = vmatpush1.msra.mxu0 0.0
    %2679 = vmatprep.subr.mxu0 0.0
    %2680 = vmatpush1.msra.mxu0 0.0
    %2681 = vmatprep.subr.mxu0 0.0
    %2682 = vmatpush1.msra.mxu0 0.0
    %2683 = vmatprep.subr.mxu0 0.0
    %2684 = vmatpush1.msra.mxu0 0.0
    %2685 = vmatprep.subr.mxu0 0.0
    %2686 = vmatpush1.msra.mxu0 0.0
    %2687 = vmatprep.subr.mxu0 0.0
    %2688 = vmatpush1.msra.mxu0 0.0
    %2689 = vmatprep.subr.mxu0 0.0
    %2690 = vmatpush1.msra.mxu0 0.0
    %2691 = vmatprep.subr.mxu0 0.0
    %2692 = vmatpush1.msra.mxu0 0.0
    %2693 = vmatprep.subr.mxu0 0.0
    %2694 = vmatpush1.msra.mxu0 0.0
    %2695 = vmatprep.subr.mxu0 0.0
    %2696 = vmatpush1.msra.mxu0 0.0
    %2697 = vmatprep.subr.mxu0 0.0
    %2698 = vmatpush1.msra.mxu0 0.0
    %2699 = vmatprep.subr.mxu0 0.0
    %2700 = vmatpush1.msra.mxu0 0.0
    %2701 = vmatprep.subr.mxu0 0.0
    %2702 = vmatpush1.msra.mxu0 0.0
    %2703 = vmatprep.subr.mxu0 0.0
    %2704 = vmatpush1.msra.mxu0 0.0
    %2705 = vmatprep.subr.mxu0 0.0
    %2706 = vmatpush1.msra.mxu0 0.0
    %2707 = vmatprep.subr.mxu0 0.0
    %2708 = vmatpush1.msra.mxu0 0.0
    %2709 = vmatprep.subr.mxu0 0.0
    %2710 = vmatpush1.msra.mxu0 0.0
    %2711 = vmatprep.subr.mxu0 0.0
    %2712 = vmatpush1.msra.mxu0 0.0
    %2713 = vmatprep.subr.mxu0 0.0
    %2714 = vmatpush1.msra.mxu0 0.0
    %2715 = vmatprep.subr.mxu0 0.0
    %2716 = vmatpush1.msra.mxu0 0.0
    %2717 = vmatprep.subr.mxu0 0.0
    %2718 = vmatpush1.msra.mxu0 0.0
    %2719 = vmatprep.subr.mxu0 0.0
    %2720 = vmatpush1.msra.mxu0 0.0
    %2721 = vmatprep.subr.mxu0 0.0
    %2722 = vmatpush1.msra.mxu0 0.0
    %2723 = vmatprep.subr.mxu0 0.0
    %2724 = vmatpush1.msra.mxu0 0.0
    %2725 = vmatprep.subr.mxu0 0.0
    %2726 = vmatpush1.msra.mxu0 0.0
    %2727 = vmatprep.subr.mxu0 0.0
    %2728 = vmatpush1.msra.mxu0 0.0
    %2729 = vmatprep.subr.mxu0 0.0
    %2730 = vmatpush1.msra.mxu0 0.0
    %2731 = vmatprep.subr.mxu0 0.0
    %2732 = vmatpush1.msra.mxu0 0.0
    %2733 = vmatprep.subr.mxu0 0.0
    %2734 = vmatpush1.msra.mxu0 0.0
    %2735 = vmatprep.subr.mxu0 0.0
    %2736 = vmatpush1.msra.mxu0 0.0
    %2737 = vmatprep.mubr.f32.mxu0 0.0
    %2738 = vmatmul.mubr.f32.gmra.mrb[0].mxu0 %v204
    %v2739 = vpop.f32.mrb[0].mxu0
    %v2740 = vadd.f32 %v2172, %v2739
    %v2741 = vpop.f32.mrb[0].mxu0
    %v2742 = vadd.f32 %v2174, %v2741
    %2743 = vdwg.mxu0
    %2744 = vmatprep.subr.mxu0 %v2044
    %2745 = vmatpush1.msra.mxu0 %v2043
    %2746 = vmatprep.subr.mxu0 %v2060
    %2747 = vmatpush1.msra.mxu0 %v2059
    %2748 = vmatprep.subr.mxu0 0.0
    %2749 = vmatpush1.msra.mxu0 0.0
    %2750 = vmatprep.subr.mxu0 0.0
    %2751 = vmatpush1.msra.mxu0 0.0
    %2752 = vmatprep.subr.mxu0 0.0
    %2753 = vmatpush1.msra.mxu0 0.0
    %2754 = vmatprep.subr.mxu0 0.0
    %2755 = vmatpush1.msra.mxu0 0.0
    %2756 = vmatprep.subr.mxu0 0.0
    %2757 = vmatpush1.msra.mxu0 0.0
    %2758 = vmatprep.subr.mxu0 0.0
    %2759 = vmatpush1.msra.mxu0 0.0
    %2760 = vmatprep.subr.mxu0 0.0
    %2761 = vmatpush1.msra.mxu0 0.0
    %2762 = vmatprep.subr.mxu0 0.0
    %2763 = vmatpush1.msra.mxu0 0.0
    %2764 = vmatprep.subr.mxu0 0.0
    %2765 = vmatpush1.msra.mxu0 0.0
    %2766 = vmatprep.subr.mxu0 0.0
    %2767 = vmatpush1.msra.mxu0 0.0
    %2768 = vmatprep.subr.mxu0 0.0
    %2769 = vmatpush1.msra.mxu0 0.0
    %2770 = vmatprep.subr.mxu0 0.0
    %2771 = vmatpush1.msra.mxu0 0.0
    %2772 = vmatprep.subr.mxu0 0.0
    %2773 = vmatpush1.msra.mxu0 0.0
    %2774 = vmatprep.subr.mxu0 0.0
    %2775 = vmatpush1.msra.mxu0 0.0
    %2776 = vmatprep.subr.mxu0 0.0
    %2777 = vmatpush1.msra.mxu0 0.0
    %2778 = vmatprep.subr.mxu0 0.0
    %2779 = vmatpush1.msra.mxu0 0.0
    %2780 = vmatprep.subr.mxu0 0.0
    %2781 = vmatpush1.msra.mxu0 0.0
    %2782 = vmatprep.subr.mxu0 0.0
    %2783 = vmatpush1.msra.mxu0 0.0
    %2784 = vmatprep.subr.mxu0 0.0
    %2785 = vmatpush1.msra.mxu0 0.0
    %2786 = vmatprep.subr.mxu0 0.0
    %2787 = vmatpush1.msra.mxu0 0.0
    %2788 = vmatprep.subr.mxu0 0.0
    %2789 = vmatpush1.msra.mxu0 0.0
    %2790 = vmatprep.subr.mxu0 0.0
    %2791 = vmatpush1.msra.mxu0 0.0
    %2792 = vmatprep.subr.mxu0 0.0
    %2793 = vmatpush1.msra.mxu0 0.0
    %2794 = vmatprep.subr.mxu0 0.0
    %2795 = vmatpush1.msra.mxu0 0.0
    %2796 = vmatprep.subr.mxu0 0.0
    %2797 = vmatpush1.msra.mxu0 0.0
    %2798 = vmatprep.subr.mxu0 0.0
    %2799 = vmatpush1.msra.mxu0 0.0
    %2800 = vmatprep.subr.mxu0 0.0
    %2801 = vmatpush1.msra.mxu0 0.0
    %2802 = vmatprep.subr.mxu0 0.0
    %2803 = vmatpush1.msra.mxu0 0.0
    %2804 = vmatprep.subr.mxu0 0.0
    %2805 = vmatpush1.msra.mxu0 0.0
    %2806 = vmatprep.subr.mxu0 0.0
    %2807 = vmatpush1.msra.mxu0 0.0
    %2808 = vmatprep.mubr.f32.mxu0 0.0
    %2809 = vmatmul.mubr.f32.gmra.mrb[0].mxu0 %v204
    %v2810 = vpop.f32.mrb[0].mxu0
    %v2811 = vadd.f32 %v2243, %v2810
    %v2812 = vpop.f32.mrb[0].mxu0
    %v2813 = vadd.f32 %v2245, %v2812
    %2814 = vdwg.mxu0
    %2815 = vmatprep.subr.mxu0 %v2046
    %2816 = vmatpush1.msra.mxu0 %v2045
    %2817 = vmatprep.subr.mxu0 %v2062
    %2818 = vmatpush1.msra.mxu0 %v2061
    %2819 = vmatprep.subr.mxu0 0.0
    %2820 = vmatpush1.msra.mxu0 0.0
    %2821 = vmatprep.subr.mxu0 0.0
    %2822 = vmatpush1.msra.mxu0 0.0
    %2823 = vmatprep.subr.mxu0 0.0
    %2824 = vmatpush1.msra.mxu0 0.0
    %2825 = vmatprep.subr.mxu0 0.0
    %2826 = vmatpush1.msra.mxu0 0.0
    %2827 = vmatprep.subr.mxu0 0.0
    %2828 = vmatpush1.msra.mxu0 0.0
    %2829 = vmatprep.subr.mxu0 0.0
    %2830 = vmatpush1.msra.mxu0 0.0
    %2831 = vmatprep.subr.mxu0 0.0
    %2832 = vmatpush1.msra.mxu0 0.0
    %2833 = vmatprep.subr.mxu0 0.0
    %2834 = vmatpush1.msra.mxu0 0.0
    %2835 = vmatprep.subr.mxu0 0.0
    %2836 = vmatpush1.msra.mxu0 0.0
    %2837 = vmatprep.subr.mxu0 0.0
    %2838 = vmatpush1.msra.mxu0 0.0
    %2839 = vmatprep.subr.mxu0 0.0
    %2840 = vmatpush1.msra.mxu0 0.0
    %2841 = vmatprep.subr.mxu0 0.0
    %2842 = vmatpush1.msra.mxu0 0.0
    %2843 = vmatprep.subr.mxu0 0.0
    %2844 = vmatpush1.msra.mxu0 0.0
    %2845 = vmatprep.subr.mxu0 0.0
    %2846 = vmatpush1.msra.mxu0 0.0
    %2847 = vmatprep.subr.mxu0 0.0
    %2848 = vmatpush1.msra.mxu0 0.0
    %2849 = vmatprep.subr.mxu0 0.0
    %2850 = vmatpush1.msra.mxu0 0.0
    %2851 = vmatprep.subr.mxu0 0.0
    %2852 = vmatpush1.msra.mxu0 0.0
    %2853 = vmatprep.subr.mxu0 0.0
    %2854 = vmatpush1.msra.mxu0 0.0
    %2855 = vmatprep.subr.mxu0 0.0
    %2856 = vmatpush1.msra.mxu0 0.0
    %2857 = vmatprep.subr.mxu0 0.0
    %2858 = vmatpush1.msra.mxu0 0.0
    %2859 = vmatprep.subr.mxu0 0.0
    %2860 = vmatpush1.msra.mxu0 0.0
    %2861 = vmatprep.subr.mxu0 0.0
    %2862 = vmatpush1.msra.mxu0 0.0
    %2863 = vmatprep.subr.mxu0 0.0
    %2864 = vmatpush1.msra.mxu0 0.0
    %2865 = vmatprep.subr.mxu0 0.0
    %2866 = vmatpush1.msra.mxu0 0.0
    %2867 = vmatprep.subr.mxu0 0.0
    %2868 = vmatpush1.msra.mxu0 0.0
    %2869 = vmatprep.subr.mxu0 0.0
    %2870 = vmatpush1.msra.mxu0 0.0
    %2871 = vmatprep.subr.mxu0 0.0
    %2872 = vmatpush1.msra.mxu0 0.0
    %2873 = vmatprep.subr.mxu0 0.0
    %2874 = vmatpush1.msra.mxu0 0.0
    %2875 = vmatprep.subr.mxu0 0.0
    %2876 = vmatpush1.msra.mxu0 0.0
    %2877 = vmatprep.subr.mxu0 0.0
    %2878 = vmatpush1.msra.mxu0 0.0
    %2879 = vmatprep.mubr.f32.mxu0 0.0
    %2880 = vmatmul.mubr.f32.gmra.mrb[0].mxu0 %v204
    %v2881 = vpop.f32.mrb[0].mxu0
    %v2882 = vadd.f32 %v2314, %v2881
    %v2883 = vpop.f32.mrb[0].mxu0
    %v2884 = vadd.f32 %v2316, %v2883
    %2885 = vdwg.mxu0
    %2886 = vmatprep.subr.mxu0 %v2048
    %2887 = vmatpush1.msra.mxu0 %v2047
    %2888 = vmatprep.subr.mxu0 %v2064
    %2889 = vmatpush1.msra.mxu0 %v2063
    %2890 = vmatprep.subr.mxu0 0.0
    %2891 = vmatpush1.msra.mxu0 0.0
    %2892 = vmatprep.subr.mxu0 0.0
    %2893 = vmatpush1.msra.mxu0 0.0
    %2894 = vmatprep.subr.mxu0 0.0
    %2895 = vmatpush1.msra.mxu0 0.0
    %2896 = vmatprep.subr.mxu0 0.0
    %2897 = vmatpush1.msra.mxu0 0.0
    %2898 = vmatprep.subr.mxu0 0.0
    %2899 = vmatpush1.msra.mxu0 0.0
    %2900 = vmatprep.subr.mxu0 0.0
    %2901 = vmatpush1.msra.mxu0 0.0
    %2902 = vmatprep.subr.mxu0 0.0
    %2903 = vmatpush1.msra.mxu0 0.0
    %2904 = vmatprep.subr.mxu0 0.0
    %2905 = vmatpush1.msra.mxu0 0.0
    %2906 = vmatprep.subr.mxu0 0.0
    %2907 = vmatpush1.msra.mxu0 0.0
    %2908 = vmatprep.subr.mxu0 0.0
    %2909 = vmatpush1.msra.mxu0 0.0
    %2910 = vmatprep.subr.mxu0 0.0
    %2911 = vmatpush1.msra.mxu0 0.0
    %2912 = vmatprep.subr.mxu0 0.0
    %2913 = vmatpush1.msra.mxu0 0.0
    %2914 = vmatprep.subr.mxu0 0.0
    %2915 = vmatpush1.msra.mxu0 0.0
    %2916 = vmatprep.subr.mxu0 0.0
    %2917 = vmatpush1.msra.mxu0 0.0
    %2918 = vmatprep.subr.mxu0 0.0
    %2919 = vmatpush1.msra.mxu0 0.0
    %2920 = vmatprep.subr.mxu0 0.0
    %2921 = vmatpush1.msra.mxu0 0.0
    %2922 = vmatprep.subr.mxu0 0.0
    %2923 = vmatpush1.msra.mxu0 0.0
    %2924 = vmatprep.subr.mxu0 0.0
    %2925 = vmatpush1.msra.mxu0 0.0
    %2926 = vmatprep.subr.mxu0 0.0
    %2927 = vmatpush1.msra.mxu0 0.0
    %2928 = vmatprep.subr.mxu0 0.0
    %2929 = vmatpush1.msra.mxu0 0.0
    %2930 = vmatprep.subr.mxu0 0.0
    %2931 = vmatpush1.msra.mxu0 0.0
    %2932 = vmatprep.subr.mxu0 0.0
    %2933 = vmatpush1.msra.mxu0 0.0
    %2934 = vmatprep.subr.mxu0 0.0
    %2935 = vmatpush1.msra.mxu0 0.0
    %2936 = vmatprep.subr.mxu0 0.0
    %2937 = vmatpush1.msra.mxu0 0.0
    %2938 = vmatprep.subr.mxu0 0.0
    %2939 = vmatpush1.msra.mxu0 0.0
    %2940 = vmatprep.subr.mxu0 0.0
    %2941 = vmatpush1.msra.mxu0 0.0
    %2942 = vmatprep.subr.mxu0 0.0
    %2943 = vmatpush1.msra.mxu0 0.0
    %2944 = vmatprep.subr.mxu0 0.0
    %2945 = vmatpush1.msra.mxu0 0.0
    %2946 = vmatprep.subr.mxu0 0.0
    %2947 = vmatpush1.msra.mxu0 0.0
    %2948 = vmatprep.subr.mxu0 0.0
    %2949 = vmatpush1.msra.mxu0 0.0
    %2950 = vmatprep.mubr.f32.mxu0 0.0
    %2951 = vmatmul.mubr.f32.gmra.mrb[0].mxu0 %v204
    %v2952 = vpop.f32.mrb[0].mxu0
    %v2953 = vadd.f32 %v2385, %v2952
    %v2954 = vpop.f32.mrb[0].mxu0
    %v2955 = vadd.f32 %v2387, %v2954
    %2956 = vdwg.mxu0
    %2957 = vmatprep.subr.mxu0 %v2050
    %2958 = vmatpush1.msra.mxu0 %v2049
    %2959 = vmatprep.subr.mxu0 %v2066
    %2960 = vmatpush1.msra.mxu0 %v2065
    %2961 = vmatprep.subr.mxu0 0.0
    %2962 = vmatpush1.msra.mxu0 0.0
    %2963 = vmatprep.subr.mxu0 0.0
    %2964 = vmatpush1.msra.mxu0 0.0
    %2965 = vmatprep.subr.mxu0 0.0
    %2966 = vmatpush1.msra.mxu0 0.0
    %2967 = vmatprep.subr.mxu0 0.0
    %2968 = vmatpush1.msra.mxu0 0.0
    %2969 = vmatprep.subr.mxu0 0.0
    %2970 = vmatpush1.msra.mxu0 0.0
    %2971 = vmatprep.subr.mxu0 0.0
    %2972 = vmatpush1.msra.mxu0 0.0
    %2973 = vmatprep.subr.mxu0 0.0
    %2974 = vmatpush1.msra.mxu0 0.0
    %2975 = vmatprep.subr.mxu0 0.0
    %2976 = vmatpush1.msra.mxu0 0.0
    %2977 = vmatprep.subr.mxu0 0.0
    %2978 = vmatpush1.msra.mxu0 0.0
    %2979 = vmatprep.subr.mxu0 0.0
    %2980 = vmatpush1.msra.mxu0 0.0
    %2981 = vmatprep.subr.mxu0 0.0
    %2982 = vmatpush1.msra.mxu0 0.0
    %2983 = vmatprep.subr.mxu0 0.0
    %2984 = vmatpush1.msra.mxu0 0.0
    %2985 = vmatprep.subr.mxu0 0.0
    %2986 = vmatpush1.msra.mxu0 0.0
    %2987 = vmatprep.subr.mxu0 0.0
    %2988 = vmatpush1.msra.mxu0 0.0
    %2989 = vmatprep.subr.mxu0 0.0
    %2990 = vmatpush1.msra.mxu0 0.0
    %2991 = vmatprep.subr.mxu0 0.0
    %2992 = vmatpush1.msra.mxu0 0.0
    %2993 = vmatprep.subr.mxu0 0.0
    %2994 = vmatpush1.msra.mxu0 0.0
    %2995 = vmatprep.subr.mxu0 0.0
    %2996 = vmatpush1.msra.mxu0 0.0
    %2997 = vmatprep.subr.mxu0 0.0
    %2998 = vmatpush1.msra.mxu0 0.0
    %2999 = vmatprep.subr.mxu0 0.0
    %3000 = vmatpush1.msra.mxu0 0.0
    %3001 = vmatprep.subr.mxu0 0.0
    %3002 = vmatpush1.msra.mxu0 0.0
    %3003 = vmatprep.subr.mxu0 0.0
    %3004 = vmatpush1.msra.mxu0 0.0
    %3005 = vmatprep.subr.mxu0 0.0
    %3006 = vmatpush1.msra.mxu0 0.0
    %3007 = vmatprep.subr.mxu0 0.0
    %3008 = vmatpush1.msra.mxu0 0.0
    %3009 = vmatprep.subr.mxu0 0.0
    %3010 = vmatpush1.msra.mxu0 0.0
    %3011 = vmatprep.subr.mxu0 0.0
    %3012 = vmatpush1.msra.mxu0 0.0
    %3013 = vmatprep.subr.mxu0 0.0
    %3014 = vmatpush1.msra.mxu0 0.0
    %3015 = vmatprep.subr.mxu0 0.0
    %3016 = vmatpush1.msra.mxu0 0.0
    %3017 = vmatprep.subr.mxu0 0.0
    %3018 = vmatpush1.msra.mxu0 0.0
    %3019 = vmatprep.subr.mxu0 0.0
    %3020 = vmatpush1.msra.mxu0 0.0
    %3021 = vmatprep.mubr.f32.mxu0 0.0
    %3022 = vmatmul.mubr.f32.gmra.mrb[0].mxu0 %v204
    %v3023 = vpop.f32.mrb[0].mxu0
    %v3024 = vadd.f32 %v2456, %v3023
    %v3025 = vpop.f32.mrb[0].mxu0
    %v3026 = vadd.f32 %v2458, %v3025
    %3027 = vdwg.mxu0
    %3028 = vmatprep.subr.mxu0 %v2052
    %3029 = vmatpush1.msra.mxu0 %v2051
    %3030 = vmatprep.subr.mxu0 %v2068
    %3031 = vmatpush1.msra.mxu0 %v2067
    %3032 = vmatprep.subr.mxu0 0.0
    %3033 = vmatpush1.msra.mxu0 0.0
    %3034 = vmatprep.subr.mxu0 0.0
    %3035 = vmatpush1.msra.mxu0 0.0
    %3036 = vmatprep.subr.mxu0 0.0
    %3037 = vmatpush1.msra.mxu0 0.0
    %3038 = vmatprep.subr.mxu0 0.0
    %3039 = vmatpush1.msra.mxu0 0.0
    %3040 = vmatprep.subr.mxu0 0.0
    %3041 = vmatpush1.msra.mxu0 0.0
    %3042 = vmatprep.subr.mxu0 0.0
    %3043 = vmatpush1.msra.mxu0 0.0
    %3044 = vmatprep.subr.mxu0 0.0
    %3045 = vmatpush1.msra.mxu0 0.0
    %3046 = vmatprep.subr.mxu0 0.0
    %3047 = vmatpush1.msra.mxu0 0.0
    %3048 = vmatprep.subr.mxu0 0.0
    %3049 = vmatpush1.msra.mxu0 0.0
    %3050 = vmatprep.subr.mxu0 0.0
    %3051 = vmatpush1.msra.mxu0 0.0
    %3052 = vmatprep.subr.mxu0 0.0
    %3053 = vmatpush1.msra.mxu0 0.0
    %3054 = vmatprep.subr.mxu0 0.0
    %3055 = vmatpush1.msra.mxu0 0.0
    %3056 = vmatprep.subr.mxu0 0.0
    %3057 = vmatpush1.msra.mxu0 0.0
    %3058 = vmatprep.subr.mxu0 0.0
    %3059 = vmatpush1.msra.mxu0 0.0
    %3060 = vmatprep.subr.mxu0 0.0
    %3061 = vmatpush1.msra.mxu0 0.0
    %3062 = vmatprep.subr.mxu0 0.0
    %3063 = vmatpush1.msra.mxu0 0.0
    %3064 = vmatprep.subr.mxu0 0.0
    %3065 = vmatpush1.msra.mxu0 0.0
    %3066 = vmatprep.subr.mxu0 0.0
    %3067 = vmatpush1.msra.mxu0 0.0
    %3068 = vmatprep.subr.mxu0 0.0
    %3069 = vmatpush1.msra.mxu0 0.0
    %3070 = vmatprep.subr.mxu0 0.0
    %3071 = vmatpush1.msra.mxu0 0.0
    %3072 = vmatprep.subr.mxu0 0.0
    %3073 = vmatpush1.msra.mxu0 0.0
    %3074 = vmatprep.subr.mxu0 0.0
    %3075 = vmatpush1.msra.mxu0 0.0
    %3076 = vmatprep.subr.mxu0 0.0
    %3077 = vmatpush1.msra.mxu0 0.0
    %3078 = vmatprep.subr.mxu0 0.0
    %3079 = vmatpush1.msra.mxu0 0.0
    %3080 = vmatprep.subr.mxu0 0.0
    %3081 = vmatpush1.msra.mxu0 0.0
    %3082 = vmatprep.subr.mxu0 0.0
    %3083 = vmatpush1.msra.mxu0 0.0
    %3084 = vmatprep.subr.mxu0 0.0
    %3085 = vmatpush1.msra.mxu0 0.0
    %3086 = vmatprep.subr.mxu0 0.0
    %3087 = vmatpush1.msra.mxu0 0.0
    %3088 = vmatprep.subr.mxu0 0.0
    %3089 = vmatpush1.msra.mxu0 0.0
    %3090 = vmatprep.subr.mxu0 0.0
    %3091 = vmatpush1.msra.mxu0 0.0
    %3092 = vmatprep.mubr.f32.mxu0 0.0
    %3093 = vmatmul.mubr.f32.gmra.mrb[0].mxu0 %v204
    %v3094 = vpop.f32.mrb[0].mxu0
    %v3095 = vadd.f32 %v2527, %v3094
    %v3096 = vpop.f32.mrb[0].mxu0
    %v3097 = vadd.f32 %v2529, %v3096
    %3098 = vdwg.mxu0
    %3099 = vmatprep.subr.mxu0 %v2054
    %3100 = vmatpush1.msra.mxu0 %v2053
    %3101 = vmatprep.subr.mxu0 %v2070
    %3102 = vmatpush1.msra.mxu0 %v2069
    %3103 = vmatprep.subr.mxu0 0.0
    %3104 = vmatpush1.msra.mxu0 0.0
    %3105 = vmatprep.subr.mxu0 0.0
    %3106 = vmatpush1.msra.mxu0 0.0
    %3107 = vmatprep.subr.mxu0 0.0
    %3108 = vmatpush1.msra.mxu0 0.0
    %3109 = vmatprep.subr.mxu0 0.0
    %3110 = vmatpush1.msra.mxu0 0.0
    %3111 = vmatprep.subr.mxu0 0.0
    %3112 = vmatpush1.msra.mxu0 0.0
    %3113 = vmatprep.subr.mxu0 0.0
    %3114 = vmatpush1.msra.mxu0 0.0
    %3115 = vmatprep.subr.mxu0 0.0
    %3116 = vmatpush1.msra.mxu0 0.0
    %3117 = vmatprep.subr.mxu0 0.0
    %3118 = vmatpush1.msra.mxu0 0.0
    %3119 = vmatprep.subr.mxu0 0.0
    %3120 = vmatpush1.msra.mxu0 0.0
    %3121 = vmatprep.subr.mxu0 0.0
    %3122 = vmatpush1.msra.mxu0 0.0
    %3123 = vmatprep.subr.mxu0 0.0
    %3124 = vmatpush1.msra.mxu0 0.0
    %3125 = vmatprep.subr.mxu0 0.0
    %3126 = vmatpush1.msra.mxu0 0.0
    %3127 = vmatprep.subr.mxu0 0.0
    %3128 = vmatpush1.msra.mxu0 0.0
    %3129 = vmatprep.subr.mxu0 0.0
    %3130 = vmatpush1.msra.mxu0 0.0
    %3131 = vmatprep.subr.mxu0 0.0
    %3132 = vmatpush1.msra.mxu0 0.0
    %3133 = vmatprep.subr.mxu0 0.0
    %3134 = vmatpush1.msra.mxu0 0.0
    %3135 = vmatprep.subr.mxu0 0.0
    %3136 = vmatpush1.msra.mxu0 0.0
    %3137 = vmatprep.subr.mxu0 0.0
    %3138 = vmatpush1.msra.mxu0 0.0
    %3139 = vmatprep.subr.mxu0 0.0
    %3140 = vmatpush1.msra.mxu0 0.0
    %3141 = vmatprep.subr.mxu0 0.0
    %3142 = vmatpush1.msra.mxu0 0.0
    %3143 = vmatprep.subr.mxu0 0.0
    %3144 = vmatpush1.msra.mxu0 0.0
    %3145 = vmatprep.subr.mxu0 0.0
    %3146 = vmatpush1.msra.mxu0 0.0
    %3147 = vmatprep.subr.mxu0 0.0
    %3148 = vmatpush1.msra.mxu0 0.0
    %3149 = vmatprep.subr.mxu0 0.0
    %3150 = vmatpush1.msra.mxu0 0.0
    %3151 = vmatprep.subr.mxu0 0.0
    %3152 = vmatpush1.msra.mxu0 0.0
    %3153 = vmatprep.subr.mxu0 0.0
    %3154 = vmatpush1.msra.mxu0 0.0
    %3155 = vmatprep.subr.mxu0 0.0
    %3156 = vmatpush1.msra.mxu0 0.0
    %3157 = vmatprep.subr.mxu0 0.0
    %3158 = vmatpush1.msra.mxu0 0.0
    %3159 = vmatprep.subr.mxu0 0.0
    %3160 = vmatpush1.msra.mxu0 0.0
    %3161 = vmatprep.subr.mxu0 0.0
    %3162 = vmatpush1.msra.mxu0 0.0
    %3163 = vmatprep.mubr.f32.mxu0 0.0
    %3164 = vmatmul.mubr.f32.gmra.mrb[0].mxu0 %v204
    %v3165 = vpop.f32.mrb[0].mxu0
    %v3166 = vadd.f32 %v2598, %v3165
    %v3167 = vpop.f32.mrb[0].mxu0
    %v3168 = vadd.f32 %v2600, %v3167
    %3169 = vdwg.mxu0
    %3170 = vmatprep.subr.mxu0 %v2056
    %3171 = vmatpush1.msra.mxu0 %v2055
    %3172 = vmatprep.subr.mxu0 %v2072
    %3173 = vmatpush1.msra.mxu0 %v2071
    %3174 = vmatprep.subr.mxu0 0.0
    %3175 = vmatpush1.msra.mxu0 0.0
    %3176 = vmatprep.subr.mxu0 0.0
    %3177 = vmatpush1.msra.mxu0 0.0
    %3178 = vmatprep.subr.mxu0 0.0
    %3179 = vmatpush1.msra.mxu0 0.0
    %3180 = vmatprep.subr.mxu0 0.0
    %3181 = vmatpush1.msra.mxu0 0.0
    %3182 = vmatprep.subr.mxu0 0.0
    %3183 = vmatpush1.msra.mxu0 0.0
    %3184 = vmatprep.subr.mxu0 0.0
    %3185 = vmatpush1.msra.mxu0 0.0
    %3186 = vmatprep.subr.mxu0 0.0
    %3187 = vmatpush1.msra.mxu0 0.0
    %3188 = vmatprep.subr.mxu0 0.0
    %3189 = vmatpush1.msra.mxu0 0.0
    %3190 = vmatprep.subr.mxu0 0.0
    %3191 = vmatpush1.msra.mxu0 0.0
    %3192 = vmatprep.subr.mxu0 0.0
    %3193 = vmatpush1.msra.mxu0 0.0
    %3194 = vmatprep.subr.mxu0 0.0
    %3195 = vmatpush1.msra.mxu0 0.0
    %3196 = vmatprep.subr.mxu0 0.0
    %3197 = vmatpush1.msra.mxu0 0.0
    %3198 = vmatprep.subr.mxu0 0.0
    %3199 = vmatpush1.msra.mxu0 0.0
    %3200 = vmatprep.subr.mxu0 0.0
    %3201 = vmatpush1.msra.mxu0 0.0
    %3202 = vmatprep.subr.mxu0 0.0
    %3203 = vmatpush1.msra.mxu0 0.0
    %3204 = vmatprep.subr.mxu0 0.0
    %3205 = vmatpush1.msra.mxu0 0.0
    %3206 = vmatprep.subr.mxu0 0.0
    %3207 = vmatpush1.msra.mxu0 0.0
    %3208 = vmatprep.subr.mxu0 0.0
    %3209 = vmatpush1.msra.mxu0 0.0
    %3210 = vmatprep.subr.mxu0 0.0
    %3211 = vmatpush1.msra.mxu0 0.0
    %3212 = vmatprep.subr.mxu0 0.0
    %3213 = vmatpush1.msra.mxu0 0.0
    %3214 = vmatprep.subr.mxu0 0.0
    %3215 = vmatpush1.msra.mxu0 0.0
    %3216 = vmatprep.subr.mxu0 0.0
    %3217 = vmatpush1.msra.mxu0 0.0
    %3218 = vmatprep.subr.mxu0 0.0
    %3219 = vmatpush1.msra.mxu0 0.0
    %3220 = vmatprep.subr.mxu0 0.0
    %3221 = vmatpush1.msra.mxu0 0.0
    %3222 = vmatprep.subr.mxu0 0.0
    %3223 = vmatpush1.msra.mxu0 0.0
    %3224 = vmatprep.subr.mxu0 0.0
    %3225 = vmatpush1.msra.mxu0 0.0
    %3226 = vmatprep.subr.mxu0 0.0
    %3227 = vmatpush1.msra.mxu0 0.0
    %3228 = vmatprep.subr.mxu0 0.0
    %3229 = vmatpush1.msra.mxu0 0.0
    %3230 = vmatprep.subr.mxu0 0.0
    %3231 = vmatpush1.msra.mxu0 0.0
    %3232 = vmatprep.subr.mxu0 0.0
    %3233 = vmatpush1.msra.mxu0 0.0
    %3234 = vmatprep.mubr.f32.mxu0 0.0
    %3235 = vmatmul.mubr.f32.gmra.mrb[0].mxu0 %v204
    %v3236 = vpop.f32.mrb[0].mxu0
    %v3237 = vadd.f32 %v2669, %v3236
    %v3238 = vpop.f32.mrb[0].mxu0
    %v3239 = vadd.f32 %v2671, %v3238
    %3240 = vdwg.mxu0
    %3241 = vmatprep.subr.mxu0 %v87
    %3242 = vmatpush1.msra.mxu0 %v86
    %3243 = vmatprep.subr.mxu0 %v103
    %3244 = vmatpush1.msra.mxu0 %v102
    %3245 = vmatprep.subr.mxu0 0.0
    %3246 = vmatpush1.msra.mxu0 0.0
    %3247 = vmatprep.subr.mxu0 0.0
    %3248 = vmatpush1.msra.mxu0 0.0
    %3249 = vmatprep.subr.mxu0 0.0
    %3250 = vmatpush1.msra.mxu0 0.0
    %3251 = vmatprep.subr.mxu0 0.0
    %3252 = vmatpush1.msra.mxu0 0.0
    %3253 = vmatprep.subr.mxu0 0.0
    %3254 = vmatpush1.msra.mxu0 0.0
    %3255 = vmatprep.subr.mxu0 0.0
    %3256 = vmatpush1.msra.mxu0 0.0
    %3257 = vmatprep.subr.mxu0 0.0
    %3258 = vmatpush1.msra.mxu0 0.0
    %3259 = vmatprep.subr.mxu0 0.0
    %3260 = vmatpush1.msra.mxu0 0.0
    %3261 = vmatprep.subr.mxu0 0.0
    %3262 = vmatpush1.msra.mxu0 0.0
    %3263 = vmatprep.subr.mxu0 0.0
    %3264 = vmatpush1.msra.mxu0 0.0
    %3265 = vmatprep.subr.mxu0 0.0
    %3266 = vmatpush1.msra.mxu0 0.0
    %3267 = vmatprep.subr.mxu0 0.0
    %3268 = vmatpush1.msra.mxu0 0.0
    %3269 = vmatprep.subr.mxu0 0.0
    %3270 = vmatpush1.msra.mxu0 0.0
    %3271 = vmatprep.subr.mxu0 0.0
    %3272 = vmatpush1.msra.mxu0 0.0
    %3273 = vmatprep.subr.mxu0 0.0
    %3274 = vmatpush1.msra.mxu0 0.0
    %3275 = vmatprep.subr.mxu0 0.0
    %3276 = vmatpush1.msra.mxu0 0.0
    %3277 = vmatprep.subr.mxu0 0.0
    %3278 = vmatpush1.msra.mxu0 0.0
    %3279 = vmatprep.subr.mxu0 0.0
    %3280 = vmatpush1.msra.mxu0 0.0
    %3281 = vmatprep.subr.mxu0 0.0
    %3282 = vmatpush1.msra.mxu0 0.0
    %3283 = vmatprep.subr.mxu0 0.0
    %3284 = vmatpush1.msra.mxu0 0.0
    %3285 = vmatprep.subr.mxu0 0.0
    %3286 = vmatpush1.msra.mxu0 0.0
    %3287 = vmatprep.subr.mxu0 0.0
    %3288 = vmatpush1.msra.mxu0 0.0
    %3289 = vmatprep.subr.mxu0 0.0
    %3290 = vmatpush1.msra.mxu0 0.0
    %3291 = vmatprep.subr.mxu0 0.0
    %3292 = vmatpush1.msra.mxu0 0.0
    %3293 = vmatprep.subr.mxu0 0.0
    %3294 = vmatpush1.msra.mxu0 0.0
    %3295 = vmatprep.subr.mxu0 0.0
    %3296 = vmatpush1.msra.mxu0 0.0
    %3297 = vmatprep.subr.mxu0 0.0
    %3298 = vmatpush1.msra.mxu0 0.0
    %3299 = vmatprep.subr.mxu0 0.0
    %3300 = vmatpush1.msra.mxu0 0.0
    %3301 = vmatprep.subr.mxu0 0.0
    %3302 = vmatpush1.msra.mxu0 0.0
    %3303 = vmatprep.subr.mxu0 0.0
    %3304 = vmatpush1.msra.mxu0 0.0
    %3305 = vmatprep.mubr.f32.mxu0 0.0
    %3306 = vmatmul.mubr.f32.gmra.mrb[0].mxu0 %v1343
    %v3307 = vpop.f32.mrb[0].mxu0
    %v3308 = vadd.f32 0.0, %v3307
    %v3309 = vpop.f32.mrb[0].mxu0
    %v3310 = vadd.f32 0.0, %v3309
    %3311 = vdwg.mxu0
    %3312 = vmatprep.subr.mxu0 %v89
    %3313 = vmatpush1.msra.mxu0 %v88
    %3314 = vmatprep.subr.mxu0 %v105
    %3315 = vmatpush1.msra.mxu0 %v104
    %3316 = vmatprep.subr.mxu0 0.0
    %3317 = vmatpush1.msra.mxu0 0.0
    %3318 = vmatprep.subr.mxu0 0.0
    %3319 = vmatpush1.msra.mxu0 0.0
    %3320 = vmatprep.subr.mxu0 0.0
    %3321 = vmatpush1.msra.mxu0 0.0
    %3322 = vmatprep.subr.mxu0 0.0
    %3323 = vmatpush1.msra.mxu0 0.0
    %3324 = vmatprep.subr.mxu0 0.0
    %3325 = vmatpush1.msra.mxu0 0.0
    %3326 = vmatprep.subr.mxu0 0.0
    %3327 = vmatpush1.msra.mxu0 0.0
    %3328 = vmatprep.subr.mxu0 0.0
    %3329 = vmatpush1.msra.mxu0 0.0
    %3330 = vmatprep.subr.mxu0 0.0
    %3331 = vmatpush1.msra.mxu0 0.0
    %3332 = vmatprep.subr.mxu0 0.0
    %3333 = vmatpush1.msra.mxu0 0.0
    %3334 = vmatprep.subr.mxu0 0.0
    %3335 = vmatpush1.msra.mxu0 0.0
    %3336 = vmatprep.subr.mxu0 0.0
    %3337 = vmatpush1.msra.mxu0 0.0
    %3338 = vmatprep.subr.mxu0 0.0
    %3339 = vmatpush1.msra.mxu0 0.0
    %3340 = vmatprep.subr.mxu0 0.0
    %3341 = vmatpush1.msra.mxu0 0.0
    %3342 = vmatprep.subr.mxu0 0.0
    %3343 = vmatpush1.msra.mxu0 0.0
    %3344 = vmatprep.subr.mxu0 0.0
    %3345 = vmatpush1.msra.mxu0 0.0
    %3346 = vmatprep.subr.mxu0 0.0
    %3347 = vmatpush1.msra.mxu0 0.0
    %3348 = vmatprep.subr.mxu0 0.0
    %3349 = vmatpush1.msra.mxu0 0.0
    %3350 = vmatprep.subr.mxu0 0.0
    %3351 = vmatpush1.msra.mxu0 0.0
    %3352 = vmatprep.subr.mxu0 0.0
    %3353 = vmatpush1.msra.mxu0 0.0
    %3354 = vmatprep.subr.mxu0 0.0
    %3355 = vmatpush1.msra.mxu0 0.0
    %3356 = vmatprep.subr.mxu0 0.0
    %3357 = vmatpush1.msra.mxu0 0.0
    %3358 = vmatprep.subr.mxu0 0.0
    %3359 = vmatpush1.msra.mxu0 0.0
    %3360 = vmatprep.subr.mxu0 0.0
    %3361 = vmatpush1.msra.mxu0 0.0
    %3362 = vmatprep.subr.mxu0 0.0
    %3363 = vmatpush1.msra.mxu0 0.0
    %3364 = vmatprep.subr.mxu0 0.0
    %3365 = vmatpush1.msra.mxu0 0.0
    %3366 = vmatprep.subr.mxu0 0.0
    %3367 = vmatpush1.msra.mxu0 0.0
    %3368 = vmatprep.subr.mxu0 0.0
    %3369 = vmatpush1.msra.mxu0 0.0
    %3370 = vmatprep.subr.mxu0 0.0
    %3371 = vmatpush1.msra.mxu0 0.0
    %3372 = vmatprep.subr.mxu0 0.0
    %3373 = vmatpush1.msra.mxu0 0.0
    %3374 = vmatprep.subr.mxu0 0.0
    %3375 = vmatpush1.msra.mxu0 0.0
    %3376 = vmatprep.mubr.f32.mxu0 0.0
    %3377 = vmatmul.mubr.f32.gmra.mrb[0].mxu0 %v1343
    %v3378 = vpop.f32.mrb[0].mxu0
    %v3379 = vadd.f32 0.0, %v3378
    %v3380 = vpop.f32.mrb[0].mxu0
    %v3381 = vadd.f32 0.0, %v3380
    %3382 = vdwg.mxu0
    %3383 = vmatprep.subr.mxu0 %v91
    %3384 = vmatpush1.msra.mxu0 %v90
    %3385 = vmatprep.subr.mxu0 %v107
    %3386 = vmatpush1.msra.mxu0 %v106
    %3387 = vmatprep.subr.mxu0 0.0
    %3388 = vmatpush1.msra.mxu0 0.0
    %3389 = vmatprep.subr.mxu0 0.0
    %3390 = vmatpush1.msra.mxu0 0.0
    %3391 = vmatprep.subr.mxu0 0.0
    %3392 = vmatpush1.msra.mxu0 0.0
    %3393 = vmatprep.subr.mxu0 0.0
    %3394 = vmatpush1.msra.mxu0 0.0
    %3395 = vmatprep.subr.mxu0 0.0
    %3396 = vmatpush1.msra.mxu0 0.0
    %3397 = vmatprep.subr.mxu0 0.0
    %3398 = vmatpush1.msra.mxu0 0.0
    %3399 = vmatprep.subr.mxu0 0.0
    %3400 = vmatpush1.msra.mxu0 0.0
    %3401 = vmatprep.subr.mxu0 0.0
    %3402 = vmatpush1.msra.mxu0 0.0
    %3403 = vmatprep.subr.mxu0 0.0
    %3404 = vmatpush1.msra.mxu0 0.0
    %3405 = vmatprep.subr.mxu0 0.0
    %3406 = vmatpush1.msra.mxu0 0.0
    %3407 = vmatprep.subr.mxu0 0.0
    %3408 = vmatpush1.msra.mxu0 0.0
    %3409 = vmatprep.subr.mxu0 0.0
    %3410 = vmatpush1.msra.mxu0 0.0
    %3411 = vmatprep.subr.mxu0 0.0
    %3412 = vmatpush1.msra.mxu0 0.0
    %3413 = vmatprep.subr.mxu0 0.0
    %3414 = vmatpush1.msra.mxu0 0.0
    %3415 = vmatprep.subr.mxu0 0.0
    %3416 = vmatpush1.msra.mxu0 0.0
    %3417 = vmatprep.subr.mxu0 0.0
    %3418 = vmatpush1.msra.mxu0 0.0
    %3419 = vmatprep.subr.mxu0 0.0
    %3420 = vmatpush1.msra.mxu0 0.0
    %3421 = vmatprep.subr.mxu0 0.0
    %3422 = vmatpush1.msra.mxu0 0.0
    %3423 = vmatprep.subr.mxu0 0.0
    %3424 = vmatpush1.msra.mxu0 0.0
    %3425 = vmatprep.subr.mxu0 0.0
    %3426 = vmatpush1.msra.mxu0 0.0
    %3427 = vmatprep.subr.mxu0 0.0
    %3428 = vmatpush1.msra.mxu0 0.0
    %3429 = vmatprep.subr.mxu0 0.0
    %3430 = vmatpush1.msra.mxu0 0.0
    %3431 = vmatprep.subr.mxu0 0.0
    %3432 = vmatpush1.msra.mxu0 0.0
    %3433 = vmatprep.subr.mxu0 0.0
    %3434 = vmatpush1.msra.mxu0 0.0
    %3435 = vmatprep.subr.mxu0 0.0
    %3436 = vmatpush1.msra.mxu0 0.0
    %3437 = vmatprep.subr.mxu0 0.0
    %3438 = vmatpush1.msra.mxu0 0.0
    %3439 = vmatprep.subr.mxu0 0.0
    %3440 = vmatpush1.msra.mxu0 0.0
    %3441 = vmatprep.subr.mxu0 0.0
    %3442 = vmatpush1.msra.mxu0 0.0
    %3443 = vmatprep.subr.mxu0 0.0
    %3444 = vmatpush1.msra.mxu0 0.0
    %3445 = vmatprep.subr.mxu0 0.0
    %3446 = vmatpush1.msra.mxu0 0.0
    %3447 = vmatprep.mubr.f32.mxu0 0.0
    %3448 = vmatmul.mubr.f32.gmra.mrb[0].mxu0 %v1343
    %v3449 = vpop.f32.mrb[0].mxu0
    %v3450 = vadd.f32 0.0, %v3449
    %v3451 = vpop.f32.mrb[0].mxu0
    %v3452 = vadd.f32 0.0, %v3451
    %3453 = vdwg.mxu0
    %3454 = vmatprep.subr.mxu0 %v93
    %3455 = vmatpush1.msra.mxu0 %v92
    %3456 = vmatprep.subr.mxu0 %v109
    %3457 = vmatpush1.msra.mxu0 %v108
    %3458 = vmatprep.subr.mxu0 0.0
    %3459 = vmatpush1.msra.mxu0 0.0
    %3460 = vmatprep.subr.mxu0 0.0
    %3461 = vmatpush1.msra.mxu0 0.0
    %3462 = vmatprep.subr.mxu0 0.0
    %3463 = vmatpush1.msra.mxu0 0.0
    %3464 = vmatprep.subr.mxu0 0.0
    %3465 = vmatpush1.msra.mxu0 0.0
    %3466 = vmatprep.subr.mxu0 0.0
    %3467 = vmatpush1.msra.mxu0 0.0
    %3468 = vmatprep.subr.mxu0 0.0
    %3469 = vmatpush1.msra.mxu0 0.0
    %3470 = vmatprep.subr.mxu0 0.0
    %3471 = vmatpush1.msra.mxu0 0.0
    %3472 = vmatprep.subr.mxu0 0.0
    %3473 = vmatpush1.msra.mxu0 0.0
    %3474 = vmatprep.subr.mxu0 0.0
    %3475 = vmatpush1.msra.mxu0 0.0
    %3476 = vmatprep.subr.mxu0 0.0
    %3477 = vmatpush1.msra.mxu0 0.0
    %3478 = vmatprep.subr.mxu0 0.0
    %3479 = vmatpush1.msra.mxu0 0.0
    %3480 = vmatprep.subr.mxu0 0.0
    %3481 = vmatpush1.msra.mxu0 0.0
    %3482 = vmatprep.subr.mxu0 0.0
    %3483 = vmatpush1.msra.mxu0 0.0
    %3484 = vmatprep.subr.mxu0 0.0
    %3485 = vmatpush1.msra.mxu0 0.0
    %3486 = vmatprep.subr.mxu0 0.0
    %3487 = vmatpush1.msra.mxu0 0.0
    %3488 = vmatprep.subr.mxu0 0.0
    %3489 = vmatpush1.msra.mxu0 0.0
    %3490 = vmatprep.subr.mxu0 0.0
    %3491 = vmatpush1.msra.mxu0 0.0
    %3492 = vmatprep.subr.mxu0 0.0
    %3493 = vmatpush1.msra.mxu0 0.0
    %3494 = vmatprep.subr.mxu0 0.0
    %3495 = vmatpush1.msra.mxu0 0.0
    %3496 = vmatprep.subr.mxu0 0.0
    %3497 = vmatpush1.msra.mxu0 0.0
    %3498 = vmatprep.subr.mxu0 0.0
    %3499 = vmatpush1.msra.mxu0 0.0
    %3500 = vmatprep.subr.mxu0 0.0
    %3501 = vmatpush1.msra.mxu0 0.0
    %3502 = vmatprep.subr.mxu0 0.0
    %3503 = vmatpush1.msra.mxu0 0.0
    %3504 = vmatprep.subr.mxu0 0.0
    %3505 = vmatpush1.msra.mxu0 0.0
    %3506 = vmatprep.subr.mxu0 0.0
    %3507 = vmatpush1.msra.mxu0 0.0
    %3508 = vmatprep.subr.mxu0 0.0
    %3509 = vmatpush1.msra.mxu0 0.0
    %3510 = vmatprep.subr.mxu0 0.0
    %3511 = vmatpush1.msra.mxu0 0.0
    %3512 = vmatprep.subr.mxu0 0.0
    %3513 = vmatpush1.msra.mxu0 0.0
    %3514 = vmatprep.subr.mxu0 0.0
    %3515 = vmatpush1.msra.mxu0 0.0
    %3516 = vmatprep.subr.mxu0 0.0
    %3517 = vmatpush1.msra.mxu0 0.0
    %3518 = vmatprep.mubr.f32.mxu0 0.0
    %3519 = vmatmul.mubr.f32.gmra.mrb[0].mxu0 %v1343
    %v3520 = vpop.f32.mrb[0].mxu0
    %v3521 = vadd.f32 0.0, %v3520
    %v3522 = vpop.f32.mrb[0].mxu0
    %v3523 = vadd.f32 0.0, %v3522
    %3524 = vdwg.mxu0
    %3525 = vmatprep.subr.mxu0 %v95
    %3526 = vmatpush1.msra.mxu0 %v94
    %3527 = vmatprep.subr.mxu0 %v111
    %3528 = vmatpush1.msra.mxu0 %v110
    %3529 = vmatprep.subr.mxu0 0.0
    %3530 = vmatpush1.msra.mxu0 0.0
    %3531 = vmatprep.subr.mxu0 0.0
    %3532 = vmatpush1.msra.mxu0 0.0
    %3533 = vmatprep.subr.mxu0 0.0
    %3534 = vmatpush1.msra.mxu0 0.0
    %3535 = vmatprep.subr.mxu0 0.0
    %3536 = vmatpush1.msra.mxu0 0.0
    %3537 = vmatprep.subr.mxu0 0.0
    %3538 = vmatpush1.msra.mxu0 0.0
    %3539 = vmatprep.subr.mxu0 0.0
    %3540 = vmatpush1.msra.mxu0 0.0
    %3541 = vmatprep.subr.mxu0 0.0
    %3542 = vmatpush1.msra.mxu0 0.0
    %3543 = vmatprep.subr.mxu0 0.0
    %3544 = vmatpush1.msra.mxu0 0.0
    %3545 = vmatprep.subr.mxu0 0.0
    %3546 = vmatpush1.msra.mxu0 0.0
    %3547 = vmatprep.subr.mxu0 0.0
    %3548 = vmatpush1.msra.mxu0 0.0
    %3549 = vmatprep.subr.mxu0 0.0
    %3550 = vmatpush1.msra.mxu0 0.0
    %3551 = vmatprep.subr.mxu0 0.0
    %3552 = vmatpush1.msra.mxu0 0.0
    %3553 = vmatprep.subr.mxu0 0.0
    %3554 = vmatpush1.msra.mxu0 0.0
    %3555 = vmatprep.subr.mxu0 0.0
    %3556 = vmatpush1.msra.mxu0 0.0
    %3557 = vmatprep.subr.mxu0 0.0
    %3558 = vmatpush1.msra.mxu0 0.0
    %3559 = vmatprep.subr.mxu0 0.0
    %3560 = vmatpush1.msra.mxu0 0.0
    %3561 = vmatprep.subr.mxu0 0.0
    %3562 = vmatpush1.msra.mxu0 0.0
    %3563 = vmatprep.subr.mxu0 0.0
    %3564 = vmatpush1.msra.mxu0 0.0
    %3565 = vmatprep.subr.mxu0 0.0
    %3566 = vmatpush1.msra.mxu0 0.0
    %3567 = vmatprep.subr.mxu0 0.0
    %3568 = vmatpush1.msra.mxu0 0.0
    %3569 = vmatprep.subr.mxu0 0.0
    %3570 = vmatpush1.msra.mxu0 0.0
    %3571 = vmatprep.subr.mxu0 0.0
    %3572 = vmatpush1.msra.mxu0 0.0
    %3573 = vmatprep.subr.mxu0 0.0
    %3574 = vmatpush1.msra.mxu0 0.0
    %3575 = vmatprep.subr.mxu0 0.0
    %3576 = vmatpush1.msra.mxu0 0.0
    %3577 = vmatprep.subr.mxu0 0.0
    %3578 = vmatpush1.msra.mxu0 0.0
    %3579 = vmatprep.subr.mxu0 0.0
    %3580 = vmatpush1.msra.mxu0 0.0
    %3581 = vmatprep.subr.mxu0 0.0
    %3582 = vmatpush1.msra.mxu0 0.0
    %3583 = vmatprep.subr.mxu0 0.0
    %3584 = vmatpush1.msra.mxu0 0.0
    %3585 = vmatprep.subr.mxu0 0.0
    %3586 = vmatpush1.msra.mxu0 0.0
    %3587 = vmatprep.subr.mxu0 0.0
    %3588 = vmatpush1.msra.mxu0 0.0
    %3589 = vmatprep.mubr.f32.mxu0 0.0
    %3590 = vmatmul.mubr.f32.gmra.mrb[0].mxu0 %v1343
    %v3591 = vpop.f32.mrb[0].mxu0
    %v3592 = vadd.f32 0.0, %v3591
    %v3593 = vpop.f32.mrb[0].mxu0
    %v3594 = vadd.f32 0.0, %v3593
    %3595 = vdwg.mxu0
    %3596 = vmatprep.subr.mxu0 %v97
    %3597 = vmatpush1.msra.mxu0 %v96
    %3598 = vmatprep.subr.mxu0 %v113
    %3599 = vmatpush1.msra.mxu0 %v112
    %3600 = vmatprep.subr.mxu0 0.0
    %3601 = vmatpush1.msra.mxu0 0.0
    %3602 = vmatprep.subr.mxu0 0.0
    %3603 = vmatpush1.msra.mxu0 0.0
    %3604 = vmatprep.subr.mxu0 0.0
    %3605 = vmatpush1.msra.mxu0 0.0
    %3606 = vmatprep.subr.mxu0 0.0
    %3607 = vmatpush1.msra.mxu0 0.0
    %3608 = vmatprep.subr.mxu0 0.0
    %3609 = vmatpush1.msra.mxu0 0.0
    %3610 = vmatprep.subr.mxu0 0.0
    %3611 = vmatpush1.msra.mxu0 0.0
    %3612 = vmatprep.subr.mxu0 0.0
    %3613 = vmatpush1.msra.mxu0 0.0
    %3614 = vmatprep.subr.mxu0 0.0
    %3615 = vmatpush1.msra.mxu0 0.0
    %3616 = vmatprep.subr.mxu0 0.0
    %3617 = vmatpush1.msra.mxu0 0.0
    %3618 = vmatprep.subr.mxu0 0.0
    %3619 = vmatpush1.msra.mxu0 0.0
    %3620 = vmatprep.subr.mxu0 0.0
    %3621 = vmatpush1.msra.mxu0 0.0
    %3622 = vmatprep.subr.mxu0 0.0
    %3623 = vmatpush1.msra.mxu0 0.0
    %3624 = vmatprep.subr.mxu0 0.0
    %3625 = vmatpush1.msra.mxu0 0.0
    %3626 = vmatprep.subr.mxu0 0.0
    %3627 = vmatpush1.msra.mxu0 0.0
    %3628 = vmatprep.subr.mxu0 0.0
    %3629 = vmatpush1.msra.mxu0 0.0
    %3630 = vmatprep.subr.mxu0 0.0
    %3631 = vmatpush1.msra.mxu0 0.0
    %3632 = vmatprep.subr.mxu0 0.0
    %3633 = vmatpush1.msra.mxu0 0.0
    %3634 = vmatprep.subr.mxu0 0.0
    %3635 = vmatpush1.msra.mxu0 0.0
    %3636 = vmatprep.subr.mxu0 0.0
    %3637 = vmatpush1.msra.mxu0 0.0
    %3638 = vmatprep.subr.mxu0 0.0
    %3639 = vmatpush1.msra.mxu0 0.0
    %3640 = vmatprep.subr.mxu0 0.0
    %3641 = vmatpush1.msra.mxu0 0.0
    %3642 = vmatprep.subr.mxu0 0.0
    %3643 = vmatpush1.msra.mxu0 0.0
    %3644 = vmatprep.subr.mxu0 0.0
    %3645 = vmatpush1.msra.mxu0 0.0
    %3646 = vmatprep.subr.mxu0 0.0
    %3647 = vmatpush1.msra.mxu0 0.0
    %3648 = vmatprep.subr.mxu0 0.0
    %3649 = vmatpush1.msra.mxu0 0.0
    %3650 = vmatprep.subr.mxu0 0.0
    %3651 = vmatpush1.msra.mxu0 0.0
    %3652 = vmatprep.subr.mxu0 0.0
    %3653 = vmatpush1.msra.mxu0 0.0
    %3654 = vmatprep.subr.mxu0 0.0
    %3655 = vmatpush1.msra.mxu0 0.0
    %3656 = vmatprep.subr.mxu0 0.0
    %3657 = vmatpush1.msra.mxu0 0.0
    %3658 = vmatprep.subr.mxu0 0.0
    %3659 = vmatpush1.msra.mxu0 0.0
    %3660 = vmatprep.mubr.f32.mxu0 0.0
    %3661 = vmatmul.mubr.f32.gmra.mrb[0].mxu0 %v1343
    %v3662 = vpop.f32.mrb[0].mxu0
    %v3663 = vadd.f32 0.0, %v3662
    %v3664 = vpop.f32.mrb[0].mxu0
    %v3665 = vadd.f32 0.0, %v3664
    %3666 = vdwg.mxu0
    %3667 = vmatprep.subr.mxu0 %v99
    %3668 = vmatpush1.msra.mxu0 %v98
    %3669 = vmatprep.subr.mxu0 %v115
    %3670 = vmatpush1.msra.mxu0 %v114
    %3671 = vmatprep.subr.mxu0 0.0
    %3672 = vmatpush1.msra.mxu0 0.0
    %3673 = vmatprep.subr.mxu0 0.0
    %3674 = vmatpush1.msra.mxu0 0.0
    %3675 = vmatprep.subr.mxu0 0.0
    %3676 = vmatpush1.msra.mxu0 0.0
    %3677 = vmatprep.subr.mxu0 0.0
    %3678 = vmatpush1.msra.mxu0 0.0
    %3679 = vmatprep.subr.mxu0 0.0
    %3680 = vmatpush1.msra.mxu0 0.0
    %3681 = vmatprep.subr.mxu0 0.0
    %3682 = vmatpush1.msra.mxu0 0.0
    %3683 = vmatprep.subr.mxu0 0.0
    %3684 = vmatpush1.msra.mxu0 0.0
    %3685 = vmatprep.subr.mxu0 0.0
    %3686 = vmatpush1.msra.mxu0 0.0
    %3687 = vmatprep.subr.mxu0 0.0
    %3688 = vmatpush1.msra.mxu0 0.0
    %3689 = vmatprep.subr.mxu0 0.0
    %3690 = vmatpush1.msra.mxu0 0.0
    %3691 = vmatprep.subr.mxu0 0.0
    %3692 = vmatpush1.msra.mxu0 0.0
    %3693 = vmatprep.subr.mxu0 0.0
    %3694 = vmatpush1.msra.mxu0 0.0
    %3695 = vmatprep.subr.mxu0 0.0
    %3696 = vmatpush1.msra.mxu0 0.0
    %3697 = vmatprep.subr.mxu0 0.0
    %3698 = vmatpush1.msra.mxu0 0.0
    %3699 = vmatprep.subr.mxu0 0.0
    %3700 = vmatpush1.msra.mxu0 0.0
    %3701 = vmatprep.subr.mxu0 0.0
    %3702 = vmatpush1.msra.mxu0 0.0
    %3703 = vmatprep.subr.mxu0 0.0
    %3704 = vmatpush1.msra.mxu0 0.0
    %3705 = vmatprep.subr.mxu0 0.0
    %3706 = vmatpush1.msra.mxu0 0.0
    %3707 = vmatprep.subr.mxu0 0.0
    %3708 = vmatpush1.msra.mxu0 0.0
    %3709 = vmatprep.subr.mxu0 0.0
    %3710 = vmatpush1.msra.mxu0 0.0
    %3711 = vmatprep.subr.mxu0 0.0
    %3712 = vmatpush1.msra.mxu0 0.0
    %3713 = vmatprep.subr.mxu0 0.0
    %3714 = vmatpush1.msra.mxu0 0.0
    %3715 = vmatprep.subr.mxu0 0.0
    %3716 = vmatpush1.msra.mxu0 0.0
    %3717 = vmatprep.subr.mxu0 0.0
    %3718 = vmatpush1.msra.mxu0 0.0
    %3719 = vmatprep.subr.mxu0 0.0
    %3720 = vmatpush1.msra.mxu0 0.0
    %3721 = vmatprep.subr.mxu0 0.0
    %3722 = vmatpush1.msra.mxu0 0.0
    %3723 = vmatprep.subr.mxu0 0.0
    %3724 = vmatpush1.msra.mxu0 0.0
    %3725 = vmatprep.subr.mxu0 0.0
    %3726 = vmatpush1.msra.mxu0 0.0
    %3727 = vmatprep.subr.mxu0 0.0
    %3728 = vmatpush1.msra.mxu0 0.0
    %3729 = vmatprep.subr.mxu0 0.0
    %3730 = vmatpush1.msra.mxu0 0.0
    %3731 = vmatprep.mubr.f32.mxu0 0.0
    %3732 = vmatmul.mubr.f32.gmra.mrb[0].mxu0 %v1343
    %v3733 = vpop.f32.mrb[0].mxu0
    %v3734 = vadd.f32 0.0, %v3733
    %v3735 = vpop.f32.mrb[0].mxu0
    %v3736 = vadd.f32 0.0, %v3735
    %3737 = vdwg.mxu0
    %3738 = vmatprep.subr.mxu0 %v101
    %3739 = vmatpush1.msra.mxu0 %v100
    %3740 = vmatprep.subr.mxu0 %v117
    %3741 = vmatpush1.msra.mxu0 %v116
    %3742 = vmatprep.subr.mxu0 0.0
    %3743 = vmatpush1.msra.mxu0 0.0
    %3744 = vmatprep.subr.mxu0 0.0
    %3745 = vmatpush1.msra.mxu0 0.0
    %3746 = vmatprep.subr.mxu0 0.0
    %3747 = vmatpush1.msra.mxu0 0.0
    %3748 = vmatprep.subr.mxu0 0.0
    %3749 = vmatpush1.msra.mxu0 0.0
    %3750 = vmatprep.subr.mxu0 0.0
    %3751 = vmatpush1.msra.mxu0 0.0
    %3752 = vmatprep.subr.mxu0 0.0
    %3753 = vmatpush1.msra.mxu0 0.0
    %3754 = vmatprep.subr.mxu0 0.0
    %3755 = vmatpush1.msra.mxu0 0.0
    %3756 = vmatprep.subr.mxu0 0.0
    %3757 = vmatpush1.msra.mxu0 0.0
    %3758 = vmatprep.subr.mxu0 0.0
    %3759 = vmatpush1.msra.mxu0 0.0
    %3760 = vmatprep.subr.mxu0 0.0
    %3761 = vmatpush1.msra.mxu0 0.0
    %3762 = vmatprep.subr.mxu0 0.0
    %3763 = vmatpush1.msra.mxu0 0.0
    %3764 = vmatprep.subr.mxu0 0.0
    %3765 = vmatpush1.msra.mxu0 0.0
    %3766 = vmatprep.subr.mxu0 0.0
    %3767 = vmatpush1.msra.mxu0 0.0
    %3768 = vmatprep.subr.mxu0 0.0
    %3769 = vmatpush1.msra.mxu0 0.0
    %3770 = vmatprep.subr.mxu0 0.0
    %3771 = vmatpush1.msra.mxu0 0.0
    %3772 = vmatprep.subr.mxu0 0.0
    %3773 = vmatpush1.msra.mxu0 0.0
    %3774 = vmatprep.subr.mxu0 0.0
    %3775 = vmatpush1.msra.mxu0 0.0
    %3776 = vmatprep.subr.mxu0 0.0
    %3777 = vmatpush1.msra.mxu0 0.0
    %3778 = vmatprep.subr.mxu0 0.0
    %3779 = vmatpush1.msra.mxu0 0.0
    %3780 = vmatprep.subr.mxu0 0.0
    %3781 = vmatpush1.msra.mxu0 0.0
    %3782 = vmatprep.subr.mxu0 0.0
    %3783 = vmatpush1.msra.mxu0 0.0
    %3784 = vmatprep.subr.mxu0 0.0
    %3785 = vmatpush1.msra.mxu0 0.0
    %3786 = vmatprep.subr.mxu0 0.0
    %3787 = vmatpush1.msra.mxu0 0.0
    %3788 = vmatprep.subr.mxu0 0.0
    %3789 = vmatpush1.msra.mxu0 0.0
    %3790 = vmatprep.subr.mxu0 0.0
    %3791 = vmatpush1.msra.mxu0 0.0
    %3792 = vmatprep.subr.mxu0 0.0
    %3793 = vmatpush1.msra.mxu0 0.0
    %3794 = vmatprep.subr.mxu0 0.0
    %3795 = vmatpush1.msra.mxu0 0.0
    %3796 = vmatprep.subr.mxu0 0.0
    %3797 = vmatpush1.msra.mxu0 0.0
    %3798 = vmatprep.subr.mxu0 0.0
    %3799 = vmatpush1.msra.mxu0 0.0
    %3800 = vmatprep.subr.mxu0 0.0
    %3801 = vmatpush1.msra.mxu0 0.0
    %3802 = vmatprep.mubr.f32.mxu0 0.0
    %3803 = vmatmul.mubr.f32.gmra.mrb[0].mxu0 %v1343
    %v3804 = vpop.f32.mrb[0].mxu0
    %v3805 = vadd.f32 0.0, %v3804
    %v3806 = vpop.f32.mrb[0].mxu0
    %v3807 = vadd.f32 0.0, %v3806
    %3808 = vdwg.mxu0
    %v3809 = vadd.f32 %v2740, %v3308
    %v3810 = vadd.f32 %v2742, %v3310
    %v3811 = vadd.f32 %v2811, %v3379
    %v3812 = vadd.f32 %v2813, %v3381
    %v3813 = vadd.f32 %v2882, %v3450
    %v3814 = vadd.f32 %v2884, %v3452
    %v3815 = vadd.f32 %v2953, %v3521
    %v3816 = vadd.f32 %v2955, %v3523
    %v3817 = vadd.f32 %v3024, %v3592
    %v3818 = vadd.f32 %v3026, %v3594
    %v3819 = vadd.f32 %v3095, %v3663
    %v3820 = vadd.f32 %v3097, %v3665
    %v3821 = vadd.f32 %v3166, %v3734
    %v3822 = vadd.f32 %v3168, %v3736
    %v3823 = vadd.f32 %v3237, %v3805
    %v3824 = vadd.f32 %v3239, %v3807
    %v3825 = vmul.f32 %v3814, 0.26601174
    %v3826 = vmul.f32 %v3815, 0.26601174
    %v3827 = vmul.f32 %v3816, 0.26601174
    %v3828 = vmul.f32 %v3817, 0.26601174
    %v3829 = vmul.f32 %v3818, 0.26601174
    %v3830 = vmul.f32 %v3819, 0.26601174
    %v3831 = vadd.f32 %v3809, %v3819
    %v3832 = vadd.f32 %v3810, %v3820
    %v3833 = vadd.f32 %v3811, %v3821
    %v3834 = vadd.f32 %v3812, %v3822
    %v3835 = vadd.f32 %v3813, %v3823
    %v3836 = vadd.f32 %v3814, %v3824
    %v3837 = vmul.f32 %v3831, 0.0010283804
    %v3838 = vmul.f32 %v3832, 0.0010283804
    %v3839 = vmul.f32 %v3833, 0.0010283804
    %v3840 = vmul.f32 %v3834, 0.0010283804
    %v3841 = vmul.f32 %v3835, 0.0010283804
    %v3842 = vmul.f32 %v3836, 0.0010283804
    %v3843 = vadd.f32 %v3825, %v3837
    %v3844 = vadd.f32 %v3826, %v3838
    %v3845 = vadd.f32 %v3827, %v3839
    %v3846 = vadd.f32 %v3828, %v3840
    %v3847 = vadd.f32 %v3829, %v3841
    %v3848 = vadd.f32 %v3830, %v3842
    %v3849 = vadd.f32 %v3810, %v3818
    %v3850 = vadd.f32 %v3811, %v3819
    %v3851 = vadd.f32 %v3812, %v3820
    %v3852 = vadd.f32 %v3813, %v3821
    %v3853 = vadd.f32 %v3814, %v3822
    %v3854 = vadd.f32 %v3815, %v3823
    %v3855 = vmul.f32 %v3849, 0.0075987587
    %v3856 = vmul.f32 %v3850, 0.0075987587
    %v3857 = vmul.f32 %v3851, 0.0075987587
    %v3858 = vmul.f32 %v3852, 0.0075987587
    %v3859 = vmul.f32 %v3853, 0.0075987587
    %v3860 = vmul.f32 %v3854, 0.0075987587
    %v3861 = vadd.f32 %v3843, %v3855
    %v3862 = vadd.f32 %v3844, %v3856
    %v3863 = vadd.f32 %v3845, %v3857
    %v3864 = vadd.f32 %v3846, %v3858
    %v3865 = vadd.f32 %v3847, %v3859
    %v3866 = vadd.f32 %v3848, %v3860
    %v3867 = vadd.f32 %v3811, %v3817
    %v3868 = vadd.f32 %v3812, %v3818
    %v3869 = vadd.f32 %v3813, %v3819
    %v3870 = vadd.f32 %v3814, %v3820
    %v3871 = vadd.f32 %v3815, %v3821
    %v3872 = vadd.f32 %v3816, %v3822
    %v3873 = vmul.f32 %v3867, 0.036000773
    %v3874 = vmul.f32 %v3868, 0.036000773
    %v3875 = vmul.f32 %v3869, 0.036000773
    %v3876 = vmul.f32 %v3870, 0.036000773
    %v3877 = vmul.f32 %v3871, 0.036000773
    %v3878 = vmul.f32 %v3872, 0.036000773
    %v3879 = vadd.f32 %v3861, %v3873
    %v3880 = vadd.f32 %v3862, %v3874
    %v3881 = vadd.f32 %v3863, %v3875
    %v3882 = vadd.f32 %v3864, %v3876
    %v3883 = vadd.f32 %v3865, %v3877
    %v3884 = vadd.f32 %v3866, %v3878
    %v3885 = vadd.f32 %v3812, %v3816
    %v3886 = vadd.f32 %v3813, %v3817
    %v3887 = vadd.f32 %v3814, %v3818
    %v3888 = vadd.f32 %v3815, %v3819
    %v3889 = vadd.f32 %v3816, %v3820
    %v3890 = vadd.f32 %v3817, %v3821
    %v3891 = vmul.f32 %v3885, 0.1093607
    %v3892 = vmul.f32 %v3886, 0.1093607
    %v3893 = vmul.f32 %v3887, 0.1093607
    %v3894 = vmul.f32 %v3888, 0.1093607
    %v3895 = vmul.f32 %v3889, 0.1093607
    %v3896 = vmul.f32 %v3890, 0.1093607
    %v3897 = vadd.f32 %v3879, %v3891
    %v3898 = vadd.f32 %v3880, %v3892
    %v3899 = vadd.f32 %v3881, %v3893
    %v3900 = vadd.f32 %v3882, %v3894
    %v3901 = vadd.f32 %v3883, %v3895
    %v3902 = vadd.f32 %v3884, %v3896
    %v3903 = vadd.f32 %v3813, %v3815
    %v3904 = vadd.f32 %v3814, %v3816
    %v3905 = vadd.f32 %v3815, %v3817
    %v3906 = vadd.f32 %v3816, %v3818
    %v3907 = vadd.f32 %v3817, %v3819
    %v3908 = vadd.f32 %v3818, %v3820
    %v3909 = vmul.f32 %v3903, 0.21300554
    %v3910 = vmul.f32 %v3904, 0.21300554
    %v3911 = vmul.f32 %v3905, 0.21300554
    %v3912 = vmul.f32 %v3906, 0.21300554
    %v3913 = vmul.f32 %v3907, 0.21300554
    %v3914 = vmul.f32 %v3908, 0.21300554
    %v3915 = vadd.f32 %v3897, %v3909
    %v3916 = vadd.f32 %v3898, %v3910
    %v3917 = vadd.f32 %v3899, %v3911
    %v3918 = vadd.f32 %v3900, %v3912
    %v3919 = vadd.f32 %v3901, %v3913
    %v3920 = vadd.f32 %v3902, %v3914
    %v3921 = vmul.f32 %v54, %v54
    %v3922 = vmul.f32 %v55, %v55
    %v3923 = vmul.f32 %v56, %v56
    %v3924 = vmul.f32 %v57, %v57
    %v3925 = vmul.f32 %v58, %v58
    %v3926 = vmul.f32 %v59, %v59
    %v3927 = vmul.f32 %v60, %v60
    %v3928 = vmul.f32 %v61, %v61
    %v3929 = vmul.f32 %v62, %v62
    %v3930 = vmul.f32 %v63, %v63
    %v3931 = vmul.f32 %v64, %v64
    %v3932 = vmul.f32 %v65, %v65
    %v3933 = vmul.f32 %v66, %v66
    %v3934 = vmul.f32 %v67, %v67
    %v3935 = vmul.f32 %v68, %v68
    %v3936 = vmul.f32 %v69, %v69
    %v3937 = vmul.f32 %v70, %v70
    %v3938 = vmul.f32 %v71, %v71
    %v3939 = vmul.f32 %v72, %v72
    %v3940 = vmul.f32 %v73, %v73
    %v3941 = vmul.f32 %v74, %v74
    %v3942 = vmul.f32 %v75, %v75
    %v3943 = vmul.f32 %v76, %v76
    %v3944 = vmul.f32 %v77, %v77
    %v3945 = vmul.f32 %v78, %v78
    %v3946 = vmul.f32 %v79, %v79
    %v3947 = vmul.f32 %v80, %v80
    %v3948 = vmul.f32 %v81, %v81
    %v3949 = vmul.f32 %v82, %v82
    %v3950 = vmul.f32 %v83, %v83
    %v3951 = vmul.f32 %v84, %v84
    %v3952 = vmul.f32 %v85, %v85
    %v3953 = vpack.c.bf16 %v3937, %v3921
    %v3954 = vpack.c.bf16 %v3938, %v3922
    %v3955 = vpack.c.bf16 %v3939, %v3923
    %v3956 = vpack.c.bf16 %v3940, %v3924
    %v3957 = vpack.c.bf16 %v3941, %v3925
    %v3958 = vpack.c.bf16 %v3942, %v3926
    %v3959 = vpack.c.bf16 %v3943, %v3927
    %v3960 = vpack.c.bf16 %v3944, %v3928
    %v3961 = vpack.c.bf16 %v3945, %v3929
    %v3962 = vpack.c.bf16 %v3946, %v3930
    %v3963 = vpack.c.bf16 %v3947, %v3931
    %v3964 = vpack.c.bf16 %v3948, %v3932
    %v3965 = vpack.c.bf16 %v3949, %v3933
    %v3966 = vpack.c.bf16 %v3950, %v3934
    %v3967 = vpack.c.bf16 %v3951, %v3935
    %v3968 = vpack.c.bf16 %v3952, %v3936
    %v3969 = vunpack.c.l.bf16 %v3953
    %v3970 = vunpack.c.l.bf16 %v3954
    %v3971 = vunpack.c.l.bf16 %v3955
    %v3972 = vunpack.c.l.bf16 %v3956
    %v3973 = vunpack.c.l.bf16 %v3957
    %v3974 = vunpack.c.l.bf16 %v3958
    %v3975 = vunpack.c.l.bf16 %v3959
    %v3976 = vunpack.c.l.bf16 %v3960
    %v3977 = vunpack.c.l.bf16 %v3961
    %v3978 = vunpack.c.l.bf16 %v3962
    %v3979 = vunpack.c.l.bf16 %v3963
    %v3980 = vunpack.c.l.bf16 %v3964
    %v3981 = vunpack.c.l.bf16 %v3965
    %v3982 = vunpack.c.l.bf16 %v3966
    %v3983 = vunpack.c.l.bf16 %v3967
    %v3984 = vunpack.c.l.bf16 %v3968
    %v3985 = vunpack.c.h.bf16 %v3953
    %v3986 = vunpack.c.h.bf16 %v3954
    %v3987 = vunpack.c.h.bf16 %v3955
    %v3988 = vunpack.c.h.bf16 %v3956
    %v3989 = vunpack.c.h.bf16 %v3957
    %v3990 = vunpack.c.h.bf16 %v3958
    %v3991 = vunpack.c.h.bf16 %v3959
    %v3992 = vunpack.c.h.bf16 %v3960
    %v3993 = vunpack.c.h.bf16 %v3961
    %v3994 = vunpack.c.h.bf16 %v3962
    %v3995 = vunpack.c.h.bf16 %v3963
    %v3996 = vunpack.c.h.bf16 %v3964
    %v3997 = vunpack.c.h.bf16 %v3965
    %v3998 = vunpack.c.h.bf16 %v3966
    %v3999 = vunpack.c.h.bf16 %v3967
    %v4000 = vunpack.c.h.bf16 %v3968
    %v4001 = vsub.f32 %v3921, %v3969
    %v4002 = vsub.f32 %v3922, %v3970
    %v4003 = vsub.f32 %v3923, %v3971
    %v4004 = vsub.f32 %v3924, %v3972
    %v4005 = vsub.f32 %v3925, %v3973
    %v4006 = vsub.f32 %v3926, %v3974
    %v4007 = vsub.f32 %v3927, %v3975
    %v4008 = vsub.f32 %v3928, %v3976
    %v4009 = vsub.f32 %v3929, %v3977
    %v4010 = vsub.f32 %v3930, %v3978
    %v4011 = vsub.f32 %v3931, %v3979
    %v4012 = vsub.f32 %v3932, %v3980
    %v4013 = vsub.f32 %v3933, %v3981
    %v4014 = vsub.f32 %v3934, %v3982
    %v4015 = vsub.f32 %v3935, %v3983
    %v4016 = vsub.f32 %v3936, %v3984
    %v4017 = vsub.f32 %v3937, %v3985
    %v4018 = vsub.f32 %v3938, %v3986
    %v4019 = vsub.f32 %v3939, %v3987
    %v4020 = vsub.f32 %v3940, %v3988
    %v4021 = vsub.f32 %v3941, %v3989
    %v4022 = vsub.f32 %v3942, %v3990
    %v4023 = vsub.f32 %v3943, %v3991
    %v4024 = vsub.f32 %v3944, %v3992
    %v4025 = vsub.f32 %v3945, %v3993
    %v4026 = vsub.f32 %v3946, %v3994
    %v4027 = vsub.f32 %v3947, %v3995
    %v4028 = vsub.f32 %v3948, %v3996
    %v4029 = vsub.f32 %v3949, %v3997
    %v4030 = vsub.f32 %v3950, %v3998
    %v4031 = vsub.f32 %v3951, %v3999
    %v4032 = vsub.f32 %v3952, %v4000
    %4033 = vmatprep.subr.mxu0 %v4002
    %4034 = vmatpush1.msra.mxu0 %v4001
    %4035 = vmatprep.subr.mxu0 %v4018
    %4036 = vmatpush1.msra.mxu0 %v4017
    %4037 = vmatprep.subr.mxu0 0.0
    %4038 = vmatpush1.msra.mxu0 0.0
    %4039 = vmatprep.subr.mxu0 0.0
    %4040 = vmatpush1.msra.mxu0 0.0
    %4041 = vmatprep.subr.mxu0 0.0
    %4042 = vmatpush1.msra.mxu0 0.0
    %4043 = vmatprep.subr.mxu0 0.0
    %4044 = vmatpush1.msra.mxu0 0.0
    %4045 = vmatprep.subr.mxu0 0.0
    %4046 = vmatpush1.msra.mxu0 0.0
    %4047 = vmatprep.subr.mxu0 0.0
    %4048 = vmatpush1.msra.mxu0 0.0
    %4049 = vmatprep.subr.mxu0 0.0
    %4050 = vmatpush1.msra.mxu0 0.0
    %4051 = vmatprep.subr.mxu0 0.0
    %4052 = vmatpush1.msra.mxu0 0.0
    %4053 = vmatprep.subr.mxu0 0.0
    %4054 = vmatpush1.msra.mxu0 0.0
    %4055 = vmatprep.subr.mxu0 0.0
    %4056 = vmatpush1.msra.mxu0 0.0
    %4057 = vmatprep.subr.mxu0 0.0
    %4058 = vmatpush1.msra.mxu0 0.0
    %4059 = vmatprep.subr.mxu0 0.0
    %4060 = vmatpush1.msra.mxu0 0.0
    %4061 = vmatprep.subr.mxu0 0.0
    %4062 = vmatpush1.msra.mxu0 0.0
    %4063 = vmatprep.subr.mxu0 0.0
    %4064 = vmatpush1.msra.mxu0 0.0
    %4065 = vmatprep.subr.mxu0 0.0
    %4066 = vmatpush1.msra.mxu0 0.0
    %4067 = vmatprep.subr.mxu0 0.0
    %4068 = vmatpush1.msra.mxu0 0.0
    %4069 = vmatprep.subr.mxu0 0.0
    %4070 = vmatpush1.msra.mxu0 0.0
    %4071 = vmatprep.subr.mxu0 0.0
    %4072 = vmatpush1.msra.mxu0 0.0
    %4073 = vmatprep.subr.mxu0 0.0
    %4074 = vmatpush1.msra.mxu0 0.0
    %4075 = vmatprep.subr.mxu0 0.0
    %4076 = vmatpush1.msra.mxu0 0.0
    %4077 = vmatprep.subr.mxu0 0.0
    %4078 = vmatpush1.msra.mxu0 0.0
    %4079 = vmatprep.subr.mxu0 0.0
    %4080 = vmatpush1.msra.mxu0 0.0
    %4081 = vmatprep.subr.mxu0 0.0
    %4082 = vmatpush1.msra.mxu0 0.0
    %4083 = vmatprep.subr.mxu0 0.0
    %4084 = vmatpush1.msra.mxu0 0.0
    %4085 = vmatprep.subr.mxu0 0.0
    %4086 = vmatpush1.msra.mxu0 0.0
    %4087 = vmatprep.subr.mxu0 0.0
    %4088 = vmatpush1.msra.mxu0 0.0
    %4089 = vmatprep.subr.mxu0 0.0
    %4090 = vmatpush1.msra.mxu0 0.0
    %4091 = vmatprep.subr.mxu0 0.0
    %4092 = vmatpush1.msra.mxu0 0.0
    %4093 = vmatprep.subr.mxu0 0.0
    %4094 = vmatpush1.msra.mxu0 0.0
    %4095 = vmatprep.subr.mxu0 0.0
    %4096 = vmatpush1.msra.mxu0 0.0
    %4097 = vmatprep.mubr.f32.mxu0 0.0
    %4098 = vmatmul.mubr.f32.gmra.mrb[0].mxu0 %v204
    %v4099 = vpop.f32.mrb[0].mxu0
    %v4100 = vadd.f32 0.0, %v4099
    %v4101 = vpop.f32.mrb[0].mxu0
    %v4102 = vadd.f32 0.0, %v4101
    %4103 = vdwg.mxu0
    %4104 = vmatprep.subr.mxu0 %v4004
    %4105 = vmatpush1.msra.mxu0 %v4003
    %4106 = vmatprep.subr.mxu0 %v4020
    %4107 = vmatpush1.msra.mxu0 %v4019
    %4108 = vmatprep.subr.mxu0 0.0
    %4109 = vmatpush1.msra.mxu0 0.0
    %4110 = vmatprep.subr.mxu0 0.0
    %4111 = vmatpush1.msra.mxu0 0.0
    %4112 = vmatprep.subr.mxu0 0.0
    %4113 = vmatpush1.msra.mxu0 0.0
    %4114 = vmatprep.subr.mxu0 0.0
    %4115 = vmatpush1.msra.mxu0 0.0
    %4116 = vmatprep.subr.mxu0 0.0
    %4117 = vmatpush1.msra.mxu0 0.0
    %4118 = vmatprep.subr.mxu0 0.0
    %4119 = vmatpush1.msra.mxu0 0.0
    %4120 = vmatprep.subr.mxu0 0.0
    %4121 = vmatpush1.msra.mxu0 0.0
    %4122 = vmatprep.subr.mxu0 0.0
    %4123 = vmatpush1.msra.mxu0 0.0
    %4124 = vmatprep.subr.mxu0 0.0
    %4125 = vmatpush1.msra.mxu0 0.0
    %4126 = vmatprep.subr.mxu0 0.0
    %4127 = vmatpush1.msra.mxu0 0.0
    %4128 = vmatprep.subr.mxu0 0.0
    %4129 = vmatpush1.msra.mxu0 0.0
    %4130 = vmatprep.subr.mxu0 0.0
    %4131 = vmatpush1.msra.mxu0 0.0
    %4132 = vmatprep.subr.mxu0 0.0
    %4133 = vmatpush1.msra.mxu0 0.0
    %4134 = vmatprep.subr.mxu0 0.0
    %4135 = vmatpush1.msra.mxu0 0.0
    %4136 = vmatprep.subr.mxu0 0.0
    %4137 = vmatpush1.msra.mxu0 0.0
    %4138 = vmatprep.subr.mxu0 0.0
    %4139 = vmatpush1.msra.mxu0 0.0
    %4140 = vmatprep.subr.mxu0 0.0
    %4141 = vmatpush1.msra.mxu0 0.0
    %4142 = vmatprep.subr.mxu0 0.0
    %4143 = vmatpush1.msra.mxu0 0.0
    %4144 = vmatprep.subr.mxu0 0.0
    %4145 = vmatpush1.msra.mxu0 0.0
    %4146 = vmatprep.subr.mxu0 0.0
    %4147 = vmatpush1.msra.mxu0 0.0
    %4148 = vmatprep.subr.mxu0 0.0
    %4149 = vmatpush1.msra.mxu0 0.0
    %4150 = vmatprep.subr.mxu0 0.0
    %4151 = vmatpush1.msra.mxu0 0.0
    %4152 = vmatprep.subr.mxu0 0.0
    %4153 = vmatpush1.msra.mxu0 0.0
    %4154 = vmatprep.subr.mxu0 0.0
    %4155 = vmatpush1.msra.mxu0 0.0
    %4156 = vmatprep.subr.mxu0 0.0
    %4157 = vmatpush1.msra.mxu0 0.0
    %4158 = vmatprep.subr.mxu0 0.0
    %4159 = vmatpush1.msra.mxu0 0.0
    %4160 = vmatprep.subr.mxu0 0.0
    %4161 = vmatpush1.msra.mxu0 0.0
    %4162 = vmatprep.subr.mxu0 0.0
    %4163 = vmatpush1.msra.mxu0 0.0
    %4164 = vmatprep.subr.mxu0 0.0
    %4165 = vmatpush1.msra.mxu0 0.0
    %4166 = vmatprep.subr.mxu0 0.0
    %4167 = vmatpush1.msra.mxu0 0.0
    %4168 = vmatprep.mubr.f32.mxu0 0.0
    %4169 = vmatmul.mubr.f32.gmra.mrb[0].mxu0 %v204
    %v4170 = vpop.f32.mrb[0].mxu0
    %v4171 = vadd.f32 0.0, %v4170
    %v4172 = vpop.f32.mrb[0].mxu0
    %v4173 = vadd.f32 0.0, %v4172
    %4174 = vdwg.mxu0
    %4175 = vmatprep.subr.mxu0 %v4006
    %4176 = vmatpush1.msra.mxu0 %v4005
    %4177 = vmatprep.subr.mxu0 %v4022
    %4178 = vmatpush1.msra.mxu0 %v4021
    %4179 = vmatprep.subr.mxu0 0.0
    %4180 = vmatpush1.msra.mxu0 0.0
    %4181 = vmatprep.subr.mxu0 0.0
    %4182 = vmatpush1.msra.mxu0 0.0
    %4183 = vmatprep.subr.mxu0 0.0
    %4184 = vmatpush1.msra.mxu0 0.0
    %4185 = vmatprep.subr.mxu0 0.0
    %4186 = vmatpush1.msra.mxu0 0.0
    %4187 = vmatprep.subr.mxu0 0.0
    %4188 = vmatpush1.msra.mxu0 0.0
    %4189 = vmatprep.subr.mxu0 0.0
    %4190 = vmatpush1.msra.mxu0 0.0
    %4191 = vmatprep.subr.mxu0 0.0
    %4192 = vmatpush1.msra.mxu0 0.0
    %4193 = vmatprep.subr.mxu0 0.0
    %4194 = vmatpush1.msra.mxu0 0.0
    %4195 = vmatprep.subr.mxu0 0.0
    %4196 = vmatpush1.msra.mxu0 0.0
    %4197 = vmatprep.subr.mxu0 0.0
    %4198 = vmatpush1.msra.mxu0 0.0
    %4199 = vmatprep.subr.mxu0 0.0
    %4200 = vmatpush1.msra.mxu0 0.0
    %4201 = vmatprep.subr.mxu0 0.0
    %4202 = vmatpush1.msra.mxu0 0.0
    %4203 = vmatprep.subr.mxu0 0.0
    %4204 = vmatpush1.msra.mxu0 0.0
    %4205 = vmatprep.subr.mxu0 0.0
    %4206 = vmatpush1.msra.mxu0 0.0
    %4207 = vmatprep.subr.mxu0 0.0
    %4208 = vmatpush1.msra.mxu0 0.0
    %4209 = vmatprep.subr.mxu0 0.0
    %4210 = vmatpush1.msra.mxu0 0.0
    %4211 = vmatprep.subr.mxu0 0.0
    %4212 = vmatpush1.msra.mxu0 0.0
    %4213 = vmatprep.subr.mxu0 0.0
    %4214 = vmatpush1.msra.mxu0 0.0
    %4215 = vmatprep.subr.mxu0 0.0
    %4216 = vmatpush1.msra.mxu0 0.0
    %4217 = vmatprep.subr.mxu0 0.0
    %4218 = vmatpush1.msra.mxu0 0.0
    %4219 = vmatprep.subr.mxu0 0.0
    %4220 = vmatpush1.msra.mxu0 0.0
    %4221 = vmatprep.subr.mxu0 0.0
    %4222 = vmatpush1.msra.mxu0 0.0
    %4223 = vmatprep.subr.mxu0 0.0
    %4224 = vmatpush1.msra.mxu0 0.0
    %4225 = vmatprep.subr.mxu0 0.0
    %4226 = vmatpush1.msra.mxu0 0.0
    %4227 = vmatprep.subr.mxu0 0.0
    %4228 = vmatpush1.msra.mxu0 0.0
    %4229 = vmatprep.subr.mxu0 0.0
    %4230 = vmatpush1.msra.mxu0 0.0
    %4231 = vmatprep.subr.mxu0 0.0
    %4232 = vmatpush1.msra.mxu0 0.0
    %4233 = vmatprep.subr.mxu0 0.0
    %4234 = vmatpush1.msra.mxu0 0.0
    %4235 = vmatprep.subr.mxu0 0.0
    %4236 = vmatpush1.msra.mxu0 0.0
    %4237 = vmatprep.subr.mxu0 0.0
    %4238 = vmatpush1.msra.mxu0 0.0
    %4239 = vmatprep.mubr.f32.mxu0 0.0
    %4240 = vmatmul.mubr.f32.gmra.mrb[0].mxu0 %v204
    %v4241 = vpop.f32.mrb[0].mxu0
    %v4242 = vadd.f32 0.0, %v4241
    %v4243 = vpop.f32.mrb[0].mxu0
    %v4244 = vadd.f32 0.0, %v4243
    %4245 = vdwg.mxu0
    %4246 = vmatprep.subr.mxu0 %v4008
    %4247 = vmatpush1.msra.mxu0 %v4007
    %4248 = vmatprep.subr.mxu0 %v4024
    %4249 = vmatpush1.msra.mxu0 %v4023
    %4250 = vmatprep.subr.mxu0 0.0
    %4251 = vmatpush1.msra.mxu0 0.0
    %4252 = vmatprep.subr.mxu0 0.0
    %4253 = vmatpush1.msra.mxu0 0.0
    %4254 = vmatprep.subr.mxu0 0.0
    %4255 = vmatpush1.msra.mxu0 0.0
    %4256 = vmatprep.subr.mxu0 0.0
    %4257 = vmatpush1.msra.mxu0 0.0
    %4258 = vmatprep.subr.mxu0 0.0
    %4259 = vmatpush1.msra.mxu0 0.0
    %4260 = vmatprep.subr.mxu0 0.0
    %4261 = vmatpush1.msra.mxu0 0.0
    %4262 = vmatprep.subr.mxu0 0.0
    %4263 = vmatpush1.msra.mxu0 0.0
    %4264 = vmatprep.subr.mxu0 0.0
    %4265 = vmatpush1.msra.mxu0 0.0
    %4266 = vmatprep.subr.mxu0 0.0
    %4267 = vmatpush1.msra.mxu0 0.0
    %4268 = vmatprep.subr.mxu0 0.0
    %4269 = vmatpush1.msra.mxu0 0.0
    %4270 = vmatprep.subr.mxu0 0.0
    %4271 = vmatpush1.msra.mxu0 0.0
    %4272 = vmatprep.subr.mxu0 0.0
    %4273 = vmatpush1.msra.mxu0 0.0
    %4274 = vmatprep.subr.mxu0 0.0
    %4275 = vmatpush1.msra.mxu0 0.0
    %4276 = vmatprep.subr.mxu0 0.0
    %4277 = vmatpush1.msra.mxu0 0.0
    %4278 = vmatprep.subr.mxu0 0.0
    %4279 = vmatpush1.msra.mxu0 0.0
    %4280 = vmatprep.subr.mxu0 0.0
    %4281 = vmatpush1.msra.mxu0 0.0
    %4282 = vmatprep.subr.mxu0 0.0
    %4283 = vmatpush1.msra.mxu0 0.0
    %4284 = vmatprep.subr.mxu0 0.0
    %4285 = vmatpush1.msra.mxu0 0.0
    %4286 = vmatprep.subr.mxu0 0.0
    %4287 = vmatpush1.msra.mxu0 0.0
    %4288 = vmatprep.subr.mxu0 0.0
    %4289 = vmatpush1.msra.mxu0 0.0
    %4290 = vmatprep.subr.mxu0 0.0
    %4291 = vmatpush1.msra.mxu0 0.0
    %4292 = vmatprep.subr.mxu0 0.0
    %4293 = vmatpush1.msra.mxu0 0.0
    %4294 = vmatprep.subr.mxu0 0.0
    %4295 = vmatpush1.msra.mxu0 0.0
    %4296 = vmatprep.subr.mxu0 0.0
    %4297 = vmatpush1.msra.mxu0 0.0
    %4298 = vmatprep.subr.mxu0 0.0
    %4299 = vmatpush1.msra.mxu0 0.0
    %4300 = vmatprep.subr.mxu0 0.0
    %4301 = vmatpush1.msra.mxu0 0.0
    %4302 = vmatprep.subr.mxu0 0.0
    %4303 = vmatpush1.msra.mxu0 0.0
    %4304 = vmatprep.subr.mxu0 0.0
    %4305 = vmatpush1.msra.mxu0 0.0
    %4306 = vmatprep.subr.mxu0 0.0
    %4307 = vmatpush1.msra.mxu0 0.0
    %4308 = vmatprep.subr.mxu0 0.0
    %4309 = vmatpush1.msra.mxu0 0.0
    %4310 = vmatprep.mubr.f32.mxu0 0.0
    %4311 = vmatmul.mubr.f32.gmra.mrb[0].mxu0 %v204
    %v4312 = vpop.f32.mrb[0].mxu0
    %v4313 = vadd.f32 0.0, %v4312
    %v4314 = vpop.f32.mrb[0].mxu0
    %v4315 = vadd.f32 0.0, %v4314
    %4316 = vdwg.mxu0
    %4317 = vmatprep.subr.mxu0 %v4010
    %4318 = vmatpush1.msra.mxu0 %v4009
    %4319 = vmatprep.subr.mxu0 %v4026
    %4320 = vmatpush1.msra.mxu0 %v4025
    %4321 = vmatprep.subr.mxu0 0.0
    %4322 = vmatpush1.msra.mxu0 0.0
    %4323 = vmatprep.subr.mxu0 0.0
    %4324 = vmatpush1.msra.mxu0 0.0
    %4325 = vmatprep.subr.mxu0 0.0
    %4326 = vmatpush1.msra.mxu0 0.0
    %4327 = vmatprep.subr.mxu0 0.0
    %4328 = vmatpush1.msra.mxu0 0.0
    %4329 = vmatprep.subr.mxu0 0.0
    %4330 = vmatpush1.msra.mxu0 0.0
    %4331 = vmatprep.subr.mxu0 0.0
    %4332 = vmatpush1.msra.mxu0 0.0
    %4333 = vmatprep.subr.mxu0 0.0
    %4334 = vmatpush1.msra.mxu0 0.0
    %4335 = vmatprep.subr.mxu0 0.0
    %4336 = vmatpush1.msra.mxu0 0.0
    %4337 = vmatprep.subr.mxu0 0.0
    %4338 = vmatpush1.msra.mxu0 0.0
    %4339 = vmatprep.subr.mxu0 0.0
    %4340 = vmatpush1.msra.mxu0 0.0
    %4341 = vmatprep.subr.mxu0 0.0
    %4342 = vmatpush1.msra.mxu0 0.0
    %4343 = vmatprep.subr.mxu0 0.0
    %4344 = vmatpush1.msra.mxu0 0.0
    %4345 = vmatprep.subr.mxu0 0.0
    %4346 = vmatpush1.msra.mxu0 0.0
    %4347 = vmatprep.subr.mxu0 0.0
    %4348 = vmatpush1.msra.mxu0 0.0
    %4349 = vmatprep.subr.mxu0 0.0
    %4350 = vmatpush1.msra.mxu0 0.0
    %4351 = vmatprep.subr.mxu0 0.0
    %4352 = vmatpush1.msra.mxu0 0.0
    %4353 = vmatprep.subr.mxu0 0.0
    %4354 = vmatpush1.msra.mxu0 0.0
    %4355 = vmatprep.subr.mxu0 0.0
    %4356 = vmatpush1.msra.mxu0 0.0
    %4357 = vmatprep.subr.mxu0 0.0
    %4358 = vmatpush1.msra.mxu0 0.0
    %4359 = vmatprep.subr.mxu0 0.0
    %4360 = vmatpush1.msra.mxu0 0.0
    %4361 = vmatprep.subr.mxu0 0.0
    %4362 = vmatpush1.msra.mxu0 0.0
    %4363 = vmatprep.subr.mxu0 0.0
    %4364 = vmatpush1.msra.mxu0 0.0
    %4365 = vmatprep.subr.mxu0 0.0
    %4366 = vmatpush1.msra.mxu0 0.0
    %4367 = vmatprep.subr.mxu0 0.0
    %4368 = vmatpush1.msra.mxu0 0.0
    %4369 = vmatprep.subr.mxu0 0.0
    %4370 = vmatpush1.msra.mxu0 0.0
    %4371 = vmatprep.subr.mxu0 0.0
    %4372 = vmatpush1.msra.mxu0 0.0
    %4373 = vmatprep.subr.mxu0 0.0
    %4374 = vmatpush1.msra.mxu0 0.0
    %4375 = vmatprep.subr.mxu0 0.0
    %4376 = vmatpush1.msra.mxu0 0.0
    %4377 = vmatprep.subr.mxu0 0.0
    %4378 = vmatpush1.msra.mxu0 0.0
    %4379 = vmatprep.subr.mxu0 0.0
    %4380 = vmatpush1.msra.mxu0 0.0
    %4381 = vmatprep.mubr.f32.mxu0 0.0
    %4382 = vmatmul.mubr.f32.gmra.mrb[0].mxu0 %v204
    %v4383 = vpop.f32.mrb[0].mxu0
    %v4384 = vadd.f32 0.0, %v4383
    %v4385 = vpop.f32.mrb[0].mxu0
    %v4386 = vadd.f32 0.0, %v4385
    %4387 = vdwg.mxu0
    %4388 = vmatprep.subr.mxu0 %v4012
    %4389 = vmatpush1.msra.mxu0 %v4011
    %4390 = vmatprep.subr.mxu0 %v4028
    %4391 = vmatpush1.msra.mxu0 %v4027
    %4392 = vmatprep.subr.mxu0 0.0
    %4393 = vmatpush1.msra.mxu0 0.0
    %4394 = vmatprep.subr.mxu0 0.0
    %4395 = vmatpush1.msra.mxu0 0.0
    %4396 = vmatprep.subr.mxu0 0.0
    %4397 = vmatpush1.msra.mxu0 0.0
    %4398 = vmatprep.subr.mxu0 0.0
    %4399 = vmatpush1.msra.mxu0 0.0
    %4400 = vmatprep.subr.mxu0 0.0
    %4401 = vmatpush1.msra.mxu0 0.0
    %4402 = vmatprep.subr.mxu0 0.0
    %4403 = vmatpush1.msra.mxu0 0.0
    %4404 = vmatprep.subr.mxu0 0.0
    %4405 = vmatpush1.msra.mxu0 0.0
    %4406 = vmatprep.subr.mxu0 0.0
    %4407 = vmatpush1.msra.mxu0 0.0
    %4408 = vmatprep.subr.mxu0 0.0
    %4409 = vmatpush1.msra.mxu0 0.0
    %4410 = vmatprep.subr.mxu0 0.0
    %4411 = vmatpush1.msra.mxu0 0.0
    %4412 = vmatprep.subr.mxu0 0.0
    %4413 = vmatpush1.msra.mxu0 0.0
    %4414 = vmatprep.subr.mxu0 0.0
    %4415 = vmatpush1.msra.mxu0 0.0
    %4416 = vmatprep.subr.mxu0 0.0
    %4417 = vmatpush1.msra.mxu0 0.0
    %4418 = vmatprep.subr.mxu0 0.0
    %4419 = vmatpush1.msra.mxu0 0.0
    %4420 = vmatprep.subr.mxu0 0.0
    %4421 = vmatpush1.msra.mxu0 0.0
    %4422 = vmatprep.subr.mxu0 0.0
    %4423 = vmatpush1.msra.mxu0 0.0
    %4424 = vmatprep.subr.mxu0 0.0
    %4425 = vmatpush1.msra.mxu0 0.0
    %4426 = vmatprep.subr.mxu0 0.0
    %4427 = vmatpush1.msra.mxu0 0.0
    %4428 = vmatprep.subr.mxu0 0.0
    %4429 = vmatpush1.msra.mxu0 0.0
    %4430 = vmatprep.subr.mxu0 0.0
    %4431 = vmatpush1.msra.mxu0 0.0
    %4432 = vmatprep.subr.mxu0 0.0
    %4433 = vmatpush1.msra.mxu0 0.0
    %4434 = vmatprep.subr.mxu0 0.0
    %4435 = vmatpush1.msra.mxu0 0.0
    %4436 = vmatprep.subr.mxu0 0.0
    %4437 = vmatpush1.msra.mxu0 0.0
    %4438 = vmatprep.subr.mxu0 0.0
    %4439 = vmatpush1.msra.mxu0 0.0
    %4440 = vmatprep.subr.mxu0 0.0
    %4441 = vmatpush1.msra.mxu0 0.0
    %4442 = vmatprep.subr.mxu0 0.0
    %4443 = vmatpush1.msra.mxu0 0.0
    %4444 = vmatprep.subr.mxu0 0.0
    %4445 = vmatpush1.msra.mxu0 0.0
    %4446 = vmatprep.subr.mxu0 0.0
    %4447 = vmatpush1.msra.mxu0 0.0
    %4448 = vmatprep.subr.mxu0 0.0
    %4449 = vmatpush1.msra.mxu0 0.0
    %4450 = vmatprep.subr.mxu0 0.0
    %4451 = vmatpush1.msra.mxu0 0.0
    %4452 = vmatprep.mubr.f32.mxu0 0.0
    %4453 = vmatmul.mubr.f32.gmra.mrb[0].mxu0 %v204
    %v4454 = vpop.f32.mrb[0].mxu0
    %v4455 = vadd.f32 0.0, %v4454
    %v4456 = vpop.f32.mrb[0].mxu0
    %v4457 = vadd.f32 0.0, %v4456
    %4458 = vdwg.mxu0
    %4459 = vmatprep.subr.mxu0 %v4014
    %4460 = vmatpush1.msra.mxu0 %v4013
    %4461 = vmatprep.subr.mxu0 %v4030
    %4462 = vmatpush1.msra.mxu0 %v4029
    %4463 = vmatprep.subr.mxu0 0.0
    %4464 = vmatpush1.msra.mxu0 0.0
    %4465 = vmatprep.subr.mxu0 0.0
    %4466 = vmatpush1.msra.mxu0 0.0
    %4467 = vmatprep.subr.mxu0 0.0
    %4468 = vmatpush1.msra.mxu0 0.0
    %4469 = vmatprep.subr.mxu0 0.0
    %4470 = vmatpush1.msra.mxu0 0.0
    %4471 = vmatprep.subr.mxu0 0.0
    %4472 = vmatpush1.msra.mxu0 0.0
    %4473 = vmatprep.subr.mxu0 0.0
    %4474 = vmatpush1.msra.mxu0 0.0
    %4475 = vmatprep.subr.mxu0 0.0
    %4476 = vmatpush1.msra.mxu0 0.0
    %4477 = vmatprep.subr.mxu0 0.0
    %4478 = vmatpush1.msra.mxu0 0.0
    %4479 = vmatprep.subr.mxu0 0.0
    %4480 = vmatpush1.msra.mxu0 0.0
    %4481 = vmatprep.subr.mxu0 0.0
    %4482 = vmatpush1.msra.mxu0 0.0
    %4483 = vmatprep.subr.mxu0 0.0
    %4484 = vmatpush1.msra.mxu0 0.0
    %4485 = vmatprep.subr.mxu0 0.0
    %4486 = vmatpush1.msra.mxu0 0.0
    %4487 = vmatprep.subr.mxu0 0.0
    %4488 = vmatpush1.msra.mxu0 0.0
    %4489 = vmatprep.subr.mxu0 0.0
    %4490 = vmatpush1.msra.mxu0 0.0
    %4491 = vmatprep.subr.mxu0 0.0
    %4492 = vmatpush1.msra.mxu0 0.0
    %4493 = vmatprep.subr.mxu0 0.0
    %4494 = vmatpush1.msra.mxu0 0.0
    %4495 = vmatprep.subr.mxu0 0.0
    %4496 = vmatpush1.msra.mxu0 0.0
    %4497 = vmatprep.subr.mxu0 0.0
    %4498 = vmatpush1.msra.mxu0 0.0
    %4499 = vmatprep.subr.mxu0 0.0
    %4500 = vmatpush1.msra.mxu0 0.0
    %4501 = vmatprep.subr.mxu0 0.0
    %4502 = vmatpush1.msra.mxu0 0.0
    %4503 = vmatprep.subr.mxu0 0.0
    %4504 = vmatpush1.msra.mxu0 0.0
    %4505 = vmatprep.subr.mxu0 0.0
    %4506 = vmatpush1.msra.mxu0 0.0
    %4507 = vmatprep.subr.mxu0 0.0
    %4508 = vmatpush1.msra.mxu0 0.0
    %4509 = vmatprep.subr.mxu0 0.0
    %4510 = vmatpush1.msra.mxu0 0.0
    %4511 = vmatprep.subr.mxu0 0.0
    %4512 = vmatpush1.msra.mxu0 0.0
    %4513 = vmatprep.subr.mxu0 0.0
    %4514 = vmatpush1.msra.mxu0 0.0
    %4515 = vmatprep.subr.mxu0 0.0
    %4516 = vmatpush1.msra.mxu0 0.0
    %4517 = vmatprep.subr.mxu0 0.0
    %4518 = vmatpush1.msra.mxu0 0.0
    %4519 = vmatprep.subr.mxu0 0.0
    %4520 = vmatpush1.msra.mxu0 0.0
    %4521 = vmatprep.subr.mxu0 0.0
    %4522 = vmatpush1.msra.mxu0 0.0
    %4523 = vmatprep.mubr.f32.mxu0 0.0
    %4524 = vmatmul.mubr.f32.gmra.mrb[0].mxu0 %v204
    %v4525 = vpop.f32.mrb[0].mxu0
    %v4526 = vadd.f32 0.0, %v4525
    %v4527 = vpop.f32.mrb[0].mxu0
    %v4528 = vadd.f32 0.0, %v4527
    %4529 = vdwg.mxu0
    %4530 = vmatprep.subr.mxu0 %v4016
    %4531 = vmatpush1.msra.mxu0 %v4015
    %4532 = vmatprep.subr.mxu0 %v4032
    %4533 = vmatpush1.msra.mxu0 %v4031
    %4534 = vmatprep.subr.mxu0 0.0
    %4535 = vmatpush1.msra.mxu0 0.0
    %4536 = vmatprep.subr.mxu0 0.0
    %4537 = vmatpush1.msra.mxu0 0.0
    %4538 = vmatprep.subr.mxu0 0.0
    %4539 = vmatpush1.msra.mxu0 0.0
    %4540 = vmatprep.subr.mxu0 0.0
    %4541 = vmatpush1.msra.mxu0 0.0
    %4542 = vmatprep.subr.mxu0 0.0
    %4543 = vmatpush1.msra.mxu0 0.0
    %4544 = vmatprep.subr.mxu0 0.0
    %4545 = vmatpush1.msra.mxu0 0.0
    %4546 = vmatprep.subr.mxu0 0.0
    %4547 = vmatpush1.msra.mxu0 0.0
    %4548 = vmatprep.subr.mxu0 0.0
    %4549 = vmatpush1.msra.mxu0 0.0
    %4550 = vmatprep.subr.mxu0 0.0
    %4551 = vmatpush1.msra.mxu0 0.0
    %4552 = vmatprep.subr.mxu0 0.0
    %4553 = vmatpush1.msra.mxu0 0.0
    %4554 = vmatprep.subr.mxu0 0.0
    %4555 = vmatpush1.msra.mxu0 0.0
    %4556 = vmatprep.subr.mxu0 0.0
    %4557 = vmatpush1.msra.mxu0 0.0
    %4558 = vmatprep.subr.mxu0 0.0
    %4559 = vmatpush1.msra.mxu0 0.0
    %4560 = vmatprep.subr.mxu0 0.0
    %4561 = vmatpush1.msra.mxu0 0.0
    %4562 = vmatprep.subr.mxu0 0.0
    %4563 = vmatpush1.msra.mxu0 0.0
    %4564 = vmatprep.subr.mxu0 0.0
    %4565 = vmatpush1.msra.mxu0 0.0
    %4566 = vmatprep.subr.mxu0 0.0
    %4567 = vmatpush1.msra.mxu0 0.0
    %4568 = vmatprep.subr.mxu0 0.0
    %4569 = vmatpush1.msra.mxu0 0.0
    %4570 = vmatprep.subr.mxu0 0.0
    %4571 = vmatpush1.msra.mxu0 0.0
    %4572 = vmatprep.subr.mxu0 0.0
    %4573 = vmatpush1.msra.mxu0 0.0
    %4574 = vmatprep.subr.mxu0 0.0
    %4575 = vmatpush1.msra.mxu0 0.0
    %4576 = vmatprep.subr.mxu0 0.0
    %4577 = vmatpush1.msra.mxu0 0.0
    %4578 = vmatprep.subr.mxu0 0.0
    %4579 = vmatpush1.msra.mxu0 0.0
    %4580 = vmatprep.subr.mxu0 0.0
    %4581 = vmatpush1.msra.mxu0 0.0
    %4582 = vmatprep.subr.mxu0 0.0
    %4583 = vmatpush1.msra.mxu0 0.0
    %4584 = vmatprep.subr.mxu0 0.0
    %4585 = vmatpush1.msra.mxu0 0.0
    %4586 = vmatprep.subr.mxu0 0.0
    %4587 = vmatpush1.msra.mxu0 0.0
    %4588 = vmatprep.subr.mxu0 0.0
    %4589 = vmatpush1.msra.mxu0 0.0
    %4590 = vmatprep.subr.mxu0 0.0
    %4591 = vmatpush1.msra.mxu0 0.0
    %4592 = vmatprep.subr.mxu0 0.0
    %4593 = vmatpush1.msra.mxu0 0.0
    %4594 = vmatprep.mubr.f32.mxu0 0.0
    %4595 = vmatmul.mubr.f32.gmra.mrb[0].mxu0 %v204
    %v4596 = vpop.f32.mrb[0].mxu0
    %v4597 = vadd.f32 0.0, %v4596
    %v4598 = vpop.f32.mrb[0].mxu0
    %v4599 = vadd.f32 0.0, %v4598
    %4600 = vdwg.mxu0
    %4601 = vmatprep.subr.mxu0 %v3970
    %4602 = vmatpush1.msra.mxu0 %v3969
    %4603 = vmatprep.subr.mxu0 %v3986
    %4604 = vmatpush1.msra.mxu0 %v3985
    %4605 = vmatprep.subr.mxu0 0.0
    %4606 = vmatpush1.msra.mxu0 0.0
    %4607 = vmatprep.subr.mxu0 0.0
    %4608 = vmatpush1.msra.mxu0 0.0
    %4609 = vmatprep.subr.mxu0 0.0
    %4610 = vmatpush1.msra.mxu0 0.0
    %4611 = vmatprep.subr.mxu0 0.0
    %4612 = vmatpush1.msra.mxu0 0.0
    %4613 = vmatprep.subr.mxu0 0.0
    %4614 = vmatpush1.msra.mxu0 0.0
    %4615 = vmatprep.subr.mxu0 0.0
    %4616 = vmatpush1.msra.mxu0 0.0
    %4617 = vmatprep.subr.mxu0 0.0
    %4618 = vmatpush1.msra.mxu0 0.0
    %4619 = vmatprep.subr.mxu0 0.0
    %4620 = vmatpush1.msra.mxu0 0.0
    %4621 = vmatprep.subr.mxu0 0.0
    %4622 = vmatpush1.msra.mxu0 0.0
    %4623 = vmatprep.subr.mxu0 0.0
    %4624 = vmatpush1.msra.mxu0 0.0
    %4625 = vmatprep.subr.mxu0 0.0
    %4626 = vmatpush1.msra.mxu0 0.0
    %4627 = vmatprep.subr.mxu0 0.0
    %4628 = vmatpush1.msra.mxu0 0.0
    %4629 = vmatprep.subr.mxu0 0.0
    %4630 = vmatpush1.msra.mxu0 0.0
    %4631 = vmatprep.subr.mxu0 0.0
    %4632 = vmatpush1.msra.mxu0 0.0
    %4633 = vmatprep.subr.mxu0 0.0
    %4634 = vmatpush1.msra.mxu0 0.0
    %4635 = vmatprep.subr.mxu0 0.0
    %4636 = vmatpush1.msra.mxu0 0.0
    %4637 = vmatprep.subr.mxu0 0.0
    %4638 = vmatpush1.msra.mxu0 0.0
    %4639 = vmatprep.subr.mxu0 0.0
    %4640 = vmatpush1.msra.mxu0 0.0
    %4641 = vmatprep.subr.mxu0 0.0
    %4642 = vmatpush1.msra.mxu0 0.0
    %4643 = vmatprep.subr.mxu0 0.0
    %4644 = vmatpush1.msra.mxu0 0.0
    %4645 = vmatprep.subr.mxu0 0.0
    %4646 = vmatpush1.msra.mxu0 0.0
    %4647 = vmatprep.subr.mxu0 0.0
    %4648 = vmatpush1.msra.mxu0 0.0
    %4649 = vmatprep.subr.mxu0 0.0
    %4650 = vmatpush1.msra.mxu0 0.0
    %4651 = vmatprep.subr.mxu0 0.0
    %4652 = vmatpush1.msra.mxu0 0.0
    %4653 = vmatprep.subr.mxu0 0.0
    %4654 = vmatpush1.msra.mxu0 0.0
    %4655 = vmatprep.subr.mxu0 0.0
    %4656 = vmatpush1.msra.mxu0 0.0
    %4657 = vmatprep.subr.mxu0 0.0
    %4658 = vmatpush1.msra.mxu0 0.0
    %4659 = vmatprep.subr.mxu0 0.0
    %4660 = vmatpush1.msra.mxu0 0.0
    %4661 = vmatprep.subr.mxu0 0.0
    %4662 = vmatpush1.msra.mxu0 0.0
    %4663 = vmatprep.subr.mxu0 0.0
    %4664 = vmatpush1.msra.mxu0 0.0
    %4665 = vmatprep.mubr.f32.mxu0 0.0
    %4666 = vmatmul.mubr.f32.gmra.mrb[0].mxu0 %v204
    %v4667 = vpop.f32.mrb[0].mxu0
    %v4668 = vadd.f32 %v4100, %v4667
    %v4669 = vpop.f32.mrb[0].mxu0
    %v4670 = vadd.f32 %v4102, %v4669
    %4671 = vdwg.mxu0
    %4672 = vmatprep.subr.mxu0 %v3972
    %4673 = vmatpush1.msra.mxu0 %v3971
    %4674 = vmatprep.subr.mxu0 %v3988
    %4675 = vmatpush1.msra.mxu0 %v3987
    %4676 = vmatprep.subr.mxu0 0.0
    %4677 = vmatpush1.msra.mxu0 0.0
    %4678 = vmatprep.subr.mxu0 0.0
    %4679 = vmatpush1.msra.mxu0 0.0
    %4680 = vmatprep.subr.mxu0 0.0
    %4681 = vmatpush1.msra.mxu0 0.0
    %4682 = vmatprep.subr.mxu0 0.0
    %4683 = vmatpush1.msra.mxu0 0.0
    %4684 = vmatprep.subr.mxu0 0.0
    %4685 = vmatpush1.msra.mxu0 0.0
    %4686 = vmatprep.subr.mxu0 0.0
    %4687 = vmatpush1.msra.mxu0 0.0
    %4688 = vmatprep.subr.mxu0 0.0
    %4689 = vmatpush1.msra.mxu0 0.0
    %4690 = vmatprep.subr.mxu0 0.0
    %4691 = vmatpush1.msra.mxu0 0.0
    %4692 = vmatprep.subr.mxu0 0.0
    %4693 = vmatpush1.msra.mxu0 0.0
    %4694 = vmatprep.subr.mxu0 0.0
    %4695 = vmatpush1.msra.mxu0 0.0
    %4696 = vmatprep.subr.mxu0 0.0
    %4697 = vmatpush1.msra.mxu0 0.0
    %4698 = vmatprep.subr.mxu0 0.0
    %4699 = vmatpush1.msra.mxu0 0.0
    %4700 = vmatprep.subr.mxu0 0.0
    %4701 = vmatpush1.msra.mxu0 0.0
    %4702 = vmatprep.subr.mxu0 0.0
    %4703 = vmatpush1.msra.mxu0 0.0
    %4704 = vmatprep.subr.mxu0 0.0
    %4705 = vmatpush1.msra.mxu0 0.0
    %4706 = vmatprep.subr.mxu0 0.0
    %4707 = vmatpush1.msra.mxu0 0.0
    %4708 = vmatprep.subr.mxu0 0.0
    %4709 = vmatpush1.msra.mxu0 0.0
    %4710 = vmatprep.subr.mxu0 0.0
    %4711 = vmatpush1.msra.mxu0 0.0
    %4712 = vmatprep.subr.mxu0 0.0
    %4713 = vmatpush1.msra.mxu0 0.0
    %4714 = vmatprep.subr.mxu0 0.0
    %4715 = vmatpush1.msra.mxu0 0.0
    %4716 = vmatprep.subr.mxu0 0.0
    %4717 = vmatpush1.msra.mxu0 0.0
    %4718 = vmatprep.subr.mxu0 0.0
    %4719 = vmatpush1.msra.mxu0 0.0
    %4720 = vmatprep.subr.mxu0 0.0
    %4721 = vmatpush1.msra.mxu0 0.0
    %4722 = vmatprep.subr.mxu0 0.0
    %4723 = vmatpush1.msra.mxu0 0.0
    %4724 = vmatprep.subr.mxu0 0.0
    %4725 = vmatpush1.msra.mxu0 0.0
    %4726 = vmatprep.subr.mxu0 0.0
    %4727 = vmatpush1.msra.mxu0 0.0
    %4728 = vmatprep.subr.mxu0 0.0
    %4729 = vmatpush1.msra.mxu0 0.0
    %4730 = vmatprep.subr.mxu0 0.0
    %4731 = vmatpush1.msra.mxu0 0.0
    %4732 = vmatprep.subr.mxu0 0.0
    %4733 = vmatpush1.msra.mxu0 0.0
    %4734 = vmatprep.subr.mxu0 0.0
    %4735 = vmatpush1.msra.mxu0 0.0
    %4736 = vmatprep.mubr.f32.mxu0 0.0
    %4737 = vmatmul.mubr.f32.gmra.mrb[0].mxu0 %v204
    %v4738 = vpop.f32.mrb[0].mxu0
    %v4739 = vadd.f32 %v4171, %v4738
    %v4740 = vpop.f32.mrb[0].mxu0
    %v4741 = vadd.f32 %v4173, %v4740
    %4742 = vdwg.mxu0
    %4743 = vmatprep.subr.mxu0 %v3974
    %4744 = vmatpush1.msra.mxu0 %v3973
    %4745 = vmatprep.subr.mxu0 %v3990
    %4746 = vmatpush1.msra.mxu0 %v3989
    %4747 = vmatprep.subr.mxu0 0.0
    %4748 = vmatpush1.msra.mxu0 0.0
    %4749 = vmatprep.subr.mxu0 0.0
    %4750 = vmatpush1.msra.mxu0 0.0
    %4751 = vmatprep.subr.mxu0 0.0
    %4752 = vmatpush1.msra.mxu0 0.0
    %4753 = vmatprep.subr.mxu0 0.0
    %4754 = vmatpush1.msra.mxu0 0.0
    %4755 = vmatprep.subr.mxu0 0.0
    %4756 = vmatpush1.msra.mxu0 0.0
    %4757 = vmatprep.subr.mxu0 0.0
    %4758 = vmatpush1.msra.mxu0 0.0
    %4759 = vmatprep.subr.mxu0 0.0
    %4760 = vmatpush1.msra.mxu0 0.0
    %4761 = vmatprep.subr.mxu0 0.0
    %4762 = vmatpush1.msra.mxu0 0.0
    %4763 = vmatprep.subr.mxu0 0.0
    %4764 = vmatpush1.msra.mxu0 0.0
    %4765 = vmatprep.subr.mxu0 0.0
    %4766 = vmatpush1.msra.mxu0 0.0
    %4767 = vmatprep.subr.mxu0 0.0
    %4768 = vmatpush1.msra.mxu0 0.0
    %4769 = vmatprep.subr.mxu0 0.0
    %4770 = vmatpush1.msra.mxu0 0.0
    %4771 = vmatprep.subr.mxu0 0.0
    %4772 = vmatpush1.msra.mxu0 0.0
    %4773 = vmatprep.subr.mxu0 0.0
    %4774 = vmatpush1.msra.mxu0 0.0
    %4775 = vmatprep.subr.mxu0 0.0
    %4776 = vmatpush1.msra.mxu0 0.0
    %4777 = vmatprep.subr.mxu0 0.0
    %4778 = vmatpush1.msra.mxu0 0.0
    %4779 = vmatprep.subr.mxu0 0.0
    %4780 = vmatpush1.msra.mxu0 0.0
    %4781 = vmatprep.subr.mxu0 0.0
    %4782 = vmatpush1.msra.mxu0 0.0
    %4783 = vmatprep.subr.mxu0 0.0
    %4784 = vmatpush1.msra.mxu0 0.0
    %4785 = vmatprep.subr.mxu0 0.0
    %4786 = vmatpush1.msra.mxu0 0.0
    %4787 = vmatprep.subr.mxu0 0.0
    %4788 = vmatpush1.msra.mxu0 0.0
    %4789 = vmatprep.subr.mxu0 0.0
    %4790 = vmatpush1.msra.mxu0 0.0
    %4791 = vmatprep.subr.mxu0 0.0
    %4792 = vmatpush1.msra.mxu0 0.0
    %4793 = vmatprep.subr.mxu0 0.0
    %4794 = vmatpush1.msra.mxu0 0.0
    %4795 = vmatprep.subr.mxu0 0.0
    %4796 = vmatpush1.msra.mxu0 0.0
    %4797 = vmatprep.subr.mxu0 0.0
    %4798 = vmatpush1.msra.mxu0 0.0
    %4799 = vmatprep.subr.mxu0 0.0
    %4800 = vmatpush1.msra.mxu0 0.0
    %4801 = vmatprep.subr.mxu0 0.0
    %4802 = vmatpush1.msra.mxu0 0.0
    %4803 = vmatprep.subr.mxu0 0.0
    %4804 = vmatpush1.msra.mxu0 0.0
    %4805 = vmatprep.subr.mxu0 0.0
    %4806 = vmatpush1.msra.mxu0 0.0
    %4807 = vmatprep.mubr.f32.mxu0 0.0
    %4808 = vmatmul.mubr.f32.gmra.mrb[0].mxu0 %v204
    %v4809 = vpop.f32.mrb[0].mxu0
    %v4810 = vadd.f32 %v4242, %v4809
    %v4811 = vpop.f32.mrb[0].mxu0
    %v4812 = vadd.f32 %v4244, %v4811
    %4813 = vdwg.mxu0
    %4814 = vmatprep.subr.mxu0 %v3976
    %4815 = vmatpush1.msra.mxu0 %v3975
    %4816 = vmatprep.subr.mxu0 %v3992
    %4817 = vmatpush1.msra.mxu0 %v3991
    %4818 = vmatprep.subr.mxu0 0.0
    %4819 = vmatpush1.msra.mxu0 0.0
    %4820 = vmatprep.subr.mxu0 0.0
    %4821 = vmatpush1.msra.mxu0 0.0
    %4822 = vmatprep.subr.mxu0 0.0
    %4823 = vmatpush1.msra.mxu0 0.0
    %4824 = vmatprep.subr.mxu0 0.0
    %4825 = vmatpush1.msra.mxu0 0.0
    %4826 = vmatprep.subr.mxu0 0.0
    %4827 = vmatpush1.msra.mxu0 0.0
    %4828 = vmatprep.subr.mxu0 0.0
    %4829 = vmatpush1.msra.mxu0 0.0
    %4830 = vmatprep.subr.mxu0 0.0
    %4831 = vmatpush1.msra.mxu0 0.0
    %4832 = vmatprep.subr.mxu0 0.0
    %4833 = vmatpush1.msra.mxu0 0.0
    %4834 = vmatprep.subr.mxu0 0.0
    %4835 = vmatpush1.msra.mxu0 0.0
    %4836 = vmatprep.subr.mxu0 0.0
    %4837 = vmatpush1.msra.mxu0 0.0
    %4838 = vmatprep.subr.mxu0 0.0
    %4839 = vmatpush1.msra.mxu0 0.0
    %4840 = vmatprep.subr.mxu0 0.0
    %4841 = vmatpush1.msra.mxu0 0.0
    %4842 = vmatprep.subr.mxu0 0.0
    %4843 = vmatpush1.msra.mxu0 0.0
    %4844 = vmatprep.subr.mxu0 0.0
    %4845 = vmatpush1.msra.mxu0 0.0
    %4846 = vmatprep.subr.mxu0 0.0
    %4847 = vmatpush1.msra.mxu0 0.0
    %4848 = vmatprep.subr.mxu0 0.0
    %4849 = vmatpush1.msra.mxu0 0.0
    %4850 = vmatprep.subr.mxu0 0.0
    %4851 = vmatpush1.msra.mxu0 0.0
    %4852 = vmatprep.subr.mxu0 0.0
    %4853 = vmatpush1.msra.mxu0 0.0
    %4854 = vmatprep.subr.mxu0 0.0
    %4855 = vmatpush1.msra.mxu0 0.0
    %4856 = vmatprep.subr.mxu0 0.0
    %4857 = vmatpush1.msra.mxu0 0.0
    %4858 = vmatprep.subr.mxu0 0.0
    %4859 = vmatpush1.msra.mxu0 0.0
    %4860 = vmatprep.subr.mxu0 0.0
    %4861 = vmatpush1.msra.mxu0 0.0
    %4862 = vmatprep.subr.mxu0 0.0
    %4863 = vmatpush1.msra.mxu0 0.0
    %4864 = vmatprep.subr.mxu0 0.0
    %4865 = vmatpush1.msra.mxu0 0.0
    %4866 = vmatprep.subr.mxu0 0.0
    %4867 = vmatpush1.msra.mxu0 0.0
    %4868 = vmatprep.subr.mxu0 0.0
    %4869 = vmatpush1.msra.mxu0 0.0
    %4870 = vmatprep.subr.mxu0 0.0
    %4871 = vmatpush1.msra.mxu0 0.0
    %4872 = vmatprep.subr.mxu0 0.0
    %4873 = vmatpush1.msra.mxu0 0.0
    %4874 = vmatprep.subr.mxu0 0.0
    %4875 = vmatpush1.msra.mxu0 0.0
    %4876 = vmatprep.subr.mxu0 0.0
    %4877 = vmatpush1.msra.mxu0 0.0
    %4878 = vmatprep.mubr.f32.mxu0 0.0
    %4879 = vmatmul.mubr.f32.gmra.mrb[0].mxu0 %v204
    %v4880 = vpop.f32.mrb[0].mxu0
    %v4881 = vadd.f32 %v4313, %v4880
    %v4882 = vpop.f32.mrb[0].mxu0
    %v4883 = vadd.f32 %v4315, %v4882
    %4884 = vdwg.mxu0
    %4885 = vmatprep.subr.mxu0 %v3978
    %4886 = vmatpush1.msra.mxu0 %v3977
    %4887 = vmatprep.subr.mxu0 %v3994
    %4888 = vmatpush1.msra.mxu0 %v3993
    %4889 = vmatprep.subr.mxu0 0.0
    %4890 = vmatpush1.msra.mxu0 0.0
    %4891 = vmatprep.subr.mxu0 0.0
    %4892 = vmatpush1.msra.mxu0 0.0
    %4893 = vmatprep.subr.mxu0 0.0
    %4894 = vmatpush1.msra.mxu0 0.0
    %4895 = vmatprep.subr.mxu0 0.0
    %4896 = vmatpush1.msra.mxu0 0.0
    %4897 = vmatprep.subr.mxu0 0.0
    %4898 = vmatpush1.msra.mxu0 0.0
    %4899 = vmatprep.subr.mxu0 0.0
    %4900 = vmatpush1.msra.mxu0 0.0
    %4901 = vmatprep.subr.mxu0 0.0
    %4902 = vmatpush1.msra.mxu0 0.0
    %4903 = vmatprep.subr.mxu0 0.0
    %4904 = vmatpush1.msra.mxu0 0.0
    %4905 = vmatprep.subr.mxu0 0.0
    %4906 = vmatpush1.msra.mxu0 0.0
    %4907 = vmatprep.subr.mxu0 0.0
    %4908 = vmatpush1.msra.mxu0 0.0
    %4909 = vmatprep.subr.mxu0 0.0
    %4910 = vmatpush1.msra.mxu0 0.0
    %4911 = vmatprep.subr.mxu0 0.0
    %4912 = vmatpush1.msra.mxu0 0.0
    %4913 = vmatprep.subr.mxu0 0.0
    %4914 = vmatpush1.msra.mxu0 0.0
    %4915 = vmatprep.subr.mxu0 0.0
    %4916 = vmatpush1.msra.mxu0 0.0
    %4917 = vmatprep.subr.mxu0 0.0
    %4918 = vmatpush1.msra.mxu0 0.0
    %4919 = vmatprep.subr.mxu0 0.0
    %4920 = vmatpush1.msra.mxu0 0.0
    %4921 = vmatprep.subr.mxu0 0.0
    %4922 = vmatpush1.msra.mxu0 0.0
    %4923 = vmatprep.subr.mxu0 0.0
    %4924 = vmatpush1.msra.mxu0 0.0
    %4925 = vmatprep.subr.mxu0 0.0
    %4926 = vmatpush1.msra.mxu0 0.0
    %4927 = vmatprep.subr.mxu0 0.0
    %4928 = vmatpush1.msra.mxu0 0.0
    %4929 = vmatprep.subr.mxu0 0.0
    %4930 = vmatpush1.msra.mxu0 0.0
    %4931 = vmatprep.subr.mxu0 0.0
    %4932 = vmatpush1.msra.mxu0 0.0
    %4933 = vmatprep.subr.mxu0 0.0
    %4934 = vmatpush1.msra.mxu0 0.0
    %4935 = vmatprep.subr.mxu0 0.0
    %4936 = vmatpush1.msra.mxu0 0.0
    %4937 = vmatprep.subr.mxu0 0.0
    %4938 = vmatpush1.msra.mxu0 0.0
    %4939 = vmatprep.subr.mxu0 0.0
    %4940 = vmatpush1.msra.mxu0 0.0
    %4941 = vmatprep.subr.mxu0 0.0
    %4942 = vmatpush1.msra.mxu0 0.0
    %4943 = vmatprep.subr.mxu0 0.0
    %4944 = vmatpush1.msra.mxu0 0.0
    %4945 = vmatprep.subr.mxu0 0.0
    %4946 = vmatpush1.msra.mxu0 0.0
    %4947 = vmatprep.subr.mxu0 0.0
    %4948 = vmatpush1.msra.mxu0 0.0
    %4949 = vmatprep.mubr.f32.mxu0 0.0
    %4950 = vmatmul.mubr.f32.gmra.mrb[0].mxu0 %v204
    %v4951 = vpop.f32.mrb[0].mxu0
    %v4952 = vadd.f32 %v4384, %v4951
    %v4953 = vpop.f32.mrb[0].mxu0
    %v4954 = vadd.f32 %v4386, %v4953
    %4955 = vdwg.mxu0
    %4956 = vmatprep.subr.mxu0 %v3980
    %4957 = vmatpush1.msra.mxu0 %v3979
    %4958 = vmatprep.subr.mxu0 %v3996
    %4959 = vmatpush1.msra.mxu0 %v3995
    %4960 = vmatprep.subr.mxu0 0.0
    %4961 = vmatpush1.msra.mxu0 0.0
    %4962 = vmatprep.subr.mxu0 0.0
    %4963 = vmatpush1.msra.mxu0 0.0
    %4964 = vmatprep.subr.mxu0 0.0
    %4965 = vmatpush1.msra.mxu0 0.0
    %4966 = vmatprep.subr.mxu0 0.0
    %4967 = vmatpush1.msra.mxu0 0.0
    %4968 = vmatprep.subr.mxu0 0.0
    %4969 = vmatpush1.msra.mxu0 0.0
    %4970 = vmatprep.subr.mxu0 0.0
    %4971 = vmatpush1.msra.mxu0 0.0
    %4972 = vmatprep.subr.mxu0 0.0
    %4973 = vmatpush1.msra.mxu0 0.0
    %4974 = vmatprep.subr.mxu0 0.0
    %4975 = vmatpush1.msra.mxu0 0.0
    %4976 = vmatprep.subr.mxu0 0.0
    %4977 = vmatpush1.msra.mxu0 0.0
    %4978 = vmatprep.subr.mxu0 0.0
    %4979 = vmatpush1.msra.mxu0 0.0
    %4980 = vmatprep.subr.mxu0 0.0
    %4981 = vmatpush1.msra.mxu0 0.0
    %4982 = vmatprep.subr.mxu0 0.0
    %4983 = vmatpush1.msra.mxu0 0.0
    %4984 = vmatprep.subr.mxu0 0.0
    %4985 = vmatpush1.msra.mxu0 0.0
    %4986 = vmatprep.subr.mxu0 0.0
    %4987 = vmatpush1.msra.mxu0 0.0
    %4988 = vmatprep.subr.mxu0 0.0
    %4989 = vmatpush1.msra.mxu0 0.0
    %4990 = vmatprep.subr.mxu0 0.0
    %4991 = vmatpush1.msra.mxu0 0.0
    %4992 = vmatprep.subr.mxu0 0.0
    %4993 = vmatpush1.msra.mxu0 0.0
    %4994 = vmatprep.subr.mxu0 0.0
    %4995 = vmatpush1.msra.mxu0 0.0
    %4996 = vmatprep.subr.mxu0 0.0
    %4997 = vmatpush1.msra.mxu0 0.0
    %4998 = vmatprep.subr.mxu0 0.0
    %4999 = vmatpush1.msra.mxu0 0.0
    %5000 = vmatprep.subr.mxu0 0.0
    %5001 = vmatpush1.msra.mxu0 0.0
    %5002 = vmatprep.subr.mxu0 0.0
    %5003 = vmatpush1.msra.mxu0 0.0
    %5004 = vmatprep.subr.mxu0 0.0
    %5005 = vmatpush1.msra.mxu0 0.0
    %5006 = vmatprep.subr.mxu0 0.0
    %5007 = vmatpush1.msra.mxu0 0.0
    %5008 = vmatprep.subr.mxu0 0.0
    %5009 = vmatpush1.msra.mxu0 0.0
    %5010 = vmatprep.subr.mxu0 0.0
    %5011 = vmatpush1.msra.mxu0 0.0
    %5012 = vmatprep.subr.mxu0 0.0
    %5013 = vmatpush1.msra.mxu0 0.0
    %5014 = vmatprep.subr.mxu0 0.0
    %5015 = vmatpush1.msra.mxu0 0.0
    %5016 = vmatprep.subr.mxu0 0.0
    %5017 = vmatpush1.msra.mxu0 0.0
    %5018 = vmatprep.subr.mxu0 0.0
    %5019 = vmatpush1.msra.mxu0 0.0
    %5020 = vmatprep.mubr.f32.mxu0 0.0
    %5021 = vmatmul.mubr.f32.gmra.mrb[0].mxu0 %v204
    %v5022 = vpop.f32.mrb[0].mxu0
    %v5023 = vadd.f32 %v4455, %v5022
    %v5024 = vpop.f32.mrb[0].mxu0
    %v5025 = vadd.f32 %v4457, %v5024
    %5026 = vdwg.mxu0
    %5027 = vmatprep.subr.mxu0 %v3982
    %5028 = vmatpush1.msra.mxu0 %v3981
    %5029 = vmatprep.subr.mxu0 %v3998
    %5030 = vmatpush1.msra.mxu0 %v3997
    %5031 = vmatprep.subr.mxu0 0.0
    %5032 = vmatpush1.msra.mxu0 0.0
    %5033 = vmatprep.subr.mxu0 0.0
    %5034 = vmatpush1.msra.mxu0 0.0
    %5035 = vmatprep.subr.mxu0 0.0
    %5036 = vmatpush1.msra.mxu0 0.0
    %5037 = vmatprep.subr.mxu0 0.0
    %5038 = vmatpush1.msra.mxu0 0.0
    %5039 = vmatprep.subr.mxu0 0.0
    %5040 = vmatpush1.msra.mxu0 0.0
    %5041 = vmatprep.subr.mxu0 0.0
    %5042 = vmatpush1.msra.mxu0 0.0
    %5043 = vmatprep.subr.mxu0 0.0
    %5044 = vmatpush1.msra.mxu0 0.0
    %5045 = vmatprep.subr.mxu0 0.0
    %5046 = vmatpush1.msra.mxu0 0.0
    %5047 = vmatprep.subr.mxu0 0.0
    %5048 = vmatpush1.msra.mxu0 0.0
    %5049 = vmatprep.subr.mxu0 0.0
    %5050 = vmatpush1.msra.mxu0 0.0
    %5051 = vmatprep.subr.mxu0 0.0
    %5052 = vmatpush1.msra.mxu0 0.0
    %5053 = vmatprep.subr.mxu0 0.0
    %5054 = vmatpush1.msra.mxu0 0.0
    %5055 = vmatprep.subr.mxu0 0.0
    %5056 = vmatpush1.msra.mxu0 0.0
    %5057 = vmatprep.subr.mxu0 0.0
    %5058 = vmatpush1.msra.mxu0 0.0
    %5059 = vmatprep.subr.mxu0 0.0
    %5060 = vmatpush1.msra.mxu0 0.0
    %5061 = vmatprep.subr.mxu0 0.0
    %5062 = vmatpush1.msra.mxu0 0.0
    %5063 = vmatprep.subr.mxu0 0.0
    %5064 = vmatpush1.msra.mxu0 0.0
    %5065 = vmatprep.subr.mxu0 0.0
    %5066 = vmatpush1.msra.mxu0 0.0
    %5067 = vmatprep.subr.mxu0 0.0
    %5068 = vmatpush1.msra.mxu0 0.0
    %5069 = vmatprep.subr.mxu0 0.0
    %5070 = vmatpush1.msra.mxu0 0.0
    %5071 = vmatprep.subr.mxu0 0.0
    %5072 = vmatpush1.msra.mxu0 0.0
    %5073 = vmatprep.subr.mxu0 0.0
    %5074 = vmatpush1.msra.mxu0 0.0
    %5075 = vmatprep.subr.mxu0 0.0
    %5076 = vmatpush1.msra.mxu0 0.0
    %5077 = vmatprep.subr.mxu0 0.0
    %5078 = vmatpush1.msra.mxu0 0.0
    %5079 = vmatprep.subr.mxu0 0.0
    %5080 = vmatpush1.msra.mxu0 0.0
    %5081 = vmatprep.subr.mxu0 0.0
    %5082 = vmatpush1.msra.mxu0 0.0
    %5083 = vmatprep.subr.mxu0 0.0
    %5084 = vmatpush1.msra.mxu0 0.0
    %5085 = vmatprep.subr.mxu0 0.0
    %5086 = vmatpush1.msra.mxu0 0.0
    %5087 = vmatprep.subr.mxu0 0.0
    %5088 = vmatpush1.msra.mxu0 0.0
    %5089 = vmatprep.subr.mxu0 0.0
    %5090 = vmatpush1.msra.mxu0 0.0
    %5091 = vmatprep.mubr.f32.mxu0 0.0
    %5092 = vmatmul.mubr.f32.gmra.mrb[0].mxu0 %v204
    %v5093 = vpop.f32.mrb[0].mxu0
    %v5094 = vadd.f32 %v4526, %v5093
    %v5095 = vpop.f32.mrb[0].mxu0
    %v5096 = vadd.f32 %v4528, %v5095
    %5097 = vdwg.mxu0
    %5098 = vmatprep.subr.mxu0 %v3984
    %5099 = vmatpush1.msra.mxu0 %v3983
    %5100 = vmatprep.subr.mxu0 %v4000
    %5101 = vmatpush1.msra.mxu0 %v3999
    %5102 = vmatprep.subr.mxu0 0.0
    %5103 = vmatpush1.msra.mxu0 0.0
    %5104 = vmatprep.subr.mxu0 0.0
    %5105 = vmatpush1.msra.mxu0 0.0
    %5106 = vmatprep.subr.mxu0 0.0
    %5107 = vmatpush1.msra.mxu0 0.0
    %5108 = vmatprep.subr.mxu0 0.0
    %5109 = vmatpush1.msra.mxu0 0.0
    %5110 = vmatprep.subr.mxu0 0.0
    %5111 = vmatpush1.msra.mxu0 0.0
    %5112 = vmatprep.subr.mxu0 0.0
    %5113 = vmatpush1.msra.mxu0 0.0
    %5114 = vmatprep.subr.mxu0 0.0
    %5115 = vmatpush1.msra.mxu0 0.0
    %5116 = vmatprep.subr.mxu0 0.0
    %5117 = vmatpush1.msra.mxu0 0.0
    %5118 = vmatprep.subr.mxu0 0.0
    %5119 = vmatpush1.msra.mxu0 0.0
    %5120 = vmatprep.subr.mxu0 0.0
    %5121 = vmatpush1.msra.mxu0 0.0
    %5122 = vmatprep.subr.mxu0 0.0
    %5123 = vmatpush1.msra.mxu0 0.0
    %5124 = vmatprep.subr.mxu0 0.0
    %5125 = vmatpush1.msra.mxu0 0.0
    %5126 = vmatprep.subr.mxu0 0.0
    %5127 = vmatpush1.msra.mxu0 0.0
    %5128 = vmatprep.subr.mxu0 0.0
    %5129 = vmatpush1.msra.mxu0 0.0
    %5130 = vmatprep.subr.mxu0 0.0
    %5131 = vmatpush1.msra.mxu0 0.0
    %5132 = vmatprep.subr.mxu0 0.0
    %5133 = vmatpush1.msra.mxu0 0.0
    %5134 = vmatprep.subr.mxu0 0.0
    %5135 = vmatpush1.msra.mxu0 0.0
    %5136 = vmatprep.subr.mxu0 0.0
    %5137 = vmatpush1.msra.mxu0 0.0
    %5138 = vmatprep.subr.mxu0 0.0
    %5139 = vmatpush1.msra.mxu0 0.0
    %5140 = vmatprep.subr.mxu0 0.0
    %5141 = vmatpush1.msra.mxu0 0.0
    %5142 = vmatprep.subr.mxu0 0.0
    %5143 = vmatpush1.msra.mxu0 0.0
    %5144 = vmatprep.subr.mxu0 0.0
    %5145 = vmatpush1.msra.mxu0 0.0
    %5146 = vmatprep.subr.mxu0 0.0
    %5147 = vmatpush1.msra.mxu0 0.0
    %5148 = vmatprep.subr.mxu0 0.0
    %5149 = vmatpush1.msra.mxu0 0.0
    %5150 = vmatprep.subr.mxu0 0.0
    %5151 = vmatpush1.msra.mxu0 0.0
    %5152 = vmatprep.subr.mxu0 0.0
    %5153 = vmatpush1.msra.mxu0 0.0
    %5154 = vmatprep.subr.mxu0 0.0
    %5155 = vmatpush1.msra.mxu0 0.0
    %5156 = vmatprep.subr.mxu0 0.0
    %5157 = vmatpush1.msra.mxu0 0.0
    %5158 = vmatprep.subr.mxu0 0.0
    %5159 = vmatpush1.msra.mxu0 0.0
    %5160 = vmatprep.subr.mxu0 0.0
    %5161 = vmatpush1.msra.mxu0 0.0
    %5162 = vmatprep.mubr.f32.mxu0 0.0
    %5163 = vmatmul.mubr.f32.gmra.mrb[0].mxu0 %v204
    %v5164 = vpop.f32.mrb[0].mxu0
    %v5165 = vadd.f32 %v4597, %v5164
    %v5166 = vpop.f32.mrb[0].mxu0
    %v5167 = vadd.f32 %v4599, %v5166
    %5168 = vdwg.mxu0
    %5169 = vmatprep.subr.mxu0 %v3922
    %5170 = vmatpush1.msra.mxu0 %v3921
    %5171 = vmatprep.subr.mxu0 %v3938
    %5172 = vmatpush1.msra.mxu0 %v3937
    %5173 = vmatprep.subr.mxu0 0.0
    %5174 = vmatpush1.msra.mxu0 0.0
    %5175 = vmatprep.subr.mxu0 0.0
    %5176 = vmatpush1.msra.mxu0 0.0
    %5177 = vmatprep.subr.mxu0 0.0
    %5178 = vmatpush1.msra.mxu0 0.0
    %5179 = vmatprep.subr.mxu0 0.0
    %5180 = vmatpush1.msra.mxu0 0.0
    %5181 = vmatprep.subr.mxu0 0.0
    %5182 = vmatpush1.msra.mxu0 0.0
    %5183 = vmatprep.subr.mxu0 0.0
    %5184 = vmatpush1.msra.mxu0 0.0
    %5185 = vmatprep.subr.mxu0 0.0
    %5186 = vmatpush1.msra.mxu0 0.0
    %5187 = vmatprep.subr.mxu0 0.0
    %5188 = vmatpush1.msra.mxu0 0.0
    %5189 = vmatprep.subr.mxu0 0.0
    %5190 = vmatpush1.msra.mxu0 0.0
    %5191 = vmatprep.subr.mxu0 0.0
    %5192 = vmatpush1.msra.mxu0 0.0
    %5193 = vmatprep.subr.mxu0 0.0
    %5194 = vmatpush1.msra.mxu0 0.0
    %5195 = vmatprep.subr.mxu0 0.0
    %5196 = vmatpush1.msra.mxu0 0.0
    %5197 = vmatprep.subr.mxu0 0.0
    %5198 = vmatpush1.msra.mxu0 0.0
    %5199 = vmatprep.subr.mxu0 0.0
    %5200 = vmatpush1.msra.mxu0 0.0
    %5201 = vmatprep.subr.mxu0 0.0
    %5202 = vmatpush1.msra.mxu0 0.0
    %5203 = vmatprep.subr.mxu0 0.0
    %5204 = vmatpush1.msra.mxu0 0.0
    %5205 = vmatprep.subr.mxu0 0.0
    %5206 = vmatpush1.msra.mxu0 0.0
    %5207 = vmatprep.subr.mxu0 0.0
    %5208 = vmatpush1.msra.mxu0 0.0
    %5209 = vmatprep.subr.mxu0 0.0
    %5210 = vmatpush1.msra.mxu0 0.0
    %5211 = vmatprep.subr.mxu0 0.0
    %5212 = vmatpush1.msra.mxu0 0.0
    %5213 = vmatprep.subr.mxu0 0.0
    %5214 = vmatpush1.msra.mxu0 0.0
    %5215 = vmatprep.subr.mxu0 0.0
    %5216 = vmatpush1.msra.mxu0 0.0
    %5217 = vmatprep.subr.mxu0 0.0
    %5218 = vmatpush1.msra.mxu0 0.0
    %5219 = vmatprep.subr.mxu0 0.0
    %5220 = vmatpush1.msra.mxu0 0.0
    %5221 = vmatprep.subr.mxu0 0.0
    %5222 = vmatpush1.msra.mxu0 0.0
    %5223 = vmatprep.subr.mxu0 0.0
    %5224 = vmatpush1.msra.mxu0 0.0
    %5225 = vmatprep.subr.mxu0 0.0
    %5226 = vmatpush1.msra.mxu0 0.0
    %5227 = vmatprep.subr.mxu0 0.0
    %5228 = vmatpush1.msra.mxu0 0.0
    %5229 = vmatprep.subr.mxu0 0.0
    %5230 = vmatpush1.msra.mxu0 0.0
    %5231 = vmatprep.subr.mxu0 0.0
    %5232 = vmatpush1.msra.mxu0 0.0
    %5233 = vmatprep.mubr.f32.mxu0 0.0
    %5234 = vmatmul.mubr.f32.gmra.mrb[0].mxu0 %v1343
    %v5235 = vpop.f32.mrb[0].mxu0
    %v5236 = vadd.f32 0.0, %v5235
    %v5237 = vpop.f32.mrb[0].mxu0
    %v5238 = vadd.f32 0.0, %v5237
    %5239 = vdwg.mxu0
    %5240 = vmatprep.subr.mxu0 %v3924
    %5241 = vmatpush1.msra.mxu0 %v3923
    %5242 = vmatprep.subr.mxu0 %v3940
    %5243 = vmatpush1.msra.mxu0 %v3939
    %5244 = vmatprep.subr.mxu0 0.0
    %5245 = vmatpush1.msra.mxu0 0.0
    %5246 = vmatprep.subr.mxu0 0.0
    %5247 = vmatpush1.msra.mxu0 0.0
    %5248 = vmatprep.subr.mxu0 0.0
    %5249 = vmatpush1.msra.mxu0 0.0
    %5250 = vmatprep.subr.mxu0 0.0
    %5251 = vmatpush1.msra.mxu0 0.0
    %5252 = vmatprep.subr.mxu0 0.0
    %5253 = vmatpush1.msra.mxu0 0.0
    %5254 = vmatprep.subr.mxu0 0.0
    %5255 = vmatpush1.msra.mxu0 0.0
    %5256 = vmatprep.subr.mxu0 0.0
    %5257 = vmatpush1.msra.mxu0 0.0
    %5258 = vmatprep.subr.mxu0 0.0
    %5259 = vmatpush1.msra.mxu0 0.0
    %5260 = vmatprep.subr.mxu0 0.0
    %5261 = vmatpush1.msra.mxu0 0.0
    %5262 = vmatprep.subr.mxu0 0.0
    %5263 = vmatpush1.msra.mxu0 0.0
    %5264 = vmatprep.subr.mxu0 0.0
    %5265 = vmatpush1.msra.mxu0 0.0
    %5266 = vmatprep.subr.mxu0 0.0
    %5267 = vmatpush1.msra.mxu0 0.0
    %5268 = vmatprep.subr.mxu0 0.0
    %5269 = vmatpush1.msra.mxu0 0.0
    %5270 = vmatprep.subr.mxu0 0.0
    %5271 = vmatpush1.msra.mxu0 0.0
    %5272 = vmatprep.subr.mxu0 0.0
    %5273 = vmatpush1.msra.mxu0 0.0
    %5274 = vmatprep.subr.mxu0 0.0
    %5275 = vmatpush1.msra.mxu0 0.0
    %5276 = vmatprep.subr.mxu0 0.0
    %5277 = vmatpush1.msra.mxu0 0.0
    %5278 = vmatprep.subr.mxu0 0.0
    %5279 = vmatpush1.msra.mxu0 0.0
    %5280 = vmatprep.subr.mxu0 0.0
    %5281 = vmatpush1.msra.mxu0 0.0
    %5282 = vmatprep.subr.mxu0 0.0
    %5283 = vmatpush1.msra.mxu0 0.0
    %5284 = vmatprep.subr.mxu0 0.0
    %5285 = vmatpush1.msra.mxu0 0.0
    %5286 = vmatprep.subr.mxu0 0.0
    %5287 = vmatpush1.msra.mxu0 0.0
    %5288 = vmatprep.subr.mxu0 0.0
    %5289 = vmatpush1.msra.mxu0 0.0
    %5290 = vmatprep.subr.mxu0 0.0
    %5291 = vmatpush1.msra.mxu0 0.0
    %5292 = vmatprep.subr.mxu0 0.0
    %5293 = vmatpush1.msra.mxu0 0.0
    %5294 = vmatprep.subr.mxu0 0.0
    %5295 = vmatpush1.msra.mxu0 0.0
    %5296 = vmatprep.subr.mxu0 0.0
    %5297 = vmatpush1.msra.mxu0 0.0
    %5298 = vmatprep.subr.mxu0 0.0
    %5299 = vmatpush1.msra.mxu0 0.0
    %5300 = vmatprep.subr.mxu0 0.0
    %5301 = vmatpush1.msra.mxu0 0.0
    %5302 = vmatprep.subr.mxu0 0.0
    %5303 = vmatpush1.msra.mxu0 0.0
    %5304 = vmatprep.mubr.f32.mxu0 0.0
    %5305 = vmatmul.mubr.f32.gmra.mrb[0].mxu0 %v1343
    %v5306 = vpop.f32.mrb[0].mxu0
    %v5307 = vadd.f32 0.0, %v5306
    %v5308 = vpop.f32.mrb[0].mxu0
    %v5309 = vadd.f32 0.0, %v5308
    %5310 = vdwg.mxu0
    %5311 = vmatprep.subr.mxu0 %v3926
    %5312 = vmatpush1.msra.mxu0 %v3925
    %5313 = vmatprep.subr.mxu0 %v3942
    %5314 = vmatpush1.msra.mxu0 %v3941
    %5315 = vmatprep.subr.mxu0 0.0
    %5316 = vmatpush1.msra.mxu0 0.0
    %5317 = vmatprep.subr.mxu0 0.0
    %5318 = vmatpush1.msra.mxu0 0.0
    %5319 = vmatprep.subr.mxu0 0.0
    %5320 = vmatpush1.msra.mxu0 0.0
    %5321 = vmatprep.subr.mxu0 0.0
    %5322 = vmatpush1.msra.mxu0 0.0
    %5323 = vmatprep.subr.mxu0 0.0
    %5324 = vmatpush1.msra.mxu0 0.0
    %5325 = vmatprep.subr.mxu0 0.0
    %5326 = vmatpush1.msra.mxu0 0.0
    %5327 = vmatprep.subr.mxu0 0.0
    %5328 = vmatpush1.msra.mxu0 0.0
    %5329 = vmatprep.subr.mxu0 0.0
    %5330 = vmatpush1.msra.mxu0 0.0
    %5331 = vmatprep.subr.mxu0 0.0
    %5332 = vmatpush1.msra.mxu0 0.0
    %5333 = vmatprep.subr.mxu0 0.0
    %5334 = vmatpush1.msra.mxu0 0.0
    %5335 = vmatprep.subr.mxu0 0.0
    %5336 = vmatpush1.msra.mxu0 0.0
    %5337 = vmatprep.subr.mxu0 0.0
    %5338 = vmatpush1.msra.mxu0 0.0
    %5339 = vmatprep.subr.mxu0 0.0
    %5340 = vmatpush1.msra.mxu0 0.0
    %5341 = vmatprep.subr.mxu0 0.0
    %5342 = vmatpush1.msra.mxu0 0.0
    %5343 = vmatprep.subr.mxu0 0.0
    %5344 = vmatpush1.msra.mxu0 0.0
    %5345 = vmatprep.subr.mxu0 0.0
    %5346 = vmatpush1.msra.mxu0 0.0
    %5347 = vmatprep.subr.mxu0 0.0
    %5348 = vmatpush1.msra.mxu0 0.0
    %5349 = vmatprep.subr.mxu0 0.0
    %5350 = vmatpush1.msra.mxu0 0.0
    %5351 = vmatprep.subr.mxu0 0.0
    %5352 = vmatpush1.msra.mxu0 0.0
    %5353 = vmatprep.subr.mxu0 0.0
    %5354 = vmatpush1.msra.mxu0 0.0
    %5355 = vmatprep.subr.mxu0 0.0
    %5356 = vmatpush1.msra.mxu0 0.0
    %5357 = vmatprep.subr.mxu0 0.0
    %5358 = vmatpush1.msra.mxu0 0.0
    %5359 = vmatprep.subr.mxu0 0.0
    %5360 = vmatpush1.msra.mxu0 0.0
    %5361 = vmatprep.subr.mxu0 0.0
    %5362 = vmatpush1.msra.mxu0 0.0
    %5363 = vmatprep.subr.mxu0 0.0
    %5364 = vmatpush1.msra.mxu0 0.0
    %5365 = vmatprep.subr.mxu0 0.0
    %5366 = vmatpush1.msra.mxu0 0.0
    %5367 = vmatprep.subr.mxu0 0.0
    %5368 = vmatpush1.msra.mxu0 0.0
    %5369 = vmatprep.subr.mxu0 0.0
    %5370 = vmatpush1.msra.mxu0 0.0
    %5371 = vmatprep.subr.mxu0 0.0
    %5372 = vmatpush1.msra.mxu0 0.0
    %5373 = vmatprep.subr.mxu0 0.0
    %5374 = vmatpush1.msra.mxu0 0.0
    %5375 = vmatprep.mubr.f32.mxu0 0.0
    %5376 = vmatmul.mubr.f32.gmra.mrb[0].mxu0 %v1343
    %v5377 = vpop.f32.mrb[0].mxu0
    %v5378 = vadd.f32 0.0, %v5377
    %v5379 = vpop.f32.mrb[0].mxu0
    %v5380 = vadd.f32 0.0, %v5379
    %5381 = vdwg.mxu0
    %5382 = vmatprep.subr.mxu0 %v3928
    %5383 = vmatpush1.msra.mxu0 %v3927
    %5384 = vmatprep.subr.mxu0 %v3944
    %5385 = vmatpush1.msra.mxu0 %v3943
    %5386 = vmatprep.subr.mxu0 0.0
    %5387 = vmatpush1.msra.mxu0 0.0
    %5388 = vmatprep.subr.mxu0 0.0
    %5389 = vmatpush1.msra.mxu0 0.0
    %5390 = vmatprep.subr.mxu0 0.0
    %5391 = vmatpush1.msra.mxu0 0.0
    %5392 = vmatprep.subr.mxu0 0.0
    %5393 = vmatpush1.msra.mxu0 0.0
    %5394 = vmatprep.subr.mxu0 0.0
    %5395 = vmatpush1.msra.mxu0 0.0
    %5396 = vmatprep.subr.mxu0 0.0
    %5397 = vmatpush1.msra.mxu0 0.0
    %5398 = vmatprep.subr.mxu0 0.0
    %5399 = vmatpush1.msra.mxu0 0.0
    %5400 = vmatprep.subr.mxu0 0.0
    %5401 = vmatpush1.msra.mxu0 0.0
    %5402 = vmatprep.subr.mxu0 0.0
    %5403 = vmatpush1.msra.mxu0 0.0
    %5404 = vmatprep.subr.mxu0 0.0
    %5405 = vmatpush1.msra.mxu0 0.0
    %5406 = vmatprep.subr.mxu0 0.0
    %5407 = vmatpush1.msra.mxu0 0.0
    %5408 = vmatprep.subr.mxu0 0.0
    %5409 = vmatpush1.msra.mxu0 0.0
    %5410 = vmatprep.subr.mxu0 0.0
    %5411 = vmatpush1.msra.mxu0 0.0
    %5412 = vmatprep.subr.mxu0 0.0
    %5413 = vmatpush1.msra.mxu0 0.0
    %5414 = vmatprep.subr.mxu0 0.0
    %5415 = vmatpush1.msra.mxu0 0.0
    %5416 = vmatprep.subr.mxu0 0.0
    %5417 = vmatpush1.msra.mxu0 0.0
    %5418 = vmatprep.subr.mxu0 0.0
    %5419 = vmatpush1.msra.mxu0 0.0
    %5420 = vmatprep.subr.mxu0 0.0
    %5421 = vmatpush1.msra.mxu0 0.0
    %5422 = vmatprep.subr.mxu0 0.0
    %5423 = vmatpush1.msra.mxu0 0.0
    %5424 = vmatprep.subr.mxu0 0.0
    %5425 = vmatpush1.msra.mxu0 0.0
    %5426 = vmatprep.subr.mxu0 0.0
    %5427 = vmatpush1.msra.mxu0 0.0
    %5428 = vmatprep.subr.mxu0 0.0
    %5429 = vmatpush1.msra.mxu0 0.0
    %5430 = vmatprep.subr.mxu0 0.0
    %5431 = vmatpush1.msra.mxu0 0.0
    %5432 = vmatprep.subr.mxu0 0.0
    %5433 = vmatpush1.msra.mxu0 0.0
    %5434 = vmatprep.subr.mxu0 0.0
    %5435 = vmatpush1.msra.mxu0 0.0
    %5436 = vmatprep.subr.mxu0 0.0
    %5437 = vmatpush1.msra.mxu0 0.0
    %5438 = vmatprep.subr.mxu0 0.0
    %5439 = vmatpush1.msra.mxu0 0.0
    %5440 = vmatprep.subr.mxu0 0.0
    %5441 = vmatpush1.msra.mxu0 0.0
    %5442 = vmatprep.subr.mxu0 0.0
    %5443 = vmatpush1.msra.mxu0 0.0
    %5444 = vmatprep.subr.mxu0 0.0
    %5445 = vmatpush1.msra.mxu0 0.0
    %5446 = vmatprep.mubr.f32.mxu0 0.0
    %5447 = vmatmul.mubr.f32.gmra.mrb[0].mxu0 %v1343
    %v5448 = vpop.f32.mrb[0].mxu0
    %v5449 = vadd.f32 0.0, %v5448
    %v5450 = vpop.f32.mrb[0].mxu0
    %v5451 = vadd.f32 0.0, %v5450
    %5452 = vdwg.mxu0
    %5453 = vmatprep.subr.mxu0 %v3930
    %5454 = vmatpush1.msra.mxu0 %v3929
    %5455 = vmatprep.subr.mxu0 %v3946
    %5456 = vmatpush1.msra.mxu0 %v3945
    %5457 = vmatprep.subr.mxu0 0.0
    %5458 = vmatpush1.msra.mxu0 0.0
    %5459 = vmatprep.subr.mxu0 0.0
    %5460 = vmatpush1.msra.mxu0 0.0
    %5461 = vmatprep.subr.mxu0 0.0
    %5462 = vmatpush1.msra.mxu0 0.0
    %5463 = vmatprep.subr.mxu0 0.0
    %5464 = vmatpush1.msra.mxu0 0.0
    %5465 = vmatprep.subr.mxu0 0.0
    %5466 = vmatpush1.msra.mxu0 0.0
    %5467 = vmatprep.subr.mxu0 0.0
    %5468 = vmatpush1.msra.mxu0 0.0
    %5469 = vmatprep.subr.mxu0 0.0
    %5470 = vmatpush1.msra.mxu0 0.0
    %5471 = vmatprep.subr.mxu0 0.0
    %5472 = vmatpush1.msra.mxu0 0.0
    %5473 = vmatprep.subr.mxu0 0.0
    %5474 = vmatpush1.msra.mxu0 0.0
    %5475 = vmatprep.subr.mxu0 0.0
    %5476 = vmatpush1.msra.mxu0 0.0
    %5477 = vmatprep.subr.mxu0 0.0
    %5478 = vmatpush1.msra.mxu0 0.0
    %5479 = vmatprep.subr.mxu0 0.0
    %5480 = vmatpush1.msra.mxu0 0.0
    %5481 = vmatprep.subr.mxu0 0.0
    %5482 = vmatpush1.msra.mxu0 0.0
    %5483 = vmatprep.subr.mxu0 0.0
    %5484 = vmatpush1.msra.mxu0 0.0
    %5485 = vmatprep.subr.mxu0 0.0
    %5486 = vmatpush1.msra.mxu0 0.0
    %5487 = vmatprep.subr.mxu0 0.0
    %5488 = vmatpush1.msra.mxu0 0.0
    %5489 = vmatprep.subr.mxu0 0.0
    %5490 = vmatpush1.msra.mxu0 0.0
    %5491 = vmatprep.subr.mxu0 0.0
    %5492 = vmatpush1.msra.mxu0 0.0
    %5493 = vmatprep.subr.mxu0 0.0
    %5494 = vmatpush1.msra.mxu0 0.0
    %5495 = vmatprep.subr.mxu0 0.0
    %5496 = vmatpush1.msra.mxu0 0.0
    %5497 = vmatprep.subr.mxu0 0.0
    %5498 = vmatpush1.msra.mxu0 0.0
    %5499 = vmatprep.subr.mxu0 0.0
    %5500 = vmatpush1.msra.mxu0 0.0
    %5501 = vmatprep.subr.mxu0 0.0
    %5502 = vmatpush1.msra.mxu0 0.0
    %5503 = vmatprep.subr.mxu0 0.0
    %5504 = vmatpush1.msra.mxu0 0.0
    %5505 = vmatprep.subr.mxu0 0.0
    %5506 = vmatpush1.msra.mxu0 0.0
    %5507 = vmatprep.subr.mxu0 0.0
    %5508 = vmatpush1.msra.mxu0 0.0
    %5509 = vmatprep.subr.mxu0 0.0
    %5510 = vmatpush1.msra.mxu0 0.0
    %5511 = vmatprep.subr.mxu0 0.0
    %5512 = vmatpush1.msra.mxu0 0.0
    %5513 = vmatprep.subr.mxu0 0.0
    %5514 = vmatpush1.msra.mxu0 0.0
    %5515 = vmatprep.subr.mxu0 0.0
    %5516 = vmatpush1.msra.mxu0 0.0
    %5517 = vmatprep.mubr.f32.mxu0 0.0
    %5518 = vmatmul.mubr.f32.gmra.mrb[0].mxu0 %v1343
    %v5519 = vpop.f32.mrb[0].mxu0
    %v5520 = vadd.f32 0.0, %v5519
    %v5521 = vpop.f32.mrb[0].mxu0
    %v5522 = vadd.f32 0.0, %v5521
    %5523 = vdwg.mxu0
    %5524 = vmatprep.subr.mxu0 %v3932
    %5525 = vmatpush1.msra.mxu0 %v3931
    %5526 = vmatprep.subr.mxu0 %v3948
    %5527 = vmatpush1.msra.mxu0 %v3947
    %5528 = vmatprep.subr.mxu0 0.0
    %5529 = vmatpush1.msra.mxu0 0.0
    %5530 = vmatprep.subr.mxu0 0.0
    %5531 = vmatpush1.msra.mxu0 0.0
    %5532 = vmatprep.subr.mxu0 0.0
    %5533 = vmatpush1.msra.mxu0 0.0
    %5534 = vmatprep.subr.mxu0 0.0
    %5535 = vmatpush1.msra.mxu0 0.0
    %5536 = vmatprep.subr.mxu0 0.0
    %5537 = vmatpush1.msra.mxu0 0.0
    %5538 = vmatprep.subr.mxu0 0.0
    %5539 = vmatpush1.msra.mxu0 0.0
    %5540 = vmatprep.subr.mxu0 0.0
    %5541 = vmatpush1.msra.mxu0 0.0
    %5542 = vmatprep.subr.mxu0 0.0
    %5543 = vmatpush1.msra.mxu0 0.0
    %5544 = vmatprep.subr.mxu0 0.0
    %5545 = vmatpush1.msra.mxu0 0.0
    %5546 = vmatprep.subr.mxu0 0.0
    %5547 = vmatpush1.msra.mxu0 0.0
    %5548 = vmatprep.subr.mxu0 0.0
    %5549 = vmatpush1.msra.mxu0 0.0
    %5550 = vmatprep.subr.mxu0 0.0
    %5551 = vmatpush1.msra.mxu0 0.0
    %5552 = vmatprep.subr.mxu0 0.0
    %5553 = vmatpush1.msra.mxu0 0.0
    %5554 = vmatprep.subr.mxu0 0.0
    %5555 = vmatpush1.msra.mxu0 0.0
    %5556 = vmatprep.subr.mxu0 0.0
    %5557 = vmatpush1.msra.mxu0 0.0
    %5558 = vmatprep.subr.mxu0 0.0
    %5559 = vmatpush1.msra.mxu0 0.0
    %5560 = vmatprep.subr.mxu0 0.0
    %5561 = vmatpush1.msra.mxu0 0.0
    %5562 = vmatprep.subr.mxu0 0.0
    %5563 = vmatpush1.msra.mxu0 0.0
    %5564 = vmatprep.subr.mxu0 0.0
    %5565 = vmatpush1.msra.mxu0 0.0
    %5566 = vmatprep.subr.mxu0 0.0
    %5567 = vmatpush1.msra.mxu0 0.0
    %5568 = vmatprep.subr.mxu0 0.0
    %5569 = vmatpush1.msra.mxu0 0.0
    %5570 = vmatprep.subr.mxu0 0.0
    %5571 = vmatpush1.msra.mxu0 0.0
    %5572 = vmatprep.subr.mxu0 0.0
    %5573 = vmatpush1.msra.mxu0 0.0
    %5574 = vmatprep.subr.mxu0 0.0
    %5575 = vmatpush1.msra.mxu0 0.0
    %5576 = vmatprep.subr.mxu0 0.0
    %5577 = vmatpush1.msra.mxu0 0.0
    %5578 = vmatprep.subr.mxu0 0.0
    %5579 = vmatpush1.msra.mxu0 0.0
    %5580 = vmatprep.subr.mxu0 0.0
    %5581 = vmatpush1.msra.mxu0 0.0
    %5582 = vmatprep.subr.mxu0 0.0
    %5583 = vmatpush1.msra.mxu0 0.0
    %5584 = vmatprep.subr.mxu0 0.0
    %5585 = vmatpush1.msra.mxu0 0.0
    %5586 = vmatprep.subr.mxu0 0.0
    %5587 = vmatpush1.msra.mxu0 0.0
    %5588 = vmatprep.mubr.f32.mxu0 0.0
    %5589 = vmatmul.mubr.f32.gmra.mrb[0].mxu0 %v1343
    %v5590 = vpop.f32.mrb[0].mxu0
    %v5591 = vadd.f32 0.0, %v5590
    %v5592 = vpop.f32.mrb[0].mxu0
    %v5593 = vadd.f32 0.0, %v5592
    %5594 = vdwg.mxu0
    %5595 = vmatprep.subr.mxu0 %v3934
    %5596 = vmatpush1.msra.mxu0 %v3933
    %5597 = vmatprep.subr.mxu0 %v3950
    %5598 = vmatpush1.msra.mxu0 %v3949
    %5599 = vmatprep.subr.mxu0 0.0
    %5600 = vmatpush1.msra.mxu0 0.0
    %5601 = vmatprep.subr.mxu0 0.0
    %5602 = vmatpush1.msra.mxu0 0.0
    %5603 = vmatprep.subr.mxu0 0.0
    %5604 = vmatpush1.msra.mxu0 0.0
    %5605 = vmatprep.subr.mxu0 0.0
    %5606 = vmatpush1.msra.mxu0 0.0
    %5607 = vmatprep.subr.mxu0 0.0
    %5608 = vmatpush1.msra.mxu0 0.0
    %5609 = vmatprep.subr.mxu0 0.0
    %5610 = vmatpush1.msra.mxu0 0.0
    %5611 = vmatprep.subr.mxu0 0.0
    %5612 = vmatpush1.msra.mxu0 0.0
    %5613 = vmatprep.subr.mxu0 0.0
    %5614 = vmatpush1.msra.mxu0 0.0
    %5615 = vmatprep.subr.mxu0 0.0
    %5616 = vmatpush1.msra.mxu0 0.0
    %5617 = vmatprep.subr.mxu0 0.0
    %5618 = vmatpush1.msra.mxu0 0.0
    %5619 = vmatprep.subr.mxu0 0.0
    %5620 = vmatpush1.msra.mxu0 0.0
    %5621 = vmatprep.subr.mxu0 0.0
    %5622 = vmatpush1.msra.mxu0 0.0
    %5623 = vmatprep.subr.mxu0 0.0
    %5624 = vmatpush1.msra.mxu0 0.0
    %5625 = vmatprep.subr.mxu0 0.0
    %5626 = vmatpush1.msra.mxu0 0.0
    %5627 = vmatprep.subr.mxu0 0.0
    %5628 = vmatpush1.msra.mxu0 0.0
    %5629 = vmatprep.subr.mxu0 0.0
    %5630 = vmatpush1.msra.mxu0 0.0
    %5631 = vmatprep.subr.mxu0 0.0
    %5632 = vmatpush1.msra.mxu0 0.0
    %5633 = vmatprep.subr.mxu0 0.0
    %5634 = vmatpush1.msra.mxu0 0.0
    %5635 = vmatprep.subr.mxu0 0.0
    %5636 = vmatpush1.msra.mxu0 0.0
    %5637 = vmatprep.subr.mxu0 0.0
    %5638 = vmatpush1.msra.mxu0 0.0
    %5639 = vmatprep.subr.mxu0 0.0
    %5640 = vmatpush1.msra.mxu0 0.0
    %5641 = vmatprep.subr.mxu0 0.0
    %5642 = vmatpush1.msra.mxu0 0.0
    %5643 = vmatprep.subr.mxu0 0.0
    %5644 = vmatpush1.msra.mxu0 0.0
    %5645 = vmatprep.subr.mxu0 0.0
    %5646 = vmatpush1.msra.mxu0 0.0
    %5647 = vmatprep.subr.mxu0 0.0
    %5648 = vmatpush1.msra.mxu0 0.0
    %5649 = vmatprep.subr.mxu0 0.0
    %5650 = vmatpush1.msra.mxu0 0.0
    %5651 = vmatprep.subr.mxu0 0.0
    %5652 = vmatpush1.msra.mxu0 0.0
    %5653 = vmatprep.subr.mxu0 0.0
    %5654 = vmatpush1.msra.mxu0 0.0
    %5655 = vmatprep.subr.mxu0 0.0
    %5656 = vmatpush1.msra.mxu0 0.0
    %5657 = vmatprep.subr.mxu0 0.0
    %5658 = vmatpush1.msra.mxu0 0.0
    %5659 = vmatprep.mubr.f32.mxu0 0.0
    %5660 = vmatmul.mubr.f32.gmra.mrb[0].mxu0 %v1343
    %v5661 = vpop.f32.mrb[0].mxu0
    %v5662 = vadd.f32 0.0, %v5661
    %v5663 = vpop.f32.mrb[0].mxu0
    %v5664 = vadd.f32 0.0, %v5663
    %5665 = vdwg.mxu0
    %5666 = vmatprep.subr.mxu0 %v3936
    %5667 = vmatpush1.msra.mxu0 %v3935
    %5668 = vmatprep.subr.mxu0 %v3952
    %5669 = vmatpush1.msra.mxu0 %v3951
    %5670 = vmatprep.subr.mxu0 0.0
    %5671 = vmatpush1.msra.mxu0 0.0
    %5672 = vmatprep.subr.mxu0 0.0
    %5673 = vmatpush1.msra.mxu0 0.0
    %5674 = vmatprep.subr.mxu0 0.0
    %5675 = vmatpush1.msra.mxu0 0.0
    %5676 = vmatprep.subr.mxu0 0.0
    %5677 = vmatpush1.msra.mxu0 0.0
    %5678 = vmatprep.subr.mxu0 0.0
    %5679 = vmatpush1.msra.mxu0 0.0
    %5680 = vmatprep.subr.mxu0 0.0
    %5681 = vmatpush1.msra.mxu0 0.0
    %5682 = vmatprep.subr.mxu0 0.0
    %5683 = vmatpush1.msra.mxu0 0.0
    %5684 = vmatprep.subr.mxu0 0.0
    %5685 = vmatpush1.msra.mxu0 0.0
    %5686 = vmatprep.subr.mxu0 0.0
    %5687 = vmatpush1.msra.mxu0 0.0
    %5688 = vmatprep.subr.mxu0 0.0
    %5689 = vmatpush1.msra.mxu0 0.0
    %5690 = vmatprep.subr.mxu0 0.0
    %5691 = vmatpush1.msra.mxu0 0.0
    %5692 = vmatprep.subr.mxu0 0.0
    %5693 = vmatpush1.msra.mxu0 0.0
    %5694 = vmatprep.subr.mxu0 0.0
    %5695 = vmatpush1.msra.mxu0 0.0
    %5696 = vmatprep.subr.mxu0 0.0
    %5697 = vmatpush1.msra.mxu0 0.0
    %5698 = vmatprep.subr.mxu0 0.0
    %5699 = vmatpush1.msra.mxu0 0.0
    %5700 = vmatprep.subr.mxu0 0.0
    %5701 = vmatpush1.msra.mxu0 0.0
    %5702 = vmatprep.subr.mxu0 0.0
    %5703 = vmatpush1.msra.mxu0 0.0
    %5704 = vmatprep.subr.mxu0 0.0
    %5705 = vmatpush1.msra.mxu0 0.0
    %5706 = vmatprep.subr.mxu0 0.0
    %5707 = vmatpush1.msra.mxu0 0.0
    %5708 = vmatprep.subr.mxu0 0.0
    %5709 = vmatpush1.msra.mxu0 0.0
    %5710 = vmatprep.subr.mxu0 0.0
    %5711 = vmatpush1.msra.mxu0 0.0
    %5712 = vmatprep.subr.mxu0 0.0
    %5713 = vmatpush1.msra.mxu0 0.0
    %5714 = vmatprep.subr.mxu0 0.0
    %5715 = vmatpush1.msra.mxu0 0.0
    %5716 = vmatprep.subr.mxu0 0.0
    %5717 = vmatpush1.msra.mxu0 0.0
    %5718 = vmatprep.subr.mxu0 0.0
    %5719 = vmatpush1.msra.mxu0 0.0
    %5720 = vmatprep.subr.mxu0 0.0
    %5721 = vmatpush1.msra.mxu0 0.0
    %5722 = vmatprep.subr.mxu0 0.0
    %5723 = vmatpush1.msra.mxu0 0.0
    %5724 = vmatprep.subr.mxu0 0.0
    %5725 = vmatpush1.msra.mxu0 0.0
    %5726 = vmatprep.subr.mxu0 0.0
    %5727 = vmatpush1.msra.mxu0 0.0
    %5728 = vmatprep.subr.mxu0 0.0
    %5729 = vmatpush1.msra.mxu0 0.0
    %5730 = vmatprep.mubr.f32.mxu0 0.0
    %5731 = vmatmul.mubr.f32.gmra.mrb[0].mxu0 %v1343
    %v5732 = vpop.f32.mrb[0].mxu0
    %v5733 = vadd.f32 0.0, %v5732
    %v5734 = vpop.f32.mrb[0].mxu0
    %v5735 = vadd.f32 0.0, %v5734
    %5736 = vdwg.mxu0
    %v5737 = vadd.f32 %v4668, %v5236
    %v5738 = vadd.f32 %v4670, %v5238
    %v5739 = vadd.f32 %v4739, %v5307
    %v5740 = vadd.f32 %v4741, %v5309
    %v5741 = vadd.f32 %v4810, %v5378
    %v5742 = vadd.f32 %v4812, %v5380
    %v5743 = vadd.f32 %v4881, %v5449
    %v5744 = vadd.f32 %v4883, %v5451
    %v5745 = vadd.f32 %v4952, %v5520
    %v5746 = vadd.f32 %v4954, %v5522
    %v5747 = vadd.f32 %v5023, %v5591
    %v5748 = vadd.f32 %v5025, %v5593
    %v5749 = vadd.f32 %v5094, %v5662
    %v5750 = vadd.f32 %v5096, %v5664
    %v5751 = vadd.f32 %v5165, %v5733
    %v5752 = vadd.f32 %v5167, %v5735
    %v5753 = vmul.f32 %v5742, 0.26601174
    %v5754 = vmul.f32 %v5743, 0.26601174
    %v5755 = vmul.f32 %v5744, 0.26601174
    %v5756 = vmul.f32 %v5745, 0.26601174
    %v5757 = vmul.f32 %v5746, 0.26601174
    %v5758 = vmul.f32 %v5747, 0.26601174
    %v5759 = vadd.f32 %v5737, %v5747
    %v5760 = vadd.f32 %v5738, %v5748
    %v5761 = vadd.f32 %v5739, %v5749
    %v5762 = vadd.f32 %v5740, %v5750
    %v5763 = vadd.f32 %v5741, %v5751
    %v5764 = vadd.f32 %v5742, %v5752
    %v5765 = vmul.f32 %v5759, 0.0010283804
    %v5766 = vmul.f32 %v5760, 0.0010283804
    %v5767 = vmul.f32 %v5761, 0.0010283804
    %v5768 = vmul.f32 %v5762, 0.0010283804
    %v5769 = vmul.f32 %v5763, 0.0010283804
    %v5770 = vmul.f32 %v5764, 0.0010283804
    %v5771 = vadd.f32 %v5753, %v5765
    %v5772 = vadd.f32 %v5754, %v5766
    %v5773 = vadd.f32 %v5755, %v5767
    %v5774 = vadd.f32 %v5756, %v5768
    %v5775 = vadd.f32 %v5757, %v5769
    %v5776 = vadd.f32 %v5758, %v5770
    %v5777 = vadd.f32 %v5738, %v5746
    %v5778 = vadd.f32 %v5739, %v5747
    %v5779 = vadd.f32 %v5740, %v5748
    %v5780 = vadd.f32 %v5741, %v5749
    %v5781 = vadd.f32 %v5742, %v5750
    %v5782 = vadd.f32 %v5743, %v5751
    %v5783 = vmul.f32 %v5777, 0.0075987587
    %v5784 = vmul.f32 %v5778, 0.0075987587
    %v5785 = vmul.f32 %v5779, 0.0075987587
    %v5786 = vmul.f32 %v5780, 0.0075987587
    %v5787 = vmul.f32 %v5781, 0.0075987587
    %v5788 = vmul.f32 %v5782, 0.0075987587
    %v5789 = vadd.f32 %v5771, %v5783
    %v5790 = vadd.f32 %v5772, %v5784
    %v5791 = vadd.f32 %v5773, %v5785
    %v5792 = vadd.f32 %v5774, %v5786
    %v5793 = vadd.f32 %v5775, %v5787
    %v5794 = vadd.f32 %v5776, %v5788
    %v5795 = vadd.f32 %v5739, %v5745
    %v5796 = vadd.f32 %v5740, %v5746
    %v5797 = vadd.f32 %v5741, %v5747
    %v5798 = vadd.f32 %v5742, %v5748
    %v5799 = vadd.f32 %v5743, %v5749
    %v5800 = vadd.f32 %v5744, %v5750
    %v5801 = vmul.f32 %v5795, 0.036000773
    %v5802 = vmul.f32 %v5796, 0.036000773
    %v5803 = vmul.f32 %v5797, 0.036000773
    %v5804 = vmul.f32 %v5798, 0.036000773
    %v5805 = vmul.f32 %v5799, 0.036000773
    %v5806 = vmul.f32 %v5800, 0.036000773
    %v5807 = vadd.f32 %v5789, %v5801
    %v5808 = vadd.f32 %v5790, %v5802
    %v5809 = vadd.f32 %v5791, %v5803
    %v5810 = vadd.f32 %v5792, %v5804
    %v5811 = vadd.f32 %v5793, %v5805
    %v5812 = vadd.f32 %v5794, %v5806
    %v5813 = vadd.f32 %v5740, %v5744
    %v5814 = vadd.f32 %v5741, %v5745
    %v5815 = vadd.f32 %v5742, %v5746
    %v5816 = vadd.f32 %v5743, %v5747
    %v5817 = vadd.f32 %v5744, %v5748
    %v5818 = vadd.f32 %v5745, %v5749
    %v5819 = vmul.f32 %v5813, 0.1093607
    %v5820 = vmul.f32 %v5814, 0.1093607
    %v5821 = vmul.f32 %v5815, 0.1093607
    %v5822 = vmul.f32 %v5816, 0.1093607
    %v5823 = vmul.f32 %v5817, 0.1093607
    %v5824 = vmul.f32 %v5818, 0.1093607
    %v5825 = vadd.f32 %v5807, %v5819
    %v5826 = vadd.f32 %v5808, %v5820
    %v5827 = vadd.f32 %v5809, %v5821
    %v5828 = vadd.f32 %v5810, %v5822
    %v5829 = vadd.f32 %v5811, %v5823
    %v5830 = vadd.f32 %v5812, %v5824
    %v5831 = vadd.f32 %v5741, %v5743
    %v5832 = vadd.f32 %v5742, %v5744
    %v5833 = vadd.f32 %v5743, %v5745
    %v5834 = vadd.f32 %v5744, %v5746
    %v5835 = vadd.f32 %v5745, %v5747
    %v5836 = vadd.f32 %v5746, %v5748
    %v5837 = vmul.f32 %v5831, 0.21300554
    %v5838 = vmul.f32 %v5832, 0.21300554
    %v5839 = vmul.f32 %v5833, 0.21300554
    %v5840 = vmul.f32 %v5834, 0.21300554
    %v5841 = vmul.f32 %v5835, 0.21300554
    %v5842 = vmul.f32 %v5836, 0.21300554
    %v5843 = vadd.f32 %v5825, %v5837
    %v5844 = vadd.f32 %v5826, %v5838
    %v5845 = vadd.f32 %v5827, %v5839
    %v5846 = vadd.f32 %v5828, %v5840
    %v5847 = vadd.f32 %v5829, %v5841
    %v5848 = vadd.f32 %v5830, %v5842
    %v5849 = vmul.f32 %v86, %v86
    %v5850 = vmul.f32 %v87, %v87
    %v5851 = vmul.f32 %v88, %v88
    %v5852 = vmul.f32 %v89, %v89
    %v5853 = vmul.f32 %v90, %v90
    %v5854 = vmul.f32 %v91, %v91
    %v5855 = vmul.f32 %v92, %v92
    %v5856 = vmul.f32 %v93, %v93
    %v5857 = vmul.f32 %v94, %v94
    %v5858 = vmul.f32 %v95, %v95
    %v5859 = vmul.f32 %v96, %v96
    %v5860 = vmul.f32 %v97, %v97
    %v5861 = vmul.f32 %v98, %v98
    %v5862 = vmul.f32 %v99, %v99
    %v5863 = vmul.f32 %v100, %v100
    %v5864 = vmul.f32 %v101, %v101
    %v5865 = vmul.f32 %v102, %v102
    %v5866 = vmul.f32 %v103, %v103
    %v5867 = vmul.f32 %v104, %v104
    %v5868 = vmul.f32 %v105, %v105
    %v5869 = vmul.f32 %v106, %v106
    %v5870 = vmul.f32 %v107, %v107
    %v5871 = vmul.f32 %v108, %v108
    %v5872 = vmul.f32 %v109, %v109
    %v5873 = vmul.f32 %v110, %v110
    %v5874 = vmul.f32 %v111, %v111
    %v5875 = vmul.f32 %v112, %v112
    %v5876 = vmul.f32 %v113, %v113
    %v5877 = vmul.f32 %v114, %v114
    %v5878 = vmul.f32 %v115, %v115
    %v5879 = vmul.f32 %v116, %v116
    %v5880 = vmul.f32 %v117, %v117
    %v5881 = vpack.c.bf16 %v5865, %v5849
    %v5882 = vpack.c.bf16 %v5866, %v5850
    %v5883 = vpack.c.bf16 %v5867, %v5851
    %v5884 = vpack.c.bf16 %v5868, %v5852
    %v5885 = vpack.c.bf16 %v5869, %v5853
    %v5886 = vpack.c.bf16 %v5870, %v5854
    %v5887 = vpack.c.bf16 %v5871, %v5855
    %v5888 = vpack.c.bf16 %v5872, %v5856
    %v5889 = vpack.c.bf16 %v5873, %v5857
    %v5890 = vpack.c.bf16 %v5874, %v5858
    %v5891 = vpack.c.bf16 %v5875, %v5859
    %v5892 = vpack.c.bf16 %v5876, %v5860
    %v5893 = vpack.c.bf16 %v5877, %v5861
    %v5894 = vpack.c.bf16 %v5878, %v5862
    %v5895 = vpack.c.bf16 %v5879, %v5863
    %v5896 = vpack.c.bf16 %v5880, %v5864
    %v5897 = vunpack.c.l.bf16 %v5881
    %v5898 = vunpack.c.l.bf16 %v5882
    %v5899 = vunpack.c.l.bf16 %v5883
    %v5900 = vunpack.c.l.bf16 %v5884
    %v5901 = vunpack.c.l.bf16 %v5885
    %v5902 = vunpack.c.l.bf16 %v5886
    %v5903 = vunpack.c.l.bf16 %v5887
    %v5904 = vunpack.c.l.bf16 %v5888
    %v5905 = vunpack.c.l.bf16 %v5889
    %v5906 = vunpack.c.l.bf16 %v5890
    %v5907 = vunpack.c.l.bf16 %v5891
    %v5908 = vunpack.c.l.bf16 %v5892
    %v5909 = vunpack.c.l.bf16 %v5893
    %v5910 = vunpack.c.l.bf16 %v5894
    %v5911 = vunpack.c.l.bf16 %v5895
    %v5912 = vunpack.c.l.bf16 %v5896
    %v5913 = vunpack.c.h.bf16 %v5881
    %v5914 = vunpack.c.h.bf16 %v5882
    %v5915 = vunpack.c.h.bf16 %v5883
    %v5916 = vunpack.c.h.bf16 %v5884
    %v5917 = vunpack.c.h.bf16 %v5885
    %v5918 = vunpack.c.h.bf16 %v5886
    %v5919 = vunpack.c.h.bf16 %v5887
    %v5920 = vunpack.c.h.bf16 %v5888
    %v5921 = vunpack.c.h.bf16 %v5889
    %v5922 = vunpack.c.h.bf16 %v5890
    %v5923 = vunpack.c.h.bf16 %v5891
    %v5924 = vunpack.c.h.bf16 %v5892
    %v5925 = vunpack.c.h.bf16 %v5893
    %v5926 = vunpack.c.h.bf16 %v5894
    %v5927 = vunpack.c.h.bf16 %v5895
    %v5928 = vunpack.c.h.bf16 %v5896
    %v5929 = vsub.f32 %v5849, %v5897
    %v5930 = vsub.f32 %v5850, %v5898
    %v5931 = vsub.f32 %v5851, %v5899
    %v5932 = vsub.f32 %v5852, %v5900
    %v5933 = vsub.f32 %v5853, %v5901
    %v5934 = vsub.f32 %v5854, %v5902
    %v5935 = vsub.f32 %v5855, %v5903
    %v5936 = vsub.f32 %v5856, %v5904
    %v5937 = vsub.f32 %v5857, %v5905
    %v5938 = vsub.f32 %v5858, %v5906
    %v5939 = vsub.f32 %v5859, %v5907
    %v5940 = vsub.f32 %v5860, %v5908
    %v5941 = vsub.f32 %v5861, %v5909
    %v5942 = vsub.f32 %v5862, %v5910
    %v5943 = vsub.f32 %v5863, %v5911
    %v5944 = vsub.f32 %v5864, %v5912
    %v5945 = vsub.f32 %v5865, %v5913
    %v5946 = vsub.f32 %v5866, %v5914
    %v5947 = vsub.f32 %v5867, %v5915
    %v5948 = vsub.f32 %v5868, %v5916
    %v5949 = vsub.f32 %v5869, %v5917
    %v5950 = vsub.f32 %v5870, %v5918
    %v5951 = vsub.f32 %v5871, %v5919
    %v5952 = vsub.f32 %v5872, %v5920
    %v5953 = vsub.f32 %v5873, %v5921
    %v5954 = vsub.f32 %v5874, %v5922
    %v5955 = vsub.f32 %v5875, %v5923
    %v5956 = vsub.f32 %v5876, %v5924
    %v5957 = vsub.f32 %v5877, %v5925
    %v5958 = vsub.f32 %v5878, %v5926
    %v5959 = vsub.f32 %v5879, %v5927
    %v5960 = vsub.f32 %v5880, %v5928
    %5961 = vmatprep.subr.mxu0 %v5930
    %5962 = vmatpush1.msra.mxu0 %v5929
    %5963 = vmatprep.subr.mxu0 %v5946
    %5964 = vmatpush1.msra.mxu0 %v5945
    %5965 = vmatprep.subr.mxu0 0.0
    %5966 = vmatpush1.msra.mxu0 0.0
    %5967 = vmatprep.subr.mxu0 0.0
    %5968 = vmatpush1.msra.mxu0 0.0
    %5969 = vmatprep.subr.mxu0 0.0
    %5970 = vmatpush1.msra.mxu0 0.0
    %5971 = vmatprep.subr.mxu0 0.0
    %5972 = vmatpush1.msra.mxu0 0.0
    %5973 = vmatprep.subr.mxu0 0.0
    %5974 = vmatpush1.msra.mxu0 0.0
    %5975 = vmatprep.subr.mxu0 0.0
    %5976 = vmatpush1.msra.mxu0 0.0
    %5977 = vmatprep.subr.mxu0 0.0
    %5978 = vmatpush1.msra.mxu0 0.0
    %5979 = vmatprep.subr.mxu0 0.0
    %5980 = vmatpush1.msra.mxu0 0.0
    %5981 = vmatprep.subr.mxu0 0.0
    %5982 = vmatpush1.msra.mxu0 0.0
    %5983 = vmatprep.subr.mxu0 0.0
    %5984 = vmatpush1.msra.mxu0 0.0
    %5985 = vmatprep.subr.mxu0 0.0
    %5986 = vmatpush1.msra.mxu0 0.0
    %5987 = vmatprep.subr.mxu0 0.0
    %5988 = vmatpush1.msra.mxu0 0.0
    %5989 = vmatprep.subr.mxu0 0.0
    %5990 = vmatpush1.msra.mxu0 0.0
    %5991 = vmatprep.subr.mxu0 0.0
    %5992 = vmatpush1.msra.mxu0 0.0
    %5993 = vmatprep.subr.mxu0 0.0
    %5994 = vmatpush1.msra.mxu0 0.0
    %5995 = vmatprep.subr.mxu0 0.0
    %5996 = vmatpush1.msra.mxu0 0.0
    %5997 = vmatprep.subr.mxu0 0.0
    %5998 = vmatpush1.msra.mxu0 0.0
    %5999 = vmatprep.subr.mxu0 0.0
    %6000 = vmatpush1.msra.mxu0 0.0
    %6001 = vmatprep.subr.mxu0 0.0
    %6002 = vmatpush1.msra.mxu0 0.0
    %6003 = vmatprep.subr.mxu0 0.0
    %6004 = vmatpush1.msra.mxu0 0.0
    %6005 = vmatprep.subr.mxu0 0.0
    %6006 = vmatpush1.msra.mxu0 0.0
    %6007 = vmatprep.subr.mxu0 0.0
    %6008 = vmatpush1.msra.mxu0 0.0
    %6009 = vmatprep.subr.mxu0 0.0
    %6010 = vmatpush1.msra.mxu0 0.0
    %6011 = vmatprep.subr.mxu0 0.0
    %6012 = vmatpush1.msra.mxu0 0.0
    %6013 = vmatprep.subr.mxu0 0.0
    %6014 = vmatpush1.msra.mxu0 0.0
    %6015 = vmatprep.subr.mxu0 0.0
    %6016 = vmatpush1.msra.mxu0 0.0
    %6017 = vmatprep.subr.mxu0 0.0
    %6018 = vmatpush1.msra.mxu0 0.0
    %6019 = vmatprep.subr.mxu0 0.0
    %6020 = vmatpush1.msra.mxu0 0.0
    %6021 = vmatprep.subr.mxu0 0.0
    %6022 = vmatpush1.msra.mxu0 0.0
    %6023 = vmatprep.subr.mxu0 0.0
    %6024 = vmatpush1.msra.mxu0 0.0
    %6025 = vmatprep.mubr.f32.mxu0 0.0
    %6026 = vmatmul.mubr.f32.gmra.mrb[0].mxu0 %v204
    %v6027 = vpop.f32.mrb[0].mxu0
    %v6028 = vadd.f32 0.0, %v6027
    %v6029 = vpop.f32.mrb[0].mxu0
    %v6030 = vadd.f32 0.0, %v6029
    %6031 = vdwg.mxu0
    %6032 = vmatprep.subr.mxu0 %v5932
    %6033 = vmatpush1.msra.mxu0 %v5931
    %6034 = vmatprep.subr.mxu0 %v5948
    %6035 = vmatpush1.msra.mxu0 %v5947
    %6036 = vmatprep.subr.mxu0 0.0
    %6037 = vmatpush1.msra.mxu0 0.0
    %6038 = vmatprep.subr.mxu0 0.0
    %6039 = vmatpush1.msra.mxu0 0.0
    %6040 = vmatprep.subr.mxu0 0.0
    %6041 = vmatpush1.msra.mxu0 0.0
    %6042 = vmatprep.subr.mxu0 0.0
    %6043 = vmatpush1.msra.mxu0 0.0
    %6044 = vmatprep.subr.mxu0 0.0
    %6045 = vmatpush1.msra.mxu0 0.0
    %6046 = vmatprep.subr.mxu0 0.0
    %6047 = vmatpush1.msra.mxu0 0.0
    %6048 = vmatprep.subr.mxu0 0.0
    %6049 = vmatpush1.msra.mxu0 0.0
    %6050 = vmatprep.subr.mxu0 0.0
    %6051 = vmatpush1.msra.mxu0 0.0
    %6052 = vmatprep.subr.mxu0 0.0
    %6053 = vmatpush1.msra.mxu0 0.0
    %6054 = vmatprep.subr.mxu0 0.0
    %6055 = vmatpush1.msra.mxu0 0.0
    %6056 = vmatprep.subr.mxu0 0.0
    %6057 = vmatpush1.msra.mxu0 0.0
    %6058 = vmatprep.subr.mxu0 0.0
    %6059 = vmatpush1.msra.mxu0 0.0
    %6060 = vmatprep.subr.mxu0 0.0
    %6061 = vmatpush1.msra.mxu0 0.0
    %6062 = vmatprep.subr.mxu0 0.0
    %6063 = vmatpush1.msra.mxu0 0.0
    %6064 = vmatprep.subr.mxu0 0.0
    %6065 = vmatpush1.msra.mxu0 0.0
    %6066 = vmatprep.subr.mxu0 0.0
    %6067 = vmatpush1.msra.mxu0 0.0
    %6068 = vmatprep.subr.mxu0 0.0
    %6069 = vmatpush1.msra.mxu0 0.0
    %6070 = vmatprep.subr.mxu0 0.0
    %6071 = vmatpush1.msra.mxu0 0.0
    %6072 = vmatprep.subr.mxu0 0.0
    %6073 = vmatpush1.msra.mxu0 0.0
    %6074 = vmatprep.subr.mxu0 0.0
    %6075 = vmatpush1.msra.mxu0 0.0
    %6076 = vmatprep.subr.mxu0 0.0
    %6077 = vmatpush1.msra.mxu0 0.0
    %6078 = vmatprep.subr.mxu0 0.0
    %6079 = vmatpush1.msra.mxu0 0.0
    %6080 = vmatprep.subr.mxu0 0.0
    %6081 = vmatpush1.msra.mxu0 0.0
    %6082 = vmatprep.subr.mxu0 0.0
    %6083 = vmatpush1.msra.mxu0 0.0
    %6084 = vmatprep.subr.mxu0 0.0
    %6085 = vmatpush1.msra.mxu0 0.0
    %6086 = vmatprep.subr.mxu0 0.0
    %6087 = vmatpush1.msra.mxu0 0.0
    %6088 = vmatprep.subr.mxu0 0.0
    %6089 = vmatpush1.msra.mxu0 0.0
    %6090 = vmatprep.subr.mxu0 0.0
    %6091 = vmatpush1.msra.mxu0 0.0
    %6092 = vmatprep.subr.mxu0 0.0
    %6093 = vmatpush1.msra.mxu0 0.0
    %6094 = vmatprep.subr.mxu0 0.0
    %6095 = vmatpush1.msra.mxu0 0.0
    %6096 = vmatprep.mubr.f32.mxu0 0.0
    %6097 = vmatmul.mubr.f32.gmra.mrb[0].mxu0 %v204
    %v6098 = vpop.f32.mrb[0].mxu0
    %v6099 = vadd.f32 0.0, %v6098
    %v6100 = vpop.f32.mrb[0].mxu0
    %v6101 = vadd.f32 0.0, %v6100
    %6102 = vdwg.mxu0
    %6103 = vmatprep.subr.mxu0 %v5934
    %6104 = vmatpush1.msra.mxu0 %v5933
    %6105 = vmatprep.subr.mxu0 %v5950
    %6106 = vmatpush1.msra.mxu0 %v5949
    %6107 = vmatprep.subr.mxu0 0.0
    %6108 = vmatpush1.msra.mxu0 0.0
    %6109 = vmatprep.subr.mxu0 0.0
    %6110 = vmatpush1.msra.mxu0 0.0
    %6111 = vmatprep.subr.mxu0 0.0
    %6112 = vmatpush1.msra.mxu0 0.0
    %6113 = vmatprep.subr.mxu0 0.0
    %6114 = vmatpush1.msra.mxu0 0.0
    %6115 = vmatprep.subr.mxu0 0.0
    %6116 = vmatpush1.msra.mxu0 0.0
    %6117 = vmatprep.subr.mxu0 0.0
    %6118 = vmatpush1.msra.mxu0 0.0
    %6119 = vmatprep.subr.mxu0 0.0
    %6120 = vmatpush1.msra.mxu0 0.0
    %6121 = vmatprep.subr.mxu0 0.0
    %6122 = vmatpush1.msra.mxu0 0.0
    %6123 = vmatprep.subr.mxu0 0.0
    %6124 = vmatpush1.msra.mxu0 0.0
    %6125 = vmatprep.subr.mxu0 0.0
    %6126 = vmatpush1.msra.mxu0 0.0
    %6127 = vmatprep.subr.mxu0 0.0
    %6128 = vmatpush1.msra.mxu0 0.0
    %6129 = vmatprep.subr.mxu0 0.0
    %6130 = vmatpush1.msra.mxu0 0.0
    %6131 = vmatprep.subr.mxu0 0.0
    %6132 = vmatpush1.msra.mxu0 0.0
    %6133 = vmatprep.subr.mxu0 0.0
    %6134 = vmatpush1.msra.mxu0 0.0
    %6135 = vmatprep.subr.mxu0 0.0
    %6136 = vmatpush1.msra.mxu0 0.0
    %6137 = vmatprep.subr.mxu0 0.0
    %6138 = vmatpush1.msra.mxu0 0.0
    %6139 = vmatprep.subr.mxu0 0.0
    %6140 = vmatpush1.msra.mxu0 0.0
    %6141 = vmatprep.subr.mxu0 0.0
    %6142 = vmatpush1.msra.mxu0 0.0
    %6143 = vmatprep.subr.mxu0 0.0
    %6144 = vmatpush1.msra.mxu0 0.0
    %6145 = vmatprep.subr.mxu0 0.0
    %6146 = vmatpush1.msra.mxu0 0.0
    %6147 = vmatprep.subr.mxu0 0.0
    %6148 = vmatpush1.msra.mxu0 0.0
    %6149 = vmatprep.subr.mxu0 0.0
    %6150 = vmatpush1.msra.mxu0 0.0
    %6151 = vmatprep.subr.mxu0 0.0
    %6152 = vmatpush1.msra.mxu0 0.0
    %6153 = vmatprep.subr.mxu0 0.0
    %6154 = vmatpush1.msra.mxu0 0.0
    %6155 = vmatprep.subr.mxu0 0.0
    %6156 = vmatpush1.msra.mxu0 0.0
    %6157 = vmatprep.subr.mxu0 0.0
    %6158 = vmatpush1.msra.mxu0 0.0
    %6159 = vmatprep.subr.mxu0 0.0
    %6160 = vmatpush1.msra.mxu0 0.0
    %6161 = vmatprep.subr.mxu0 0.0
    %6162 = vmatpush1.msra.mxu0 0.0
    %6163 = vmatprep.subr.mxu0 0.0
    %6164 = vmatpush1.msra.mxu0 0.0
    %6165 = vmatprep.subr.mxu0 0.0
    %6166 = vmatpush1.msra.mxu0 0.0
    %6167 = vmatprep.mubr.f32.mxu0 0.0
    %6168 = vmatmul.mubr.f32.gmra.mrb[0].mxu0 %v204
    %v6169 = vpop.f32.mrb[0].mxu0
    %v6170 = vadd.f32 0.0, %v6169
    %v6171 = vpop.f32.mrb[0].mxu0
    %v6172 = vadd.f32 0.0, %v6171
    %6173 = vdwg.mxu0
    %6174 = vmatprep.subr.mxu0 %v5936
    %6175 = vmatpush1.msra.mxu0 %v5935
    %6176 = vmatprep.subr.mxu0 %v5952
    %6177 = vmatpush1.msra.mxu0 %v5951
    %6178 = vmatprep.subr.mxu0 0.0
    %6179 = vmatpush1.msra.mxu0 0.0
    %6180 = vmatprep.subr.mxu0 0.0
    %6181 = vmatpush1.msra.mxu0 0.0
    %6182 = vmatprep.subr.mxu0 0.0
    %6183 = vmatpush1.msra.mxu0 0.0
    %6184 = vmatprep.subr.mxu0 0.0
    %6185 = vmatpush1.msra.mxu0 0.0
    %6186 = vmatprep.subr.mxu0 0.0
    %6187 = vmatpush1.msra.mxu0 0.0
    %6188 = vmatprep.subr.mxu0 0.0
    %6189 = vmatpush1.msra.mxu0 0.0
    %6190 = vmatprep.subr.mxu0 0.0
    %6191 = vmatpush1.msra.mxu0 0.0
    %6192 = vmatprep.subr.mxu0 0.0
    %6193 = vmatpush1.msra.mxu0 0.0
    %6194 = vmatprep.subr.mxu0 0.0
    %6195 = vmatpush1.msra.mxu0 0.0
    %6196 = vmatprep.subr.mxu0 0.0
    %6197 = vmatpush1.msra.mxu0 0.0
    %6198 = vmatprep.subr.mxu0 0.0
    %6199 = vmatpush1.msra.mxu0 0.0
    %6200 = vmatprep.subr.mxu0 0.0
    %6201 = vmatpush1.msra.mxu0 0.0
    %6202 = vmatprep.subr.mxu0 0.0
    %6203 = vmatpush1.msra.mxu0 0.0
    %6204 = vmatprep.subr.mxu0 0.0
    %6205 = vmatpush1.msra.mxu0 0.0
    %6206 = vmatprep.subr.mxu0 0.0
    %6207 = vmatpush1.msra.mxu0 0.0
    %6208 = vmatprep.subr.mxu0 0.0
    %6209 = vmatpush1.msra.mxu0 0.0
    %6210 = vmatprep.subr.mxu0 0.0
    %6211 = vmatpush1.msra.mxu0 0.0
    %6212 = vmatprep.subr.mxu0 0.0
    %6213 = vmatpush1.msra.mxu0 0.0
    %6214 = vmatprep.subr.mxu0 0.0
    %6215 = vmatpush1.msra.mxu0 0.0
    %6216 = vmatprep.subr.mxu0 0.0
    %6217 = vmatpush1.msra.mxu0 0.0
    %6218 = vmatprep.subr.mxu0 0.0
    %6219 = vmatpush1.msra.mxu0 0.0
    %6220 = vmatprep.subr.mxu0 0.0
    %6221 = vmatpush1.msra.mxu0 0.0
    %6222 = vmatprep.subr.mxu0 0.0
    %6223 = vmatpush1.msra.mxu0 0.0
    %6224 = vmatprep.subr.mxu0 0.0
    %6225 = vmatpush1.msra.mxu0 0.0
    %6226 = vmatprep.subr.mxu0 0.0
    %6227 = vmatpush1.msra.mxu0 0.0
    %6228 = vmatprep.subr.mxu0 0.0
    %6229 = vmatpush1.msra.mxu0 0.0
    %6230 = vmatprep.subr.mxu0 0.0
    %6231 = vmatpush1.msra.mxu0 0.0
    %6232 = vmatprep.subr.mxu0 0.0
    %6233 = vmatpush1.msra.mxu0 0.0
    %6234 = vmatprep.subr.mxu0 0.0
    %6235 = vmatpush1.msra.mxu0 0.0
    %6236 = vmatprep.subr.mxu0 0.0
    %6237 = vmatpush1.msra.mxu0 0.0
    %6238 = vmatprep.mubr.f32.mxu0 0.0
    %6239 = vmatmul.mubr.f32.gmra.mrb[0].mxu0 %v204
    %v6240 = vpop.f32.mrb[0].mxu0
    %v6241 = vadd.f32 0.0, %v6240
    %v6242 = vpop.f32.mrb[0].mxu0
    %v6243 = vadd.f32 0.0, %v6242
    %6244 = vdwg.mxu0
    %6245 = vmatprep.subr.mxu0 %v5938
    %6246 = vmatpush1.msra.mxu0 %v5937
    %6247 = vmatprep.subr.mxu0 %v5954
    %6248 = vmatpush1.msra.mxu0 %v5953
    %6249 = vmatprep.subr.mxu0 0.0
    %6250 = vmatpush1.msra.mxu0 0.0
    %6251 = vmatprep.subr.mxu0 0.0
    %6252 = vmatpush1.msra.mxu0 0.0
    %6253 = vmatprep.subr.mxu0 0.0
    %6254 = vmatpush1.msra.mxu0 0.0
    %6255 = vmatprep.subr.mxu0 0.0
    %6256 = vmatpush1.msra.mxu0 0.0
    %6257 = vmatprep.subr.mxu0 0.0
    %6258 = vmatpush1.msra.mxu0 0.0
    %6259 = vmatprep.subr.mxu0 0.0
    %6260 = vmatpush1.msra.mxu0 0.0
    %6261 = vmatprep.subr.mxu0 0.0
    %6262 = vmatpush1.msra.mxu0 0.0
    %6263 = vmatprep.subr.mxu0 0.0
    %6264 = vmatpush1.msra.mxu0 0.0
    %6265 = vmatprep.subr.mxu0 0.0
    %6266 = vmatpush1.msra.mxu0 0.0
    %6267 = vmatprep.subr.mxu0 0.0
    %6268 = vmatpush1.msra.mxu0 0.0
    %6269 = vmatprep.subr.mxu0 0.0
    %6270 = vmatpush1.msra.mxu0 0.0
    %6271 = vmatprep.subr.mxu0 0.0
    %6272 = vmatpush1.msra.mxu0 0.0
    %6273 = vmatprep.subr.mxu0 0.0
    %6274 = vmatpush1.msra.mxu0 0.0
    %6275 = vmatprep.subr.mxu0 0.0
    %6276 = vmatpush1.msra.mxu0 0.0
    %6277 = vmatprep.subr.mxu0 0.0
    %6278 = vmatpush1.msra.mxu0 0.0
    %6279 = vmatprep.subr.mxu0 0.0
    %6280 = vmatpush1.msra.mxu0 0.0
    %6281 = vmatprep.subr.mxu0 0.0
    %6282 = vmatpush1.msra.mxu0 0.0
    %6283 = vmatprep.subr.mxu0 0.0
    %6284 = vmatpush1.msra.mxu0 0.0
    %6285 = vmatprep.subr.mxu0 0.0
    %6286 = vmatpush1.msra.mxu0 0.0
    %6287 = vmatprep.subr.mxu0 0.0
    %6288 = vmatpush1.msra.mxu0 0.0
    %6289 = vmatprep.subr.mxu0 0.0
    %6290 = vmatpush1.msra.mxu0 0.0
    %6291 = vmatprep.subr.mxu0 0.0
    %6292 = vmatpush1.msra.mxu0 0.0
    %6293 = vmatprep.subr.mxu0 0.0
    %6294 = vmatpush1.msra.mxu0 0.0
    %6295 = vmatprep.subr.mxu0 0.0
    %6296 = vmatpush1.msra.mxu0 0.0
    %6297 = vmatprep.subr.mxu0 0.0
    %6298 = vmatpush1.msra.mxu0 0.0
    %6299 = vmatprep.subr.mxu0 0.0
    %6300 = vmatpush1.msra.mxu0 0.0
    %6301 = vmatprep.subr.mxu0 0.0
    %6302 = vmatpush1.msra.mxu0 0.0
    %6303 = vmatprep.subr.mxu0 0.0
    %6304 = vmatpush1.msra.mxu0 0.0
    %6305 = vmatprep.subr.mxu0 0.0
    %6306 = vmatpush1.msra.mxu0 0.0
    %6307 = vmatprep.subr.mxu0 0.0
    %6308 = vmatpush1.msra.mxu0 0.0
    %6309 = vmatprep.mubr.f32.mxu0 0.0
    %6310 = vmatmul.mubr.f32.gmra.mrb[0].mxu0 %v204
    %v6311 = vpop.f32.mrb[0].mxu0
    %v6312 = vadd.f32 0.0, %v6311
    %v6313 = vpop.f32.mrb[0].mxu0
    %v6314 = vadd.f32 0.0, %v6313
    %6315 = vdwg.mxu0
    %6316 = vmatprep.subr.mxu0 %v5940
    %6317 = vmatpush1.msra.mxu0 %v5939
    %6318 = vmatprep.subr.mxu0 %v5956
    %6319 = vmatpush1.msra.mxu0 %v5955
    %6320 = vmatprep.subr.mxu0 0.0
    %6321 = vmatpush1.msra.mxu0 0.0
    %6322 = vmatprep.subr.mxu0 0.0
    %6323 = vmatpush1.msra.mxu0 0.0
    %6324 = vmatprep.subr.mxu0 0.0
    %6325 = vmatpush1.msra.mxu0 0.0
    %6326 = vmatprep.subr.mxu0 0.0
    %6327 = vmatpush1.msra.mxu0 0.0
    %6328 = vmatprep.subr.mxu0 0.0
    %6329 = vmatpush1.msra.mxu0 0.0
    %6330 = vmatprep.subr.mxu0 0.0
    %6331 = vmatpush1.msra.mxu0 0.0
    %6332 = vmatprep.subr.mxu0 0.0
    %6333 = vmatpush1.msra.mxu0 0.0
    %6334 = vmatprep.subr.mxu0 0.0
    %6335 = vmatpush1.msra.mxu0 0.0
    %6336 = vmatprep.subr.mxu0 0.0
    %6337 = vmatpush1.msra.mxu0 0.0
    %6338 = vmatprep.subr.mxu0 0.0
    %6339 = vmatpush1.msra.mxu0 0.0
    %6340 = vmatprep.subr.mxu0 0.0
    %6341 = vmatpush1.msra.mxu0 0.0
    %6342 = vmatprep.subr.mxu0 0.0
    %6343 = vmatpush1.msra.mxu0 0.0
    %6344 = vmatprep.subr.mxu0 0.0
    %6345 = vmatpush1.msra.mxu0 0.0
    %6346 = vmatprep.subr.mxu0 0.0
    %6347 = vmatpush1.msra.mxu0 0.0
    %6348 = vmatprep.subr.mxu0 0.0
    %6349 = vmatpush1.msra.mxu0 0.0
    %6350 = vmatprep.subr.mxu0 0.0
    %6351 = vmatpush1.msra.mxu0 0.0
    %6352 = vmatprep.subr.mxu0 0.0
    %6353 = vmatpush1.msra.mxu0 0.0
    %6354 = vmatprep.subr.mxu0 0.0
    %6355 = vmatpush1.msra.mxu0 0.0
    %6356 = vmatprep.subr.mxu0 0.0
    %6357 = vmatpush1.msra.mxu0 0.0
    %6358 = vmatprep.subr.mxu0 0.0
    %6359 = vmatpush1.msra.mxu0 0.0
    %6360 = vmatprep.subr.mxu0 0.0
    %6361 = vmatpush1.msra.mxu0 0.0
    %6362 = vmatprep.subr.mxu0 0.0
    %6363 = vmatpush1.msra.mxu0 0.0
    %6364 = vmatprep.subr.mxu0 0.0
    %6365 = vmatpush1.msra.mxu0 0.0
    %6366 = vmatprep.subr.mxu0 0.0
    %6367 = vmatpush1.msra.mxu0 0.0
    %6368 = vmatprep.subr.mxu0 0.0
    %6369 = vmatpush1.msra.mxu0 0.0
    %6370 = vmatprep.subr.mxu0 0.0
    %6371 = vmatpush1.msra.mxu0 0.0
    %6372 = vmatprep.subr.mxu0 0.0
    %6373 = vmatpush1.msra.mxu0 0.0
    %6374 = vmatprep.subr.mxu0 0.0
    %6375 = vmatpush1.msra.mxu0 0.0
    %6376 = vmatprep.subr.mxu0 0.0
    %6377 = vmatpush1.msra.mxu0 0.0
    %6378 = vmatprep.subr.mxu0 0.0
    %6379 = vmatpush1.msra.mxu0 0.0
    %6380 = vmatprep.mubr.f32.mxu0 0.0
    %6381 = vmatmul.mubr.f32.gmra.mrb[0].mxu0 %v204
    %v6382 = vpop.f32.mrb[0].mxu0
    %v6383 = vadd.f32 0.0, %v6382
    %v6384 = vpop.f32.mrb[0].mxu0
    %v6385 = vadd.f32 0.0, %v6384
    %6386 = vdwg.mxu0
    %6387 = vmatprep.subr.mxu0 %v5942
    %6388 = vmatpush1.msra.mxu0 %v5941
    %6389 = vmatprep.subr.mxu0 %v5958
    %6390 = vmatpush1.msra.mxu0 %v5957
    %6391 = vmatprep.subr.mxu0 0.0
    %6392 = vmatpush1.msra.mxu0 0.0
    %6393 = vmatprep.subr.mxu0 0.0
    %6394 = vmatpush1.msra.mxu0 0.0
    %6395 = vmatprep.subr.mxu0 0.0
    %6396 = vmatpush1.msra.mxu0 0.0
    %6397 = vmatprep.subr.mxu0 0.0
    %6398 = vmatpush1.msra.mxu0 0.0
    %6399 = vmatprep.subr.mxu0 0.0
    %6400 = vmatpush1.msra.mxu0 0.0
    %6401 = vmatprep.subr.mxu0 0.0
    %6402 = vmatpush1.msra.mxu0 0.0
    %6403 = vmatprep.subr.mxu0 0.0
    %6404 = vmatpush1.msra.mxu0 0.0
    %6405 = vmatprep.subr.mxu0 0.0
    %6406 = vmatpush1.msra.mxu0 0.0
    %6407 = vmatprep.subr.mxu0 0.0
    %6408 = vmatpush1.msra.mxu0 0.0
    %6409 = vmatprep.subr.mxu0 0.0
    %6410 = vmatpush1.msra.mxu0 0.0
    %6411 = vmatprep.subr.mxu0 0.0
    %6412 = vmatpush1.msra.mxu0 0.0
    %6413 = vmatprep.subr.mxu0 0.0
    %6414 = vmatpush1.msra.mxu0 0.0
    %6415 = vmatprep.subr.mxu0 0.0
    %6416 = vmatpush1.msra.mxu0 0.0
    %6417 = vmatprep.subr.mxu0 0.0
    %6418 = vmatpush1.msra.mxu0 0.0
    %6419 = vmatprep.subr.mxu0 0.0
    %6420 = vmatpush1.msra.mxu0 0.0
    %6421 = vmatprep.subr.mxu0 0.0
    %6422 = vmatpush1.msra.mxu0 0.0
    %6423 = vmatprep.subr.mxu0 0.0
    %6424 = vmatpush1.msra.mxu0 0.0
    %6425 = vmatprep.subr.mxu0 0.0
    %6426 = vmatpush1.msra.mxu0 0.0
    %6427 = vmatprep.subr.mxu0 0.0
    %6428 = vmatpush1.msra.mxu0 0.0
    %6429 = vmatprep.subr.mxu0 0.0
    %6430 = vmatpush1.msra.mxu0 0.0
    %6431 = vmatprep.subr.mxu0 0.0
    %6432 = vmatpush1.msra.mxu0 0.0
    %6433 = vmatprep.subr.mxu0 0.0
    %6434 = vmatpush1.msra.mxu0 0.0
    %6435 = vmatprep.subr.mxu0 0.0
    %6436 = vmatpush1.msra.mxu0 0.0
    %6437 = vmatprep.subr.mxu0 0.0
    %6438 = vmatpush1.msra.mxu0 0.0
    %6439 = vmatprep.subr.mxu0 0.0
    %6440 = vmatpush1.msra.mxu0 0.0
    %6441 = vmatprep.subr.mxu0 0.0
    %6442 = vmatpush1.msra.mxu0 0.0
    %6443 = vmatprep.subr.mxu0 0.0
    %6444 = vmatpush1.msra.mxu0 0.0
    %6445 = vmatprep.subr.mxu0 0.0
    %6446 = vmatpush1.msra.mxu0 0.0
    %6447 = vmatprep.subr.mxu0 0.0
    %6448 = vmatpush1.msra.mxu0 0.0
    %6449 = vmatprep.subr.mxu0 0.0
    %6450 = vmatpush1.msra.mxu0 0.0
    %6451 = vmatprep.mubr.f32.mxu0 0.0
    %6452 = vmatmul.mubr.f32.gmra.mrb[0].mxu0 %v204
    %v6453 = vpop.f32.mrb[0].mxu0
    %v6454 = vadd.f32 0.0, %v6453
    %v6455 = vpop.f32.mrb[0].mxu0
    %v6456 = vadd.f32 0.0, %v6455
    %6457 = vdwg.mxu0
    %6458 = vmatprep.subr.mxu0 %v5944
    %6459 = vmatpush1.msra.mxu0 %v5943
    %6460 = vmatprep.subr.mxu0 %v5960
    %6461 = vmatpush1.msra.mxu0 %v5959
    %6462 = vmatprep.subr.mxu0 0.0
    %6463 = vmatpush1.msra.mxu0 0.0
    %6464 = vmatprep.subr.mxu0 0.0
    %6465 = vmatpush1.msra.mxu0 0.0
    %6466 = vmatprep.subr.mxu0 0.0
    %6467 = vmatpush1.msra.mxu0 0.0
    %6468 = vmatprep.subr.mxu0 0.0
    %6469 = vmatpush1.msra.mxu0 0.0
    %6470 = vmatprep.subr.mxu0 0.0
    %6471 = vmatpush1.msra.mxu0 0.0
    %6472 = vmatprep.subr.mxu0 0.0
    %6473 = vmatpush1.msra.mxu0 0.0
    %6474 = vmatprep.subr.mxu0 0.0
    %6475 = vmatpush1.msra.mxu0 0.0
    %6476 = vmatprep.subr.mxu0 0.0
    %6477 = vmatpush1.msra.mxu0 0.0
    %6478 = vmatprep.subr.mxu0 0.0
    %6479 = vmatpush1.msra.mxu0 0.0
    %6480 = vmatprep.subr.mxu0 0.0
    %6481 = vmatpush1.msra.mxu0 0.0
    %6482 = vmatprep.subr.mxu0 0.0
    %6483 = vmatpush1.msra.mxu0 0.0
    %6484 = vmatprep.subr.mxu0 0.0
    %6485 = vmatpush1.msra.mxu0 0.0
    %6486 = vmatprep.subr.mxu0 0.0
    %6487 = vmatpush1.msra.mxu0 0.0
    %6488 = vmatprep.subr.mxu0 0.0
    %6489 = vmatpush1.msra.mxu0 0.0
    %6490 = vmatprep.subr.mxu0 0.0
    %6491 = vmatpush1.msra.mxu0 0.0
    %6492 = vmatprep.subr.mxu0 0.0
    %6493 = vmatpush1.msra.mxu0 0.0
    %6494 = vmatprep.subr.mxu0 0.0
    %6495 = vmatpush1.msra.mxu0 0.0
    %6496 = vmatprep.subr.mxu0 0.0
    %6497 = vmatpush1.msra.mxu0 0.0
    %6498 = vmatprep.subr.mxu0 0.0
    %6499 = vmatpush1.msra.mxu0 0.0
    %6500 = vmatprep.subr.mxu0 0.0
    %6501 = vmatpush1.msra.mxu0 0.0
    %6502 = vmatprep.subr.mxu0 0.0
    %6503 = vmatpush1.msra.mxu0 0.0
    %6504 = vmatprep.subr.mxu0 0.0
    %6505 = vmatpush1.msra.mxu0 0.0
    %6506 = vmatprep.subr.mxu0 0.0
    %6507 = vmatpush1.msra.mxu0 0.0
    %6508 = vmatprep.subr.mxu0 0.0
    %6509 = vmatpush1.msra.mxu0 0.0
    %6510 = vmatprep.subr.mxu0 0.0
    %6511 = vmatpush1.msra.mxu0 0.0
    %6512 = vmatprep.subr.mxu0 0.0
    %6513 = vmatpush1.msra.mxu0 0.0
    %6514 = vmatprep.subr.mxu0 0.0
    %6515 = vmatpush1.msra.mxu0 0.0
    %6516 = vmatprep.subr.mxu0 0.0
    %6517 = vmatpush1.msra.mxu0 0.0
    %6518 = vmatprep.subr.mxu0 0.0
    %6519 = vmatpush1.msra.mxu0 0.0
    %6520 = vmatprep.subr.mxu0 0.0
    %6521 = vmatpush1.msra.mxu0 0.0
    %6522 = vmatprep.mubr.f32.mxu0 0.0
    %6523 = vmatmul.mubr.f32.gmra.mrb[0].mxu0 %v204
    %v6524 = vpop.f32.mrb[0].mxu0
    %v6525 = vadd.f32 0.0, %v6524
    %v6526 = vpop.f32.mrb[0].mxu0
    %v6527 = vadd.f32 0.0, %v6526
    %6528 = vdwg.mxu0
    %6529 = vmatprep.subr.mxu0 %v5898
    %6530 = vmatpush1.msra.mxu0 %v5897
    %6531 = vmatprep.subr.mxu0 %v5914
    %6532 = vmatpush1.msra.mxu0 %v5913
    %6533 = vmatprep.subr.mxu0 0.0
    %6534 = vmatpush1.msra.mxu0 0.0
    %6535 = vmatprep.subr.mxu0 0.0
    %6536 = vmatpush1.msra.mxu0 0.0
    %6537 = vmatprep.subr.mxu0 0.0
    %6538 = vmatpush1.msra.mxu0 0.0
    %6539 = vmatprep.subr.mxu0 0.0
    %6540 = vmatpush1.msra.mxu0 0.0
    %6541 = vmatprep.subr.mxu0 0.0
    %6542 = vmatpush1.msra.mxu0 0.0
    %6543 = vmatprep.subr.mxu0 0.0
    %6544 = vmatpush1.msra.mxu0 0.0
    %6545 = vmatprep.subr.mxu0 0.0
    %6546 = vmatpush1.msra.mxu0 0.0
    %6547 = vmatprep.subr.mxu0 0.0
    %6548 = vmatpush1.msra.mxu0 0.0
    %6549 = vmatprep.subr.mxu0 0.0
    %6550 = vmatpush1.msra.mxu0 0.0
    %6551 = vmatprep.subr.mxu0 0.0
    %6552 = vmatpush1.msra.mxu0 0.0
    %6553 = vmatprep.subr.mxu0 0.0
    %6554 = vmatpush1.msra.mxu0 0.0
    %6555 = vmatprep.subr.mxu0 0.0
    %6556 = vmatpush1.msra.mxu0 0.0
    %6557 = vmatprep.subr.mxu0 0.0
    %6558 = vmatpush1.msra.mxu0 0.0
    %6559 = vmatprep.subr.mxu0 0.0
    %6560 = vmatpush1.msra.mxu0 0.0
    %6561 = vmatprep.subr.mxu0 0.0
    %6562 = vmatpush1.msra.mxu0 0.0
    %6563 = vmatprep.subr.mxu0 0.0
    %6564 = vmatpush1.msra.mxu0 0.0
    %6565 = vmatprep.subr.mxu0 0.0
    %6566 = vmatpush1.msra.mxu0 0.0
    %6567 = vmatprep.subr.mxu0 0.0
    %6568 = vmatpush1.msra.mxu0 0.0
    %6569 = vmatprep.subr.mxu0 0.0
    %6570 = vmatpush1.msra.mxu0 0.0
    %6571 = vmatprep.subr.mxu0 0.0
    %6572 = vmatpush1.msra.mxu0 0.0
    %6573 = vmatprep.subr.mxu0 0.0
    %6574 = vmatpush1.msra.mxu0 0.0
    %6575 = vmatprep.subr.mxu0 0.0
    %6576 = vmatpush1.msra.mxu0 0.0
    %6577 = vmatprep.subr.mxu0 0.0
    %6578 = vmatpush1.msra.mxu0 0.0
    %6579 = vmatprep.subr.mxu0 0.0
    %6580 = vmatpush1.msra.mxu0 0.0
    %6581 = vmatprep.subr.mxu0 0.0
    %6582 = vmatpush1.msra.mxu0 0.0
    %6583 = vmatprep.subr.mxu0 0.0
    %6584 = vmatpush1.msra.mxu0 0.0
    %6585 = vmatprep.subr.mxu0 0.0
    %6586 = vmatpush1.msra.mxu0 0.0
    %6587 = vmatprep.subr.mxu0 0.0
    %6588 = vmatpush1.msra.mxu0 0.0
    %6589 = vmatprep.subr.mxu0 0.0
    %6590 = vmatpush1.msra.mxu0 0.0
    %6591 = vmatprep.subr.mxu0 0.0
    %6592 = vmatpush1.msra.mxu0 0.0
    %6593 = vmatprep.mubr.f32.mxu0 0.0
    %6594 = vmatmul.mubr.f32.gmra.mrb[0].mxu0 %v204
    %v6595 = vpop.f32.mrb[0].mxu0
    %v6596 = vadd.f32 %v6028, %v6595
    %v6597 = vpop.f32.mrb[0].mxu0
    %v6598 = vadd.f32 %v6030, %v6597
    %6599 = vdwg.mxu0
    %6600 = vmatprep.subr.mxu0 %v5900
    %6601 = vmatpush1.msra.mxu0 %v5899
    %6602 = vmatprep.subr.mxu0 %v5916
    %6603 = vmatpush1.msra.mxu0 %v5915
    %6604 = vmatprep.subr.mxu0 0.0
    %6605 = vmatpush1.msra.mxu0 0.0
    %6606 = vmatprep.subr.mxu0 0.0
    %6607 = vmatpush1.msra.mxu0 0.0
    %6608 = vmatprep.subr.mxu0 0.0
    %6609 = vmatpush1.msra.mxu0 0.0
    %6610 = vmatprep.subr.mxu0 0.0
    %6611 = vmatpush1.msra.mxu0 0.0
    %6612 = vmatprep.subr.mxu0 0.0
    %6613 = vmatpush1.msra.mxu0 0.0
    %6614 = vmatprep.subr.mxu0 0.0
    %6615 = vmatpush1.msra.mxu0 0.0
    %6616 = vmatprep.subr.mxu0 0.0
    %6617 = vmatpush1.msra.mxu0 0.0
    %6618 = vmatprep.subr.mxu0 0.0
    %6619 = vmatpush1.msra.mxu0 0.0
    %6620 = vmatprep.subr.mxu0 0.0
    %6621 = vmatpush1.msra.mxu0 0.0
    %6622 = vmatprep.subr.mxu0 0.0
    %6623 = vmatpush1.msra.mxu0 0.0
    %6624 = vmatprep.subr.mxu0 0.0
    %6625 = vmatpush1.msra.mxu0 0.0
    %6626 = vmatprep.subr.mxu0 0.0
    %6627 = vmatpush1.msra.mxu0 0.0
    %6628 = vmatprep.subr.mxu0 0.0
    %6629 = vmatpush1.msra.mxu0 0.0
    %6630 = vmatprep.subr.mxu0 0.0
    %6631 = vmatpush1.msra.mxu0 0.0
    %6632 = vmatprep.subr.mxu0 0.0
    %6633 = vmatpush1.msra.mxu0 0.0
    %6634 = vmatprep.subr.mxu0 0.0
    %6635 = vmatpush1.msra.mxu0 0.0
    %6636 = vmatprep.subr.mxu0 0.0
    %6637 = vmatpush1.msra.mxu0 0.0
    %6638 = vmatprep.subr.mxu0 0.0
    %6639 = vmatpush1.msra.mxu0 0.0
    %6640 = vmatprep.subr.mxu0 0.0
    %6641 = vmatpush1.msra.mxu0 0.0
    %6642 = vmatprep.subr.mxu0 0.0
    %6643 = vmatpush1.msra.mxu0 0.0
    %6644 = vmatprep.subr.mxu0 0.0
    %6645 = vmatpush1.msra.mxu0 0.0
    %6646 = vmatprep.subr.mxu0 0.0
    %6647 = vmatpush1.msra.mxu0 0.0
    %6648 = vmatprep.subr.mxu0 0.0
    %6649 = vmatpush1.msra.mxu0 0.0
    %6650 = vmatprep.subr.mxu0 0.0
    %6651 = vmatpush1.msra.mxu0 0.0
    %6652 = vmatprep.subr.mxu0 0.0
    %6653 = vmatpush1.msra.mxu0 0.0
    %6654 = vmatprep.subr.mxu0 0.0
    %6655 = vmatpush1.msra.mxu0 0.0
    %6656 = vmatprep.subr.mxu0 0.0
    %6657 = vmatpush1.msra.mxu0 0.0
    %6658 = vmatprep.subr.mxu0 0.0
    %6659 = vmatpush1.msra.mxu0 0.0
    %6660 = vmatprep.subr.mxu0 0.0
    %6661 = vmatpush1.msra.mxu0 0.0
    %6662 = vmatprep.subr.mxu0 0.0
    %6663 = vmatpush1.msra.mxu0 0.0
    %6664 = vmatprep.mubr.f32.mxu0 0.0
    %6665 = vmatmul.mubr.f32.gmra.mrb[0].mxu0 %v204
    %v6666 = vpop.f32.mrb[0].mxu0
    %v6667 = vadd.f32 %v6099, %v6666
    %v6668 = vpop.f32.mrb[0].mxu0
    %v6669 = vadd.f32 %v6101, %v6668
    %6670 = vdwg.mxu0
    %6671 = vmatprep.subr.mxu0 %v5902
    %6672 = vmatpush1.msra.mxu0 %v5901
    %6673 = vmatprep.subr.mxu0 %v5918
    %6674 = vmatpush1.msra.mxu0 %v5917
    %6675 = vmatprep.subr.mxu0 0.0
    %6676 = vmatpush1.msra.mxu0 0.0
    %6677 = vmatprep.subr.mxu0 0.0
    %6678 = vmatpush1.msra.mxu0 0.0
    %6679 = vmatprep.subr.mxu0 0.0
    %6680 = vmatpush1.msra.mxu0 0.0
    %6681 = vmatprep.subr.mxu0 0.0
    %6682 = vmatpush1.msra.mxu0 0.0
    %6683 = vmatprep.subr.mxu0 0.0
    %6684 = vmatpush1.msra.mxu0 0.0
    %6685 = vmatprep.subr.mxu0 0.0
    %6686 = vmatpush1.msra.mxu0 0.0
    %6687 = vmatprep.subr.mxu0 0.0
    %6688 = vmatpush1.msra.mxu0 0.0
    %6689 = vmatprep.subr.mxu0 0.0
    %6690 = vmatpush1.msra.mxu0 0.0
    %6691 = vmatprep.subr.mxu0 0.0
    %6692 = vmatpush1.msra.mxu0 0.0
    %6693 = vmatprep.subr.mxu0 0.0
    %6694 = vmatpush1.msra.mxu0 0.0
    %6695 = vmatprep.subr.mxu0 0.0
    %6696 = vmatpush1.msra.mxu0 0.0
    %6697 = vmatprep.subr.mxu0 0.0
    %6698 = vmatpush1.msra.mxu0 0.0
    %6699 = vmatprep.subr.mxu0 0.0
    %6700 = vmatpush1.msra.mxu0 0.0
    %6701 = vmatprep.subr.mxu0 0.0
    %6702 = vmatpush1.msra.mxu0 0.0
    %6703 = vmatprep.subr.mxu0 0.0
    %6704 = vmatpush1.msra.mxu0 0.0
    %6705 = vmatprep.subr.mxu0 0.0
    %6706 = vmatpush1.msra.mxu0 0.0
    %6707 = vmatprep.subr.mxu0 0.0
    %6708 = vmatpush1.msra.mxu0 0.0
    %6709 = vmatprep.subr.mxu0 0.0
    %6710 = vmatpush1.msra.mxu0 0.0
    %6711 = vmatprep.subr.mxu0 0.0
    %6712 = vmatpush1.msra.mxu0 0.0
    %6713 = vmatprep.subr.mxu0 0.0
    %6714 = vmatpush1.msra.mxu0 0.0
    %6715 = vmatprep.subr.mxu0 0.0
    %6716 = vmatpush1.msra.mxu0 0.0
    %6717 = vmatprep.subr.mxu0 0.0
    %6718 = vmatpush1.msra.mxu0 0.0
    %6719 = vmatprep.subr.mxu0 0.0
    %6720 = vmatpush1.msra.mxu0 0.0
    %6721 = vmatprep.subr.mxu0 0.0
    %6722 = vmatpush1.msra.mxu0 0.0
    %6723 = vmatprep.subr.mxu0 0.0
    %6724 = vmatpush1.msra.mxu0 0.0
    %6725 = vmatprep.subr.mxu0 0.0
    %6726 = vmatpush1.msra.mxu0 0.0
    %6727 = vmatprep.subr.mxu0 0.0
    %6728 = vmatpush1.msra.mxu0 0.0
    %6729 = vmatprep.subr.mxu0 0.0
    %6730 = vmatpush1.msra.mxu0 0.0
    %6731 = vmatprep.subr.mxu0 0.0
    %6732 = vmatpush1.msra.mxu0 0.0
    %6733 = vmatprep.subr.mxu0 0.0
    %6734 = vmatpush1.msra.mxu0 0.0
    %6735 = vmatprep.mubr.f32.mxu0 0.0
    %6736 = vmatmul.mubr.f32.gmra.mrb[0].mxu0 %v204
    %v6737 = vpop.f32.mrb[0].mxu0
    %v6738 = vadd.f32 %v6170, %v6737
    %v6739 = vpop.f32.mrb[0].mxu0
    %v6740 = vadd.f32 %v6172, %v6739
    %6741 = vdwg.mxu0
    %6742 = vmatprep.subr.mxu0 %v5904
    %6743 = vmatpush1.msra.mxu0 %v5903
    %6744 = vmatprep.subr.mxu0 %v5920
    %6745 = vmatpush1.msra.mxu0 %v5919
    %6746 = vmatprep.subr.mxu0 0.0
    %6747 = vmatpush1.msra.mxu0 0.0
    %6748 = vmatprep.subr.mxu0 0.0
    %6749 = vmatpush1.msra.mxu0 0.0
    %6750 = vmatprep.subr.mxu0 0.0
    %6751 = vmatpush1.msra.mxu0 0.0
    %6752 = vmatprep.subr.mxu0 0.0
    %6753 = vmatpush1.msra.mxu0 0.0
    %6754 = vmatprep.subr.mxu0 0.0
    %6755 = vmatpush1.msra.mxu0 0.0
    %6756 = vmatprep.subr.mxu0 0.0
    %6757 = vmatpush1.msra.mxu0 0.0
    %6758 = vmatprep.subr.mxu0 0.0
    %6759 = vmatpush1.msra.mxu0 0.0
    %6760 = vmatprep.subr.mxu0 0.0
    %6761 = vmatpush1.msra.mxu0 0.0
    %6762 = vmatprep.subr.mxu0 0.0
    %6763 = vmatpush1.msra.mxu0 0.0
    %6764 = vmatprep.subr.mxu0 0.0
    %6765 = vmatpush1.msra.mxu0 0.0
    %6766 = vmatprep.subr.mxu0 0.0
    %6767 = vmatpush1.msra.mxu0 0.0
    %6768 = vmatprep.subr.mxu0 0.0
    %6769 = vmatpush1.msra.mxu0 0.0
    %6770 = vmatprep.subr.mxu0 0.0
    %6771 = vmatpush1.msra.mxu0 0.0
    %6772 = vmatprep.subr.mxu0 0.0
    %6773 = vmatpush1.msra.mxu0 0.0
    %6774 = vmatprep.subr.mxu0 0.0
    %6775 = vmatpush1.msra.mxu0 0.0
    %6776 = vmatprep.subr.mxu0 0.0
    %6777 = vmatpush1.msra.mxu0 0.0
    %6778 = vmatprep.subr.mxu0 0.0
    %6779 = vmatpush1.msra.mxu0 0.0
    %6780 = vmatprep.subr.mxu0 0.0
    %6781 = vmatpush1.msra.mxu0 0.0
    %6782 = vmatprep.subr.mxu0 0.0
    %6783 = vmatpush1.msra.mxu0 0.0
    %6784 = vmatprep.subr.mxu0 0.0
    %6785 = vmatpush1.msra.mxu0 0.0
    %6786 = vmatprep.subr.mxu0 0.0
    %6787 = vmatpush1.msra.mxu0 0.0
    %6788 = vmatprep.subr.mxu0 0.0
    %6789 = vmatpush1.msra.mxu0 0.0
    %6790 = vmatprep.subr.mxu0 0.0
    %6791 = vmatpush1.msra.mxu0 0.0
    %6792 = vmatprep.subr.mxu0 0.0
    %6793 = vmatpush1.msra.mxu0 0.0
    %6794 = vmatprep.subr.mxu0 0.0
    %6795 = vmatpush1.msra.mxu0 0.0
    %6796 = vmatprep.subr.mxu0 0.0
    %6797 = vmatpush1.msra.mxu0 0.0
    %6798 = vmatprep.subr.mxu0 0.0
    %6799 = vmatpush1.msra.mxu0 0.0
    %6800 = vmatprep.subr.mxu0 0.0
    %6801 = vmatpush1.msra.mxu0 0.0
    %6802 = vmatprep.subr.mxu0 0.0
    %6803 = vmatpush1.msra.mxu0 0.0
    %6804 = vmatprep.subr.mxu0 0.0
    %6805 = vmatpush1.msra.mxu0 0.0
    %6806 = vmatprep.mubr.f32.mxu0 0.0
    %6807 = vmatmul.mubr.f32.gmra.mrb[0].mxu0 %v204
    %v6808 = vpop.f32.mrb[0].mxu0
    %v6809 = vadd.f32 %v6241, %v6808
    %v6810 = vpop.f32.mrb[0].mxu0
    %v6811 = vadd.f32 %v6243, %v6810
    %6812 = vdwg.mxu0
    %6813 = vmatprep.subr.mxu0 %v5906
    %6814 = vmatpush1.msra.mxu0 %v5905
    %6815 = vmatprep.subr.mxu0 %v5922
    %6816 = vmatpush1.msra.mxu0 %v5921
    %6817 = vmatprep.subr.mxu0 0.0
    %6818 = vmatpush1.msra.mxu0 0.0
    %6819 = vmatprep.subr.mxu0 0.0
    %6820 = vmatpush1.msra.mxu0 0.0
    %6821 = vmatprep.subr.mxu0 0.0
    %6822 = vmatpush1.msra.mxu0 0.0
    %6823 = vmatprep.subr.mxu0 0.0
    %6824 = vmatpush1.msra.mxu0 0.0
    %6825 = vmatprep.subr.mxu0 0.0
    %6826 = vmatpush1.msra.mxu0 0.0
    %6827 = vmatprep.subr.mxu0 0.0
    %6828 = vmatpush1.msra.mxu0 0.0
    %6829 = vmatprep.subr.mxu0 0.0
    %6830 = vmatpush1.msra.mxu0 0.0
    %6831 = vmatprep.subr.mxu0 0.0
    %6832 = vmatpush1.msra.mxu0 0.0
    %6833 = vmatprep.subr.mxu0 0.0
    %6834 = vmatpush1.msra.mxu0 0.0
    %6835 = vmatprep.subr.mxu0 0.0
    %6836 = vmatpush1.msra.mxu0 0.0
    %6837 = vmatprep.subr.mxu0 0.0
    %6838 = vmatpush1.msra.mxu0 0.0
    %6839 = vmatprep.subr.mxu0 0.0
    %6840 = vmatpush1.msra.mxu0 0.0
    %6841 = vmatprep.subr.mxu0 0.0
    %6842 = vmatpush1.msra.mxu0 0.0
    %6843 = vmatprep.subr.mxu0 0.0
    %6844 = vmatpush1.msra.mxu0 0.0
    %6845 = vmatprep.subr.mxu0 0.0
    %6846 = vmatpush1.msra.mxu0 0.0
    %6847 = vmatprep.subr.mxu0 0.0
    %6848 = vmatpush1.msra.mxu0 0.0
    %6849 = vmatprep.subr.mxu0 0.0
    %6850 = vmatpush1.msra.mxu0 0.0
    %6851 = vmatprep.subr.mxu0 0.0
    %6852 = vmatpush1.msra.mxu0 0.0
    %6853 = vmatprep.subr.mxu0 0.0
    %6854 = vmatpush1.msra.mxu0 0.0
    %6855 = vmatprep.subr.mxu0 0.0
    %6856 = vmatpush1.msra.mxu0 0.0
    %6857 = vmatprep.subr.mxu0 0.0
    %6858 = vmatpush1.msra.mxu0 0.0
    %6859 = vmatprep.subr.mxu0 0.0
    %6860 = vmatpush1.msra.mxu0 0.0
    %6861 = vmatprep.subr.mxu0 0.0
    %6862 = vmatpush1.msra.mxu0 0.0
    %6863 = vmatprep.subr.mxu0 0.0
    %6864 = vmatpush1.msra.mxu0 0.0
    %6865 = vmatprep.subr.mxu0 0.0
    %6866 = vmatpush1.msra.mxu0 0.0
    %6867 = vmatprep.subr.mxu0 0.0
    %6868 = vmatpush1.msra.mxu0 0.0
    %6869 = vmatprep.subr.mxu0 0.0
    %6870 = vmatpush1.msra.mxu0 0.0
    %6871 = vmatprep.subr.mxu0 0.0
    %6872 = vmatpush1.msra.mxu0 0.0
    %6873 = vmatprep.subr.mxu0 0.0
    %6874 = vmatpush1.msra.mxu0 0.0
    %6875 = vmatprep.subr.mxu0 0.0
    %6876 = vmatpush1.msra.mxu0 0.0
    %6877 = vmatprep.mubr.f32.mxu0 0.0
    %6878 = vmatmul.mubr.f32.gmra.mrb[0].mxu0 %v204
    %v6879 = vpop.f32.mrb[0].mxu0
    %v6880 = vadd.f32 %v6312, %v6879
    %v6881 = vpop.f32.mrb[0].mxu0
    %v6882 = vadd.f32 %v6314, %v6881
    %6883 = vdwg.mxu0
    %6884 = vmatprep.subr.mxu0 %v5908
    %6885 = vmatpush1.msra.mxu0 %v5907
    %6886 = vmatprep.subr.mxu0 %v5924
    %6887 = vmatpush1.msra.mxu0 %v5923
    %6888 = vmatprep.subr.mxu0 0.0
    %6889 = vmatpush1.msra.mxu0 0.0
    %6890 = vmatprep.subr.mxu0 0.0
    %6891 = vmatpush1.msra.mxu0 0.0
    %6892 = vmatprep.subr.mxu0 0.0
    %6893 = vmatpush1.msra.mxu0 0.0
    %6894 = vmatprep.subr.mxu0 0.0
    %6895 = vmatpush1.msra.mxu0 0.0
    %6896 = vmatprep.subr.mxu0 0.0
    %6897 = vmatpush1.msra.mxu0 0.0
    %6898 = vmatprep.subr.mxu0 0.0
    %6899 = vmatpush1.msra.mxu0 0.0
    %6900 = vmatprep.subr.mxu0 0.0
    %6901 = vmatpush1.msra.mxu0 0.0
    %6902 = vmatprep.subr.mxu0 0.0
    %6903 = vmatpush1.msra.mxu0 0.0
    %6904 = vmatprep.subr.mxu0 0.0
    %6905 = vmatpush1.msra.mxu0 0.0
    %6906 = vmatprep.subr.mxu0 0.0
    %6907 = vmatpush1.msra.mxu0 0.0
    %6908 = vmatprep.subr.mxu0 0.0
    %6909 = vmatpush1.msra.mxu0 0.0
    %6910 = vmatprep.subr.mxu0 0.0
    %6911 = vmatpush1.msra.mxu0 0.0
    %6912 = vmatprep.subr.mxu0 0.0
    %6913 = vmatpush1.msra.mxu0 0.0
    %6914 = vmatprep.subr.mxu0 0.0
    %6915 = vmatpush1.msra.mxu0 0.0
    %6916 = vmatprep.subr.mxu0 0.0
    %6917 = vmatpush1.msra.mxu0 0.0
    %6918 = vmatprep.subr.mxu0 0.0
    %6919 = vmatpush1.msra.mxu0 0.0
    %6920 = vmatprep.subr.mxu0 0.0
    %6921 = vmatpush1.msra.mxu0 0.0
    %6922 = vmatprep.subr.mxu0 0.0
    %6923 = vmatpush1.msra.mxu0 0.0
    %6924 = vmatprep.subr.mxu0 0.0
    %6925 = vmatpush1.msra.mxu0 0.0
    %6926 = vmatprep.subr.mxu0 0.0
    %6927 = vmatpush1.msra.mxu0 0.0
    %6928 = vmatprep.subr.mxu0 0.0
    %6929 = vmatpush1.msra.mxu0 0.0
    %6930 = vmatprep.subr.mxu0 0.0
    %6931 = vmatpush1.msra.mxu0 0.0
    %6932 = vmatprep.subr.mxu0 0.0
    %6933 = vmatpush1.msra.mxu0 0.0
    %6934 = vmatprep.subr.mxu0 0.0
    %6935 = vmatpush1.msra.mxu0 0.0
    %6936 = vmatprep.subr.mxu0 0.0
    %6937 = vmatpush1.msra.mxu0 0.0
    %6938 = vmatprep.subr.mxu0 0.0
    %6939 = vmatpush1.msra.mxu0 0.0
    %6940 = vmatprep.subr.mxu0 0.0
    %6941 = vmatpush1.msra.mxu0 0.0
    %6942 = vmatprep.subr.mxu0 0.0
    %6943 = vmatpush1.msra.mxu0 0.0
    %6944 = vmatprep.subr.mxu0 0.0
    %6945 = vmatpush1.msra.mxu0 0.0
    %6946 = vmatprep.subr.mxu0 0.0
    %6947 = vmatpush1.msra.mxu0 0.0
    %6948 = vmatprep.mubr.f32.mxu0 0.0
    %6949 = vmatmul.mubr.f32.gmra.mrb[0].mxu0 %v204
    %v6950 = vpop.f32.mrb[0].mxu0
    %v6951 = vadd.f32 %v6383, %v6950
    %v6952 = vpop.f32.mrb[0].mxu0
    %v6953 = vadd.f32 %v6385, %v6952
    %6954 = vdwg.mxu0
    %6955 = vmatprep.subr.mxu0 %v5910
    %6956 = vmatpush1.msra.mxu0 %v5909
    %6957 = vmatprep.subr.mxu0 %v5926
    %6958 = vmatpush1.msra.mxu0 %v5925
    %6959 = vmatprep.subr.mxu0 0.0
    %6960 = vmatpush1.msra.mxu0 0.0
    %6961 = vmatprep.subr.mxu0 0.0
    %6962 = vmatpush1.msra.mxu0 0.0
    %6963 = vmatprep.subr.mxu0 0.0
    %6964 = vmatpush1.msra.mxu0 0.0
    %6965 = vmatprep.subr.mxu0 0.0
    %6966 = vmatpush1.msra.mxu0 0.0
    %6967 = vmatprep.subr.mxu0 0.0
    %6968 = vmatpush1.msra.mxu0 0.0
    %6969 = vmatprep.subr.mxu0 0.0
    %6970 = vmatpush1.msra.mxu0 0.0
    %6971 = vmatprep.subr.mxu0 0.0
    %6972 = vmatpush1.msra.mxu0 0.0
    %6973 = vmatprep.subr.mxu0 0.0
    %6974 = vmatpush1.msra.mxu0 0.0
    %6975 = vmatprep.subr.mxu0 0.0
    %6976 = vmatpush1.msra.mxu0 0.0
    %6977 = vmatprep.subr.mxu0 0.0
    %6978 = vmatpush1.msra.mxu0 0.0
    %6979 = vmatprep.subr.mxu0 0.0
    %6980 = vmatpush1.msra.mxu0 0.0
    %6981 = vmatprep.subr.mxu0 0.0
    %6982 = vmatpush1.msra.mxu0 0.0
    %6983 = vmatprep.subr.mxu0 0.0
    %6984 = vmatpush1.msra.mxu0 0.0
    %6985 = vmatprep.subr.mxu0 0.0
    %6986 = vmatpush1.msra.mxu0 0.0
    %6987 = vmatprep.subr.mxu0 0.0
    %6988 = vmatpush1.msra.mxu0 0.0
    %6989 = vmatprep.subr.mxu0 0.0
    %6990 = vmatpush1.msra.mxu0 0.0
    %6991 = vmatprep.subr.mxu0 0.0
    %6992 = vmatpush1.msra.mxu0 0.0
    %6993 = vmatprep.subr.mxu0 0.0
    %6994 = vmatpush1.msra.mxu0 0.0
    %6995 = vmatprep.subr.mxu0 0.0
    %6996 = vmatpush1.msra.mxu0 0.0
    %6997 = vmatprep.subr.mxu0 0.0
    %6998 = vmatpush1.msra.mxu0 0.0
    %6999 = vmatprep.subr.mxu0 0.0
    %7000 = vmatpush1.msra.mxu0 0.0
    %7001 = vmatprep.subr.mxu0 0.0
    %7002 = vmatpush1.msra.mxu0 0.0
    %7003 = vmatprep.subr.mxu0 0.0
    %7004 = vmatpush1.msra.mxu0 0.0
    %7005 = vmatprep.subr.mxu0 0.0
    %7006 = vmatpush1.msra.mxu0 0.0
    %7007 = vmatprep.subr.mxu0 0.0
    %7008 = vmatpush1.msra.mxu0 0.0
    %7009 = vmatprep.subr.mxu0 0.0
    %7010 = vmatpush1.msra.mxu0 0.0
    %7011 = vmatprep.subr.mxu0 0.0
    %7012 = vmatpush1.msra.mxu0 0.0
    %7013 = vmatprep.subr.mxu0 0.0
    %7014 = vmatpush1.msra.mxu0 0.0
    %7015 = vmatprep.subr.mxu0 0.0
    %7016 = vmatpush1.msra.mxu0 0.0
    %7017 = vmatprep.subr.mxu0 0.0
    %7018 = vmatpush1.msra.mxu0 0.0
    %7019 = vmatprep.mubr.f32.mxu0 0.0
    %7020 = vmatmul.mubr.f32.gmra.mrb[0].mxu0 %v204
    %v7021 = vpop.f32.mrb[0].mxu0
    %v7022 = vadd.f32 %v6454, %v7021
    %v7023 = vpop.f32.mrb[0].mxu0
    %v7024 = vadd.f32 %v6456, %v7023
    %7025 = vdwg.mxu0
    %7026 = vmatprep.subr.mxu0 %v5912
    %7027 = vmatpush1.msra.mxu0 %v5911
    %7028 = vmatprep.subr.mxu0 %v5928
    %7029 = vmatpush1.msra.mxu0 %v5927
    %7030 = vmatprep.subr.mxu0 0.0
    %7031 = vmatpush1.msra.mxu0 0.0
    %7032 = vmatprep.subr.mxu0 0.0
    %7033 = vmatpush1.msra.mxu0 0.0
    %7034 = vmatprep.subr.mxu0 0.0
    %7035 = vmatpush1.msra.mxu0 0.0
    %7036 = vmatprep.subr.mxu0 0.0
    %7037 = vmatpush1.msra.mxu0 0.0
    %7038 = vmatprep.subr.mxu0 0.0
    %7039 = vmatpush1.msra.mxu0 0.0
    %7040 = vmatprep.subr.mxu0 0.0
    %7041 = vmatpush1.msra.mxu0 0.0
    %7042 = vmatprep.subr.mxu0 0.0
    %7043 = vmatpush1.msra.mxu0 0.0
    %7044 = vmatprep.subr.mxu0 0.0
    %7045 = vmatpush1.msra.mxu0 0.0
    %7046 = vmatprep.subr.mxu0 0.0
    %7047 = vmatpush1.msra.mxu0 0.0
    %7048 = vmatprep.subr.mxu0 0.0
    %7049 = vmatpush1.msra.mxu0 0.0
    %7050 = vmatprep.subr.mxu0 0.0
    %7051 = vmatpush1.msra.mxu0 0.0
    %7052 = vmatprep.subr.mxu0 0.0
    %7053 = vmatpush1.msra.mxu0 0.0
    %7054 = vmatprep.subr.mxu0 0.0
    %7055 = vmatpush1.msra.mxu0 0.0
    %7056 = vmatprep.subr.mxu0 0.0
    %7057 = vmatpush1.msra.mxu0 0.0
    %7058 = vmatprep.subr.mxu0 0.0
    %7059 = vmatpush1.msra.mxu0 0.0
    %7060 = vmatprep.subr.mxu0 0.0
    %7061 = vmatpush1.msra.mxu0 0.0
    %7062 = vmatprep.subr.mxu0 0.0
    %7063 = vmatpush1.msra.mxu0 0.0
    %7064 = vmatprep.subr.mxu0 0.0
    %7065 = vmatpush1.msra.mxu0 0.0
    %7066 = vmatprep.subr.mxu0 0.0
    %7067 = vmatpush1.msra.mxu0 0.0
    %7068 = vmatprep.subr.mxu0 0.0
    %7069 = vmatpush1.msra.mxu0 0.0
    %7070 = vmatprep.subr.mxu0 0.0
    %7071 = vmatpush1.msra.mxu0 0.0
    %7072 = vmatprep.subr.mxu0 0.0
    %7073 = vmatpush1.msra.mxu0 0.0
    %7074 = vmatprep.subr.mxu0 0.0
    %7075 = vmatpush1.msra.mxu0 0.0
    %7076 = vmatprep.subr.mxu0 0.0
    %7077 = vmatpush1.msra.mxu0 0.0
    %7078 = vmatprep.subr.mxu0 0.0
    %7079 = vmatpush1.msra.mxu0 0.0
    %7080 = vmatprep.subr.mxu0 0.0
    %7081 = vmatpush1.msra.mxu0 0.0
    %7082 = vmatprep.subr.mxu0 0.0
    %7083 = vmatpush1.msra.mxu0 0.0
    %7084 = vmatprep.subr.mxu0 0.0
    %7085 = vmatpush1.msra.mxu0 0.0
    %7086 = vmatprep.subr.mxu0 0.0
    %7087 = vmatpush1.msra.mxu0 0.0
    %7088 = vmatprep.subr.mxu0 0.0
    %7089 = vmatpush1.msra.mxu0 0.0
    %7090 = vmatprep.mubr.f32.mxu0 0.0
    %7091 = vmatmul.mubr.f32.gmra.mrb[0].mxu0 %v204
    %v7092 = vpop.f32.mrb[0].mxu0
    %v7093 = vadd.f32 %v6525, %v7092
    %v7094 = vpop.f32.mrb[0].mxu0
    %v7095 = vadd.f32 %v6527, %v7094
    %7096 = vdwg.mxu0
    %7097 = vmatprep.subr.mxu0 %v5850
    %7098 = vmatpush1.msra.mxu0 %v5849
    %7099 = vmatprep.subr.mxu0 %v5866
    %7100 = vmatpush1.msra.mxu0 %v5865
    %7101 = vmatprep.subr.mxu0 0.0
    %7102 = vmatpush1.msra.mxu0 0.0
    %7103 = vmatprep.subr.mxu0 0.0
    %7104 = vmatpush1.msra.mxu0 0.0
    %7105 = vmatprep.subr.mxu0 0.0
    %7106 = vmatpush1.msra.mxu0 0.0
    %7107 = vmatprep.subr.mxu0 0.0
    %7108 = vmatpush1.msra.mxu0 0.0
    %7109 = vmatprep.subr.mxu0 0.0
    %7110 = vmatpush1.msra.mxu0 0.0
    %7111 = vmatprep.subr.mxu0 0.0
    %7112 = vmatpush1.msra.mxu0 0.0
    %7113 = vmatprep.subr.mxu0 0.0
    %7114 = vmatpush1.msra.mxu0 0.0
    %7115 = vmatprep.subr.mxu0 0.0
    %7116 = vmatpush1.msra.mxu0 0.0
    %7117 = vmatprep.subr.mxu0 0.0
    %7118 = vmatpush1.msra.mxu0 0.0
    %7119 = vmatprep.subr.mxu0 0.0
    %7120 = vmatpush1.msra.mxu0 0.0
    %7121 = vmatprep.subr.mxu0 0.0
    %7122 = vmatpush1.msra.mxu0 0.0
    %7123 = vmatprep.subr.mxu0 0.0
    %7124 = vmatpush1.msra.mxu0 0.0
    %7125 = vmatprep.subr.mxu0 0.0
    %7126 = vmatpush1.msra.mxu0 0.0
    %7127 = vmatprep.subr.mxu0 0.0
    %7128 = vmatpush1.msra.mxu0 0.0
    %7129 = vmatprep.subr.mxu0 0.0
    %7130 = vmatpush1.msra.mxu0 0.0
    %7131 = vmatprep.subr.mxu0 0.0
    %7132 = vmatpush1.msra.mxu0 0.0
    %7133 = vmatprep.subr.mxu0 0.0
    %7134 = vmatpush1.msra.mxu0 0.0
    %7135 = vmatprep.subr.mxu0 0.0
    %7136 = vmatpush1.msra.mxu0 0.0
    %7137 = vmatprep.subr.mxu0 0.0
    %7138 = vmatpush1.msra.mxu0 0.0
    %7139 = vmatprep.subr.mxu0 0.0
    %7140 = vmatpush1.msra.mxu0 0.0
    %7141 = vmatprep.subr.mxu0 0.0
    %7142 = vmatpush1.msra.mxu0 0.0
    %7143 = vmatprep.subr.mxu0 0.0
    %7144 = vmatpush1.msra.mxu0 0.0
    %7145 = vmatprep.subr.mxu0 0.0
    %7146 = vmatpush1.msra.mxu0 0.0
    %7147 = vmatprep.subr.mxu0 0.0
    %7148 = vmatpush1.msra.mxu0 0.0
    %7149 = vmatprep.subr.mxu0 0.0
    %7150 = vmatpush1.msra.mxu0 0.0
    %7151 = vmatprep.subr.mxu0 0.0
    %7152 = vmatpush1.msra.mxu0 0.0
    %7153 = vmatprep.subr.mxu0 0.0
    %7154 = vmatpush1.msra.mxu0 0.0
    %7155 = vmatprep.subr.mxu0 0.0
    %7156 = vmatpush1.msra.mxu0 0.0
    %7157 = vmatprep.subr.mxu0 0.0
    %7158 = vmatpush1.msra.mxu0 0.0
    %7159 = vmatprep.subr.mxu0 0.0
    %7160 = vmatpush1.msra.mxu0 0.0
    %7161 = vmatprep.mubr.f32.mxu0 0.0
    %7162 = vmatmul.mubr.f32.gmra.mrb[0].mxu0 %v1343
    %v7163 = vpop.f32.mrb[0].mxu0
    %v7164 = vadd.f32 0.0, %v7163
    %v7165 = vpop.f32.mrb[0].mxu0
    %v7166 = vadd.f32 0.0, %v7165
    %7167 = vdwg.mxu0
    %7168 = vmatprep.subr.mxu0 %v5852
    %7169 = vmatpush1.msra.mxu0 %v5851
    %7170 = vmatprep.subr.mxu0 %v5868
    %7171 = vmatpush1.msra.mxu0 %v5867
    %7172 = vmatprep.subr.mxu0 0.0
    %7173 = vmatpush1.msra.mxu0 0.0
    %7174 = vmatprep.subr.mxu0 0.0
    %7175 = vmatpush1.msra.mxu0 0.0
    %7176 = vmatprep.subr.mxu0 0.0
    %7177 = vmatpush1.msra.mxu0 0.0
    %7178 = vmatprep.subr.mxu0 0.0
    %7179 = vmatpush1.msra.mxu0 0.0
    %7180 = vmatprep.subr.mxu0 0.0
    %7181 = vmatpush1.msra.mxu0 0.0
    %7182 = vmatprep.subr.mxu0 0.0
    %7183 = vmatpush1.msra.mxu0 0.0
    %7184 = vmatprep.subr.mxu0 0.0
    %7185 = vmatpush1.msra.mxu0 0.0
    %7186 = vmatprep.subr.mxu0 0.0
    %7187 = vmatpush1.msra.mxu0 0.0
    %7188 = vmatprep.subr.mxu0 0.0
    %7189 = vmatpush1.msra.mxu0 0.0
    %7190 = vmatprep.subr.mxu0 0.0
    %7191 = vmatpush1.msra.mxu0 0.0
    %7192 = vmatprep.subr.mxu0 0.0
    %7193 = vmatpush1.msra.mxu0 0.0
    %7194 = vmatprep.subr.mxu0 0.0
    %7195 = vmatpush1.msra.mxu0 0.0
    %7196 = vmatprep.subr.mxu0 0.0
    %7197 = vmatpush1.msra.mxu0 0.0
    %7198 = vmatprep.subr.mxu0 0.0
    %7199 = vmatpush1.msra.mxu0 0.0
    %7200 = vmatprep.subr.mxu0 0.0
    %7201 = vmatpush1.msra.mxu0 0.0
    %7202 = vmatprep.subr.mxu0 0.0
    %7203 = vmatpush1.msra.mxu0 0.0
    %7204 = vmatprep.subr.mxu0 0.0
    %7205 = vmatpush1.msra.mxu0 0.0
    %7206 = vmatprep.subr.mxu0 0.0
    %7207 = vmatpush1.msra.mxu0 0.0
    %7208 = vmatprep.subr.mxu0 0.0
    %7209 = vmatpush1.msra.mxu0 0.0
    %7210 = vmatprep.subr.mxu0 0.0
    %7211 = vmatpush1.msra.mxu0 0.0
    %7212 = vmatprep.subr.mxu0 0.0
    %7213 = vmatpush1.msra.mxu0 0.0
    %7214 = vmatprep.subr.mxu0 0.0
    %7215 = vmatpush1.msra.mxu0 0.0
    %7216 = vmatprep.subr.mxu0 0.0
    %7217 = vmatpush1.msra.mxu0 0.0
    %7218 = vmatprep.subr.mxu0 0.0
    %7219 = vmatpush1.msra.mxu0 0.0
    %7220 = vmatprep.subr.mxu0 0.0
    %7221 = vmatpush1.msra.mxu0 0.0
    %7222 = vmatprep.subr.mxu0 0.0
    %7223 = vmatpush1.msra.mxu0 0.0
    %7224 = vmatprep.subr.mxu0 0.0
    %7225 = vmatpush1.msra.mxu0 0.0
    %7226 = vmatprep.subr.mxu0 0.0
    %7227 = vmatpush1.msra.mxu0 0.0
    %7228 = vmatprep.subr.mxu0 0.0
    %7229 = vmatpush1.msra.mxu0 0.0
    %7230 = vmatprep.subr.mxu0 0.0
    %7231 = vmatpush1.msra.mxu0 0.0
    %7232 = vmatprep.mubr.f32.mxu0 0.0
    %7233 = vmatmul.mubr.f32.gmra.mrb[0].mxu0 %v1343
    %v7234 = vpop.f32.mrb[0].mxu0
    %v7235 = vadd.f32 0.0, %v7234
    %v7236 = vpop.f32.mrb[0].mxu0
    %v7237 = vadd.f32 0.0, %v7236
    %7238 = vdwg.mxu0
    %7239 = vmatprep.subr.mxu0 %v5854
    %7240 = vmatpush1.msra.mxu0 %v5853
    %7241 = vmatprep.subr.mxu0 %v5870
    %7242 = vmatpush1.msra.mxu0 %v5869
    %7243 = vmatprep.subr.mxu0 0.0
    %7244 = vmatpush1.msra.mxu0 0.0
    %7245 = vmatprep.subr.mxu0 0.0
    %7246 = vmatpush1.msra.mxu0 0.0
    %7247 = vmatprep.subr.mxu0 0.0
    %7248 = vmatpush1.msra.mxu0 0.0
    %7249 = vmatprep.subr.mxu0 0.0
    %7250 = vmatpush1.msra.mxu0 0.0
    %7251 = vmatprep.subr.mxu0 0.0
    %7252 = vmatpush1.msra.mxu0 0.0
    %7253 = vmatprep.subr.mxu0 0.0
    %7254 = vmatpush1.msra.mxu0 0.0
    %7255 = vmatprep.subr.mxu0 0.0
    %7256 = vmatpush1.msra.mxu0 0.0
    %7257 = vmatprep.subr.mxu0 0.0
    %7258 = vmatpush1.msra.mxu0 0.0
    %7259 = vmatprep.subr.mxu0 0.0
    %7260 = vmatpush1.msra.mxu0 0.0
    %7261 = vmatprep.subr.mxu0 0.0
    %7262 = vmatpush1.msra.mxu0 0.0
    %7263 = vmatprep.subr.mxu0 0.0
    %7264 = vmatpush1.msra.mxu0 0.0
    %7265 = vmatprep.subr.mxu0 0.0
    %7266 = vmatpush1.msra.mxu0 0.0
    %7267 = vmatprep.subr.mxu0 0.0
    %7268 = vmatpush1.msra.mxu0 0.0
    %7269 = vmatprep.subr.mxu0 0.0
    %7270 = vmatpush1.msra.mxu0 0.0
    %7271 = vmatprep.subr.mxu0 0.0
    %7272 = vmatpush1.msra.mxu0 0.0
    %7273 = vmatprep.subr.mxu0 0.0
    %7274 = vmatpush1.msra.mxu0 0.0
    %7275 = vmatprep.subr.mxu0 0.0
    %7276 = vmatpush1.msra.mxu0 0.0
    %7277 = vmatprep.subr.mxu0 0.0
    %7278 = vmatpush1.msra.mxu0 0.0
    %7279 = vmatprep.subr.mxu0 0.0
    %7280 = vmatpush1.msra.mxu0 0.0
    %7281 = vmatprep.subr.mxu0 0.0
    %7282 = vmatpush1.msra.mxu0 0.0
    %7283 = vmatprep.subr.mxu0 0.0
    %7284 = vmatpush1.msra.mxu0 0.0
    %7285 = vmatprep.subr.mxu0 0.0
    %7286 = vmatpush1.msra.mxu0 0.0
    %7287 = vmatprep.subr.mxu0 0.0
    %7288 = vmatpush1.msra.mxu0 0.0
    %7289 = vmatprep.subr.mxu0 0.0
    %7290 = vmatpush1.msra.mxu0 0.0
    %7291 = vmatprep.subr.mxu0 0.0
    %7292 = vmatpush1.msra.mxu0 0.0
    %7293 = vmatprep.subr.mxu0 0.0
    %7294 = vmatpush1.msra.mxu0 0.0
    %7295 = vmatprep.subr.mxu0 0.0
    %7296 = vmatpush1.msra.mxu0 0.0
    %7297 = vmatprep.subr.mxu0 0.0
    %7298 = vmatpush1.msra.mxu0 0.0
    %7299 = vmatprep.subr.mxu0 0.0
    %7300 = vmatpush1.msra.mxu0 0.0
    %7301 = vmatprep.subr.mxu0 0.0
    %7302 = vmatpush1.msra.mxu0 0.0
    %7303 = vmatprep.mubr.f32.mxu0 0.0
    %7304 = vmatmul.mubr.f32.gmra.mrb[0].mxu0 %v1343
    %v7305 = vpop.f32.mrb[0].mxu0
    %v7306 = vadd.f32 0.0, %v7305
    %v7307 = vpop.f32.mrb[0].mxu0
    %v7308 = vadd.f32 0.0, %v7307
    %7309 = vdwg.mxu0
    %7310 = vmatprep.subr.mxu0 %v5856
    %7311 = vmatpush1.msra.mxu0 %v5855
    %7312 = vmatprep.subr.mxu0 %v5872
    %7313 = vmatpush1.msra.mxu0 %v5871
    %7314 = vmatprep.subr.mxu0 0.0
    %7315 = vmatpush1.msra.mxu0 0.0
    %7316 = vmatprep.subr.mxu0 0.0
    %7317 = vmatpush1.msra.mxu0 0.0
    %7318 = vmatprep.subr.mxu0 0.0
    %7319 = vmatpush1.msra.mxu0 0.0
    %7320 = vmatprep.subr.mxu0 0.0
    %7321 = vmatpush1.msra.mxu0 0.0
    %7322 = vmatprep.subr.mxu0 0.0
    %7323 = vmatpush1.msra.mxu0 0.0
    %7324 = vmatprep.subr.mxu0 0.0
    %7325 = vmatpush1.msra.mxu0 0.0
    %7326 = vmatprep.subr.mxu0 0.0
    %7327 = vmatpush1.msra.mxu0 0.0
    %7328 = vmatprep.subr.mxu0 0.0
    %7329 = vmatpush1.msra.mxu0 0.0
    %7330 = vmatprep.subr.mxu0 0.0
    %7331 = vmatpush1.msra.mxu0 0.0
    %7332 = vmatprep.subr.mxu0 0.0
    %7333 = vmatpush1.msra.mxu0 0.0
    %7334 = vmatprep.subr.mxu0 0.0
    %7335 = vmatpush1.msra.mxu0 0.0
    %7336 = vmatprep.subr.mxu0 0.0
    %7337 = vmatpush1.msra.mxu0 0.0
    %7338 = vmatprep.subr.mxu0 0.0
    %7339 = vmatpush1.msra.mxu0 0.0
    %7340 = vmatprep.subr.mxu0 0.0
    %7341 = vmatpush1.msra.mxu0 0.0
    %7342 = vmatprep.subr.mxu0 0.0
    %7343 = vmatpush1.msra.mxu0 0.0
    %7344 = vmatprep.subr.mxu0 0.0
    %7345 = vmatpush1.msra.mxu0 0.0
    %7346 = vmatprep.subr.mxu0 0.0
    %7347 = vmatpush1.msra.mxu0 0.0
    %7348 = vmatprep.subr.mxu0 0.0
    %7349 = vmatpush1.msra.mxu0 0.0
    %7350 = vmatprep.subr.mxu0 0.0
    %7351 = vmatpush1.msra.mxu0 0.0
    %7352 = vmatprep.subr.mxu0 0.0
    %7353 = vmatpush1.msra.mxu0 0.0
    %7354 = vmatprep.subr.mxu0 0.0
    %7355 = vmatpush1.msra.mxu0 0.0
    %7356 = vmatprep.subr.mxu0 0.0
    %7357 = vmatpush1.msra.mxu0 0.0
    %7358 = vmatprep.subr.mxu0 0.0
    %7359 = vmatpush1.msra.mxu0 0.0
    %7360 = vmatprep.subr.mxu0 0.0
    %7361 = vmatpush1.msra.mxu0 0.0
    %7362 = vmatprep.subr.mxu0 0.0
    %7363 = vmatpush1.msra.mxu0 0.0
    %7364 = vmatprep.subr.mxu0 0.0
    %7365 = vmatpush1.msra.mxu0 0.0
    %7366 = vmatprep.subr.mxu0 0.0
    %7367 = vmatpush1.msra.mxu0 0.0
    %7368 = vmatprep.subr.mxu0 0.0
    %7369 = vmatpush1.msra.mxu0 0.0
    %7370 = vmatprep.subr.mxu0 0.0
    %7371 = vmatpush1.msra.mxu0 0.0
    %7372 = vmatprep.subr.mxu0 0.0
    %7373 = vmatpush1.msra.mxu0 0.0
    %7374 = vmatprep.mubr.f32.mxu0 0.0
    %7375 = vmatmul.mubr.f32.gmra.mrb[0].mxu0 %v1343
    %v7376 = vpop.f32.mrb[0].mxu0
    %v7377 = vadd.f32 0.0, %v7376
    %v7378 = vpop.f32.mrb[0].mxu0
    %v7379 = vadd.f32 0.0, %v7378
    %7380 = vdwg.mxu0
    %7381 = vmatprep.subr.mxu0 %v5858
    %7382 = vmatpush1.msra.mxu0 %v5857
    %7383 = vmatprep.subr.mxu0 %v5874
    %7384 = vmatpush1.msra.mxu0 %v5873
    %7385 = vmatprep.subr.mxu0 0.0
    %7386 = vmatpush1.msra.mxu0 0.0
    %7387 = vmatprep.subr.mxu0 0.0
    %7388 = vmatpush1.msra.mxu0 0.0
    %7389 = vmatprep.subr.mxu0 0.0
    %7390 = vmatpush1.msra.mxu0 0.0
    %7391 = vmatprep.subr.mxu0 0.0
    %7392 = vmatpush1.msra.mxu0 0.0
    %7393 = vmatprep.subr.mxu0 0.0
    %7394 = vmatpush1.msra.mxu0 0.0
    %7395 = vmatprep.subr.mxu0 0.0
    %7396 = vmatpush1.msra.mxu0 0.0
    %7397 = vmatprep.subr.mxu0 0.0
    %7398 = vmatpush1.msra.mxu0 0.0
    %7399 = vmatprep.subr.mxu0 0.0
    %7400 = vmatpush1.msra.mxu0 0.0
    %7401 = vmatprep.subr.mxu0 0.0
    %7402 = vmatpush1.msra.mxu0 0.0
    %7403 = vmatprep.subr.mxu0 0.0
    %7404 = vmatpush1.msra.mxu0 0.0
    %7405 = vmatprep.subr.mxu0 0.0
    %7406 = vmatpush1.msra.mxu0 0.0
    %7407 = vmatprep.subr.mxu0 0.0
    %7408 = vmatpush1.msra.mxu0 0.0
    %7409 = vmatprep.subr.mxu0 0.0
    %7410 = vmatpush1.msra.mxu0 0.0
    %7411 = vmatprep.subr.mxu0 0.0
    %7412 = vmatpush1.msra.mxu0 0.0
    %7413 = vmatprep.subr.mxu0 0.0
    %7414 = vmatpush1.msra.mxu0 0.0
    %7415 = vmatprep.subr.mxu0 0.0
    %7416 = vmatpush1.msra.mxu0 0.0
    %7417 = vmatprep.subr.mxu0 0.0
    %7418 = vmatpush1.msra.mxu0 0.0
    %7419 = vmatprep.subr.mxu0 0.0
    %7420 = vmatpush1.msra.mxu0 0.0
    %7421 = vmatprep.subr.mxu0 0.0
    %7422 = vmatpush1.msra.mxu0 0.0
    %7423 = vmatprep.subr.mxu0 0.0
    %7424 = vmatpush1.msra.mxu0 0.0
    %7425 = vmatprep.subr.mxu0 0.0
    %7426 = vmatpush1.msra.mxu0 0.0
    %7427 = vmatprep.subr.mxu0 0.0
    %7428 = vmatpush1.msra.mxu0 0.0
    %7429 = vmatprep.subr.mxu0 0.0
    %7430 = vmatpush1.msra.mxu0 0.0
    %7431 = vmatprep.subr.mxu0 0.0
    %7432 = vmatpush1.msra.mxu0 0.0
    %7433 = vmatprep.subr.mxu0 0.0
    %7434 = vmatpush1.msra.mxu0 0.0
    %7435 = vmatprep.subr.mxu0 0.0
    %7436 = vmatpush1.msra.mxu0 0.0
    %7437 = vmatprep.subr.mxu0 0.0
    %7438 = vmatpush1.msra.mxu0 0.0
    %7439 = vmatprep.subr.mxu0 0.0
    %7440 = vmatpush1.msra.mxu0 0.0
    %7441 = vmatprep.subr.mxu0 0.0
    %7442 = vmatpush1.msra.mxu0 0.0
    %7443 = vmatprep.subr.mxu0 0.0
    %7444 = vmatpush1.msra.mxu0 0.0
    %7445 = vmatprep.mubr.f32.mxu0 0.0
    %7446 = vmatmul.mubr.f32.gmra.mrb[0].mxu0 %v1343
    %v7447 = vpop.f32.mrb[0].mxu0
    %v7448 = vadd.f32 0.0, %v7447
    %v7449 = vpop.f32.mrb[0].mxu0
    %v7450 = vadd.f32 0.0, %v7449
    %7451 = vdwg.mxu0
    %7452 = vmatprep.subr.mxu0 %v5860
    %7453 = vmatpush1.msra.mxu0 %v5859
    %7454 = vmatprep.subr.mxu0 %v5876
    %7455 = vmatpush1.msra.mxu0 %v5875
    %7456 = vmatprep.subr.mxu0 0.0
    %7457 = vmatpush1.msra.mxu0 0.0
    %7458 = vmatprep.subr.mxu0 0.0
    %7459 = vmatpush1.msra.mxu0 0.0
    %7460 = vmatprep.subr.mxu0 0.0
    %7461 = vmatpush1.msra.mxu0 0.0
    %7462 = vmatprep.subr.mxu0 0.0
    %7463 = vmatpush1.msra.mxu0 0.0
    %7464 = vmatprep.subr.mxu0 0.0
    %7465 = vmatpush1.msra.mxu0 0.0
    %7466 = vmatprep.subr.mxu0 0.0
    %7467 = vmatpush1.msra.mxu0 0.0
    %7468 = vmatprep.subr.mxu0 0.0
    %7469 = vmatpush1.msra.mxu0 0.0
    %7470 = vmatprep.subr.mxu0 0.0
    %7471 = vmatpush1.msra.mxu0 0.0
    %7472 = vmatprep.subr.mxu0 0.0
    %7473 = vmatpush1.msra.mxu0 0.0
    %7474 = vmatprep.subr.mxu0 0.0
    %7475 = vmatpush1.msra.mxu0 0.0
    %7476 = vmatprep.subr.mxu0 0.0
    %7477 = vmatpush1.msra.mxu0 0.0
    %7478 = vmatprep.subr.mxu0 0.0
    %7479 = vmatpush1.msra.mxu0 0.0
    %7480 = vmatprep.subr.mxu0 0.0
    %7481 = vmatpush1.msra.mxu0 0.0
    %7482 = vmatprep.subr.mxu0 0.0
    %7483 = vmatpush1.msra.mxu0 0.0
    %7484 = vmatprep.subr.mxu0 0.0
    %7485 = vmatpush1.msra.mxu0 0.0
    %7486 = vmatprep.subr.mxu0 0.0
    %7487 = vmatpush1.msra.mxu0 0.0
    %7488 = vmatprep.subr.mxu0 0.0
    %7489 = vmatpush1.msra.mxu0 0.0
    %7490 = vmatprep.subr.mxu0 0.0
    %7491 = vmatpush1.msra.mxu0 0.0
    %7492 = vmatprep.subr.mxu0 0.0
    %7493 = vmatpush1.msra.mxu0 0.0
    %7494 = vmatprep.subr.mxu0 0.0
    %7495 = vmatpush1.msra.mxu0 0.0
    %7496 = vmatprep.subr.mxu0 0.0
    %7497 = vmatpush1.msra.mxu0 0.0
    %7498 = vmatprep.subr.mxu0 0.0
    %7499 = vmatpush1.msra.mxu0 0.0
    %7500 = vmatprep.subr.mxu0 0.0
    %7501 = vmatpush1.msra.mxu0 0.0
    %7502 = vmatprep.subr.mxu0 0.0
    %7503 = vmatpush1.msra.mxu0 0.0
    %7504 = vmatprep.subr.mxu0 0.0
    %7505 = vmatpush1.msra.mxu0 0.0
    %7506 = vmatprep.subr.mxu0 0.0
    %7507 = vmatpush1.msra.mxu0 0.0
    %7508 = vmatprep.subr.mxu0 0.0
    %7509 = vmatpush1.msra.mxu0 0.0
    %7510 = vmatprep.subr.mxu0 0.0
    %7511 = vmatpush1.msra.mxu0 0.0
    %7512 = vmatprep.subr.mxu0 0.0
    %7513 = vmatpush1.msra.mxu0 0.0
    %7514 = vmatprep.subr.mxu0 0.0
    %7515 = vmatpush1.msra.mxu0 0.0
    %7516 = vmatprep.mubr.f32.mxu0 0.0
    %7517 = vmatmul.mubr.f32.gmra.mrb[0].mxu0 %v1343
    %v7518 = vpop.f32.mrb[0].mxu0
    %v7519 = vadd.f32 0.0, %v7518
    %v7520 = vpop.f32.mrb[0].mxu0
    %v7521 = vadd.f32 0.0, %v7520
    %7522 = vdwg.mxu0
    %7523 = vmatprep.subr.mxu0 %v5862
    %7524 = vmatpush1.msra.mxu0 %v5861
    %7525 = vmatprep.subr.mxu0 %v5878
    %7526 = vmatpush1.msra.mxu0 %v5877
    %7527 = vmatprep.subr.mxu0 0.0
    %7528 = vmatpush1.msra.mxu0 0.0
    %7529 = vmatprep.subr.mxu0 0.0
    %7530 = vmatpush1.msra.mxu0 0.0
    %7531 = vmatprep.subr.mxu0 0.0
    %7532 = vmatpush1.msra.mxu0 0.0
    %7533 = vmatprep.subr.mxu0 0.0
    %7534 = vmatpush1.msra.mxu0 0.0
    %7535 = vmatprep.subr.mxu0 0.0
    %7536 = vmatpush1.msra.mxu0 0.0
    %7537 = vmatprep.subr.mxu0 0.0
    %7538 = vmatpush1.msra.mxu0 0.0
    %7539 = vmatprep.subr.mxu0 0.0
    %7540 = vmatpush1.msra.mxu0 0.0
    %7541 = vmatprep.subr.mxu0 0.0
    %7542 = vmatpush1.msra.mxu0 0.0
    %7543 = vmatprep.subr.mxu0 0.0
    %7544 = vmatpush1.msra.mxu0 0.0
    %7545 = vmatprep.subr.mxu0 0.0
    %7546 = vmatpush1.msra.mxu0 0.0
    %7547 = vmatprep.subr.mxu0 0.0
    %7548 = vmatpush1.msra.mxu0 0.0
    %7549 = vmatprep.subr.mxu0 0.0
    %7550 = vmatpush1.msra.mxu0 0.0
    %7551 = vmatprep.subr.mxu0 0.0
    %7552 = vmatpush1.msra.mxu0 0.0
    %7553 = vmatprep.subr.mxu0 0.0
    %7554 = vmatpush1.msra.mxu0 0.0
    %7555 = vmatprep.subr.mxu0 0.0
    %7556 = vmatpush1.msra.mxu0 0.0
    %7557 = vmatprep.subr.mxu0 0.0
    %7558 = vmatpush1.msra.mxu0 0.0
    %7559 = vmatprep.subr.mxu0 0.0
    %7560 = vmatpush1.msra.mxu0 0.0
    %7561 = vmatprep.subr.mxu0 0.0
    %7562 = vmatpush1.msra.mxu0 0.0
    %7563 = vmatprep.subr.mxu0 0.0
    %7564 = vmatpush1.msra.mxu0 0.0
    %7565 = vmatprep.subr.mxu0 0.0
    %7566 = vmatpush1.msra.mxu0 0.0
    %7567 = vmatprep.subr.mxu0 0.0
    %7568 = vmatpush1.msra.mxu0 0.0
    %7569 = vmatprep.subr.mxu0 0.0
    %7570 = vmatpush1.msra.mxu0 0.0
    %7571 = vmatprep.subr.mxu0 0.0
    %7572 = vmatpush1.msra.mxu0 0.0
    %7573 = vmatprep.subr.mxu0 0.0
    %7574 = vmatpush1.msra.mxu0 0.0
    %7575 = vmatprep.subr.mxu0 0.0
    %7576 = vmatpush1.msra.mxu0 0.0
    %7577 = vmatprep.subr.mxu0 0.0
    %7578 = vmatpush1.msra.mxu0 0.0
    %7579 = vmatprep.subr.mxu0 0.0
    %7580 = vmatpush1.msra.mxu0 0.0
    %7581 = vmatprep.subr.mxu0 0.0
    %7582 = vmatpush1.msra.mxu0 0.0
    %7583 = vmatprep.subr.mxu0 0.0
    %7584 = vmatpush1.msra.mxu0 0.0
    %7585 = vmatprep.subr.mxu0 0.0
    %7586 = vmatpush1.msra.mxu0 0.0
    %7587 = vmatprep.mubr.f32.mxu0 0.0
    %7588 = vmatmul.mubr.f32.gmra.mrb[0].mxu0 %v1343
    %v7589 = vpop.f32.mrb[0].mxu0
    %v7590 = vadd.f32 0.0, %v7589
    %v7591 = vpop.f32.mrb[0].mxu0
    %v7592 = vadd.f32 0.0, %v7591
    %7593 = vdwg.mxu0
    %7594 = vmatprep.subr.mxu0 %v5864
    %7595 = vmatpush1.msra.mxu0 %v5863
    %7596 = vmatprep.subr.mxu0 %v5880
    %7597 = vmatpush1.msra.mxu0 %v5879
    %7598 = vmatprep.subr.mxu0 0.0
    %7599 = vmatpush1.msra.mxu0 0.0
    %7600 = vmatprep.subr.mxu0 0.0
    %7601 = vmatpush1.msra.mxu0 0.0
    %7602 = vmatprep.subr.mxu0 0.0
    %7603 = vmatpush1.msra.mxu0 0.0
    %7604 = vmatprep.subr.mxu0 0.0
    %7605 = vmatpush1.msra.mxu0 0.0
    %7606 = vmatprep.subr.mxu0 0.0
    %7607 = vmatpush1.msra.mxu0 0.0
    %7608 = vmatprep.subr.mxu0 0.0
    %7609 = vmatpush1.msra.mxu0 0.0
    %7610 = vmatprep.subr.mxu0 0.0
    %7611 = vmatpush1.msra.mxu0 0.0
    %7612 = vmatprep.subr.mxu0 0.0
    %7613 = vmatpush1.msra.mxu0 0.0
    %7614 = vmatprep.subr.mxu0 0.0
    %7615 = vmatpush1.msra.mxu0 0.0
    %7616 = vmatprep.subr.mxu0 0.0
    %7617 = vmatpush1.msra.mxu0 0.0
    %7618 = vmatprep.subr.mxu0 0.0
    %7619 = vmatpush1.msra.mxu0 0.0
    %7620 = vmatprep.subr.mxu0 0.0
    %7621 = vmatpush1.msra.mxu0 0.0
    %7622 = vmatprep.subr.mxu0 0.0
    %7623 = vmatpush1.msra.mxu0 0.0
    %7624 = vmatprep.subr.mxu0 0.0
    %7625 = vmatpush1.msra.mxu0 0.0
    %7626 = vmatprep.subr.mxu0 0.0
    %7627 = vmatpush1.msra.mxu0 0.0
    %7628 = vmatprep.subr.mxu0 0.0
    %7629 = vmatpush1.msra.mxu0 0.0
    %7630 = vmatprep.subr.mxu0 0.0
    %7631 = vmatpush1.msra.mxu0 0.0
    %7632 = vmatprep.subr.mxu0 0.0
    %7633 = vmatpush1.msra.mxu0 0.0
    %7634 = vmatprep.subr.mxu0 0.0
    %7635 = vmatpush1.msra.mxu0 0.0
    %7636 = vmatprep.subr.mxu0 0.0
    %7637 = vmatpush1.msra.mxu0 0.0
    %7638 = vmatprep.subr.mxu0 0.0
    %7639 = vmatpush1.msra.mxu0 0.0
    %7640 = vmatprep.subr.mxu0 0.0
    %7641 = vmatpush1.msra.mxu0 0.0
    %7642 = vmatprep.subr.mxu0 0.0
    %7643 = vmatpush1.msra.mxu0 0.0
    %7644 = vmatprep.subr.mxu0 0.0
    %7645 = vmatpush1.msra.mxu0 0.0
    %7646 = vmatprep.subr.mxu0 0.0
    %7647 = vmatpush1.msra.mxu0 0.0
    %7648 = vmatprep.subr.mxu0 0.0
    %7649 = vmatpush1.msra.mxu0 0.0
    %7650 = vmatprep.subr.mxu0 0.0
    %7651 = vmatpush1.msra.mxu0 0.0
    %7652 = vmatprep.subr.mxu0 0.0
    %7653 = vmatpush1.msra.mxu0 0.0
    %7654 = vmatprep.subr.mxu0 0.0
    %7655 = vmatpush1.msra.mxu0 0.0
    %7656 = vmatprep.subr.mxu0 0.0
    %7657 = vmatpush1.msra.mxu0 0.0
    %7658 = vmatprep.mubr.f32.mxu0 0.0
    %7659 = vmatmul.mubr.f32.gmra.mrb[0].mxu0 %v1343
    %v7660 = vpop.f32.mrb[0].mxu0
    %v7661 = vadd.f32 0.0, %v7660
    %v7662 = vpop.f32.mrb[0].mxu0
    %v7663 = vadd.f32 0.0, %v7662
    %7664 = vdwg.mxu0
    %v7665 = vadd.f32 %v6596, %v7164
    %v7666 = vadd.f32 %v6598, %v7166
    %v7667 = vadd.f32 %v6667, %v7235
    %v7668 = vadd.f32 %v6669, %v7237
    %v7669 = vadd.f32 %v6738, %v7306
    %v7670 = vadd.f32 %v6740, %v7308
    %v7671 = vadd.f32 %v6809, %v7377
    %v7672 = vadd.f32 %v6811, %v7379
    %v7673 = vadd.f32 %v6880, %v7448
    %v7674 = vadd.f32 %v6882, %v7450
    %v7675 = vadd.f32 %v6951, %v7519
    %v7676 = vadd.f32 %v6953, %v7521
    %v7677 = vadd.f32 %v7022, %v7590
    %v7678 = vadd.f32 %v7024, %v7592
    %v7679 = vadd.f32 %v7093, %v7661
    %v7680 = vadd.f32 %v7095, %v7663
    %v7681 = vmul.f32 %v7670, 0.26601174
    %v7682 = vmul.f32 %v7671, 0.26601174
    %v7683 = vmul.f32 %v7672, 0.26601174
    %v7684 = vmul.f32 %v7673, 0.26601174
    %v7685 = vmul.f32 %v7674, 0.26601174
    %v7686 = vmul.f32 %v7675, 0.26601174
    %v7687 = vadd.f32 %v7665, %v7675
    %v7688 = vadd.f32 %v7666, %v7676
    %v7689 = vadd.f32 %v7667, %v7677
    %v7690 = vadd.f32 %v7668, %v7678
    %v7691 = vadd.f32 %v7669, %v7679
    %v7692 = vadd.f32 %v7670, %v7680
    %v7693 = vmul.f32 %v7687, 0.0010283804
    %v7694 = vmul.f32 %v7688, 0.0010283804
    %v7695 = vmul.f32 %v7689, 0.0010283804
    %v7696 = vmul.f32 %v7690, 0.0010283804
    %v7697 = vmul.f32 %v7691, 0.0010283804
    %v7698 = vmul.f32 %v7692, 0.0010283804
    %v7699 = vadd.f32 %v7681, %v7693
    %v7700 = vadd.f32 %v7682, %v7694
    %v7701 = vadd.f32 %v7683, %v7695
    %v7702 = vadd.f32 %v7684, %v7696
    %v7703 = vadd.f32 %v7685, %v7697
    %v7704 = vadd.f32 %v7686, %v7698
    %v7705 = vadd.f32 %v7666, %v7674
    %v7706 = vadd.f32 %v7667, %v7675
    %v7707 = vadd.f32 %v7668, %v7676
    %v7708 = vadd.f32 %v7669, %v7677
    %v7709 = vadd.f32 %v7670, %v7678
    %v7710 = vadd.f32 %v7671, %v7679
    %v7711 = vmul.f32 %v7705, 0.0075987587
    %v7712 = vmul.f32 %v7706, 0.0075987587
    %v7713 = vmul.f32 %v7707, 0.0075987587
    %v7714 = vmul.f32 %v7708, 0.0075987587
    %v7715 = vmul.f32 %v7709, 0.0075987587
    %v7716 = vmul.f32 %v7710, 0.0075987587
    %v7717 = vadd.f32 %v7699, %v7711
    %v7718 = vadd.f32 %v7700, %v7712
    %v7719 = vadd.f32 %v7701, %v7713
    %v7720 = vadd.f32 %v7702, %v7714
    %v7721 = vadd.f32 %v7703, %v7715
    %v7722 = vadd.f32 %v7704, %v7716
    %v7723 = vadd.f32 %v7667, %v7673
    %v7724 = vadd.f32 %v7668, %v7674
    %v7725 = vadd.f32 %v7669, %v7675
    %v7726 = vadd.f32 %v7670, %v7676
    %v7727 = vadd.f32 %v7671, %v7677
    %v7728 = vadd.f32 %v7672, %v7678
    %v7729 = vmul.f32 %v7723, 0.036000773
    %v7730 = vmul.f32 %v7724, 0.036000773
    %v7731 = vmul.f32 %v7725, 0.036000773
    %v7732 = vmul.f32 %v7726, 0.036000773
    %v7733 = vmul.f32 %v7727, 0.036000773
    %v7734 = vmul.f32 %v7728, 0.036000773
    %v7735 = vadd.f32 %v7717, %v7729
    %v7736 = vadd.f32 %v7718, %v7730
    %v7737 = vadd.f32 %v7719, %v7731
    %v7738 = vadd.f32 %v7720, %v7732
    %v7739 = vadd.f32 %v7721, %v7733
    %v7740 = vadd.f32 %v7722, %v7734
    %v7741 = vadd.f32 %v7668, %v7672
    %v7742 = vadd.f32 %v7669, %v7673
    %v7743 = vadd.f32 %v7670, %v7674
    %v7744 = vadd.f32 %v7671, %v7675
    %v7745 = vadd.f32 %v7672, %v7676
    %v7746 = vadd.f32 %v7673, %v7677
    %v7747 = vmul.f32 %v7741, 0.1093607
    %v7748 = vmul.f32 %v7742, 0.1093607
    %v7749 = vmul.f32 %v7743, 0.1093607
    %v7750 = vmul.f32 %v7744, 0.1093607
    %v7751 = vmul.f32 %v7745, 0.1093607
    %v7752 = vmul.f32 %v7746, 0.1093607
    %v7753 = vadd.f32 %v7735, %v7747
    %v7754 = vadd.f32 %v7736, %v7748
    %v7755 = vadd.f32 %v7737, %v7749
    %v7756 = vadd.f32 %v7738, %v7750
    %v7757 = vadd.f32 %v7739, %v7751
    %v7758 = vadd.f32 %v7740, %v7752
    %v7759 = vadd.f32 %v7669, %v7671
    %v7760 = vadd.f32 %v7670, %v7672
    %v7761 = vadd.f32 %v7671, %v7673
    %v7762 = vadd.f32 %v7672, %v7674
    %v7763 = vadd.f32 %v7673, %v7675
    %v7764 = vadd.f32 %v7674, %v7676
    %v7765 = vmul.f32 %v7759, 0.21300554
    %v7766 = vmul.f32 %v7760, 0.21300554
    %v7767 = vmul.f32 %v7761, 0.21300554
    %v7768 = vmul.f32 %v7762, 0.21300554
    %v7769 = vmul.f32 %v7763, 0.21300554
    %v7770 = vmul.f32 %v7764, 0.21300554
    %v7771 = vadd.f32 %v7753, %v7765
    %v7772 = vadd.f32 %v7754, %v7766
    %v7773 = vadd.f32 %v7755, %v7767
    %v7774 = vadd.f32 %v7756, %v7768
    %v7775 = vadd.f32 %v7757, %v7769
    %v7776 = vadd.f32 %v7758, %v7770
    %v7777 = vmul.f32 %v54, %v86
    %v7778 = vmul.f32 %v55, %v87
    %v7779 = vmul.f32 %v56, %v88
    %v7780 = vmul.f32 %v57, %v89
    %v7781 = vmul.f32 %v58, %v90
    %v7782 = vmul.f32 %v59, %v91
    %v7783 = vmul.f32 %v60, %v92
    %v7784 = vmul.f32 %v61, %v93
    %v7785 = vmul.f32 %v62, %v94
    %v7786 = vmul.f32 %v63, %v95
    %v7787 = vmul.f32 %v64, %v96
    %v7788 = vmul.f32 %v65, %v97
    %v7789 = vmul.f32 %v66, %v98
    %v7790 = vmul.f32 %v67, %v99
    %v7791 = vmul.f32 %v68, %v100
    %v7792 = vmul.f32 %v69, %v101
    %v7793 = vmul.f32 %v70, %v102
    %v7794 = vmul.f32 %v71, %v103
    %v7795 = vmul.f32 %v72, %v104
    %v7796 = vmul.f32 %v73, %v105
    %v7797 = vmul.f32 %v74, %v106
    %v7798 = vmul.f32 %v75, %v107
    %v7799 = vmul.f32 %v76, %v108
    %v7800 = vmul.f32 %v77, %v109
    %v7801 = vmul.f32 %v78, %v110
    %v7802 = vmul.f32 %v79, %v111
    %v7803 = vmul.f32 %v80, %v112
    %v7804 = vmul.f32 %v81, %v113
    %v7805 = vmul.f32 %v82, %v114
    %v7806 = vmul.f32 %v83, %v115
    %v7807 = vmul.f32 %v84, %v116
    %v7808 = vmul.f32 %v85, %v117
    %v7809 = vpack.c.bf16 %v7793, %v7777
    %v7810 = vpack.c.bf16 %v7794, %v7778
    %v7811 = vpack.c.bf16 %v7795, %v7779
    %v7812 = vpack.c.bf16 %v7796, %v7780
    %v7813 = vpack.c.bf16 %v7797, %v7781
    %v7814 = vpack.c.bf16 %v7798, %v7782
    %v7815 = vpack.c.bf16 %v7799, %v7783
    %v7816 = vpack.c.bf16 %v7800, %v7784
    %v7817 = vpack.c.bf16 %v7801, %v7785
    %v7818 = vpack.c.bf16 %v7802, %v7786
    %v7819 = vpack.c.bf16 %v7803, %v7787
    %v7820 = vpack.c.bf16 %v7804, %v7788
    %v7821 = vpack.c.bf16 %v7805, %v7789
    %v7822 = vpack.c.bf16 %v7806, %v7790
    %v7823 = vpack.c.bf16 %v7807, %v7791
    %v7824 = vpack.c.bf16 %v7808, %v7792
    %v7825 = vunpack.c.l.bf16 %v7809
    %v7826 = vunpack.c.l.bf16 %v7810
    %v7827 = vunpack.c.l.bf16 %v7811
    %v7828 = vunpack.c.l.bf16 %v7812
    %v7829 = vunpack.c.l.bf16 %v7813
    %v7830 = vunpack.c.l.bf16 %v7814
    %v7831 = vunpack.c.l.bf16 %v7815
    %v7832 = vunpack.c.l.bf16 %v7816
    %v7833 = vunpack.c.l.bf16 %v7817
    %v7834 = vunpack.c.l.bf16 %v7818
    %v7835 = vunpack.c.l.bf16 %v7819
    %v7836 = vunpack.c.l.bf16 %v7820
    %v7837 = vunpack.c.l.bf16 %v7821
    %v7838 = vunpack.c.l.bf16 %v7822
    %v7839 = vunpack.c.l.bf16 %v7823
    %v7840 = vunpack.c.l.bf16 %v7824
    %v7841 = vunpack.c.h.bf16 %v7809
    %v7842 = vunpack.c.h.bf16 %v7810
    %v7843 = vunpack.c.h.bf16 %v7811
    %v7844 = vunpack.c.h.bf16 %v7812
    %v7845 = vunpack.c.h.bf16 %v7813
    %v7846 = vunpack.c.h.bf16 %v7814
    %v7847 = vunpack.c.h.bf16 %v7815
    %v7848 = vunpack.c.h.bf16 %v7816
    %v7849 = vunpack.c.h.bf16 %v7817
    %v7850 = vunpack.c.h.bf16 %v7818
    %v7851 = vunpack.c.h.bf16 %v7819
    %v7852 = vunpack.c.h.bf16 %v7820
    %v7853 = vunpack.c.h.bf16 %v7821
    %v7854 = vunpack.c.h.bf16 %v7822
    %v7855 = vunpack.c.h.bf16 %v7823
    %v7856 = vunpack.c.h.bf16 %v7824
    %v7857 = vsub.f32 %v7777, %v7825
    %v7858 = vsub.f32 %v7778, %v7826
    %v7859 = vsub.f32 %v7779, %v7827
    %v7860 = vsub.f32 %v7780, %v7828
    %v7861 = vsub.f32 %v7781, %v7829
    %v7862 = vsub.f32 %v7782, %v7830
    %v7863 = vsub.f32 %v7783, %v7831
    %v7864 = vsub.f32 %v7784, %v7832
    %v7865 = vsub.f32 %v7785, %v7833
    %v7866 = vsub.f32 %v7786, %v7834
    %v7867 = vsub.f32 %v7787, %v7835
    %v7868 = vsub.f32 %v7788, %v7836
    %v7869 = vsub.f32 %v7789, %v7837
    %v7870 = vsub.f32 %v7790, %v7838
    %v7871 = vsub.f32 %v7791, %v7839
    %v7872 = vsub.f32 %v7792, %v7840
    %v7873 = vsub.f32 %v7793, %v7841
    %v7874 = vsub.f32 %v7794, %v7842
    %v7875 = vsub.f32 %v7795, %v7843
    %v7876 = vsub.f32 %v7796, %v7844
    %v7877 = vsub.f32 %v7797, %v7845
    %v7878 = vsub.f32 %v7798, %v7846
    %v7879 = vsub.f32 %v7799, %v7847
    %v7880 = vsub.f32 %v7800, %v7848
    %v7881 = vsub.f32 %v7801, %v7849
    %v7882 = vsub.f32 %v7802, %v7850
    %v7883 = vsub.f32 %v7803, %v7851
    %v7884 = vsub.f32 %v7804, %v7852
    %v7885 = vsub.f32 %v7805, %v7853
    %v7886 = vsub.f32 %v7806, %v7854
    %v7887 = vsub.f32 %v7807, %v7855
    %v7888 = vsub.f32 %v7808, %v7856
    %7889 = vmatprep.subr.mxu0 %v7858
    %7890 = vmatpush1.msra.mxu0 %v7857
    %7891 = vmatprep.subr.mxu0 %v7874
    %7892 = vmatpush1.msra.mxu0 %v7873
    %7893 = vmatprep.subr.mxu0 0.0
    %7894 = vmatpush1.msra.mxu0 0.0
    %7895 = vmatprep.subr.mxu0 0.0
    %7896 = vmatpush1.msra.mxu0 0.0
    %7897 = vmatprep.subr.mxu0 0.0
    %7898 = vmatpush1.msra.mxu0 0.0
    %7899 = vmatprep.subr.mxu0 0.0
    %7900 = vmatpush1.msra.mxu0 0.0
    %7901 = vmatprep.subr.mxu0 0.0
    %7902 = vmatpush1.msra.mxu0 0.0
    %7903 = vmatprep.subr.mxu0 0.0
    %7904 = vmatpush1.msra.mxu0 0.0
    %7905 = vmatprep.subr.mxu0 0.0
    %7906 = vmatpush1.msra.mxu0 0.0
    %7907 = vmatprep.subr.mxu0 0.0
    %7908 = vmatpush1.msra.mxu0 0.0
    %7909 = vmatprep.subr.mxu0 0.0
    %7910 = vmatpush1.msra.mxu0 0.0
    %7911 = vmatprep.subr.mxu0 0.0
    %7912 = vmatpush1.msra.mxu0 0.0
    %7913 = vmatprep.subr.mxu0 0.0
    %7914 = vmatpush1.msra.mxu0 0.0
    %7915 = vmatprep.subr.mxu0 0.0
    %7916 = vmatpush1.msra.mxu0 0.0
    %7917 = vmatprep.subr.mxu0 0.0
    %7918 = vmatpush1.msra.mxu0 0.0
    %7919 = vmatprep.subr.mxu0 0.0
    %7920 = vmatpush1.msra.mxu0 0.0
    %7921 = vmatprep.subr.mxu0 0.0
    %7922 = vmatpush1.msra.mxu0 0.0
    %7923 = vmatprep.subr.mxu0 0.0
    %7924 = vmatpush1.msra.mxu0 0.0
    %7925 = vmatprep.subr.mxu0 0.0
    %7926 = vmatpush1.msra.mxu0 0.0
    %7927 = vmatprep.subr.mxu0 0.0
    %7928 = vmatpush1.msra.mxu0 0.0
    %7929 = vmatprep.subr.mxu0 0.0
    %7930 = vmatpush1.msra.mxu0 0.0
    %7931 = vmatprep.subr.mxu0 0.0
    %7932 = vmatpush1.msra.mxu0 0.0
    %7933 = vmatprep.subr.mxu0 0.0
    %7934 = vmatpush1.msra.mxu0 0.0
    %7935 = vmatprep.subr.mxu0 0.0
    %7936 = vmatpush1.msra.mxu0 0.0
    %7937 = vmatprep.subr.mxu0 0.0
    %7938 = vmatpush1.msra.mxu0 0.0
    %7939 = vmatprep.subr.mxu0 0.0
    %7940 = vmatpush1.msra.mxu0 0.0
    %7941 = vmatprep.subr.mxu0 0.0
    %7942 = vmatpush1.msra.mxu0 0.0
    %7943 = vmatprep.subr.mxu0 0.0
    %7944 = vmatpush1.msra.mxu0 0.0
    %7945 = vmatprep.subr.mxu0 0.0
    %7946 = vmatpush1.msra.mxu0 0.0
    %7947 = vmatprep.subr.mxu0 0.0
    %7948 = vmatpush1.msra.mxu0 0.0
    %7949 = vmatprep.subr.mxu0 0.0
    %7950 = vmatpush1.msra.mxu0 0.0
    %7951 = vmatprep.subr.mxu0 0.0
    %7952 = vmatpush1.msra.mxu0 0.0
    %7953 = vmatprep.mubr.f32.mxu0 0.0
    %7954 = vmatmul.mubr.f32.gmra.mrb[0].mxu0 %v204
    %v7955 = vpop.f32.mrb[0].mxu0
    %v7956 = vadd.f32 0.0, %v7955
    %v7957 = vpop.f32.mrb[0].mxu0
    %v7958 = vadd.f32 0.0, %v7957
    %7959 = vdwg.mxu0
    %7960 = vmatprep.subr.mxu0 %v7860
    %7961 = vmatpush1.msra.mxu0 %v7859
    %7962 = vmatprep.subr.mxu0 %v7876
    %7963 = vmatpush1.msra.mxu0 %v7875
    %7964 = vmatprep.subr.mxu0 0.0
    %7965 = vmatpush1.msra.mxu0 0.0
    %7966 = vmatprep.subr.mxu0 0.0
    %7967 = vmatpush1.msra.mxu0 0.0
    %7968 = vmatprep.subr.mxu0 0.0
    %7969 = vmatpush1.msra.mxu0 0.0
    %7970 = vmatprep.subr.mxu0 0.0
    %7971 = vmatpush1.msra.mxu0 0.0
    %7972 = vmatprep.subr.mxu0 0.0
    %7973 = vmatpush1.msra.mxu0 0.0
    %7974 = vmatprep.subr.mxu0 0.0
    %7975 = vmatpush1.msra.mxu0 0.0
    %7976 = vmatprep.subr.mxu0 0.0
    %7977 = vmatpush1.msra.mxu0 0.0
    %7978 = vmatprep.subr.mxu0 0.0
    %7979 = vmatpush1.msra.mxu0 0.0
    %7980 = vmatprep.subr.mxu0 0.0
    %7981 = vmatpush1.msra.mxu0 0.0
    %7982 = vmatprep.subr.mxu0 0.0
    %7983 = vmatpush1.msra.mxu0 0.0
    %7984 = vmatprep.subr.mxu0 0.0
    %7985 = vmatpush1.msra.mxu0 0.0
    %7986 = vmatprep.subr.mxu0 0.0
    %7987 = vmatpush1.msra.mxu0 0.0
    %7988 = vmatprep.subr.mxu0 0.0
    %7989 = vmatpush1.msra.mxu0 0.0
    %7990 = vmatprep.subr.mxu0 0.0
    %7991 = vmatpush1.msra.mxu0 0.0
    %7992 = vmatprep.subr.mxu0 0.0
    %7993 = vmatpush1.msra.mxu0 0.0
    %7994 = vmatprep.subr.mxu0 0.0
    %7995 = vmatpush1.msra.mxu0 0.0
    %7996 = vmatprep.subr.mxu0 0.0
    %7997 = vmatpush1.msra.mxu0 0.0
    %7998 = vmatprep.subr.mxu0 0.0
    %7999 = vmatpush1.msra.mxu0 0.0
    %8000 = vmatprep.subr.mxu0 0.0
    %8001 = vmatpush1.msra.mxu0 0.0
    %8002 = vmatprep.subr.mxu0 0.0
    %8003 = vmatpush1.msra.mxu0 0.0
    %8004 = vmatprep.subr.mxu0 0.0
    %8005 = vmatpush1.msra.mxu0 0.0
    %8006 = vmatprep.subr.mxu0 0.0
    %8007 = vmatpush1.msra.mxu0 0.0
    %8008 = vmatprep.subr.mxu0 0.0
    %8009 = vmatpush1.msra.mxu0 0.0
    %8010 = vmatprep.subr.mxu0 0.0
    %8011 = vmatpush1.msra.mxu0 0.0
    %8012 = vmatprep.subr.mxu0 0.0
    %8013 = vmatpush1.msra.mxu0 0.0
    %8014 = vmatprep.subr.mxu0 0.0
    %8015 = vmatpush1.msra.mxu0 0.0
    %8016 = vmatprep.subr.mxu0 0.0
    %8017 = vmatpush1.msra.mxu0 0.0
    %8018 = vmatprep.subr.mxu0 0.0
    %8019 = vmatpush1.msra.mxu0 0.0
    %8020 = vmatprep.subr.mxu0 0.0
    %8021 = vmatpush1.msra.mxu0 0.0
    %8022 = vmatprep.subr.mxu0 0.0
    %8023 = vmatpush1.msra.mxu0 0.0
    %8024 = vmatprep.mubr.f32.mxu0 0.0
    %8025 = vmatmul.mubr.f32.gmra.mrb[0].mxu0 %v204
    %v8026 = vpop.f32.mrb[0].mxu0
    %v8027 = vadd.f32 0.0, %v8026
    %v8028 = vpop.f32.mrb[0].mxu0
    %v8029 = vadd.f32 0.0, %v8028
    %8030 = vdwg.mxu0
    %8031 = vmatprep.subr.mxu0 %v7862
    %8032 = vmatpush1.msra.mxu0 %v7861
    %8033 = vmatprep.subr.mxu0 %v7878
    %8034 = vmatpush1.msra.mxu0 %v7877
    %8035 = vmatprep.subr.mxu0 0.0
    %8036 = vmatpush1.msra.mxu0 0.0
    %8037 = vmatprep.subr.mxu0 0.0
    %8038 = vmatpush1.msra.mxu0 0.0
    %8039 = vmatprep.subr.mxu0 0.0
    %8040 = vmatpush1.msra.mxu0 0.0
    %8041 = vmatprep.subr.mxu0 0.0
    %8042 = vmatpush1.msra.mxu0 0.0
    %8043 = vmatprep.subr.mxu0 0.0
    %8044 = vmatpush1.msra.mxu0 0.0
    %8045 = vmatprep.subr.mxu0 0.0
    %8046 = vmatpush1.msra.mxu0 0.0
    %8047 = vmatprep.subr.mxu0 0.0
    %8048 = vmatpush1.msra.mxu0 0.0
    %8049 = vmatprep.subr.mxu0 0.0
    %8050 = vmatpush1.msra.mxu0 0.0
    %8051 = vmatprep.subr.mxu0 0.0
    %8052 = vmatpush1.msra.mxu0 0.0
    %8053 = vmatprep.subr.mxu0 0.0
    %8054 = vmatpush1.msra.mxu0 0.0
    %8055 = vmatprep.subr.mxu0 0.0
    %8056 = vmatpush1.msra.mxu0 0.0
    %8057 = vmatprep.subr.mxu0 0.0
    %8058 = vmatpush1.msra.mxu0 0.0
    %8059 = vmatprep.subr.mxu0 0.0
    %8060 = vmatpush1.msra.mxu0 0.0
    %8061 = vmatprep.subr.mxu0 0.0
    %8062 = vmatpush1.msra.mxu0 0.0
    %8063 = vmatprep.subr.mxu0 0.0
    %8064 = vmatpush1.msra.mxu0 0.0
    %8065 = vmatprep.subr.mxu0 0.0
    %8066 = vmatpush1.msra.mxu0 0.0
    %8067 = vmatprep.subr.mxu0 0.0
    %8068 = vmatpush1.msra.mxu0 0.0
    %8069 = vmatprep.subr.mxu0 0.0
    %8070 = vmatpush1.msra.mxu0 0.0
    %8071 = vmatprep.subr.mxu0 0.0
    %8072 = vmatpush1.msra.mxu0 0.0
    %8073 = vmatprep.subr.mxu0 0.0
    %8074 = vmatpush1.msra.mxu0 0.0
    %8075 = vmatprep.subr.mxu0 0.0
    %8076 = vmatpush1.msra.mxu0 0.0
    %8077 = vmatprep.subr.mxu0 0.0
    %8078 = vmatpush1.msra.mxu0 0.0
    %8079 = vmatprep.subr.mxu0 0.0
    %8080 = vmatpush1.msra.mxu0 0.0
    %8081 = vmatprep.subr.mxu0 0.0
    %8082 = vmatpush1.msra.mxu0 0.0
    %8083 = vmatprep.subr.mxu0 0.0
    %8084 = vmatpush1.msra.mxu0 0.0
    %8085 = vmatprep.subr.mxu0 0.0
    %8086 = vmatpush1.msra.mxu0 0.0
    %8087 = vmatprep.subr.mxu0 0.0
    %8088 = vmatpush1.msra.mxu0 0.0
    %8089 = vmatprep.subr.mxu0 0.0
    %8090 = vmatpush1.msra.mxu0 0.0
    %8091 = vmatprep.subr.mxu0 0.0
    %8092 = vmatpush1.msra.mxu0 0.0
    %8093 = vmatprep.subr.mxu0 0.0
    %8094 = vmatpush1.msra.mxu0 0.0
    %8095 = vmatprep.mubr.f32.mxu0 0.0
    %8096 = vmatmul.mubr.f32.gmra.mrb[0].mxu0 %v204
    %v8097 = vpop.f32.mrb[0].mxu0
    %v8098 = vadd.f32 0.0, %v8097
    %v8099 = vpop.f32.mrb[0].mxu0
    %v8100 = vadd.f32 0.0, %v8099
    %8101 = vdwg.mxu0
    %8102 = vmatprep.subr.mxu0 %v7864
    %8103 = vmatpush1.msra.mxu0 %v7863
    %8104 = vmatprep.subr.mxu0 %v7880
    %8105 = vmatpush1.msra.mxu0 %v7879
    %8106 = vmatprep.subr.mxu0 0.0
    %8107 = vmatpush1.msra.mxu0 0.0
    %8108 = vmatprep.subr.mxu0 0.0
    %8109 = vmatpush1.msra.mxu0 0.0
    %8110 = vmatprep.subr.mxu0 0.0
    %8111 = vmatpush1.msra.mxu0 0.0
    %8112 = vmatprep.subr.mxu0 0.0
    %8113 = vmatpush1.msra.mxu0 0.0
    %8114 = vmatprep.subr.mxu0 0.0
    %8115 = vmatpush1.msra.mxu0 0.0
    %8116 = vmatprep.subr.mxu0 0.0
    %8117 = vmatpush1.msra.mxu0 0.0
    %8118 = vmatprep.subr.mxu0 0.0
    %8119 = vmatpush1.msra.mxu0 0.0
    %8120 = vmatprep.subr.mxu0 0.0
    %8121 = vmatpush1.msra.mxu0 0.0
    %8122 = vmatprep.subr.mxu0 0.0
    %8123 = vmatpush1.msra.mxu0 0.0
    %8124 = vmatprep.subr.mxu0 0.0
    %8125 = vmatpush1.msra.mxu0 0.0
    %8126 = vmatprep.subr.mxu0 0.0
    %8127 = vmatpush1.msra.mxu0 0.0
    %8128 = vmatprep.subr.mxu0 0.0
    %8129 = vmatpush1.msra.mxu0 0.0
    %8130 = vmatprep.subr.mxu0 0.0
    %8131 = vmatpush1.msra.mxu0 0.0
    %8132 = vmatprep.subr.mxu0 0.0
    %8133 = vmatpush1.msra.mxu0 0.0
    %8134 = vmatprep.subr.mxu0 0.0
    %8135 = vmatpush1.msra.mxu0 0.0
    %8136 = vmatprep.subr.mxu0 0.0
    %8137 = vmatpush1.msra.mxu0 0.0
    %8138 = vmatprep.subr.mxu0 0.0
    %8139 = vmatpush1.msra.mxu0 0.0
    %8140 = vmatprep.subr.mxu0 0.0
    %8141 = vmatpush1.msra.mxu0 0.0
    %8142 = vmatprep.subr.mxu0 0.0
    %8143 = vmatpush1.msra.mxu0 0.0
    %8144 = vmatprep.subr.mxu0 0.0
    %8145 = vmatpush1.msra.mxu0 0.0
    %8146 = vmatprep.subr.mxu0 0.0
    %8147 = vmatpush1.msra.mxu0 0.0
    %8148 = vmatprep.subr.mxu0 0.0
    %8149 = vmatpush1.msra.mxu0 0.0
    %8150 = vmatprep.subr.mxu0 0.0
    %8151 = vmatpush1.msra.mxu0 0.0
    %8152 = vmatprep.subr.mxu0 0.0
    %8153 = vmatpush1.msra.mxu0 0.0
    %8154 = vmatprep.subr.mxu0 0.0
    %8155 = vmatpush1.msra.mxu0 0.0
    %8156 = vmatprep.subr.mxu0 0.0
    %8157 = vmatpush1.msra.mxu0 0.0
    %8158 = vmatprep.subr.mxu0 0.0
    %8159 = vmatpush1.msra.mxu0 0.0
    %8160 = vmatprep.subr.mxu0 0.0
    %8161 = vmatpush1.msra.mxu0 0.0
    %8162 = vmatprep.subr.mxu0 0.0
    %8163 = vmatpush1.msra.mxu0 0.0
    %8164 = vmatprep.subr.mxu0 0.0
    %8165 = vmatpush1.msra.mxu0 0.0
    %8166 = vmatprep.mubr.f32.mxu0 0.0
    %8167 = vmatmul.mubr.f32.gmra.mrb[0].mxu0 %v204
    %v8168 = vpop.f32.mrb[0].mxu0
    %v8169 = vadd.f32 0.0, %v8168
    %v8170 = vpop.f32.mrb[0].mxu0
    %v8171 = vadd.f32 0.0, %v8170
    %8172 = vdwg.mxu0
    %8173 = vmatprep.subr.mxu0 %v7866
    %8174 = vmatpush1.msra.mxu0 %v7865
    %8175 = vmatprep.subr.mxu0 %v7882
    %8176 = vmatpush1.msra.mxu0 %v7881
    %8177 = vmatprep.subr.mxu0 0.0
    %8178 = vmatpush1.msra.mxu0 0.0
    %8179 = vmatprep.subr.mxu0 0.0
    %8180 = vmatpush1.msra.mxu0 0.0
    %8181 = vmatprep.subr.mxu0 0.0
    %8182 = vmatpush1.msra.mxu0 0.0
    %8183 = vmatprep.subr.mxu0 0.0
    %8184 = vmatpush1.msra.mxu0 0.0
    %8185 = vmatprep.subr.mxu0 0.0
    %8186 = vmatpush1.msra.mxu0 0.0
    %8187 = vmatprep.subr.mxu0 0.0
    %8188 = vmatpush1.msra.mxu0 0.0
    %8189 = vmatprep.subr.mxu0 0.0
    %8190 = vmatpush1.msra.mxu0 0.0
    %8191 = vmatprep.subr.mxu0 0.0
    %8192 = vmatpush1.msra.mxu0 0.0
    %8193 = vmatprep.subr.mxu0 0.0
    %8194 = vmatpush1.msra.mxu0 0.0
    %8195 = vmatprep.subr.mxu0 0.0
    %8196 = vmatpush1.msra.mxu0 0.0
    %8197 = vmatprep.subr.mxu0 0.0
    %8198 = vmatpush1.msra.mxu0 0.0
    %8199 = vmatprep.subr.mxu0 0.0
    %8200 = vmatpush1.msra.mxu0 0.0
    %8201 = vmatprep.subr.mxu0 0.0
    %8202 = vmatpush1.msra.mxu0 0.0
    %8203 = vmatprep.subr.mxu0 0.0
    %8204 = vmatpush1.msra.mxu0 0.0
    %8205 = vmatprep.subr.mxu0 0.0
    %8206 = vmatpush1.msra.mxu0 0.0
    %8207 = vmatprep.subr.mxu0 0.0
    %8208 = vmatpush1.msra.mxu0 0.0
    %8209 = vmatprep.subr.mxu0 0.0
    %8210 = vmatpush1.msra.mxu0 0.0
    %8211 = vmatprep.subr.mxu0 0.0
    %8212 = vmatpush1.msra.mxu0 0.0
    %8213 = vmatprep.subr.mxu0 0.0
    %8214 = vmatpush1.msra.mxu0 0.0
    %8215 = vmatprep.subr.mxu0 0.0
    %8216 = vmatpush1.msra.mxu0 0.0
    %8217 = vmatprep.subr.mxu0 0.0
    %8218 = vmatpush1.msra.mxu0 0.0
    %8219 = vmatprep.subr.mxu0 0.0
    %8220 = vmatpush1.msra.mxu0 0.0
    %8221 = vmatprep.subr.mxu0 0.0
    %8222 = vmatpush1.msra.mxu0 0.0
    %8223 = vmatprep.subr.mxu0 0.0
    %8224 = vmatpush1.msra.mxu0 0.0
    %8225 = vmatprep.subr.mxu0 0.0
    %8226 = vmatpush1.msra.mxu0 0.0
    %8227 = vmatprep.subr.mxu0 0.0
    %8228 = vmatpush1.msra.mxu0 0.0
    %8229 = vmatprep.subr.mxu0 0.0
    %8230 = vmatpush1.msra.mxu0 0.0
    %8231 = vmatprep.subr.mxu0 0.0
    %8232 = vmatpush1.msra.mxu0 0.0
    %8233 = vmatprep.subr.mxu0 0.0
    %8234 = vmatpush1.msra.mxu0 0.0
    %8235 = vmatprep.subr.mxu0 0.0
    %8236 = vmatpush1.msra.mxu0 0.0
    %8237 = vmatprep.mubr.f32.mxu0 0.0
    %8238 = vmatmul.mubr.f32.gmra.mrb[0].mxu0 %v204
    %v8239 = vpop.f32.mrb[0].mxu0
    %v8240 = vadd.f32 0.0, %v8239
    %v8241 = vpop.f32.mrb[0].mxu0
    %v8242 = vadd.f32 0.0, %v8241
    %8243 = vdwg.mxu0
    %8244 = vmatprep.subr.mxu0 %v7868
    %8245 = vmatpush1.msra.mxu0 %v7867
    %8246 = vmatprep.subr.mxu0 %v7884
    %8247 = vmatpush1.msra.mxu0 %v7883
    %8248 = vmatprep.subr.mxu0 0.0
    %8249 = vmatpush1.msra.mxu0 0.0
    %8250 = vmatprep.subr.mxu0 0.0
    %8251 = vmatpush1.msra.mxu0 0.0
    %8252 = vmatprep.subr.mxu0 0.0
    %8253 = vmatpush1.msra.mxu0 0.0
    %8254 = vmatprep.subr.mxu0 0.0
    %8255 = vmatpush1.msra.mxu0 0.0
    %8256 = vmatprep.subr.mxu0 0.0
    %8257 = vmatpush1.msra.mxu0 0.0
    %8258 = vmatprep.subr.mxu0 0.0
    %8259 = vmatpush1.msra.mxu0 0.0
    %8260 = vmatprep.subr.mxu0 0.0
    %8261 = vmatpush1.msra.mxu0 0.0
    %8262 = vmatprep.subr.mxu0 0.0
    %8263 = vmatpush1.msra.mxu0 0.0
    %8264 = vmatprep.subr.mxu0 0.0
    %8265 = vmatpush1.msra.mxu0 0.0
    %8266 = vmatprep.subr.mxu0 0.0
    %8267 = vmatpush1.msra.mxu0 0.0
    %8268 = vmatprep.subr.mxu0 0.0
    %8269 = vmatpush1.msra.mxu0 0.0
    %8270 = vmatprep.subr.mxu0 0.0
    %8271 = vmatpush1.msra.mxu0 0.0
    %8272 = vmatprep.subr.mxu0 0.0
    %8273 = vmatpush1.msra.mxu0 0.0
    %8274 = vmatprep.subr.mxu0 0.0
    %8275 = vmatpush1.msra.mxu0 0.0
    %8276 = vmatprep.subr.mxu0 0.0
    %8277 = vmatpush1.msra.mxu0 0.0
    %8278 = vmatprep.subr.mxu0 0.0
    %8279 = vmatpush1.msra.mxu0 0.0
    %8280 = vmatprep.subr.mxu0 0.0
    %8281 = vmatpush1.msra.mxu0 0.0
    %8282 = vmatprep.subr.mxu0 0.0
    %8283 = vmatpush1.msra.mxu0 0.0
    %8284 = vmatprep.subr.mxu0 0.0
    %8285 = vmatpush1.msra.mxu0 0.0
    %8286 = vmatprep.subr.mxu0 0.0
    %8287 = vmatpush1.msra.mxu0 0.0
    %8288 = vmatprep.subr.mxu0 0.0
    %8289 = vmatpush1.msra.mxu0 0.0
    %8290 = vmatprep.subr.mxu0 0.0
    %8291 = vmatpush1.msra.mxu0 0.0
    %8292 = vmatprep.subr.mxu0 0.0
    %8293 = vmatpush1.msra.mxu0 0.0
    %8294 = vmatprep.subr.mxu0 0.0
    %8295 = vmatpush1.msra.mxu0 0.0
    %8296 = vmatprep.subr.mxu0 0.0
    %8297 = vmatpush1.msra.mxu0 0.0
    %8298 = vmatprep.subr.mxu0 0.0
    %8299 = vmatpush1.msra.mxu0 0.0
    %8300 = vmatprep.subr.mxu0 0.0
    %8301 = vmatpush1.msra.mxu0 0.0
    %8302 = vmatprep.subr.mxu0 0.0
    %8303 = vmatpush1.msra.mxu0 0.0
    %8304 = vmatprep.subr.mxu0 0.0
    %8305 = vmatpush1.msra.mxu0 0.0
    %8306 = vmatprep.subr.mxu0 0.0
    %8307 = vmatpush1.msra.mxu0 0.0
    %8308 = vmatprep.mubr.f32.mxu0 0.0
    %8309 = vmatmul.mubr.f32.gmra.mrb[0].mxu0 %v204
    %v8310 = vpop.f32.mrb[0].mxu0
    %v8311 = vadd.f32 0.0, %v8310
    %v8312 = vpop.f32.mrb[0].mxu0
    %v8313 = vadd.f32 0.0, %v8312
    %8314 = vdwg.mxu0
    %8315 = vmatprep.subr.mxu0 %v7870
    %8316 = vmatpush1.msra.mxu0 %v7869
    %8317 = vmatprep.subr.mxu0 %v7886
    %8318 = vmatpush1.msra.mxu0 %v7885
    %8319 = vmatprep.subr.mxu0 0.0
    %8320 = vmatpush1.msra.mxu0 0.0
    %8321 = vmatprep.subr.mxu0 0.0
    %8322 = vmatpush1.msra.mxu0 0.0
    %8323 = vmatprep.subr.mxu0 0.0
    %8324 = vmatpush1.msra.mxu0 0.0
    %8325 = vmatprep.subr.mxu0 0.0
    %8326 = vmatpush1.msra.mxu0 0.0
    %8327 = vmatprep.subr.mxu0 0.0
    %8328 = vmatpush1.msra.mxu0 0.0
    %8329 = vmatprep.subr.mxu0 0.0
    %8330 = vmatpush1.msra.mxu0 0.0
    %8331 = vmatprep.subr.mxu0 0.0
    %8332 = vmatpush1.msra.mxu0 0.0
    %8333 = vmatprep.subr.mxu0 0.0
    %8334 = vmatpush1.msra.mxu0 0.0
    %8335 = vmatprep.subr.mxu0 0.0
    %8336 = vmatpush1.msra.mxu0 0.0
    %8337 = vmatprep.subr.mxu0 0.0
    %8338 = vmatpush1.msra.mxu0 0.0
    %8339 = vmatprep.subr.mxu0 0.0
    %8340 = vmatpush1.msra.mxu0 0.0
    %8341 = vmatprep.subr.mxu0 0.0
    %8342 = vmatpush1.msra.mxu0 0.0
    %8343 = vmatprep.subr.mxu0 0.0
    %8344 = vmatpush1.msra.mxu0 0.0
    %8345 = vmatprep.subr.mxu0 0.0
    %8346 = vmatpush1.msra.mxu0 0.0
    %8347 = vmatprep.subr.mxu0 0.0
    %8348 = vmatpush1.msra.mxu0 0.0
    %8349 = vmatprep.subr.mxu0 0.0
    %8350 = vmatpush1.msra.mxu0 0.0
    %8351 = vmatprep.subr.mxu0 0.0
    %8352 = vmatpush1.msra.mxu0 0.0
    %8353 = vmatprep.subr.mxu0 0.0
    %8354 = vmatpush1.msra.mxu0 0.0
    %8355 = vmatprep.subr.mxu0 0.0
    %8356 = vmatpush1.msra.mxu0 0.0
    %8357 = vmatprep.subr.mxu0 0.0
    %8358 = vmatpush1.msra.mxu0 0.0
    %8359 = vmatprep.subr.mxu0 0.0
    %8360 = vmatpush1.msra.mxu0 0.0
    %8361 = vmatprep.subr.mxu0 0.0
    %8362 = vmatpush1.msra.mxu0 0.0
    %8363 = vmatprep.subr.mxu0 0.0
    %8364 = vmatpush1.msra.mxu0 0.0
    %8365 = vmatprep.subr.mxu0 0.0
    %8366 = vmatpush1.msra.mxu0 0.0
    %8367 = vmatprep.subr.mxu0 0.0
    %8368 = vmatpush1.msra.mxu0 0.0
    %8369 = vmatprep.subr.mxu0 0.0
    %8370 = vmatpush1.msra.mxu0 0.0
    %8371 = vmatprep.subr.mxu0 0.0
    %8372 = vmatpush1.msra.mxu0 0.0
    %8373 = vmatprep.subr.mxu0 0.0
    %8374 = vmatpush1.msra.mxu0 0.0
    %8375 = vmatprep.subr.mxu0 0.0
    %8376 = vmatpush1.msra.mxu0 0.0
    %8377 = vmatprep.subr.mxu0 0.0
    %8378 = vmatpush1.msra.mxu0 0.0
    %8379 = vmatprep.mubr.f32.mxu0 0.0
    %8380 = vmatmul.mubr.f32.gmra.mrb[0].mxu0 %v204
    %v8381 = vpop.f32.mrb[0].mxu0
    %v8382 = vadd.f32 0.0, %v8381
    %v8383 = vpop.f32.mrb[0].mxu0
    %v8384 = vadd.f32 0.0, %v8383
    %8385 = vdwg.mxu0
    %8386 = vmatprep.subr.mxu0 %v7872
    %8387 = vmatpush1.msra.mxu0 %v7871
    %8388 = vmatprep.subr.mxu0 %v7888
    %8389 = vmatpush1.msra.mxu0 %v7887
    %8390 = vmatprep.subr.mxu0 0.0
    %8391 = vmatpush1.msra.mxu0 0.0
    %8392 = vmatprep.subr.mxu0 0.0
    %8393 = vmatpush1.msra.mxu0 0.0
    %8394 = vmatprep.subr.mxu0 0.0
    %8395 = vmatpush1.msra.mxu0 0.0
    %8396 = vmatprep.subr.mxu0 0.0
    %8397 = vmatpush1.msra.mxu0 0.0
    %8398 = vmatprep.subr.mxu0 0.0
    %8399 = vmatpush1.msra.mxu0 0.0
    %8400 = vmatprep.subr.mxu0 0.0
    %8401 = vmatpush1.msra.mxu0 0.0
    %8402 = vmatprep.subr.mxu0 0.0
    %8403 = vmatpush1.msra.mxu0 0.0
    %8404 = vmatprep.subr.mxu0 0.0
    %8405 = vmatpush1.msra.mxu0 0.0
    %8406 = vmatprep.subr.mxu0 0.0
    %8407 = vmatpush1.msra.mxu0 0.0
    %8408 = vmatprep.subr.mxu0 0.0
    %8409 = vmatpush1.msra.mxu0 0.0
    %8410 = vmatprep.subr.mxu0 0.0
    %8411 = vmatpush1.msra.mxu0 0.0
    %8412 = vmatprep.subr.mxu0 0.0
    %8413 = vmatpush1.msra.mxu0 0.0
    %8414 = vmatprep.subr.mxu0 0.0
    %8415 = vmatpush1.msra.mxu0 0.0
    %8416 = vmatprep.subr.mxu0 0.0
    %8417 = vmatpush1.msra.mxu0 0.0
    %8418 = vmatprep.subr.mxu0 0.0
    %8419 = vmatpush1.msra.mxu0 0.0
    %8420 = vmatprep.subr.mxu0 0.0
    %8421 = vmatpush1.msra.mxu0 0.0
    %8422 = vmatprep.subr.mxu0 0.0
    %8423 = vmatpush1.msra.mxu0 0.0
    %8424 = vmatprep.subr.mxu0 0.0
    %8425 = vmatpush1.msra.mxu0 0.0
    %8426 = vmatprep.subr.mxu0 0.0
    %8427 = vmatpush1.msra.mxu0 0.0
    %8428 = vmatprep.subr.mxu0 0.0
    %8429 = vmatpush1.msra.mxu0 0.0
    %8430 = vmatprep.subr.mxu0 0.0
    %8431 = vmatpush1.msra.mxu0 0.0
    %8432 = vmatprep.subr.mxu0 0.0
    %8433 = vmatpush1.msra.mxu0 0.0
    %8434 = vmatprep.subr.mxu0 0.0
    %8435 = vmatpush1.msra.mxu0 0.0
    %8436 = vmatprep.subr.mxu0 0.0
    %8437 = vmatpush1.msra.mxu0 0.0
    %8438 = vmatprep.subr.mxu0 0.0
    %8439 = vmatpush1.msra.mxu0 0.0
    %8440 = vmatprep.subr.mxu0 0.0
    %8441 = vmatpush1.msra.mxu0 0.0
    %8442 = vmatprep.subr.mxu0 0.0
    %8443 = vmatpush1.msra.mxu0 0.0
    %8444 = vmatprep.subr.mxu0 0.0
    %8445 = vmatpush1.msra.mxu0 0.0
    %8446 = vmatprep.subr.mxu0 0.0
    %8447 = vmatpush1.msra.mxu0 0.0
    %8448 = vmatprep.subr.mxu0 0.0
    %8449 = vmatpush1.msra.mxu0 0.0
    %8450 = vmatprep.mubr.f32.mxu0 0.0
    %8451 = vmatmul.mubr.f32.gmra.mrb[0].mxu0 %v204
    %v8452 = vpop.f32.mrb[0].mxu0
    %v8453 = vadd.f32 0.0, %v8452
    %v8454 = vpop.f32.mrb[0].mxu0
    %v8455 = vadd.f32 0.0, %v8454
    %8456 = vdwg.mxu0
    %8457 = vmatprep.subr.mxu0 %v7826
    %8458 = vmatpush1.msra.mxu0 %v7825
    %8459 = vmatprep.subr.mxu0 %v7842
    %8460 = vmatpush1.msra.mxu0 %v7841
    %8461 = vmatprep.subr.mxu0 0.0
    %8462 = vmatpush1.msra.mxu0 0.0
    %8463 = vmatprep.subr.mxu0 0.0
    %8464 = vmatpush1.msra.mxu0 0.0
    %8465 = vmatprep.subr.mxu0 0.0
    %8466 = vmatpush1.msra.mxu0 0.0
    %8467 = vmatprep.subr.mxu0 0.0
    %8468 = vmatpush1.msra.mxu0 0.0
    %8469 = vmatprep.subr.mxu0 0.0
    %8470 = vmatpush1.msra.mxu0 0.0
    %8471 = vmatprep.subr.mxu0 0.0
    %8472 = vmatpush1.msra.mxu0 0.0
    %8473 = vmatprep.subr.mxu0 0.0
    %8474 = vmatpush1.msra.mxu0 0.0
    %8475 = vmatprep.subr.mxu0 0.0
    %8476 = vmatpush1.msra.mxu0 0.0
    %8477 = vmatprep.subr.mxu0 0.0
    %8478 = vmatpush1.msra.mxu0 0.0
    %8479 = vmatprep.subr.mxu0 0.0
    %8480 = vmatpush1.msra.mxu0 0.0
    %8481 = vmatprep.subr.mxu0 0.0
    %8482 = vmatpush1.msra.mxu0 0.0
    %8483 = vmatprep.subr.mxu0 0.0
    %8484 = vmatpush1.msra.mxu0 0.0
    %8485 = vmatprep.subr.mxu0 0.0
    %8486 = vmatpush1.msra.mxu0 0.0
    %8487 = vmatprep.subr.mxu0 0.0
    %8488 = vmatpush1.msra.mxu0 0.0
    %8489 = vmatprep.subr.mxu0 0.0
    %8490 = vmatpush1.msra.mxu0 0.0
    %8491 = vmatprep.subr.mxu0 0.0
    %8492 = vmatpush1.msra.mxu0 0.0
    %8493 = vmatprep.subr.mxu0 0.0
    %8494 = vmatpush1.msra.mxu0 0.0
    %8495 = vmatprep.subr.mxu0 0.0
    %8496 = vmatpush1.msra.mxu0 0.0
    %8497 = vmatprep.subr.mxu0 0.0
    %8498 = vmatpush1.msra.mxu0 0.0
    %8499 = vmatprep.subr.mxu0 0.0
    %8500 = vmatpush1.msra.mxu0 0.0
    %8501 = vmatprep.subr.mxu0 0.0
    %8502 = vmatpush1.msra.mxu0 0.0
    %8503 = vmatprep.subr.mxu0 0.0
    %8504 = vmatpush1.msra.mxu0 0.0
    %8505 = vmatprep.subr.mxu0 0.0
    %8506 = vmatpush1.msra.mxu0 0.0
    %8507 = vmatprep.subr.mxu0 0.0
    %8508 = vmatpush1.msra.mxu0 0.0
    %8509 = vmatprep.subr.mxu0 0.0
    %8510 = vmatpush1.msra.mxu0 0.0
    %8511 = vmatprep.subr.mxu0 0.0
    %8512 = vmatpush1.msra.mxu0 0.0
    %8513 = vmatprep.subr.mxu0 0.0
    %8514 = vmatpush1.msra.mxu0 0.0
    %8515 = vmatprep.subr.mxu0 0.0
    %8516 = vmatpush1.msra.mxu0 0.0
    %8517 = vmatprep.subr.mxu0 0.0
    %8518 = vmatpush1.msra.mxu0 0.0
    %8519 = vmatprep.subr.mxu0 0.0
    %8520 = vmatpush1.msra.mxu0 0.0
    %8521 = vmatprep.mubr.f32.mxu0 0.0
    %8522 = vmatmul.mubr.f32.gmra.mrb[0].mxu0 %v204
    %v8523 = vpop.f32.mrb[0].mxu0
    %v8524 = vadd.f32 %v7956, %v8523
    %v8525 = vpop.f32.mrb[0].mxu0
    %v8526 = vadd.f32 %v7958, %v8525
    %8527 = vdwg.mxu0
    %8528 = vmatprep.subr.mxu0 %v7828
    %8529 = vmatpush1.msra.mxu0 %v7827
    %8530 = vmatprep.subr.mxu0 %v7844
    %8531 = vmatpush1.msra.mxu0 %v7843
    %8532 = vmatprep.subr.mxu0 0.0
    %8533 = vmatpush1.msra.mxu0 0.0
    %8534 = vmatprep.subr.mxu0 0.0
    %8535 = vmatpush1.msra.mxu0 0.0
    %8536 = vmatprep.subr.mxu0 0.0
    %8537 = vmatpush1.msra.mxu0 0.0
    %8538 = vmatprep.subr.mxu0 0.0
    %8539 = vmatpush1.msra.mxu0 0.0
    %8540 = vmatprep.subr.mxu0 0.0
    %8541 = vmatpush1.msra.mxu0 0.0
    %8542 = vmatprep.subr.mxu0 0.0
    %8543 = vmatpush1.msra.mxu0 0.0
    %8544 = vmatprep.subr.mxu0 0.0
    %8545 = vmatpush1.msra.mxu0 0.0
    %8546 = vmatprep.subr.mxu0 0.0
    %8547 = vmatpush1.msra.mxu0 0.0
    %8548 = vmatprep.subr.mxu0 0.0
    %8549 = vmatpush1.msra.mxu0 0.0
    %8550 = vmatprep.subr.mxu0 0.0
    %8551 = vmatpush1.msra.mxu0 0.0
    %8552 = vmatprep.subr.mxu0 0.0
    %8553 = vmatpush1.msra.mxu0 0.0
    %8554 = vmatprep.subr.mxu0 0.0
    %8555 = vmatpush1.msra.mxu0 0.0
    %8556 = vmatprep.subr.mxu0 0.0
    %8557 = vmatpush1.msra.mxu0 0.0
    %8558 = vmatprep.subr.mxu0 0.0
    %8559 = vmatpush1.msra.mxu0 0.0
    %8560 = vmatprep.subr.mxu0 0.0
    %8561 = vmatpush1.msra.mxu0 0.0
    %8562 = vmatprep.subr.mxu0 0.0
    %8563 = vmatpush1.msra.mxu0 0.0
    %8564 = vmatprep.subr.mxu0 0.0
    %8565 = vmatpush1.msra.mxu0 0.0
    %8566 = vmatprep.subr.mxu0 0.0
    %8567 = vmatpush1.msra.mxu0 0.0
    %8568 = vmatprep.subr.mxu0 0.0
    %8569 = vmatpush1.msra.mxu0 0.0
    %8570 = vmatprep.subr.mxu0 0.0
    %8571 = vmatpush1.msra.mxu0 0.0
    %8572 = vmatprep.subr.mxu0 0.0
    %8573 = vmatpush1.msra.mxu0 0.0
    %8574 = vmatprep.subr.mxu0 0.0
    %8575 = vmatpush1.msra.mxu0 0.0
    %8576 = vmatprep.subr.mxu0 0.0
    %8577 = vmatpush1.msra.mxu0 0.0
    %8578 = vmatprep.subr.mxu0 0.0
    %8579 = vmatpush1.msra.mxu0 0.0
    %8580 = vmatprep.subr.mxu0 0.0
    %8581 = vmatpush1.msra.mxu0 0.0
    %8582 = vmatprep.subr.mxu0 0.0
    %8583 = vmatpush1.msra.mxu0 0.0
    %8584 = vmatprep.subr.mxu0 0.0
    %8585 = vmatpush1.msra.mxu0 0.0
    %8586 = vmatprep.subr.mxu0 0.0
    %8587 = vmatpush1.msra.mxu0 0.0
    %8588 = vmatprep.subr.mxu0 0.0
    %8589 = vmatpush1.msra.mxu0 0.0
    %8590 = vmatprep.subr.mxu0 0.0
    %8591 = vmatpush1.msra.mxu0 0.0
    %8592 = vmatprep.mubr.f32.mxu0 0.0
    %8593 = vmatmul.mubr.f32.gmra.mrb[0].mxu0 %v204
    %v8594 = vpop.f32.mrb[0].mxu0
    %v8595 = vadd.f32 %v8027, %v8594
    %v8596 = vpop.f32.mrb[0].mxu0
    %v8597 = vadd.f32 %v8029, %v8596
    %8598 = vdwg.mxu0
    %8599 = vmatprep.subr.mxu0 %v7830
    %8600 = vmatpush1.msra.mxu0 %v7829
    %8601 = vmatprep.subr.mxu0 %v7846
    %8602 = vmatpush1.msra.mxu0 %v7845
    %8603 = vmatprep.subr.mxu0 0.0
    %8604 = vmatpush1.msra.mxu0 0.0
    %8605 = vmatprep.subr.mxu0 0.0
    %8606 = vmatpush1.msra.mxu0 0.0
    %8607 = vmatprep.subr.mxu0 0.0
    %8608 = vmatpush1.msra.mxu0 0.0
    %8609 = vmatprep.subr.mxu0 0.0
    %8610 = vmatpush1.msra.mxu0 0.0
    %8611 = vmatprep.subr.mxu0 0.0
    %8612 = vmatpush1.msra.mxu0 0.0
    %8613 = vmatprep.subr.mxu0 0.0
    %8614 = vmatpush1.msra.mxu0 0.0
    %8615 = vmatprep.subr.mxu0 0.0
    %8616 = vmatpush1.msra.mxu0 0.0
    %8617 = vmatprep.subr.mxu0 0.0
    %8618 = vmatpush1.msra.mxu0 0.0
    %8619 = vmatprep.subr.mxu0 0.0
    %8620 = vmatpush1.msra.mxu0 0.0
    %8621 = vmatprep.subr.mxu0 0.0
    %8622 = vmatpush1.msra.mxu0 0.0
    %8623 = vmatprep.subr.mxu0 0.0
    %8624 = vmatpush1.msra.mxu0 0.0
    %8625 = vmatprep.subr.mxu0 0.0
    %8626 = vmatpush1.msra.mxu0 0.0
    %8627 = vmatprep.subr.mxu0 0.0
    %8628 = vmatpush1.msra.mxu0 0.0
    %8629 = vmatprep.subr.mxu0 0.0
    %8630 = vmatpush1.msra.mxu0 0.0
    %8631 = vmatprep.subr.mxu0 0.0
    %8632 = vmatpush1.msra.mxu0 0.0
    %8633 = vmatprep.subr.mxu0 0.0
    %8634 = vmatpush1.msra.mxu0 0.0
    %8635 = vmatprep.subr.mxu0 0.0
    %8636 = vmatpush1.msra.mxu0 0.0
    %8637 = vmatprep.subr.mxu0 0.0
    %8638 = vmatpush1.msra.mxu0 0.0
    %8639 = vmatprep.subr.mxu0 0.0
    %8640 = vmatpush1.msra.mxu0 0.0
    %8641 = vmatprep.subr.mxu0 0.0
    %8642 = vmatpush1.msra.mxu0 0.0
    %8643 = vmatprep.subr.mxu0 0.0
    %8644 = vmatpush1.msra.mxu0 0.0
    %8645 = vmatprep.subr.mxu0 0.0
    %8646 = vmatpush1.msra.mxu0 0.0
    %8647 = vmatprep.subr.mxu0 0.0
    %8648 = vmatpush1.msra.mxu0 0.0
    %8649 = vmatprep.subr.mxu0 0.0
    %8650 = vmatpush1.msra.mxu0 0.0
    %8651 = vmatprep.subr.mxu0 0.0
    %8652 = vmatpush1.msra.mxu0 0.0
    %8653 = vmatprep.subr.mxu0 0.0
    %8654 = vmatpush1.msra.mxu0 0.0
    %8655 = vmatprep.subr.mxu0 0.0
    %8656 = vmatpush1.msra.mxu0 0.0
    %8657 = vmatprep.subr.mxu0 0.0
    %8658 = vmatpush1.msra.mxu0 0.0
    %8659 = vmatprep.subr.mxu0 0.0
    %8660 = vmatpush1.msra.mxu0 0.0
    %8661 = vmatprep.subr.mxu0 0.0
    %8662 = vmatpush1.msra.mxu0 0.0
    %8663 = vmatprep.mubr.f32.mxu0 0.0
    %8664 = vmatmul.mubr.f32.gmra.mrb[0].mxu0 %v204
    %v8665 = vpop.f32.mrb[0].mxu0
    %v8666 = vadd.f32 %v8098, %v8665
    %v8667 = vpop.f32.mrb[0].mxu0
    %v8668 = vadd.f32 %v8100, %v8667
    %8669 = vdwg.mxu0
    %8670 = vmatprep.subr.mxu0 %v7832
    %8671 = vmatpush1.msra.mxu0 %v7831
    %8672 = vmatprep.subr.mxu0 %v7848
    %8673 = vmatpush1.msra.mxu0 %v7847
    %8674 = vmatprep.subr.mxu0 0.0
    %8675 = vmatpush1.msra.mxu0 0.0
    %8676 = vmatprep.subr.mxu0 0.0
    %8677 = vmatpush1.msra.mxu0 0.0
    %8678 = vmatprep.subr.mxu0 0.0
    %8679 = vmatpush1.msra.mxu0 0.0
    %8680 = vmatprep.subr.mxu0 0.0
    %8681 = vmatpush1.msra.mxu0 0.0
    %8682 = vmatprep.subr.mxu0 0.0
    %8683 = vmatpush1.msra.mxu0 0.0
    %8684 = vmatprep.subr.mxu0 0.0
    %8685 = vmatpush1.msra.mxu0 0.0
    %8686 = vmatprep.subr.mxu0 0.0
    %8687 = vmatpush1.msra.mxu0 0.0
    %8688 = vmatprep.subr.mxu0 0.0
    %8689 = vmatpush1.msra.mxu0 0.0
    %8690 = vmatprep.subr.mxu0 0.0
    %8691 = vmatpush1.msra.mxu0 0.0
    %8692 = vmatprep.subr.mxu0 0.0
    %8693 = vmatpush1.msra.mxu0 0.0
    %8694 = vmatprep.subr.mxu0 0.0
    %8695 = vmatpush1.msra.mxu0 0.0
    %8696 = vmatprep.subr.mxu0 0.0
    %8697 = vmatpush1.msra.mxu0 0.0
    %8698 = vmatprep.subr.mxu0 0.0
    %8699 = vmatpush1.msra.mxu0 0.0
    %8700 = vmatprep.subr.mxu0 0.0
    %8701 = vmatpush1.msra.mxu0 0.0
    %8702 = vmatprep.subr.mxu0 0.0
    %8703 = vmatpush1.msra.mxu0 0.0
    %8704 = vmatprep.subr.mxu0 0.0
    %8705 = vmatpush1.msra.mxu0 0.0
    %8706 = vmatprep.subr.mxu0 0.0
    %8707 = vmatpush1.msra.mxu0 0.0
    %8708 = vmatprep.subr.mxu0 0.0
    %8709 = vmatpush1.msra.mxu0 0.0
    %8710 = vmatprep.subr.mxu0 0.0
    %8711 = vmatpush1.msra.mxu0 0.0
    %8712 = vmatprep.subr.mxu0 0.0
    %8713 = vmatpush1.msra.mxu0 0.0
    %8714 = vmatprep.subr.mxu0 0.0
    %8715 = vmatpush1.msra.mxu0 0.0
    %8716 = vmatprep.subr.mxu0 0.0
    %8717 = vmatpush1.msra.mxu0 0.0
    %8718 = vmatprep.subr.mxu0 0.0
    %8719 = vmatpush1.msra.mxu0 0.0
    %8720 = vmatprep.subr.mxu0 0.0
    %8721 = vmatpush1.msra.mxu0 0.0
    %8722 = vmatprep.subr.mxu0 0.0
    %8723 = vmatpush1.msra.mxu0 0.0
    %8724 = vmatprep.subr.mxu0 0.0
    %8725 = vmatpush1.msra.mxu0 0.0
    %8726 = vmatprep.subr.mxu0 0.0
    %8727 = vmatpush1.msra.mxu0 0.0
    %8728 = vmatprep.subr.mxu0 0.0
    %8729 = vmatpush1.msra.mxu0 0.0
    %8730 = vmatprep.subr.mxu0 0.0
    %8731 = vmatpush1.msra.mxu0 0.0
    %8732 = vmatprep.subr.mxu0 0.0
    %8733 = vmatpush1.msra.mxu0 0.0
    %8734 = vmatprep.mubr.f32.mxu0 0.0
    %8735 = vmatmul.mubr.f32.gmra.mrb[0].mxu0 %v204
    %v8736 = vpop.f32.mrb[0].mxu0
    %v8737 = vadd.f32 %v8169, %v8736
    %v8738 = vpop.f32.mrb[0].mxu0
    %v8739 = vadd.f32 %v8171, %v8738
    %8740 = vdwg.mxu0
    %8741 = vmatprep.subr.mxu0 %v7834
    %8742 = vmatpush1.msra.mxu0 %v7833
    %8743 = vmatprep.subr.mxu0 %v7850
    %8744 = vmatpush1.msra.mxu0 %v7849
    %8745 = vmatprep.subr.mxu0 0.0
    %8746 = vmatpush1.msra.mxu0 0.0
    %8747 = vmatprep.subr.mxu0 0.0
    %8748 = vmatpush1.msra.mxu0 0.0
    %8749 = vmatprep.subr.mxu0 0.0
    %8750 = vmatpush1.msra.mxu0 0.0
    %8751 = vmatprep.subr.mxu0 0.0
    %8752 = vmatpush1.msra.mxu0 0.0
    %8753 = vmatprep.subr.mxu0 0.0
    %8754 = vmatpush1.msra.mxu0 0.0
    %8755 = vmatprep.subr.mxu0 0.0
    %8756 = vmatpush1.msra.mxu0 0.0
    %8757 = vmatprep.subr.mxu0 0.0
    %8758 = vmatpush1.msra.mxu0 0.0
    %8759 = vmatprep.subr.mxu0 0.0
    %8760 = vmatpush1.msra.mxu0 0.0
    %8761 = vmatprep.subr.mxu0 0.0
    %8762 = vmatpush1.msra.mxu0 0.0
    %8763 = vmatprep.subr.mxu0 0.0
    %8764 = vmatpush1.msra.mxu0 0.0
    %8765 = vmatprep.subr.mxu0 0.0
    %8766 = vmatpush1.msra.mxu0 0.0
    %8767 = vmatprep.subr.mxu0 0.0
    %8768 = vmatpush1.msra.mxu0 0.0
    %8769 = vmatprep.subr.mxu0 0.0
    %8770 = vmatpush1.msra.mxu0 0.0
    %8771 = vmatprep.subr.mxu0 0.0
    %8772 = vmatpush1.msra.mxu0 0.0
    %8773 = vmatprep.subr.mxu0 0.0
    %8774 = vmatpush1.msra.mxu0 0.0
    %8775 = vmatprep.subr.mxu0 0.0
    %8776 = vmatpush1.msra.mxu0 0.0
    %8777 = vmatprep.subr.mxu0 0.0
    %8778 = vmatpush1.msra.mxu0 0.0
    %8779 = vmatprep.subr.mxu0 0.0
    %8780 = vmatpush1.msra.mxu0 0.0
    %8781 = vmatprep.subr.mxu0 0.0
    %8782 = vmatpush1.msra.mxu0 0.0
    %8783 = vmatprep.subr.mxu0 0.0
    %8784 = vmatpush1.msra.mxu0 0.0
    %8785 = vmatprep.subr.mxu0 0.0
    %8786 = vmatpush1.msra.mxu0 0.0
    %8787 = vmatprep.subr.mxu0 0.0
    %8788 = vmatpush1.msra.mxu0 0.0
    %8789 = vmatprep.subr.mxu0 0.0
    %8790 = vmatpush1.msra.mxu0 0.0
    %8791 = vmatprep.subr.mxu0 0.0
    %8792 = vmatpush1.msra.mxu0 0.0
    %8793 = vmatprep.subr.mxu0 0.0
    %8794 = vmatpush1.msra.mxu0 0.0
    %8795 = vmatprep.subr.mxu0 0.0
    %8796 = vmatpush1.msra.mxu0 0.0
    %8797 = vmatprep.subr.mxu0 0.0
    %8798 = vmatpush1.msra.mxu0 0.0
    %8799 = vmatprep.subr.mxu0 0.0
    %8800 = vmatpush1.msra.mxu0 0.0
    %8801 = vmatprep.subr.mxu0 0.0
    %8802 = vmatpush1.msra.mxu0 0.0
    %8803 = vmatprep.subr.mxu0 0.0
    %8804 = vmatpush1.msra.mxu0 0.0
    %8805 = vmatprep.mubr.f32.mxu0 0.0
    %8806 = vmatmul.mubr.f32.gmra.mrb[0].mxu0 %v204
    %v8807 = vpop.f32.mrb[0].mxu0
    %v8808 = vadd.f32 %v8240, %v8807
    %v8809 = vpop.f32.mrb[0].mxu0
    %v8810 = vadd.f32 %v8242, %v8809
    %8811 = vdwg.mxu0
    %8812 = vmatprep.subr.mxu0 %v7836
    %8813 = vmatpush1.msra.mxu0 %v7835
    %8814 = vmatprep.subr.mxu0 %v7852
    %8815 = vmatpush1.msra.mxu0 %v7851
    %8816 = vmatprep.subr.mxu0 0.0
    %8817 = vmatpush1.msra.mxu0 0.0
    %8818 = vmatprep.subr.mxu0 0.0
    %8819 = vmatpush1.msra.mxu0 0.0
    %8820 = vmatprep.subr.mxu0 0.0
    %8821 = vmatpush1.msra.mxu0 0.0
    %8822 = vmatprep.subr.mxu0 0.0
    %8823 = vmatpush1.msra.mxu0 0.0
    %8824 = vmatprep.subr.mxu0 0.0
    %8825 = vmatpush1.msra.mxu0 0.0
    %8826 = vmatprep.subr.mxu0 0.0
    %8827 = vmatpush1.msra.mxu0 0.0
    %8828 = vmatprep.subr.mxu0 0.0
    %8829 = vmatpush1.msra.mxu0 0.0
    %8830 = vmatprep.subr.mxu0 0.0
    %8831 = vmatpush1.msra.mxu0 0.0
    %8832 = vmatprep.subr.mxu0 0.0
    %8833 = vmatpush1.msra.mxu0 0.0
    %8834 = vmatprep.subr.mxu0 0.0
    %8835 = vmatpush1.msra.mxu0 0.0
    %8836 = vmatprep.subr.mxu0 0.0
    %8837 = vmatpush1.msra.mxu0 0.0
    %8838 = vmatprep.subr.mxu0 0.0
    %8839 = vmatpush1.msra.mxu0 0.0
    %8840 = vmatprep.subr.mxu0 0.0
    %8841 = vmatpush1.msra.mxu0 0.0
    %8842 = vmatprep.subr.mxu0 0.0
    %8843 = vmatpush1.msra.mxu0 0.0
    %8844 = vmatprep.subr.mxu0 0.0
    %8845 = vmatpush1.msra.mxu0 0.0
    %8846 = vmatprep.subr.mxu0 0.0
    %8847 = vmatpush1.msra.mxu0 0.0
    %8848 = vmatprep.subr.mxu0 0.0
    %8849 = vmatpush1.msra.mxu0 0.0
    %8850 = vmatprep.subr.mxu0 0.0
    %8851 = vmatpush1.msra.mxu0 0.0
    %8852 = vmatprep.subr.mxu0 0.0
    %8853 = vmatpush1.msra.mxu0 0.0
    %8854 = vmatprep.subr.mxu0 0.0
    %8855 = vmatpush1.msra.mxu0 0.0
    %8856 = vmatprep.subr.mxu0 0.0
    %8857 = vmatpush1.msra.mxu0 0.0
    %8858 = vmatprep.subr.mxu0 0.0
    %8859 = vmatpush1.msra.mxu0 0.0
    %8860 = vmatprep.subr.mxu0 0.0
    %8861 = vmatpush1.msra.mxu0 0.0
    %8862 = vmatprep.subr.mxu0 0.0
    %8863 = vmatpush1.msra.mxu0 0.0
    %8864 = vmatprep.subr.mxu0 0.0
    %8865 = vmatpush1.msra.mxu0 0.0
    %8866 = vmatprep.subr.mxu0 0.0
    %8867 = vmatpush1.msra.mxu0 0.0
    %8868 = vmatprep.subr.mxu0 0.0
    %8869 = vmatpush1.msra.mxu0 0.0
    %8870 = vmatprep.subr.mxu0 0.0
    %8871 = vmatpush1.msra.mxu0 0.0
    %8872 = vmatprep.subr.mxu0 0.0
    %8873 = vmatpush1.msra.mxu0 0.0
    %8874 = vmatprep.subr.mxu0 0.0
    %8875 = vmatpush1.msra.mxu0 0.0
    %8876 = vmatprep.mubr.f32.mxu0 0.0
    %8877 = vmatmul.mubr.f32.gmra.mrb[0].mxu0 %v204
    %v8878 = vpop.f32.mrb[0].mxu0
    %v8879 = vadd.f32 %v8311, %v8878
    %v8880 = vpop.f32.mrb[0].mxu0
    %v8881 = vadd.f32 %v8313, %v8880
    %8882 = vdwg.mxu0
    %8883 = vmatprep.subr.mxu0 %v7838
    %8884 = vmatpush1.msra.mxu0 %v7837
    %8885 = vmatprep.subr.mxu0 %v7854
    %8886 = vmatpush1.msra.mxu0 %v7853
    %8887 = vmatprep.subr.mxu0 0.0
    %8888 = vmatpush1.msra.mxu0 0.0
    %8889 = vmatprep.subr.mxu0 0.0
    %8890 = vmatpush1.msra.mxu0 0.0
    %8891 = vmatprep.subr.mxu0 0.0
    %8892 = vmatpush1.msra.mxu0 0.0
    %8893 = vmatprep.subr.mxu0 0.0
    %8894 = vmatpush1.msra.mxu0 0.0
    %8895 = vmatprep.subr.mxu0 0.0
    %8896 = vmatpush1.msra.mxu0 0.0
    %8897 = vmatprep.subr.mxu0 0.0
    %8898 = vmatpush1.msra.mxu0 0.0
    %8899 = vmatprep.subr.mxu0 0.0
    %8900 = vmatpush1.msra.mxu0 0.0
    %8901 = vmatprep.subr.mxu0 0.0
    %8902 = vmatpush1.msra.mxu0 0.0
    %8903 = vmatprep.subr.mxu0 0.0
    %8904 = vmatpush1.msra.mxu0 0.0
    %8905 = vmatprep.subr.mxu0 0.0
    %8906 = vmatpush1.msra.mxu0 0.0
    %8907 = vmatprep.subr.mxu0 0.0
    %8908 = vmatpush1.msra.mxu0 0.0
    %8909 = vmatprep.subr.mxu0 0.0
    %8910 = vmatpush1.msra.mxu0 0.0
    %8911 = vmatprep.subr.mxu0 0.0
    %8912 = vmatpush1.msra.mxu0 0.0
    %8913 = vmatprep.subr.mxu0 0.0
    %8914 = vmatpush1.msra.mxu0 0.0
    %8915 = vmatprep.subr.mxu0 0.0
    %8916 = vmatpush1.msra.mxu0 0.0
    %8917 = vmatprep.subr.mxu0 0.0
    %8918 = vmatpush1.msra.mxu0 0.0
    %8919 = vmatprep.subr.mxu0 0.0
    %8920 = vmatpush1.msra.mxu0 0.0
    %8921 = vmatprep.subr.mxu0 0.0
    %8922 = vmatpush1.msra.mxu0 0.0
    %8923 = vmatprep.subr.mxu0 0.0
    %8924 = vmatpush1.msra.mxu0 0.0
    %8925 = vmatprep.subr.mxu0 0.0
    %8926 = vmatpush1.msra.mxu0 0.0
    %8927 = vmatprep.subr.mxu0 0.0
    %8928 = vmatpush1.msra.mxu0 0.0
    %8929 = vmatprep.subr.mxu0 0.0
    %8930 = vmatpush1.msra.mxu0 0.0
    %8931 = vmatprep.subr.mxu0 0.0
    %8932 = vmatpush1.msra.mxu0 0.0
    %8933 = vmatprep.subr.mxu0 0.0
    %8934 = vmatpush1.msra.mxu0 0.0
    %8935 = vmatprep.subr.mxu0 0.0
    %8936 = vmatpush1.msra.mxu0 0.0
    %8937 = vmatprep.subr.mxu0 0.0
    %8938 = vmatpush1.msra.mxu0 0.0
    %8939 = vmatprep.subr.mxu0 0.0
    %8940 = vmatpush1.msra.mxu0 0.0
    %8941 = vmatprep.subr.mxu0 0.0
    %8942 = vmatpush1.msra.mxu0 0.0
    %8943 = vmatprep.subr.mxu0 0.0
    %8944 = vmatpush1.msra.mxu0 0.0
    %8945 = vmatprep.subr.mxu0 0.0
    %8946 = vmatpush1.msra.mxu0 0.0
    %8947 = vmatprep.mubr.f32.mxu0 0.0
    %8948 = vmatmul.mubr.f32.gmra.mrb[0].mxu0 %v204
    %v8949 = vpop.f32.mrb[0].mxu0
    %v8950 = vadd.f32 %v8382, %v8949
    %v8951 = vpop.f32.mrb[0].mxu0
    %v8952 = vadd.f32 %v8384, %v8951
    %8953 = vdwg.mxu0
    %8954 = vmatprep.subr.mxu0 %v7840
    %8955 = vmatpush1.msra.mxu0 %v7839
    %8956 = vmatprep.subr.mxu0 %v7856
    %8957 = vmatpush1.msra.mxu0 %v7855
    %8958 = vmatprep.subr.mxu0 0.0
    %8959 = vmatpush1.msra.mxu0 0.0
    %8960 = vmatprep.subr.mxu0 0.0
    %8961 = vmatpush1.msra.mxu0 0.0
    %8962 = vmatprep.subr.mxu0 0.0
    %8963 = vmatpush1.msra.mxu0 0.0
    %8964 = vmatprep.subr.mxu0 0.0
    %8965 = vmatpush1.msra.mxu0 0.0
    %8966 = vmatprep.subr.mxu0 0.0
    %8967 = vmatpush1.msra.mxu0 0.0
    %8968 = vmatprep.subr.mxu0 0.0
    %8969 = vmatpush1.msra.mxu0 0.0
    %8970 = vmatprep.subr.mxu0 0.0
    %8971 = vmatpush1.msra.mxu0 0.0
    %8972 = vmatprep.subr.mxu0 0.0
    %8973 = vmatpush1.msra.mxu0 0.0
    %8974 = vmatprep.subr.mxu0 0.0
    %8975 = vmatpush1.msra.mxu0 0.0
    %8976 = vmatprep.subr.mxu0 0.0
    %8977 = vmatpush1.msra.mxu0 0.0
    %8978 = vmatprep.subr.mxu0 0.0
    %8979 = vmatpush1.msra.mxu0 0.0
    %8980 = vmatprep.subr.mxu0 0.0
    %8981 = vmatpush1.msra.mxu0 0.0
    %8982 = vmatprep.subr.mxu0 0.0
    %8983 = vmatpush1.msra.mxu0 0.0
    %8984 = vmatprep.subr.mxu0 0.0
    %8985 = vmatpush1.msra.mxu0 0.0
    %8986 = vmatprep.subr.mxu0 0.0
    %8987 = vmatpush1.msra.mxu0 0.0
    %8988 = vmatprep.subr.mxu0 0.0
    %8989 = vmatpush1.msra.mxu0 0.0
    %8990 = vmatprep.subr.mxu0 0.0
    %8991 = vmatpush1.msra.mxu0 0.0
    %8992 = vmatprep.subr.mxu0 0.0
    %8993 = vmatpush1.msra.mxu0 0.0
    %8994 = vmatprep.subr.mxu0 0.0
    %8995 = vmatpush1.msra.mxu0 0.0
    %8996 = vmatprep.subr.mxu0 0.0
    %8997 = vmatpush1.msra.mxu0 0.0
    %8998 = vmatprep.subr.mxu0 0.0
    %8999 = vmatpush1.msra.mxu0 0.0
    %9000 = vmatprep.subr.mxu0 0.0
    %9001 = vmatpush1.msra.mxu0 0.0
    %9002 = vmatprep.subr.mxu0 0.0
    %9003 = vmatpush1.msra.mxu0 0.0
    %9004 = vmatprep.subr.mxu0 0.0
    %9005 = vmatpush1.msra.mxu0 0.0
    %9006 = vmatprep.subr.mxu0 0.0
    %9007 = vmatpush1.msra.mxu0 0.0
    %9008 = vmatprep.subr.mxu0 0.0
    %9009 = vmatpush1.msra.mxu0 0.0
    %9010 = vmatprep.subr.mxu0 0.0
    %9011 = vmatpush1.msra.mxu0 0.0
    %9012 = vmatprep.subr.mxu0 0.0
    %9013 = vmatpush1.msra.mxu0 0.0
    %9014 = vmatprep.subr.mxu0 0.0
    %9015 = vmatpush1.msra.mxu0 0.0
    %9016 = vmatprep.subr.mxu0 0.0
    %9017 = vmatpush1.msra.mxu0 0.0
    %9018 = vmatprep.mubr.f32.mxu0 0.0
    %9019 = vmatmul.mubr.f32.gmra.mrb[0].mxu0 %v204
    %v9020 = vpop.f32.mrb[0].mxu0
    %v9021 = vadd.f32 %v8453, %v9020
    %v9022 = vpop.f32.mrb[0].mxu0
    %v9023 = vadd.f32 %v8455, %v9022
    %9024 = vdwg.mxu0
    %9025 = vmatprep.subr.mxu0 %v7778
    %9026 = vmatpush1.msra.mxu0 %v7777
    %9027 = vmatprep.subr.mxu0 %v7794
    %9028 = vmatpush1.msra.mxu0 %v7793
    %9029 = vmatprep.subr.mxu0 0.0
    %9030 = vmatpush1.msra.mxu0 0.0
    %9031 = vmatprep.subr.mxu0 0.0
    %9032 = vmatpush1.msra.mxu0 0.0
    %9033 = vmatprep.subr.mxu0 0.0
    %9034 = vmatpush1.msra.mxu0 0.0
    %9035 = vmatprep.subr.mxu0 0.0
    %9036 = vmatpush1.msra.mxu0 0.0
    %9037 = vmatprep.subr.mxu0 0.0
    %9038 = vmatpush1.msra.mxu0 0.0
    %9039 = vmatprep.subr.mxu0 0.0
    %9040 = vmatpush1.msra.mxu0 0.0
    %9041 = vmatprep.subr.mxu0 0.0
    %9042 = vmatpush1.msra.mxu0 0.0
    %9043 = vmatprep.subr.mxu0 0.0
    %9044 = vmatpush1.msra.mxu0 0.0
    %9045 = vmatprep.subr.mxu0 0.0
    %9046 = vmatpush1.msra.mxu0 0.0
    %9047 = vmatprep.subr.mxu0 0.0
    %9048 = vmatpush1.msra.mxu0 0.0
    %9049 = vmatprep.subr.mxu0 0.0
    %9050 = vmatpush1.msra.mxu0 0.0
    %9051 = vmatprep.subr.mxu0 0.0
    %9052 = vmatpush1.msra.mxu0 0.0
    %9053 = vmatprep.subr.mxu0 0.0
    %9054 = vmatpush1.msra.mxu0 0.0
    %9055 = vmatprep.subr.mxu0 0.0
    %9056 = vmatpush1.msra.mxu0 0.0
    %9057 = vmatprep.subr.mxu0 0.0
    %9058 = vmatpush1.msra.mxu0 0.0
    %9059 = vmatprep.subr.mxu0 0.0
    %9060 = vmatpush1.msra.mxu0 0.0
    %9061 = vmatprep.subr.mxu0 0.0
    %9062 = vmatpush1.msra.mxu0 0.0
    %9063 = vmatprep.subr.mxu0 0.0
    %9064 = vmatpush1.msra.mxu0 0.0
    %9065 = vmatprep.subr.mxu0 0.0
    %9066 = vmatpush1.msra.mxu0 0.0
    %9067 = vmatprep.subr.mxu0 0.0
    %9068 = vmatpush1.msra.mxu0 0.0
    %9069 = vmatprep.subr.mxu0 0.0
    %9070 = vmatpush1.msra.mxu0 0.0
    %9071 = vmatprep.subr.mxu0 0.0
    %9072 = vmatpush1.msra.mxu0 0.0
    %9073 = vmatprep.subr.mxu0 0.0
    %9074 = vmatpush1.msra.mxu0 0.0
    %9075 = vmatprep.subr.mxu0 0.0
    %9076 = vmatpush1.msra.mxu0 0.0
    %9077 = vmatprep.subr.mxu0 0.0
    %9078 = vmatpush1.msra.mxu0 0.0
    %9079 = vmatprep.subr.mxu0 0.0
    %9080 = vmatpush1.msra.mxu0 0.0
    %9081 = vmatprep.subr.mxu0 0.0
    %9082 = vmatpush1.msra.mxu0 0.0
    %9083 = vmatprep.subr.mxu0 0.0
    %9084 = vmatpush1.msra.mxu0 0.0
    %9085 = vmatprep.subr.mxu0 0.0
    %9086 = vmatpush1.msra.mxu0 0.0
    %9087 = vmatprep.subr.mxu0 0.0
    %9088 = vmatpush1.msra.mxu0 0.0
    %9089 = vmatprep.mubr.f32.mxu0 0.0
    %9090 = vmatmul.mubr.f32.gmra.mrb[0].mxu0 %v1343
    %v9091 = vpop.f32.mrb[0].mxu0
    %v9092 = vadd.f32 0.0, %v9091
    %v9093 = vpop.f32.mrb[0].mxu0
    %v9094 = vadd.f32 0.0, %v9093
    %9095 = vdwg.mxu0
    %9096 = vmatprep.subr.mxu0 %v7780
    %9097 = vmatpush1.msra.mxu0 %v7779
    %9098 = vmatprep.subr.mxu0 %v7796
    %9099 = vmatpush1.msra.mxu0 %v7795
    %9100 = vmatprep.subr.mxu0 0.0
    %9101 = vmatpush1.msra.mxu0 0.0
    %9102 = vmatprep.subr.mxu0 0.0
    %9103 = vmatpush1.msra.mxu0 0.0
    %9104 = vmatprep.subr.mxu0 0.0
    %9105 = vmatpush1.msra.mxu0 0.0
    %9106 = vmatprep.subr.mxu0 0.0
    %9107 = vmatpush1.msra.mxu0 0.0
    %9108 = vmatprep.subr.mxu0 0.0
    %9109 = vmatpush1.msra.mxu0 0.0
    %9110 = vmatprep.subr.mxu0 0.0
    %9111 = vmatpush1.msra.mxu0 0.0
    %9112 = vmatprep.subr.mxu0 0.0
    %9113 = vmatpush1.msra.mxu0 0.0
    %9114 = vmatprep.subr.mxu0 0.0
    %9115 = vmatpush1.msra.mxu0 0.0
    %9116 = vmatprep.subr.mxu0 0.0
    %9117 = vmatpush1.msra.mxu0 0.0
    %9118 = vmatprep.subr.mxu0 0.0
    %9119 = vmatpush1.msra.mxu0 0.0
    %9120 = vmatprep.subr.mxu0 0.0
    %9121 = vmatpush1.msra.mxu0 0.0
    %9122 = vmatprep.subr.mxu0 0.0
    %9123 = vmatpush1.msra.mxu0 0.0
    %9124 = vmatprep.subr.mxu0 0.0
    %9125 = vmatpush1.msra.mxu0 0.0
    %9126 = vmatprep.subr.mxu0 0.0
    %9127 = vmatpush1.msra.mxu0 0.0
    %9128 = vmatprep.subr.mxu0 0.0
    %9129 = vmatpush1.msra.mxu0 0.0
    %9130 = vmatprep.subr.mxu0 0.0
    %9131 = vmatpush1.msra.mxu0 0.0
    %9132 = vmatprep.subr.mxu0 0.0
    %9133 = vmatpush1.msra.mxu0 0.0
    %9134 = vmatprep.subr.mxu0 0.0
    %9135 = vmatpush1.msra.mxu0 0.0
    %9136 = vmatprep.subr.mxu0 0.0
    %9137 = vmatpush1.msra.mxu0 0.0
    %9138 = vmatprep.subr.mxu0 0.0
    %9139 = vmatpush1.msra.mxu0 0.0
    %9140 = vmatprep.subr.mxu0 0.0
    %9141 = vmatpush1.msra.mxu0 0.0
    %9142 = vmatprep.subr.mxu0 0.0
    %9143 = vmatpush1.msra.mxu0 0.0
    %9144 = vmatprep.subr.mxu0 0.0
    %9145 = vmatpush1.msra.mxu0 0.0
    %9146 = vmatprep.subr.mxu0 0.0
    %9147 = vmatpush1.msra.mxu0 0.0
    %9148 = vmatprep.subr.mxu0 0.0
    %9149 = vmatpush1.msra.mxu0 0.0
    %9150 = vmatprep.subr.mxu0 0.0
    %9151 = vmatpush1.msra.mxu0 0.0
    %9152 = vmatprep.subr.mxu0 0.0
    %9153 = vmatpush1.msra.mxu0 0.0
    %9154 = vmatprep.subr.mxu0 0.0
    %9155 = vmatpush1.msra.mxu0 0.0
    %9156 = vmatprep.subr.mxu0 0.0
    %9157 = vmatpush1.msra.mxu0 0.0
    %9158 = vmatprep.subr.mxu0 0.0
    %9159 = vmatpush1.msra.mxu0 0.0
    %9160 = vmatprep.mubr.f32.mxu0 0.0
    %9161 = vmatmul.mubr.f32.gmra.mrb[0].mxu0 %v1343
    %v9162 = vpop.f32.mrb[0].mxu0
    %v9163 = vadd.f32 0.0, %v9162
    %v9164 = vpop.f32.mrb[0].mxu0
    %v9165 = vadd.f32 0.0, %v9164
    %9166 = vdwg.mxu0
    %9167 = vmatprep.subr.mxu0 %v7782
    %9168 = vmatpush1.msra.mxu0 %v7781
    %9169 = vmatprep.subr.mxu0 %v7798
    %9170 = vmatpush1.msra.mxu0 %v7797
    %9171 = vmatprep.subr.mxu0 0.0
    %9172 = vmatpush1.msra.mxu0 0.0
    %9173 = vmatprep.subr.mxu0 0.0
    %9174 = vmatpush1.msra.mxu0 0.0
    %9175 = vmatprep.subr.mxu0 0.0
    %9176 = vmatpush1.msra.mxu0 0.0
    %9177 = vmatprep.subr.mxu0 0.0
    %9178 = vmatpush1.msra.mxu0 0.0
    %9179 = vmatprep.subr.mxu0 0.0
    %9180 = vmatpush1.msra.mxu0 0.0
    %9181 = vmatprep.subr.mxu0 0.0
    %9182 = vmatpush1.msra.mxu0 0.0
    %9183 = vmatprep.subr.mxu0 0.0
    %9184 = vmatpush1.msra.mxu0 0.0
    %9185 = vmatprep.subr.mxu0 0.0
    %9186 = vmatpush1.msra.mxu0 0.0
    %9187 = vmatprep.subr.mxu0 0.0
    %9188 = vmatpush1.msra.mxu0 0.0
    %9189 = vmatprep.subr.mxu0 0.0
    %9190 = vmatpush1.msra.mxu0 0.0
    %9191 = vmatprep.subr.mxu0 0.0
    %9192 = vmatpush1.msra.mxu0 0.0
    %9193 = vmatprep.subr.mxu0 0.0
    %9194 = vmatpush1.msra.mxu0 0.0
    %9195 = vmatprep.subr.mxu0 0.0
    %9196 = vmatpush1.msra.mxu0 0.0
    %9197 = vmatprep.subr.mxu0 0.0
    %9198 = vmatpush1.msra.mxu0 0.0
    %9199 = vmatprep.subr.mxu0 0.0
    %9200 = vmatpush1.msra.mxu0 0.0
    %9201 = vmatprep.subr.mxu0 0.0
    %9202 = vmatpush1.msra.mxu0 0.0
    %9203 = vmatprep.subr.mxu0 0.0
    %9204 = vmatpush1.msra.mxu0 0.0
    %9205 = vmatprep.subr.mxu0 0.0
    %9206 = vmatpush1.msra.mxu0 0.0
    %9207 = vmatprep.subr.mxu0 0.0
    %9208 = vmatpush1.msra.mxu0 0.0
    %9209 = vmatprep.subr.mxu0 0.0
    %9210 = vmatpush1.msra.mxu0 0.0
    %9211 = vmatprep.subr.mxu0 0.0
    %9212 = vmatpush1.msra.mxu0 0.0
    %9213 = vmatprep.subr.mxu0 0.0
    %9214 = vmatpush1.msra.mxu0 0.0
    %9215 = vmatprep.subr.mxu0 0.0
    %9216 = vmatpush1.msra.mxu0 0.0
    %9217 = vmatprep.subr.mxu0 0.0
    %9218 = vmatpush1.msra.mxu0 0.0
    %9219 = vmatprep.subr.mxu0 0.0
    %9220 = vmatpush1.msra.mxu0 0.0
    %9221 = vmatprep.subr.mxu0 0.0
    %9222 = vmatpush1.msra.mxu0 0.0
    %9223 = vmatprep.subr.mxu0 0.0
    %9224 = vmatpush1.msra.mxu0 0.0
    %9225 = vmatprep.subr.mxu0 0.0
    %9226 = vmatpush1.msra.mxu0 0.0
    %9227 = vmatprep.subr.mxu0 0.0
    %9228 = vmatpush1.msra.mxu0 0.0
    %9229 = vmatprep.subr.mxu0 0.0
    %9230 = vmatpush1.msra.mxu0 0.0
    %9231 = vmatprep.mubr.f32.mxu0 0.0
    %9232 = vmatmul.mubr.f32.gmra.mrb[0].mxu0 %v1343
    %v9233 = vpop.f32.mrb[0].mxu0
    %v9234 = vadd.f32 0.0, %v9233
    %v9235 = vpop.f32.mrb[0].mxu0
    %v9236 = vadd.f32 0.0, %v9235
    %9237 = vdwg.mxu0
    %9238 = vmatprep.subr.mxu0 %v7784
    %9239 = vmatpush1.msra.mxu0 %v7783
    %9240 = vmatprep.subr.mxu0 %v7800
    %9241 = vmatpush1.msra.mxu0 %v7799
    %9242 = vmatprep.subr.mxu0 0.0
    %9243 = vmatpush1.msra.mxu0 0.0
    %9244 = vmatprep.subr.mxu0 0.0
    %9245 = vmatpush1.msra.mxu0 0.0
    %9246 = vmatprep.subr.mxu0 0.0
    %9247 = vmatpush1.msra.mxu0 0.0
    %9248 = vmatprep.subr.mxu0 0.0
    %9249 = vmatpush1.msra.mxu0 0.0
    %9250 = vmatprep.subr.mxu0 0.0
    %9251 = vmatpush1.msra.mxu0 0.0
    %9252 = vmatprep.subr.mxu0 0.0
    %9253 = vmatpush1.msra.mxu0 0.0
    %9254 = vmatprep.subr.mxu0 0.0
    %9255 = vmatpush1.msra.mxu0 0.0
    %9256 = vmatprep.subr.mxu0 0.0
    %9257 = vmatpush1.msra.mxu0 0.0
    %9258 = vmatprep.subr.mxu0 0.0
    %9259 = vmatpush1.msra.mxu0 0.0
    %9260 = vmatprep.subr.mxu0 0.0
    %9261 = vmatpush1.msra.mxu0 0.0
    %9262 = vmatprep.subr.mxu0 0.0
    %9263 = vmatpush1.msra.mxu0 0.0
    %9264 = vmatprep.subr.mxu0 0.0
    %9265 = vmatpush1.msra.mxu0 0.0
    %9266 = vmatprep.subr.mxu0 0.0
    %9267 = vmatpush1.msra.mxu0 0.0
    %9268 = vmatprep.subr.mxu0 0.0
    %9269 = vmatpush1.msra.mxu0 0.0
    %9270 = vmatprep.subr.mxu0 0.0
    %9271 = vmatpush1.msra.mxu0 0.0
    %9272 = vmatprep.subr.mxu0 0.0
    %9273 = vmatpush1.msra.mxu0 0.0
    %9274 = vmatprep.subr.mxu0 0.0
    %9275 = vmatpush1.msra.mxu0 0.0
    %9276 = vmatprep.subr.mxu0 0.0
    %9277 = vmatpush1.msra.mxu0 0.0
    %9278 = vmatprep.subr.mxu0 0.0
    %9279 = vmatpush1.msra.mxu0 0.0
    %9280 = vmatprep.subr.mxu0 0.0
    %9281 = vmatpush1.msra.mxu0 0.0
    %9282 = vmatprep.subr.mxu0 0.0
    %9283 = vmatpush1.msra.mxu0 0.0
    %9284 = vmatprep.subr.mxu0 0.0
    %9285 = vmatpush1.msra.mxu0 0.0
    %9286 = vmatprep.subr.mxu0 0.0
    %9287 = vmatpush1.msra.mxu0 0.0
    %9288 = vmatprep.subr.mxu0 0.0
    %9289 = vmatpush1.msra.mxu0 0.0
    %9290 = vmatprep.subr.mxu0 0.0
    %9291 = vmatpush1.msra.mxu0 0.0
    %9292 = vmatprep.subr.mxu0 0.0
    %9293 = vmatpush1.msra.mxu0 0.0
    %9294 = vmatprep.subr.mxu0 0.0
    %9295 = vmatpush1.msra.mxu0 0.0
    %9296 = vmatprep.subr.mxu0 0.0
    %9297 = vmatpush1.msra.mxu0 0.0
    %9298 = vmatprep.subr.mxu0 0.0
    %9299 = vmatpush1.msra.mxu0 0.0
    %9300 = vmatprep.subr.mxu0 0.0
    %9301 = vmatpush1.msra.mxu0 0.0
    %9302 = vmatprep.mubr.f32.mxu0 0.0
    %9303 = vmatmul.mubr.f32.gmra.mrb[0].mxu0 %v1343
    %v9304 = vpop.f32.mrb[0].mxu0
    %v9305 = vadd.f32 0.0, %v9304
    %v9306 = vpop.f32.mrb[0].mxu0
    %v9307 = vadd.f32 0.0, %v9306
    %9308 = vdwg.mxu0
    %9309 = vmatprep.subr.mxu0 %v7786
    %9310 = vmatpush1.msra.mxu0 %v7785
    %9311 = vmatprep.subr.mxu0 %v7802
    %9312 = vmatpush1.msra.mxu0 %v7801
    %9313 = vmatprep.subr.mxu0 0.0
    %9314 = vmatpush1.msra.mxu0 0.0
    %9315 = vmatprep.subr.mxu0 0.0
    %9316 = vmatpush1.msra.mxu0 0.0
    %9317 = vmatprep.subr.mxu0 0.0
    %9318 = vmatpush1.msra.mxu0 0.0
    %9319 = vmatprep.subr.mxu0 0.0
    %9320 = vmatpush1.msra.mxu0 0.0
    %9321 = vmatprep.subr.mxu0 0.0
    %9322 = vmatpush1.msra.mxu0 0.0
    %9323 = vmatprep.subr.mxu0 0.0
    %9324 = vmatpush1.msra.mxu0 0.0
    %9325 = vmatprep.subr.mxu0 0.0
    %9326 = vmatpush1.msra.mxu0 0.0
    %9327 = vmatprep.subr.mxu0 0.0
    %9328 = vmatpush1.msra.mxu0 0.0
    %9329 = vmatprep.subr.mxu0 0.0
    %9330 = vmatpush1.msra.mxu0 0.0
    %9331 = vmatprep.subr.mxu0 0.0
    %9332 = vmatpush1.msra.mxu0 0.0
    %9333 = vmatprep.subr.mxu0 0.0
    %9334 = vmatpush1.msra.mxu0 0.0
    %9335 = vmatprep.subr.mxu0 0.0
    %9336 = vmatpush1.msra.mxu0 0.0
    %9337 = vmatprep.subr.mxu0 0.0
    %9338 = vmatpush1.msra.mxu0 0.0
    %9339 = vmatprep.subr.mxu0 0.0
    %9340 = vmatpush1.msra.mxu0 0.0
    %9341 = vmatprep.subr.mxu0 0.0
    %9342 = vmatpush1.msra.mxu0 0.0
    %9343 = vmatprep.subr.mxu0 0.0
    %9344 = vmatpush1.msra.mxu0 0.0
    %9345 = vmatprep.subr.mxu0 0.0
    %9346 = vmatpush1.msra.mxu0 0.0
    %9347 = vmatprep.subr.mxu0 0.0
    %9348 = vmatpush1.msra.mxu0 0.0
    %9349 = vmatprep.subr.mxu0 0.0
    %9350 = vmatpush1.msra.mxu0 0.0
    %9351 = vmatprep.subr.mxu0 0.0
    %9352 = vmatpush1.msra.mxu0 0.0
    %9353 = vmatprep.subr.mxu0 0.0
    %9354 = vmatpush1.msra.mxu0 0.0
    %9355 = vmatprep.subr.mxu0 0.0
    %9356 = vmatpush1.msra.mxu0 0.0
    %9357 = vmatprep.subr.mxu0 0.0
    %9358 = vmatpush1.msra.mxu0 0.0
    %9359 = vmatprep.subr.mxu0 0.0
    %9360 = vmatpush1.msra.mxu0 0.0
    %9361 = vmatprep.subr.mxu0 0.0
    %9362 = vmatpush1.msra.mxu0 0.0
    %9363 = vmatprep.subr.mxu0 0.0
    %9364 = vmatpush1.msra.mxu0 0.0
    %9365 = vmatprep.subr.mxu0 0.0
    %9366 = vmatpush1.msra.mxu0 0.0
    %9367 = vmatprep.subr.mxu0 0.0
    %9368 = vmatpush1.msra.mxu0 0.0
    %9369 = vmatprep.subr.mxu0 0.0
    %9370 = vmatpush1.msra.mxu0 0.0
    %9371 = vmatprep.subr.mxu0 0.0
    %9372 = vmatpush1.msra.mxu0 0.0
    %9373 = vmatprep.mubr.f32.mxu0 0.0
    %9374 = vmatmul.mubr.f32.gmra.mrb[0].mxu0 %v1343
    %v9375 = vpop.f32.mrb[0].mxu0
    %v9376 = vadd.f32 0.0, %v9375
    %v9377 = vpop.f32.mrb[0].mxu0
    %v9378 = vadd.f32 0.0, %v9377
    %9379 = vdwg.mxu0
    %9380 = vmatprep.subr.mxu0 %v7788
    %9381 = vmatpush1.msra.mxu0 %v7787
    %9382 = vmatprep.subr.mxu0 %v7804
    %9383 = vmatpush1.msra.mxu0 %v7803
    %9384 = vmatprep.subr.mxu0 0.0
    %9385 = vmatpush1.msra.mxu0 0.0
    %9386 = vmatprep.subr.mxu0 0.0
    %9387 = vmatpush1.msra.mxu0 0.0
    %9388 = vmatprep.subr.mxu0 0.0
    %9389 = vmatpush1.msra.mxu0 0.0
    %9390 = vmatprep.subr.mxu0 0.0
    %9391 = vmatpush1.msra.mxu0 0.0
    %9392 = vmatprep.subr.mxu0 0.0
    %9393 = vmatpush1.msra.mxu0 0.0
    %9394 = vmatprep.subr.mxu0 0.0
    %9395 = vmatpush1.msra.mxu0 0.0
    %9396 = vmatprep.subr.mxu0 0.0
    %9397 = vmatpush1.msra.mxu0 0.0
    %9398 = vmatprep.subr.mxu0 0.0
    %9399 = vmatpush1.msra.mxu0 0.0
    %9400 = vmatprep.subr.mxu0 0.0
    %9401 = vmatpush1.msra.mxu0 0.0
    %9402 = vmatprep.subr.mxu0 0.0
    %9403 = vmatpush1.msra.mxu0 0.0
    %9404 = vmatprep.subr.mxu0 0.0
    %9405 = vmatpush1.msra.mxu0 0.0
    %9406 = vmatprep.subr.mxu0 0.0
    %9407 = vmatpush1.msra.mxu0 0.0
    %9408 = vmatprep.subr.mxu0 0.0
    %9409 = vmatpush1.msra.mxu0 0.0
    %9410 = vmatprep.subr.mxu0 0.0
    %9411 = vmatpush1.msra.mxu0 0.0
    %9412 = vmatprep.subr.mxu0 0.0
    %9413 = vmatpush1.msra.mxu0 0.0
    %9414 = vmatprep.subr.mxu0 0.0
    %9415 = vmatpush1.msra.mxu0 0.0
    %9416 = vmatprep.subr.mxu0 0.0
    %9417 = vmatpush1.msra.mxu0 0.0
    %9418 = vmatprep.subr.mxu0 0.0
    %9419 = vmatpush1.msra.mxu0 0.0
    %9420 = vmatprep.subr.mxu0 0.0
    %9421 = vmatpush1.msra.mxu0 0.0
    %9422 = vmatprep.subr.mxu0 0.0
    %9423 = vmatpush1.msra.mxu0 0.0
    %9424 = vmatprep.subr.mxu0 0.0
    %9425 = vmatpush1.msra.mxu0 0.0
    %9426 = vmatprep.subr.mxu0 0.0
    %9427 = vmatpush1.msra.mxu0 0.0
    %9428 = vmatprep.subr.mxu0 0.0
    %9429 = vmatpush1.msra.mxu0 0.0
    %9430 = vmatprep.subr.mxu0 0.0
    %9431 = vmatpush1.msra.mxu0 0.0
    %9432 = vmatprep.subr.mxu0 0.0
    %9433 = vmatpush1.msra.mxu0 0.0
    %9434 = vmatprep.subr.mxu0 0.0
    %9435 = vmatpush1.msra.mxu0 0.0
    %9436 = vmatprep.subr.mxu0 0.0
    %9437 = vmatpush1.msra.mxu0 0.0
    %9438 = vmatprep.subr.mxu0 0.0
    %9439 = vmatpush1.msra.mxu0 0.0
    %9440 = vmatprep.subr.mxu0 0.0
    %9441 = vmatpush1.msra.mxu0 0.0
    %9442 = vmatprep.subr.mxu0 0.0
    %9443 = vmatpush1.msra.mxu0 0.0
    %9444 = vmatprep.mubr.f32.mxu0 0.0
    %9445 = vmatmul.mubr.f32.gmra.mrb[0].mxu0 %v1343
    %v9446 = vpop.f32.mrb[0].mxu0
    %v9447 = vadd.f32 0.0, %v9446
    %v9448 = vpop.f32.mrb[0].mxu0
    %v9449 = vadd.f32 0.0, %v9448
    %9450 = vdwg.mxu0
    %9451 = vmatprep.subr.mxu0 %v7790
    %9452 = vmatpush1.msra.mxu0 %v7789
    %9453 = vmatprep.subr.mxu0 %v7806
    %9454 = vmatpush1.msra.mxu0 %v7805
    %9455 = vmatprep.subr.mxu0 0.0
    %9456 = vmatpush1.msra.mxu0 0.0
    %9457 = vmatprep.subr.mxu0 0.0
    %9458 = vmatpush1.msra.mxu0 0.0
    %9459 = vmatprep.subr.mxu0 0.0
    %9460 = vmatpush1.msra.mxu0 0.0
    %9461 = vmatprep.subr.mxu0 0.0
    %9462 = vmatpush1.msra.mxu0 0.0
    %9463 = vmatprep.subr.mxu0 0.0
    %9464 = vmatpush1.msra.mxu0 0.0
    %9465 = vmatprep.subr.mxu0 0.0
    %9466 = vmatpush1.msra.mxu0 0.0
    %9467 = vmatprep.subr.mxu0 0.0
    %9468 = vmatpush1.msra.mxu0 0.0
    %9469 = vmatprep.subr.mxu0 0.0
    %9470 = vmatpush1.msra.mxu0 0.0
    %9471 = vmatprep.subr.mxu0 0.0
    %9472 = vmatpush1.msra.mxu0 0.0
    %9473 = vmatprep.subr.mxu0 0.0
    %9474 = vmatpush1.msra.mxu0 0.0
    %9475 = vmatprep.subr.mxu0 0.0
    %9476 = vmatpush1.msra.mxu0 0.0
    %9477 = vmatprep.subr.mxu0 0.0
    %9478 = vmatpush1.msra.mxu0 0.0
    %9479 = vmatprep.subr.mxu0 0.0
    %9480 = vmatpush1.msra.mxu0 0.0
    %9481 = vmatprep.subr.mxu0 0.0
    %9482 = vmatpush1.msra.mxu0 0.0
    %9483 = vmatprep.subr.mxu0 0.0
    %9484 = vmatpush1.msra.mxu0 0.0
    %9485 = vmatprep.subr.mxu0 0.0
    %9486 = vmatpush1.msra.mxu0 0.0
    %9487 = vmatprep.subr.mxu0 0.0
    %9488 = vmatpush1.msra.mxu0 0.0
    %9489 = vmatprep.subr.mxu0 0.0
    %9490 = vmatpush1.msra.mxu0 0.0
    %9491 = vmatprep.subr.mxu0 0.0
    %9492 = vmatpush1.msra.mxu0 0.0
    %9493 = vmatprep.subr.mxu0 0.0
    %9494 = vmatpush1.msra.mxu0 0.0
    %9495 = vmatprep.subr.mxu0 0.0
    %9496 = vmatpush1.msra.mxu0 0.0
    %9497 = vmatprep.subr.mxu0 0.0
    %9498 = vmatpush1.msra.mxu0 0.0
    %9499 = vmatprep.subr.mxu0 0.0
    %9500 = vmatpush1.msra.mxu0 0.0
    %9501 = vmatprep.subr.mxu0 0.0
    %9502 = vmatpush1.msra.mxu0 0.0
    %9503 = vmatprep.subr.mxu0 0.0
    %9504 = vmatpush1.msra.mxu0 0.0
    %9505 = vmatprep.subr.mxu0 0.0
    %9506 = vmatpush1.msra.mxu0 0.0
    %9507 = vmatprep.subr.mxu0 0.0
    %9508 = vmatpush1.msra.mxu0 0.0
    %9509 = vmatprep.subr.mxu0 0.0
    %9510 = vmatpush1.msra.mxu0 0.0
    %9511 = vmatprep.subr.mxu0 0.0
    %9512 = vmatpush1.msra.mxu0 0.0
    %9513 = vmatprep.subr.mxu0 0.0
    %9514 = vmatpush1.msra.mxu0 0.0
    %9515 = vmatprep.mubr.f32.mxu0 0.0
    %9516 = vmatmul.mubr.f32.gmra.mrb[0].mxu0 %v1343
    %v9517 = vpop.f32.mrb[0].mxu0
    %v9518 = vadd.f32 0.0, %v9517
    %v9519 = vpop.f32.mrb[0].mxu0
    %v9520 = vadd.f32 0.0, %v9519
    %9521 = vdwg.mxu0
    %9522 = vmatprep.subr.mxu0 %v7792
    %9523 = vmatpush1.msra.mxu0 %v7791
    %9524 = vmatprep.subr.mxu0 %v7808
    %9525 = vmatpush1.msra.mxu0 %v7807
    %9526 = vmatprep.subr.mxu0 0.0
    %9527 = vmatpush1.msra.mxu0 0.0
    %9528 = vmatprep.subr.mxu0 0.0
    %9529 = vmatpush1.msra.mxu0 0.0
    %9530 = vmatprep.subr.mxu0 0.0
    %9531 = vmatpush1.msra.mxu0 0.0
    %9532 = vmatprep.subr.mxu0 0.0
    %9533 = vmatpush1.msra.mxu0 0.0
    %9534 = vmatprep.subr.mxu0 0.0
    %9535 = vmatpush1.msra.mxu0 0.0
    %9536 = vmatprep.subr.mxu0 0.0
    %9537 = vmatpush1.msra.mxu0 0.0
    %9538 = vmatprep.subr.mxu0 0.0
    %9539 = vmatpush1.msra.mxu0 0.0
    %9540 = vmatprep.subr.mxu0 0.0
    %9541 = vmatpush1.msra.mxu0 0.0
    %9542 = vmatprep.subr.mxu0 0.0
    %9543 = vmatpush1.msra.mxu0 0.0
    %9544 = vmatprep.subr.mxu0 0.0
    %9545 = vmatpush1.msra.mxu0 0.0
    %9546 = vmatprep.subr.mxu0 0.0
    %9547 = vmatpush1.msra.mxu0 0.0
    %9548 = vmatprep.subr.mxu0 0.0
    %9549 = vmatpush1.msra.mxu0 0.0
    %9550 = vmatprep.subr.mxu0 0.0
    %9551 = vmatpush1.msra.mxu0 0.0
    %9552 = vmatprep.subr.mxu0 0.0
    %9553 = vmatpush1.msra.mxu0 0.0
    %9554 = vmatprep.subr.mxu0 0.0
    %9555 = vmatpush1.msra.mxu0 0.0
    %9556 = vmatprep.subr.mxu0 0.0
    %9557 = vmatpush1.msra.mxu0 0.0
    %9558 = vmatprep.subr.mxu0 0.0
    %9559 = vmatpush1.msra.mxu0 0.0
    %9560 = vmatprep.subr.mxu0 0.0
    %9561 = vmatpush1.msra.mxu0 0.0
    %9562 = vmatprep.subr.mxu0 0.0
    %9563 = vmatpush1.msra.mxu0 0.0
    %9564 = vmatprep.subr.mxu0 0.0
    %9565 = vmatpush1.msra.mxu0 0.0
    %9566 = vmatprep.subr.mxu0 0.0
    %9567 = vmatpush1.msra.mxu0 0.0
    %9568 = vmatprep.subr.mxu0 0.0
    %9569 = vmatpush1.msra.mxu0 0.0
    %9570 = vmatprep.subr.mxu0 0.0
    %9571 = vmatpush1.msra.mxu0 0.0
    %9572 = vmatprep.subr.mxu0 0.0
    %9573 = vmatpush1.msra.mxu0 0.0
    %9574 = vmatprep.subr.mxu0 0.0
    %9575 = vmatpush1.msra.mxu0 0.0
    %9576 = vmatprep.subr.mxu0 0.0
    %9577 = vmatpush1.msra.mxu0 0.0
    %9578 = vmatprep.subr.mxu0 0.0
    %9579 = vmatpush1.msra.mxu0 0.0
    %9580 = vmatprep.subr.mxu0 0.0
    %9581 = vmatpush1.msra.mxu0 0.0
    %9582 = vmatprep.subr.mxu0 0.0
    %9583 = vmatpush1.msra.mxu0 0.0
    %9584 = vmatprep.subr.mxu0 0.0
    %9585 = vmatpush1.msra.mxu0 0.0
    %9586 = vmatprep.mubr.f32.mxu0 0.0
    %9587 = vmatmul.mubr.f32.gmra.mrb[0].mxu0 %v1343
    %v9588 = vpop.f32.mrb[0].mxu0
    %v9589 = vadd.f32 0.0, %v9588
    %v9590 = vpop.f32.mrb[0].mxu0
    %v9591 = vadd.f32 0.0, %v9590
    %9592 = vdwg.mxu0
    %v9593 = vadd.f32 %v8524, %v9092
    %v9594 = vadd.f32 %v8526, %v9094
    %v9595 = vadd.f32 %v8595, %v9163
    %v9596 = vadd.f32 %v8597, %v9165
    %v9597 = vadd.f32 %v8666, %v9234
    %v9598 = vadd.f32 %v8668, %v9236
    %v9599 = vadd.f32 %v8737, %v9305
    %v9600 = vadd.f32 %v8739, %v9307
    %v9601 = vadd.f32 %v8808, %v9376
    %v9602 = vadd.f32 %v8810, %v9378
    %v9603 = vadd.f32 %v8879, %v9447
    %v9604 = vadd.f32 %v8881, %v9449
    %v9605 = vadd.f32 %v8950, %v9518
    %v9606 = vadd.f32 %v8952, %v9520
    %v9607 = vadd.f32 %v9021, %v9589
    %v9608 = vadd.f32 %v9023, %v9591
    %v9609 = vmul.f32 %v9598, 0.26601174
    %v9610 = vmul.f32 %v9599, 0.26601174
    %v9611 = vmul.f32 %v9600, 0.26601174
    %v9612 = vmul.f32 %v9601, 0.26601174
    %v9613 = vmul.f32 %v9602, 0.26601174
    %v9614 = vmul.f32 %v9603, 0.26601174
    %v9615 = vadd.f32 %v9593, %v9603
    %v9616 = vadd.f32 %v9594, %v9604
    %v9617 = vadd.f32 %v9595, %v9605
    %v9618 = vadd.f32 %v9596, %v9606
    %v9619 = vadd.f32 %v9597, %v9607
    %v9620 = vadd.f32 %v9598, %v9608
    %v9621 = vmul.f32 %v9615, 0.0010283804
    %v9622 = vmul.f32 %v9616, 0.0010283804
    %v9623 = vmul.f32 %v9617, 0.0010283804
    %v9624 = vmul.f32 %v9618, 0.0010283804
    %v9625 = vmul.f32 %v9619, 0.0010283804
    %v9626 = vmul.f32 %v9620, 0.0010283804
    %v9627 = vadd.f32 %v9609, %v9621
    %v9628 = vadd.f32 %v9610, %v9622
    %v9629 = vadd.f32 %v9611, %v9623
    %v9630 = vadd.f32 %v9612, %v9624
    %v9631 = vadd.f32 %v9613, %v9625
    %v9632 = vadd.f32 %v9614, %v9626
    %v9633 = vadd.f32 %v9594, %v9602
    %v9634 = vadd.f32 %v9595, %v9603
    %v9635 = vadd.f32 %v9596, %v9604
    %v9636 = vadd.f32 %v9597, %v9605
    %v9637 = vadd.f32 %v9598, %v9606
    %v9638 = vadd.f32 %v9599, %v9607
    %v9639 = vmul.f32 %v9633, 0.0075987587
    %v9640 = vmul.f32 %v9634, 0.0075987587
    %v9641 = vmul.f32 %v9635, 0.0075987587
    %v9642 = vmul.f32 %v9636, 0.0075987587
    %v9643 = vmul.f32 %v9637, 0.0075987587
    %v9644 = vmul.f32 %v9638, 0.0075987587
    %v9645 = vadd.f32 %v9627, %v9639
    %v9646 = vadd.f32 %v9628, %v9640
    %v9647 = vadd.f32 %v9629, %v9641
    %v9648 = vadd.f32 %v9630, %v9642
    %v9649 = vadd.f32 %v9631, %v9643
    %v9650 = vadd.f32 %v9632, %v9644
    %v9651 = vadd.f32 %v9595, %v9601
    %v9652 = vadd.f32 %v9596, %v9602
    %v9653 = vadd.f32 %v9597, %v9603
    %v9654 = vadd.f32 %v9598, %v9604
    %v9655 = vadd.f32 %v9599, %v9605
    %v9656 = vadd.f32 %v9600, %v9606
    %v9657 = vmul.f32 %v9651, 0.036000773
    %v9658 = vmul.f32 %v9652, 0.036000773
    %v9659 = vmul.f32 %v9653, 0.036000773
    %v9660 = vmul.f32 %v9654, 0.036000773
    %v9661 = vmul.f32 %v9655, 0.036000773
    %v9662 = vmul.f32 %v9656, 0.036000773
    %v9663 = vadd.f32 %v9645, %v9657
    %v9664 = vadd.f32 %v9646, %v9658
    %v9665 = vadd.f32 %v9647, %v9659
    %v9666 = vadd.f32 %v9648, %v9660
    %v9667 = vadd.f32 %v9649, %v9661
    %v9668 = vadd.f32 %v9650, %v9662
    %v9669 = vadd.f32 %v9596, %v9600
    %v9670 = vadd.f32 %v9597, %v9601
    %v9671 = vadd.f32 %v9598, %v9602
    %v9672 = vadd.f32 %v9599, %v9603
    %v9673 = vadd.f32 %v9600, %v9604
    %v9674 = vadd.f32 %v9601, %v9605
    %v9675 = vmul.f32 %v9669, 0.1093607
    %v9676 = vmul.f32 %v9670, 0.1093607
    %v9677 = vmul.f32 %v9671, 0.1093607
    %v9678 = vmul.f32 %v9672, 0.1093607
    %v9679 = vmul.f32 %v9673, 0.1093607
    %v9680 = vmul.f32 %v9674, 0.1093607
    %v9681 = vadd.f32 %v9663, %v9675
    %v9682 = vadd.f32 %v9664, %v9676
    %v9683 = vadd.f32 %v9665, %v9677
    %v9684 = vadd.f32 %v9666, %v9678
    %v9685 = vadd.f32 %v9667, %v9679
    %v9686 = vadd.f32 %v9668, %v9680
    %v9687 = vadd.f32 %v9597, %v9599
    %v9688 = vadd.f32 %v9598, %v9600
    %v9689 = vadd.f32 %v9599, %v9601
    %v9690 = vadd.f32 %v9600, %v9602
    %v9691 = vadd.f32 %v9601, %v9603
    %v9692 = vadd.f32 %v9602, %v9604
    %v9693 = vmul.f32 %v9687, 0.21300554
    %v9694 = vmul.f32 %v9688, 0.21300554
    %v9695 = vmul.f32 %v9689, 0.21300554
    %v9696 = vmul.f32 %v9690, 0.21300554
    %v9697 = vmul.f32 %v9691, 0.21300554
    %v9698 = vmul.f32 %v9692, 0.21300554
    %v9699 = vadd.f32 %v9681, %v9693
    %v9700 = vadd.f32 %v9682, %v9694
    %v9701 = vadd.f32 %v9683, %v9695
    %v9702 = vadd.f32 %v9684, %v9696
    %v9703 = vadd.f32 %v9685, %v9697
    %v9704 = vadd.f32 %v9686, %v9698
    %v9705 = vmul.f32 %v2019, %v2019
    %v9706 = vmul.f32 %v2020, %v2020
    %v9707 = vmul.f32 %v2021, %v2021
    %v9708 = vmul.f32 %v2022, %v2022
    %v9709 = vmul.f32 %v2023, %v2023
    %v9710 = vmul.f32 %v2024, %v2024
    %v9711 = vmul.f32 %v3915, %v3915
    %v9712 = vmul.f32 %v3916, %v3916
    %v9713 = vmul.f32 %v3917, %v3917
    %v9714 = vmul.f32 %v3918, %v3918
    %v9715 = vmul.f32 %v3919, %v3919
    %v9716 = vmul.f32 %v3920, %v3920
    %v9717 = vmul.f32 %v2019, %v3915
    %v9718 = vmul.f32 %v2020, %v3916
    %v9719 = vmul.f32 %v2021, %v3917
    %v9720 = vmul.f32 %v2022, %v3918
    %v9721 = vmul.f32 %v2023, %v3919
    %v9722 = vmul.f32 %v2024, %v3920
    %v9723 = vsub.f32 %v5843, %v9705
    %v9724 = vsub.f32 %v5844, %v9706
    %v9725 = vsub.f32 %v5845, %v9707
    %v9726 = vsub.f32 %v5846, %v9708
    %v9727 = vsub.f32 %v5847, %v9709
    %v9728 = vsub.f32 %v5848, %v9710
    %v9729 = vsub.f32 %v7771, %v9711
    %v9730 = vsub.f32 %v7772, %v9712
    %v9731 = vsub.f32 %v7773, %v9713
    %v9732 = vsub.f32 %v7774, %v9714
    %v9733 = vsub.f32 %v7775, %v9715
    %v9734 = vsub.f32 %v7776, %v9716
    %v9735 = vsub.f32 %v9699, %v9717
    %v9736 = vsub.f32 %v9700, %v9718
    %v9737 = vsub.f32 %v9701, %v9719
    %v9738 = vsub.f32 %v9702, %v9720
    %v9739 = vsub.f32 %v9703, %v9721
    %v9740 = vsub.f32 %v9704, %v9722
    %v9741 = vmul.f32 %v9717, 2.0
    %v9742 = vmul.f32 %v9718, 2.0
    %v9743 = vmul.f32 %v9719, 2.0
    %v9744 = vmul.f32 %v9720, 2.0
    %v9745 = vmul.f32 %v9721, 2.0
    %v9746 = vmul.f32 %v9722, 2.0
    %v9747 = vadd.f32 %v9741, 0.0001
    %v9748 = vadd.f32 %v9742, 0.0001
    %v9749 = vadd.f32 %v9743, 0.0001
    %v9750 = vadd.f32 %v9744, 0.0001
    %v9751 = vadd.f32 %v9745, 0.0001
    %v9752 = vadd.f32 %v9746, 0.0001
    %v9753 = vmul.f32 %v9735, 2.0
    %v9754 = vmul.f32 %v9736, 2.0
    %v9755 = vmul.f32 %v9737, 2.0
    %v9756 = vmul.f32 %v9738, 2.0
    %v9757 = vmul.f32 %v9739, 2.0
    %v9758 = vmul.f32 %v9740, 2.0
    %v9759 = vadd.f32 %v9753, 0.0009
    %v9760 = vadd.f32 %v9754, 0.0009
    %v9761 = vadd.f32 %v9755, 0.0009
    %v9762 = vadd.f32 %v9756, 0.0009
    %v9763 = vadd.f32 %v9757, 0.0009
    %v9764 = vadd.f32 %v9758, 0.0009
    %v9765 = vmul.f32 %v9747, %v9759
    %v9766 = vmul.f32 %v9748, %v9760
    %v9767 = vmul.f32 %v9749, %v9761
    %v9768 = vmul.f32 %v9750, %v9762
    %v9769 = vmul.f32 %v9751, %v9763
    %v9770 = vmul.f32 %v9752, %v9764
    %v9771 = vadd.f32 %v9705, %v9711
    %v9772 = vadd.f32 %v9706, %v9712
    %v9773 = vadd.f32 %v9707, %v9713
    %v9774 = vadd.f32 %v9708, %v9714
    %v9775 = vadd.f32 %v9709, %v9715
    %v9776 = vadd.f32 %v9710, %v9716
    %v9777 = vadd.f32 %v9771, 0.0001
    %v9778 = vadd.f32 %v9772, 0.0001
    %v9779 = vadd.f32 %v9773, 0.0001
    %v9780 = vadd.f32 %v9774, 0.0001
    %v9781 = vadd.f32 %v9775, 0.0001
    %v9782 = vadd.f32 %v9776, 0.0001
    %v9783 = vadd.f32 %v9723, %v9729
    %v9784 = vadd.f32 %v9724, %v9730
    %v9785 = vadd.f32 %v9725, %v9731
    %v9786 = vadd.f32 %v9726, %v9732
    %v9787 = vadd.f32 %v9727, %v9733
    %v9788 = vadd.f32 %v9728, %v9734
    %v9789 = vadd.f32 %v9783, 0.0009
    %v9790 = vadd.f32 %v9784, 0.0009
    %v9791 = vadd.f32 %v9785, 0.0009
    %v9792 = vadd.f32 %v9786, 0.0009
    %v9793 = vadd.f32 %v9787, 0.0009
    %v9794 = vadd.f32 %v9788, 0.0009
    %v9795 = vmul.f32 %v9777, %v9789
    %v9796 = vmul.f32 %v9778, %v9790
    %v9797 = vmul.f32 %v9779, %v9791
    %v9798 = vmul.f32 %v9780, %v9792
    %v9799 = vmul.f32 %v9781, %v9793
    %v9800 = vmul.f32 %v9782, %v9794
    %v9801 = vrcp.pop %v9795
    %v9802 = vmul.f32 %v9765, %v9801
    %v9803 = vrcp.pop %v9796
    %v9804 = vmul.f32 %v9766, %v9803
    %v9805 = vrcp.pop %v9797
    %v9806 = vmul.f32 %v9767, %v9805
    %v9807 = vrcp.pop %v9798
    %v9808 = vmul.f32 %v9768, %v9807
    %v9809 = vrcp.pop %v9799
    %v9810 = vmul.f32 %v9769, %v9809
    %v9811 = vrcp.pop %v9800
    %v9812 = vmul.f32 %v9770, %v9811
    %v9813 = vsub.f32 %v54, %v86
    %v9814 = vsub.f32 %v55, %v87
    %v9815 = vsub.f32 %v56, %v88
    %v9816 = vsub.f32 %v57, %v89
    %v9817 = vsub.f32 %v58, %v90
    %v9818 = vsub.f32 %v59, %v91
    %v9819 = vsub.f32 %v60, %v92
    %v9820 = vsub.f32 %v61, %v93
    %v9821 = vsub.f32 %v62, %v94
    %v9822 = vsub.f32 %v63, %v95
    %v9823 = vsub.f32 %v64, %v96
    %v9824 = vsub.f32 %v65, %v97
    %v9825 = vsub.f32 %v66, %v98
    %v9826 = vsub.f32 %v67, %v99
    %v9827 = vsub.f32 %v68, %v100
    %v9828 = vsub.f32 %v69, %v101
    %v9829 = vsub.f32 %v70, %v102
    %v9830 = vsub.f32 %v71, %v103
    %v9831 = vsub.f32 %v72, %v104
    %v9832 = vsub.f32 %v73, %v105
    %v9833 = vsub.f32 %v74, %v106
    %v9834 = vsub.f32 %v75, %v107
    %v9835 = vsub.f32 %v76, %v108
    %v9836 = vsub.f32 %v77, %v109
    %v9837 = vsub.f32 %v78, %v110
    %v9838 = vsub.f32 %v79, %v111
    %v9839 = vsub.f32 %v80, %v112
    %v9840 = vsub.f32 %v81, %v113
    %v9841 = vsub.f32 %v82, %v114
    %v9842 = vsub.f32 %v83, %v115
    %v9843 = vsub.f32 %v84, %v116
    %v9844 = vsub.f32 %v85, %v117
    %v9845 = vand.u32 2147483647, %v9813
    %v9846 = vand.u32 2147483647, %v9814
    %v9847 = vand.u32 2147483647, %v9815
    %v9848 = vand.u32 2147483647, %v9816
    %v9849 = vand.u32 2147483647, %v9817
    %v9850 = vand.u32 2147483647, %v9818
    %v9851 = vand.u32 2147483647, %v9819
    %v9852 = vand.u32 2147483647, %v9820
    %v9853 = vand.u32 2147483647, %v9821
    %v9854 = vand.u32 2147483647, %v9822
    %v9855 = vand.u32 2147483647, %v9823
    %v9856 = vand.u32 2147483647, %v9824
    %v9857 = vand.u32 2147483647, %v9825
    %v9858 = vand.u32 2147483647, %v9826
    %v9859 = vand.u32 2147483647, %v9827
    %v9860 = vand.u32 2147483647, %v9828
    %v9861 = vand.u32 2147483647, %v9829
    %v9862 = vand.u32 2147483647, %v9830
    %v9863 = vand.u32 2147483647, %v9831
    %v9864 = vand.u32 2147483647, %v9832
    %v9865 = vand.u32 2147483647, %v9833
    %v9866 = vand.u32 2147483647, %v9834
    %v9867 = vand.u32 2147483647, %v9835
    %v9868 = vand.u32 2147483647, %v9836
    %v9869 = vand.u32 2147483647, %v9837
    %v9870 = vand.u32 2147483647, %v9838
    %v9871 = vand.u32 2147483647, %v9839
    %v9872 = vand.u32 2147483647, %v9840
    %v9873 = vand.u32 2147483647, %v9841
    %v9874 = vand.u32 2147483647, %v9842
    %v9875 = vand.u32 2147483647, %v9843
    %v9876 = vand.u32 2147483647, %v9844
    %v9877 = vadd.f32 %v9845, %v9861
    %v9878 = vrot.slane %v9877, 4
    %v9879 = vadd.f32 %v9877, %v9878
    %v9880 = vrot.slane %v9879, 2
    %v9881 = vadd.f32 %v9879, %v9880
    %v9882 = vrot.slane %v9881, 1
    %v9883 = vadd.f32 %v9881, %v9882
    %v9884 = vadd.f32 %v9846, %v9862
    %v9885 = vrot.slane %v9884, 4
    %v9886 = vadd.f32 %v9884, %v9885
    %v9887 = vrot.slane %v9886, 2
    %v9888 = vadd.f32 %v9886, %v9887
    %v9889 = vrot.slane %v9888, 1
    %v9890 = vadd.f32 %v9888, %v9889
    %v9891 = vadd.f32 %v9847, %v9863
    %v9892 = vrot.slane %v9891, 4
    %v9893 = vadd.f32 %v9891, %v9892
    %v9894 = vrot.slane %v9893, 2
    %v9895 = vadd.f32 %v9893, %v9894
    %v9896 = vrot.slane %v9895, 1
    %v9897 = vadd.f32 %v9895, %v9896
    %v9898 = vadd.f32 %v9848, %v9864
    %v9899 = vrot.slane %v9898, 4
    %v9900 = vadd.f32 %v9898, %v9899
    %v9901 = vrot.slane %v9900, 2
    %v9902 = vadd.f32 %v9900, %v9901
    %v9903 = vrot.slane %v9902, 1
    %v9904 = vadd.f32 %v9902, %v9903
    %v9905 = vadd.f32 %v9849, %v9865
    %v9906 = vrot.slane %v9905, 4
    %v9907 = vadd.f32 %v9905, %v9906
    %v9908 = vrot.slane %v9907, 2
    %v9909 = vadd.f32 %v9907, %v9908
    %v9910 = vrot.slane %v9909, 1
    %v9911 = vadd.f32 %v9909, %v9910
    %v9912 = vadd.f32 %v9850, %v9866
    %v9913 = vrot.slane %v9912, 4
    %v9914 = vadd.f32 %v9912, %v9913
    %v9915 = vrot.slane %v9914, 2
    %v9916 = vadd.f32 %v9914, %v9915
    %v9917 = vrot.slane %v9916, 1
    %v9918 = vadd.f32 %v9916, %v9917
    %v9919 = vadd.f32 %v9851, %v9867
    %v9920 = vrot.slane %v9919, 4
    %v9921 = vadd.f32 %v9919, %v9920
    %v9922 = vrot.slane %v9921, 2
    %v9923 = vadd.f32 %v9921, %v9922
    %v9924 = vrot.slane %v9923, 1
    %v9925 = vadd.f32 %v9923, %v9924
    %v9926 = vadd.f32 %v9852, %v9868
    %v9927 = vrot.slane %v9926, 4
    %v9928 = vadd.f32 %v9926, %v9927
    %v9929 = vrot.slane %v9928, 2
    %v9930 = vadd.f32 %v9928, %v9929
    %v9931 = vrot.slane %v9930, 1
    %v9932 = vadd.f32 %v9930, %v9931
    %v9933 = vadd.f32 %v9853, %v9869
    %v9934 = vrot.slane %v9933, 4
    %v9935 = vadd.f32 %v9933, %v9934
    %v9936 = vrot.slane %v9935, 2
    %v9937 = vadd.f32 %v9935, %v9936
    %v9938 = vrot.slane %v9937, 1
    %v9939 = vadd.f32 %v9937, %v9938
    %v9940 = vadd.f32 %v9854, %v9870
    %v9941 = vrot.slane %v9940, 4
    %v9942 = vadd.f32 %v9940, %v9941
    %v9943 = vrot.slane %v9942, 2
    %v9944 = vadd.f32 %v9942, %v9943
    %v9945 = vrot.slane %v9944, 1
    %v9946 = vadd.f32 %v9944, %v9945
    %v9947 = vadd.f32 %v9855, %v9871
    %v9948 = vrot.slane %v9947, 4
    %v9949 = vadd.f32 %v9947, %v9948
    %v9950 = vrot.slane %v9949, 2
    %v9951 = vadd.f32 %v9949, %v9950
    %v9952 = vrot.slane %v9951, 1
    %v9953 = vadd.f32 %v9951, %v9952
    %v9954 = vadd.f32 %v9856, %v9872
    %v9955 = vrot.slane %v9954, 4
    %v9956 = vadd.f32 %v9954, %v9955
    %v9957 = vrot.slane %v9956, 2
    %v9958 = vadd.f32 %v9956, %v9957
    %v9959 = vrot.slane %v9958, 1
    %v9960 = vadd.f32 %v9958, %v9959
    %v9961 = vadd.f32 %v9857, %v9873
    %v9962 = vrot.slane %v9961, 4
    %v9963 = vadd.f32 %v9961, %v9962
    %v9964 = vrot.slane %v9963, 2
    %v9965 = vadd.f32 %v9963, %v9964
    %v9966 = vrot.slane %v9965, 1
    %v9967 = vadd.f32 %v9965, %v9966
    %v9968 = vadd.f32 %v9858, %v9874
    %v9969 = vrot.slane %v9968, 4
    %v9970 = vadd.f32 %v9968, %v9969
    %v9971 = vrot.slane %v9970, 2
    %v9972 = vadd.f32 %v9970, %v9971
    %v9973 = vrot.slane %v9972, 1
    %v9974 = vadd.f32 %v9972, %v9973
    %v9975 = vadd.f32 %v9859, %v9875
    %v9976 = vrot.slane %v9975, 4
    %v9977 = vadd.f32 %v9975, %v9976
    %v9978 = vrot.slane %v9977, 2
    %v9979 = vadd.f32 %v9977, %v9978
    %v9980 = vrot.slane %v9979, 1
    %v9981 = vadd.f32 %v9979, %v9980
    %v9982 = vadd.f32 %v9860, %v9876
    %v9983 = vrot.slane %v9982, 4
    %v9984 = vadd.f32 %v9982, %v9983
    %v9985 = vrot.slane %v9984, 2
    %v9986 = vadd.f32 %v9984, %v9985
    %v9987 = vrot.slane %v9986, 1
    %v9988 = vadd.f32 %v9986, %v9987
    %vm9989 = vcmask 1045504
    %v9990 = vsel %vm9989, %v9802, 0.0
    %v9991 = vrot.slane %v9990, 4
    %v9992 = vadd.f32 %v9990, %v9991
    %v9993 = vrot.slane %v9992, 2
    %v9994 = vadd.f32 %v9992, %v9993
    %v9995 = vrot.slane %v9994, 1
    %v9996 = vadd.f32 %v9994, %v9995
    %v9997 = vsel %vm9989, %v9804, 0.0
    %v9998 = vrot.slane %v9997, 4
    %v9999 = vadd.f32 %v9997, %v9998
    %v10000 = vrot.slane %v9999, 2
    %v10001 = vadd.f32 %v9999, %v10000
    %v10002 = vrot.slane %v10001, 1
    %v10003 = vadd.f32 %v10001, %v10002
    %v10004 = vsel %vm9989, %v9806, 0.0
    %v10005 = vrot.slane %v10004, 4
    %v10006 = vadd.f32 %v10004, %v10005
    %v10007 = vrot.slane %v10006, 2
    %v10008 = vadd.f32 %v10006, %v10007
    %v10009 = vrot.slane %v10008, 1
    %v10010 = vadd.f32 %v10008, %v10009
    %v10011 = vsel %vm9989, %v9808, 0.0
    %v10012 = vrot.slane %v10011, 4
    %v10013 = vadd.f32 %v10011, %v10012
    %v10014 = vrot.slane %v10013, 2
    %v10015 = vadd.f32 %v10013, %v10014
    %v10016 = vrot.slane %v10015, 1
    %v10017 = vadd.f32 %v10015, %v10016
    %v10018 = vsel %vm9989, %v9810, 0.0
    %v10019 = vrot.slane %v10018, 4
    %v10020 = vadd.f32 %v10018, %v10019
    %v10021 = vrot.slane %v10020, 2
    %v10022 = vadd.f32 %v10020, %v10021
    %v10023 = vrot.slane %v10022, 1
    %v10024 = vadd.f32 %v10022, %v10023
    %v10025 = vsel %vm9989, %v9812, 0.0
    %v10026 = vrot.slane %v10025, 4
    %v10027 = vadd.f32 %v10025, %v10026
    %v10028 = vrot.slane %v10027, 2
    %v10029 = vadd.f32 %v10027, %v10028
    %v10030 = vrot.slane %v10029, 1
    %v10031 = vadd.f32 %v10029, %v10030
    %v10032 = vadd.f32 %v9883, %v9890
    %v10033 = vadd.f32 %v10032, %v9897
    %v10034 = vadd.f32 %v10033, %v9904
    %v10035 = vadd.f32 %v10034, %v9911
    %v10036 = vadd.f32 %v10035, %v9918
    %v10037 = vadd.f32 %v10036, %v9925
    %v10038 = vadd.f32 %v10037, %v9932
    %v10039 = vadd.f32 %v10038, %v9939
    %v10040 = vadd.f32 %v10039, %v9946
    %v10041 = vadd.f32 %v10040, %v9953
    %v10042 = vadd.f32 %v10041, %v9960
    %v10043 = vadd.f32 %v10042, %v9967
    %v10044 = vadd.f32 %v10043, %v9974
    %v10045 = vadd.f32 %v10044, %v9981
    %v10046 = vadd.f32 %v10045, %v9988
    %v10047 = vadd.f32 %v9996, %v10003
    %v10048 = vadd.f32 %v10047, %v10010
    %v10049 = vadd.f32 %v10048, %v10017
    %v10050 = vadd.f32 %v10049, %v10024
    %v10051 = vadd.f32 %v10050, %v10031
    %vm10052 = vcmask 1040384
    %v10053 = vsel %vm10052, %v10046, %v10051
    %10054 = vst [vmem:[#allocation8] sm:$0x3] %v10053
    // Predicated region
    $region26: #{tpu_custom_call.1} parent=1 // pred_check
      _
    $region27: #{tpu_custom_call.1} parent=1 // pred_check_branch
      %10056 = sbr.rel (0) target = $region29
    $region28: #{tpu_custom_call.1} parent=1 // pred_region
      %s10058 = ssub.s32 32, 32
      %10059 = vsyncadd [#allocation4], %s10058
      %s10061 = sshll.u32 [#allocation8], 4
      %s10062 = int_to_ptr.vmem [resolvable:$true] %s10061
      %10064 = dma.vmem_to_hbm [thread:$0]  %s10062, 32, %s3, [#allocation4]
    $region29: #{tpu_custom_call.1} parent=1 // pred_fallthru
      _
    // Predicated region
    $region30: #{tpu_custom_call.1} parent=1 // pred_check
      _
    $region31: #{tpu_custom_call.1} parent=1 // pred_check_branch
      %10066 = sbr.rel (0) target = $region33
    $region32: #{tpu_custom_call.1} parent=1 // pred_region
      %10067 = dma.done [#allocation4], 32
    $region33: #{tpu_custom_call.1} parent=1 // pred_fallthru
      _
    %10068 = vsyncpa [#allocation3], 1
    %10069 = vsyncpa [#allocation6], 1
    %10070 = vsyncpa [#allocation4], 1

</llo_original>
